<compile_context>
chip_gen: v7x
topology: tpu7x:2x2x1
jax: 0.10.0
libtpu: 0.0.40
codegen_flags: <defaults>
</compile_context>

<pallas_src>
import functools

import numpy as np

import jax
import jax.numpy as jnp
from jax.experimental import pallas as pl
from jax.experimental.pallas import tpu as pltpu


_COMPILER_PARAMS = pltpu.CompilerParams(
    dimension_semantics=("parallel",),          # stream axis (rgb / depth)
    vmem_limit_bytes=32 * 1024 * 1024,
)


# ----------------------------- Pallas kernels -----------------------------

def _mlp_core(x_bf, x_res, m, wc_ref, w1a, w1b, b1, w2, *, W, cc, active_taps):
    """Fused FasterNet MLPBlock body on one stream's (N*H*W, C) row slab.

    out = x + Conv1x1(ReLU(BN(Conv1x1(PartialConv3(x)))))
    PartialConv3 = zero-padded 3x3 conv on the first `cc` channels, computed
    as rolled + boundary-masked matmul taps entirely in VMEM.
    """
    M = x_res.shape[0]
    x1 = x_res[:, :cc]                                   # (M, cc) f32
    y1 = jnp.zeros((M, cc), jnp.float32)
    for k in active_taps:                                # statically pruned taps
        di, dj = k // 3 - 1, k % 3 - 1
        shift = (-(di * W + dj)) % M
        shifted = x1 if shift == 0 else pltpu.roll(x1, shift=shift, axis=0)
        if k != 4:                                       # centre tap never masked
            shifted = shifted * m[:, k:k + 1]            # zero out-of-image taps
        y1 = y1 + jnp.dot(shifted.astype(jnp.bfloat16), wc_ref[0, k],
                          preferred_element_type=jnp.float32)

    # Conv1x1 (BN folded) -> bias -> ReLU -> Conv1x1 -> residual add.
    # W1 is pre-split (w1a: conv-branch rows, w1b: passthrough rows) so the
    # channel concat of Partial_conv3 never materializes.
    h = jnp.dot(y1.astype(jnp.bfloat16), w1a, preferred_element_type=jnp.float32)
    h = h + jnp.dot(x_bf[:, cc:], w1b, preferred_element_type=jnp.float32)
    h = jnp.maximum(h + b1, 0.0)
    y = jnp.dot(h.astype(jnp.bfloat16), w2, preferred_element_type=jnp.float32)
    return x_res + y


def _conv_mlp_kernel(cols_ref, wm_ref, bm_ref, m_ref, wc_ref, w1a_ref, w1b_ref,
                     b1_ref, w2_ref, o_ref, *, W, cc, active_taps):
    # patch_embed / PatchMerging (conv-as-matmul, BN scale folded into wm)
    # feeding straight into the first MLPBlock of the following stage.
    x_res = jnp.dot(cols_ref[0], wm_ref[0],
                    preferred_element_type=jnp.float32) + bm_ref[0]
    x_bf = x_res.astype(jnp.bfloat16)
    out = _mlp_core(x_bf, x_res, m_ref[...], wc_ref, w1a_ref[0], w1b_ref[0],
                    b1_ref[0], w2_ref[0], W=W, cc=cc, active_taps=active_taps)
    o_ref[0] = out.astype(o_ref.dtype)


def _mlp_kernel(x_ref, m_ref, wc_ref, w1a_ref, w1b_ref, b1_ref, w2_ref, o_ref,
                *, W, cc, active_taps):
    # Standalone MLPBlock (2nd and later blocks of a stage), in-place output.
    x_bf = x_ref[0]
    out = _mlp_core(x_bf, x_bf.astype(jnp.float32), m_ref[...], wc_ref,
                    w1a_ref[0], w1b_ref[0], b1_ref[0], w2_ref[0],
                    W=W, cc=cc, active_taps=active_taps)
    o_ref[0] = out.astype(o_ref.dtype)


# --------------------------- pallas_call wrappers ---------------------------

def _conv_masks_np(H, W, N):
    # Per-output-row validity of each of the 9 taps of a zero-padded 3x3 conv
    # on a row-major (H, W) image, tiled over the batch; trace-time constant.
    HW = H * W
    m = np.zeros((HW, 9), np.float32)
    for p in range(HW):
        h, w = divmod(p, W)
        for di in (-1, 0, 1):
            for dj in (-1, 0, 1):
                if 0 <= h + di < H and 0 <= w + dj < W:
                    m[p, (di + 1) * 3 + (dj + 1)] = 1.0
    return np.tile(m, (N, 1))


def conv_mlp_block(cols, wm, bm, blk, H, W, N):
    # cols: (S, N*H*W, K) bf16 ; wm: (S, K, C) bf16 (BN folded) ; bm: (S, 1, C) f32
    S, M, K = cols.shape
    C = wm.shape[-1]
    cc = blk["wc"].shape[-1]
    hidden = blk["b1"].shape[-1]
    mask_np = _conv_masks_np(H, W, N)
    active = tuple(k for k in range(9) if mask_np[:, k].any())
    kernel = functools.partial(_conv_mlp_kernel, W=W, cc=cc, active_taps=active)
    return pl.pallas_call(
        kernel,
        out_shape=jax.ShapeDtypeStruct((S, M, C), jnp.bfloat16),
        grid=(S,),
        in_specs=[
            pl.BlockSpec((1, M, K), lambda s: (s, 0, 0)),
            pl.BlockSpec((1, K, C), lambda s: (s, 0, 0)),
            pl.BlockSpec((1, 1, C), lambda s: (s, 0, 0)),
            pl.BlockSpec((M, 9), lambda s: (0, 0)),
            pl.BlockSpec((1, 9, cc, cc), lambda s: (s, 0, 0, 0)),
            pl.BlockSpec((1, cc, hidden), lambda s: (s, 0, 0)),
            pl.BlockSpec((1, C - cc, hidden), lambda s: (s, 0, 0)),
            pl.BlockSpec((1, 1, hidden), lambda s: (s, 0, 0)),
            pl.BlockSpec((1, hidden, C), lambda s: (s, 0, 0)),
        ],
        out_specs=pl.BlockSpec((1, M, C), lambda s: (s, 0, 0)),
        compiler_params=_COMPILER_PARAMS,
    )(cols, wm, bm, jnp.asarray(mask_np), blk["wc"], blk["w1a"], blk["w1b"],
      blk["b1"], blk["w2"])


def mlp_block(x, blk, H, W, N):
    # x: (S, N*H*W, C) bf16 -> same shape, written in place over x.
    S, M, C = x.shape
    cc = blk["wc"].shape[-1]
    hidden = blk["b1"].shape[-1]
    mask_np = _conv_masks_np(H, W, N)
    active = tuple(k for k in range(9) if mask_np[:, k].any())
    kernel = functools.partial(_mlp_kernel, W=W, cc=cc, active_taps=active)
    return pl.pallas_call(
        kernel,
        out_shape=jax.ShapeDtypeStruct((S, M, C), jnp.bfloat16),
        grid=(S,),
        in_specs=[
            pl.BlockSpec((1, M, C), lambda s: (s, 0, 0)),
            pl.BlockSpec((M, 9), lambda s: (0, 0)),
            pl.BlockSpec((1, 9, cc, cc), lambda s: (s, 0, 0, 0)),
            pl.BlockSpec((1, cc, hidden), lambda s: (s, 0, 0)),
            pl.BlockSpec((1, C - cc, hidden), lambda s: (s, 0, 0)),
            pl.BlockSpec((1, 1, hidden), lambda s: (s, 0, 0)),
            pl.BlockSpec((1, hidden, C), lambda s: (s, 0, 0)),
        ],
        out_specs=pl.BlockSpec((1, M, C), lambda s: (s, 0, 0)),
        input_output_aliases={0: 0},
        compiler_params=_COMPILER_PARAMS,
    )(x, jnp.asarray(mask_np), blk["wc"], blk["w1a"], blk["w1b"], blk["b1"],
      blk["w2"])


# ------------------------------- glue (JAX) --------------------------------

def space_to_depth(x, k):
    # exact im2col for a kxk, stride-k conv; x: (S, N, H, W, C) ->
    # (S, N*(H//k)*(W//k), k*k*C), flat K order = (kh, kw, cin).
    S, N, H, Wd, C = x.shape
    x = x.reshape(S, N, H // k, k, Wd // k, k, C)
    x = x.transpose(0, 1, 2, 4, 3, 5, 6)
    return x.reshape(S, N * (H // k) * (Wd // k), k * k * C)


def fold_bn(bn, eps=1e-5):
    gamma, beta, mean, var = bn
    scale = gamma / jnp.sqrt(var + eps)
    return scale, beta - mean * scale


# --------------------------- parameter creation ----------------------------

def _conv_to_mat(w):
    # (Cout, Cin, kh, kw) -> (kh*kw*Cin, Cout), K order = (kh, kw, cin)
    co, ci, kh, kw = w.shape
    return jnp.transpose(w, (2, 3, 1, 0)).reshape(kh * kw * ci, co)


def _bn_params(key, c):
    k1, k2, k3, k4 = jax.random.split(key, 4)
    gamma = 1.0 + 0.1 * jax.random.normal(k1, (c,), jnp.float32)
    beta = 0.05 * jax.random.normal(k2, (c,), jnp.float32)
    mean = 0.05 * jax.random.normal(k3, (c,), jnp.float32)
    var = 1.0 + 0.1 * jnp.abs(jax.random.normal(k4, (c,), jnp.float32))
    return (gamma, beta, mean, var)


def init_stream(key, in_chans, pad_chans=3, embed_dim=32, depths=(1, 2, 1, 1),
                mlp_ratio=2, n_div=4, patch_size=4):
    keys = iter(jax.random.split(key, 128))
    std = 0.05
    p = {}
    w = std * jax.random.normal(next(keys),
                                (embed_dim, in_chans, patch_size, patch_size),
                                jnp.float32)
    if in_chans < pad_chans:      # zero in-channel padding: identical conv result
        w = jnp.pad(w, ((0, 0), (0, pad_chans - in_chans), (0, 0), (0, 0)))
    s, b = fold_bn(_bn_params(next(keys), embed_dim))
    p["pe_w"] = (_conv_to_mat(w) * s[None, :]).astype(jnp.bfloat16)
    p["pe_b"] = b.reshape(1, embed_dim)

    dims = [embed_dim * (2 ** i) for i in range(4)]
    p["blocks"] = []
    p["merge_w"] = []
    p["merge_b"] = []
    for i, d in enumerate(dims):
        cc = d // n_div
        hidden = d * mlp_ratio
        blocks = []
        for _ in range(depths[i]):
            pw = std * jax.random.normal(next(keys), (cc, cc, 3, 3), jnp.float32)
            w1 = std * jax.random.normal(next(keys), (hidden, d, 1, 1), jnp.float32)
            w2 = std * jax.random.normal(next(keys), (d, hidden, 1, 1), jnp.float32)
            s1, b1 = fold_bn(_bn_params(next(keys), hidden))
            w1m = jnp.transpose(w1[:, :, 0, 0], (1, 0)) * s1[None, :]    # (d, hidden)
            blocks.append({
                "wc": _conv_to_mat(pw).reshape(9, cc, cc).astype(jnp.bfloat16),
                "w1a": w1m[:cc].astype(jnp.bfloat16),                    # conv branch
                "w1b": w1m[cc:].astype(jnp.bfloat16),                    # passthrough
                "b1": b1.reshape(1, hidden),                             # f32
                "w2": jnp.transpose(w2[:, :, 0, 0], (1, 0)).astype(jnp.bfloat16),
            })
        p["blocks"].append(blocks)
        if i < 3:
            mw = std * jax.random.normal(next(keys), (2 * d, d, 2, 2), jnp.float32)
            ms, mb = fold_bn(_bn_params(next(keys), 2 * d))
            p["merge_w"].append((_conv_to_mat(mw) * ms[None, :]).astype(jnp.bfloat16))
            p["merge_b"].append(mb.reshape(1, 2 * d))
    return p


def init_params(key, **cfg):
    k_rgb, k_dep = jax.random.split(key)
    p_rgb = init_stream(k_rgb, in_chans=3, **cfg)
    p_dep = init_stream(k_dep, in_chans=1, **cfg)
    # stack the two streams along a leading axis -> one pallas_call serves both
    return jax.tree_util.tree_map(lambda a, b: jnp.stack([a, b], axis=0),
                                  p_rgb, p_dep)


# -------------------------------- forward ----------------------------------

def generate_feats_forward(params, img_nchw, depth_nchw, patch_size=4):
    # NCHW -> NHWC, zero-pad depth to the rgb channel count, stack streams.
    img = jnp.transpose(img_nchw, (0, 2, 3, 1))
    dep = jnp.transpose(depth_nchw, (0, 2, 3, 1))
    dep = jnp.pad(dep, ((0, 0), (0, 0), (0, 0),
                        (0, img.shape[-1] - dep.shape[-1])))
    x5 = jnp.stack([img, dep], axis=0).astype(jnp.bfloat16)    # (2, N, Hi, Wi, 3)
    S, N, Hi, Wi, _ = x5.shape

    H, W = Hi // patch_size, Wi // patch_size
    cols = space_to_depth(x5, patch_size)                      # (S, N*H*W, K)

    outs = []
    n_stages = len(params["blocks"])
    for i in range(n_stages):
        if i == 0:
            wm, bm = params["pe_w"], params["pe_b"]            # patch_embed
        else:
            wm, bm = params["merge_w"][i - 1], params["merge_b"][i - 1]
        # fused conv(+BN) -> first MLPBlock of this stage
        x = conv_mlp_block(cols, wm, bm, params["blocks"][i][0], H, W, N)
        for blk in params["blocks"][i][1:]:
            x = mlp_block(x, blk, H, W, N)
        outs.append((x, H, W))
        if i < n_stages - 1:
            C = x.shape[-1]
            cols = space_to_depth(x.reshape(S, N, H, W, C), 2)
            H, W = H // 2, W // 2

    def to_nchw(t, h, w):
        s, m, c = t.shape
        t = t.reshape(s, m // (h * w), h, w, c)
        return jnp.transpose(t, (0, 1, 4, 2, 3)).astype(jnp.float32)

    outs_r = [to_nchw(t, h, w)[0] for (t, h, w) in outs]
    outs_d = [to_nchw(t, h, w)[1] for (t, h, w) in outs]
    return outs_r, outs_d


# --------------------------------- main -------------------------------------

if __name__ == "__main__":
    key = jax.random.PRNGKey(0)
    k_img, k_dep, k_par = jax.random.split(key, 3)

    img = jax.random.normal(k_img, (2, 3, 32, 32), jnp.float32)      # RGB  NCHW
    depth = jax.random.normal(k_dep, (2, 1, 32, 32), jnp.float32)    # depth NCHW

    cfg = dict(embed_dim=32, depths=(1, 2, 1, 1), mlp_ratio=2, n_div=4,
               patch_size=4)
    params = init_params(k_par, **cfg)

    fwd = jax.jit(generate_feats_forward)
    outs_r, outs_d = fwd(params, img, depth)
    for t in outs_r + outs_d:
        jax.block_until_ready(t)

    # expected pyramid shapes: (2,32,8,8) (2,64,4,4) (2,128,2,2) (2,256,1,1)
    assert outs_r[0].shape == (2, 32, 8, 8)
    assert outs_r[1].shape == (2, 64, 4, 4)
    assert outs_r[2].shape == (2, 128, 2, 2)
    assert outs_r[3].shape == (2, 256, 1, 1)
    assert outs_d[0].shape == (2, 32, 8, 8)
    assert outs_d[3].shape == (2, 256, 1, 1)
    print("KERNEL_OK")
</pallas_src>

<mosaic_0001>
module attributes {stable_mosaic.version = 11 : i64} {
  func.func @_conv_mlp_kernel(%arg0: i32, %arg1: memref<1x128x48xbf16, #tpu.memory_space<vmem>>, %arg2: memref<1x48x32xbf16, #tpu.memory_space<vmem>>, %arg3: memref<1x1x32xf32, #tpu.memory_space<vmem>>, %arg4: memref<128x9xf32, #tpu.memory_space<vmem>>, %arg5: memref<1x9x8x8xbf16, #tpu.memory_space<vmem>>, %arg6: memref<1x8x64xbf16, #tpu.memory_space<vmem>>, %arg7: memref<1x24x64xbf16, #tpu.memory_space<vmem>>, %arg8: memref<1x1x64xf32, #tpu.memory_space<vmem>>, %arg9: memref<1x64x32xbf16, #tpu.memory_space<vmem>>, %arg10: memref<1x128x32xbf16, #tpu.memory_space<vmem>>) attributes {dimension_semantics = [#tpu.dimension_semantics<parallel>], iteration_bounds = array<i64: 2>, scalar_prefetch = 0 : i64, scratch_operands = 0 : i64, tpu.core_type = #tpu.core_type<tc>, window_params = [{transform_indices = @transform_0, window_bounds = array<i64: 1, 128, 48>}, {transform_indices = @transform_1, window_bounds = array<i64: 1, 48, 32>}, {transform_indices = @transform_2, window_bounds = array<i64: 1, 1, 32>}, {pipeline_mode = #tpu.pipeline_mode<synchronous>, transform_indices = @transform_3, window_bounds = array<i64: 128, 9>}, {transform_indices = @transform_4, window_bounds = array<i64: 1, 9, 8, 8>}, {transform_indices = @transform_5, window_bounds = array<i64: 1, 8, 64>}, {transform_indices = @transform_6, window_bounds = array<i64: 1, 24, 64>}, {transform_indices = @transform_7, window_bounds = array<i64: 1, 1, 64>}, {transform_indices = @transform_8, window_bounds = array<i64: 1, 64, 32>}, {transform_indices = @transform_9, window_bounds = array<i64: 1, 128, 32>}]} {
    %c0 = arith.constant 0 : index
    %c0_0 = arith.constant 0 : index
    %c0_1 = arith.constant 0 : index
    %0 = vector.load %arg1[%c0, %c0_0, %c0_1] : memref<1x128x48xbf16, #tpu.memory_space<vmem>>, vector<1x128x48xbf16>
    %1 = vector.shape_cast %0 : vector<1x128x48xbf16> to vector<128x48xbf16>
    %c0_2 = arith.constant 0 : index
    %c0_3 = arith.constant 0 : index
    %c0_4 = arith.constant 0 : index
    %2 = vector.load %arg2[%c0_2, %c0_3, %c0_4] : memref<1x48x32xbf16, #tpu.memory_space<vmem>>, vector<1x48x32xbf16>
    %3 = vector.shape_cast %2 : vector<1x48x32xbf16> to vector<48x32xbf16>
    %cst = arith.constant dense<0.000000e+00> : vector<128x32xf32>
    %4 = tpu.matmul %1, %3, %cst {dimension_numbers = #tpu.dot_dimension_numbers<[1], [0], [0], [1], [0, 0, 1, 1], [], []>} : vector<128x48xbf16>, vector<48x32xbf16>, vector<128x32xf32> -> vector<128x32xf32>
    %c0_5 = arith.constant 0 : index
    %c0_6 = arith.constant 0 : index
    %c0_7 = arith.constant 0 : index
    %5 = vector.load %arg3[%c0_5, %c0_6, %c0_7] : memref<1x1x32xf32, #tpu.memory_space<vmem>>, vector<1x1x32xf32>
    %6 = vector.shape_cast %5 : vector<1x1x32xf32> to vector<1x32xf32>
    %7 = vector.broadcast %6 : vector<1x32xf32> to vector<128x32xf32>
    %8 = arith.addf %4, %7 : vector<128x32xf32>
    %9 = arith.truncf %8 : vector<128x32xf32> to vector<128x32xbf16>
    %c0_8 = arith.constant 0 : index
    %c0_9 = arith.constant 0 : index
    %10 = vector.load %arg4[%c0_8, %c0_9] : memref<128x9xf32, #tpu.memory_space<vmem>>, vector<128x9xf32>
    %c0_10 = arith.constant 0 : index
    %c0_11 = arith.constant 0 : index
    %c0_12 = arith.constant 0 : index
    %11 = vector.load %arg6[%c0_10, %c0_11, %c0_12] : memref<1x8x64xbf16, #tpu.memory_space<vmem>>, vector<1x8x64xbf16>
    %12 = vector.shape_cast %11 : vector<1x8x64xbf16> to vector<8x64xbf16>
    %c0_13 = arith.constant 0 : index
    %c0_14 = arith.constant 0 : index
    %c0_15 = arith.constant 0 : index
    %13 = vector.load %arg7[%c0_13, %c0_14, %c0_15] : memref<1x24x64xbf16, #tpu.memory_space<vmem>>, vector<1x24x64xbf16>
    %14 = vector.shape_cast %13 : vector<1x24x64xbf16> to vector<24x64xbf16>
    %c0_16 = arith.constant 0 : index
    %c0_17 = arith.constant 0 : index
    %c0_18 = arith.constant 0 : index
    %15 = vector.load %arg8[%c0_16, %c0_17, %c0_18] : memref<1x1x64xf32, #tpu.memory_space<vmem>>, vector<1x1x64xf32>
    %16 = vector.shape_cast %15 : vector<1x1x64xf32> to vector<1x64xf32>
    %c0_19 = arith.constant 0 : index
    %c0_20 = arith.constant 0 : index
    %c0_21 = arith.constant 0 : index
    %17 = vector.load %arg9[%c0_19, %c0_20, %c0_21] : memref<1x64x32xbf16, #tpu.memory_space<vmem>>, vector<1x64x32xbf16>
    %18 = vector.shape_cast %17 : vector<1x64x32xbf16> to vector<64x32xbf16>
    %19 = vector.extract_strided_slice %8 {offsets = [0, 0], sizes = [128, 8], strides = [1, 1]} : vector<128x32xf32> to vector<128x8xf32>
    %cst_22 = arith.constant 0.000000e+00 : f32
    %20 = vector.broadcast %cst_22 : f32 to vector<128x8xf32>
    %c9_i32 = arith.constant 9 : i32
    %21 = tpu.dynamic_rotate %19 by %c9_i32 dim 0 : vector<128x8xf32>, i32 -> vector<128x8xf32>
    %22 = vector.extract_strided_slice %10 {offsets = [0, 0], sizes = [128, 1], strides = [1, 1]} : vector<128x9xf32> to vector<128x1xf32>
    %23 = vector.broadcast %22 : vector<128x1xf32> to vector<128x8xf32>
    %24 = arith.mulf %21, %23 : vector<128x8xf32>
    %25 = arith.truncf %24 : vector<128x8xf32> to vector<128x8xbf16>
    %c0_23 = arith.constant 0 : index
    %c0_24 = arith.constant 0 : index
    %c0_25 = arith.constant 0 : index
    %c0_26 = arith.constant 0 : index
    %26 = vector.load %arg5[%c0_23, %c0_24, %c0_25, %c0_26] : memref<1x9x8x8xbf16, #tpu.memory_space<vmem>>, vector<1x1x8x8xbf16>
    %27 = vector.shape_cast %26 : vector<1x1x8x8xbf16> to vector<8x8xbf16>
    %cst_27 = arith.constant dense<0.000000e+00> : vector<128x8xf32>
    %28 = tpu.matmul %25, %27, %cst_27 {dimension_numbers = #tpu.dot_dimension_numbers<[1], [0], [0], [1], [0, 0, 1, 1], [], []>} : vector<128x8xbf16>, vector<8x8xbf16>, vector<128x8xf32> -> vector<128x8xf32>
    %29 = arith.addf %20, %28 : vector<128x8xf32>
    %c8_i32 = arith.constant 8 : i32
    %30 = tpu.dynamic_rotate %19 by %c8_i32 dim 0 : vector<128x8xf32>, i32 -> vector<128x8xf32>
    %31 = vector.extract_strided_slice %10 {offsets = [0, 1], sizes = [128, 1], strides = [1, 1]} : vector<128x9xf32> to vector<128x1xf32>
    %32 = vector.broadcast %31 : vector<128x1xf32> to vector<128x8xf32>
    %33 = arith.mulf %30, %32 : vector<128x8xf32>
    %34 = arith.truncf %33 : vector<128x8xf32> to vector<128x8xbf16>
    %c0_28 = arith.constant 0 : index
    %c1 = arith.constant 1 : index
    %c0_29 = arith.constant 0 : index
    %c0_30 = arith.constant 0 : index
    %35 = vector.load %arg5[%c0_28, %c1, %c0_29, %c0_30] : memref<1x9x8x8xbf16, #tpu.memory_space<vmem>>, vector<1x1x8x8xbf16>
    %36 = vector.shape_cast %35 : vector<1x1x8x8xbf16> to vector<8x8xbf16>
    %cst_31 = arith.constant dense<0.000000e+00> : vector<128x8xf32>
    %37 = tpu.matmul %34, %36, %cst_31 {dimension_numbers = #tpu.dot_dimension_numbers<[1], [0], [0], [1], [0, 0, 1, 1], [], []>} : vector<128x8xbf16>, vector<8x8xbf16>, vector<128x8xf32> -> vector<128x8xf32>
    %38 = arith.addf %29, %37 : vector<128x8xf32>
    %c7_i32 = arith.constant 7 : i32
    %39 = tpu.dynamic_rotate %19 by %c7_i32 dim 0 : vector<128x8xf32>, i32 -> vector<128x8xf32>
    %40 = vector.extract_strided_slice %10 {offsets = [0, 2], sizes = [128, 1], strides = [1, 1]} : vector<128x9xf32> to vector<128x1xf32>
    %41 = vector.broadcast %40 : vector<128x1xf32> to vector<128x8xf32>
    %42 = arith.mulf %39, %41 : vector<128x8xf32>
    %43 = arith.truncf %42 : vector<128x8xf32> to vector<128x8xbf16>
    %c0_32 = arith.constant 0 : index
    %c2 = arith.constant 2 : index
    %c0_33 = arith.constant 0 : index
    %c0_34 = arith.constant 0 : index
    %44 = vector.load %arg5[%c0_32, %c2, %c0_33, %c0_34] : memref<1x9x8x8xbf16, #tpu.memory_space<vmem>>, vector<1x1x8x8xbf16>
    %45 = vector.shape_cast %44 : vector<1x1x8x8xbf16> to vector<8x8xbf16>
    %cst_35 = arith.constant dense<0.000000e+00> : vector<128x8xf32>
    %46 = tpu.matmul %43, %45, %cst_35 {dimension_numbers = #tpu.dot_dimension_numbers<[1], [0], [0], [1], [0, 0, 1, 1], [], []>} : vector<128x8xbf16>, vector<8x8xbf16>, vector<128x8xf32> -> vector<128x8xf32>
    %47 = arith.addf %38, %46 : vector<128x8xf32>
    %c1_i32 = arith.constant 1 : i32
    %48 = tpu.dynamic_rotate %19 by %c1_i32 dim 0 : vector<128x8xf32>, i32 -> vector<128x8xf32>
    %49 = vector.extract_strided_slice %10 {offsets = [0, 3], sizes = [128, 1], strides = [1, 1]} : vector<128x9xf32> to vector<128x1xf32>
    %50 = vector.broadcast %49 : vector<128x1xf32> to vector<128x8xf32>
    %51 = arith.mulf %48, %50 : vector<128x8xf32>
    %52 = arith.truncf %51 : vector<128x8xf32> to vector<128x8xbf16>
    %c0_36 = arith.constant 0 : index
    %c3 = arith.constant 3 : index
    %c0_37 = arith.constant 0 : index
    %c0_38 = arith.constant 0 : index
    %53 = vector.load %arg5[%c0_36, %c3, %c0_37, %c0_38] : memref<1x9x8x8xbf16, #tpu.memory_space<vmem>>, vector<1x1x8x8xbf16>
    %54 = vector.shape_cast %53 : vector<1x1x8x8xbf16> to vector<8x8xbf16>
    %cst_39 = arith.constant dense<0.000000e+00> : vector<128x8xf32>
    %55 = tpu.matmul %52, %54, %cst_39 {dimension_numbers = #tpu.dot_dimension_numbers<[1], [0], [0], [1], [0, 0, 1, 1], [], []>} : vector<128x8xbf16>, vector<8x8xbf16>, vector<128x8xf32> -> vector<128x8xf32>
    %56 = arith.addf %47, %55 : vector<128x8xf32>
    %57 = arith.truncf %19 : vector<128x8xf32> to vector<128x8xbf16>
    %c0_40 = arith.constant 0 : index
    %c4 = arith.constant 4 : index
    %c0_41 = arith.constant 0 : index
    %c0_42 = arith.constant 0 : index
    %58 = vector.load %arg5[%c0_40, %c4, %c0_41, %c0_42] : memref<1x9x8x8xbf16, #tpu.memory_space<vmem>>, vector<1x1x8x8xbf16>
    %59 = vector.shape_cast %58 : vector<1x1x8x8xbf16> to vector<8x8xbf16>
    %cst_43 = arith.constant dense<0.000000e+00> : vector<128x8xf32>
    %60 = tpu.matmul %57, %59, %cst_43 {dimension_numbers = #tpu.dot_dimension_numbers<[1], [0], [0], [1], [0, 0, 1, 1], [], []>} : vector<128x8xbf16>, vector<8x8xbf16>, vector<128x8xf32> -> vector<128x8xf32>
    %61 = arith.addf %56, %60 : vector<128x8xf32>
    %c127_i32 = arith.constant 127 : i32
    %62 = tpu.dynamic_rotate %19 by %c127_i32 dim 0 : vector<128x8xf32>, i32 -> vector<128x8xf32>
    %63 = vector.extract_strided_slice %10 {offsets = [0, 5], sizes = [128, 1], strides = [1, 1]} : vector<128x9xf32> to vector<128x1xf32>
    %64 = vector.broadcast %63 : vector<128x1xf32> to vector<128x8xf32>
    %65 = arith.mulf %62, %64 : vector<128x8xf32>
    %66 = arith.truncf %65 : vector<128x8xf32> to vector<128x8xbf16>
    %c0_44 = arith.constant 0 : index
    %c5 = arith.constant 5 : index
    %c0_45 = arith.constant 0 : index
    %c0_46 = arith.constant 0 : index
    %67 = vector.load %arg5[%c0_44, %c5, %c0_45, %c0_46] : memref<1x9x8x8xbf16, #tpu.memory_space<vmem>>, vector<1x1x8x8xbf16>
    %68 = vector.shape_cast %67 : vector<1x1x8x8xbf16> to vector<8x8xbf16>
    %cst_47 = arith.constant dense<0.000000e+00> : vector<128x8xf32>
    %69 = tpu.matmul %66, %68, %cst_47 {dimension_numbers = #tpu.dot_dimension_numbers<[1], [0], [0], [1], [0, 0, 1, 1], [], []>} : vector<128x8xbf16>, vector<8x8xbf16>, vector<128x8xf32> -> vector<128x8xf32>
    %70 = arith.addf %61, %69 : vector<128x8xf32>
    %c121_i32 = arith.constant 121 : i32
    %71 = tpu.dynamic_rotate %19 by %c121_i32 dim 0 : vector<128x8xf32>, i32 -> vector<128x8xf32>
    %72 = vector.extract_strided_slice %10 {offsets = [0, 6], sizes = [128, 1], strides = [1, 1]} : vector<128x9xf32> to vector<128x1xf32>
    %73 = vector.broadcast %72 : vector<128x1xf32> to vector<128x8xf32>
    %74 = arith.mulf %71, %73 : vector<128x8xf32>
    %75 = arith.truncf %74 : vector<128x8xf32> to vector<128x8xbf16>
    %c0_48 = arith.constant 0 : index
    %c6 = arith.constant 6 : index
    %c0_49 = arith.constant 0 : index
    %c0_50 = arith.constant 0 : index
    %76 = vector.load %arg5[%c0_48, %c6, %c0_49, %c0_50] : memref<1x9x8x8xbf16, #tpu.memory_space<vmem>>, vector<1x1x8x8xbf16>
    %77 = vector.shape_cast %76 : vector<1x1x8x8xbf16> to vector<8x8xbf16>
    %cst_51 = arith.constant dense<0.000000e+00> : vector<128x8xf32>
    %78 = tpu.matmul %75, %77, %cst_51 {dimension_numbers = #tpu.dot_dimension_numbers<[1], [0], [0], [1], [0, 0, 1, 1], [], []>} : vector<128x8xbf16>, vector<8x8xbf16>, vector<128x8xf32> -> vector<128x8xf32>
    %79 = arith.addf %70, %78 : vector<128x8xf32>
    %c120_i32 = arith.constant 120 : i32
    %80 = tpu.dynamic_rotate %19 by %c120_i32 dim 0 : vector<128x8xf32>, i32 -> vector<128x8xf32>
    %81 = vector.extract_strided_slice %10 {offsets = [0, 7], sizes = [128, 1], strides = [1, 1]} : vector<128x9xf32> to vector<128x1xf32>
    %82 = vector.broadcast %81 : vector<128x1xf32> to vector<128x8xf32>
    %83 = arith.mulf %80, %82 : vector<128x8xf32>
    %84 = arith.truncf %83 : vector<128x8xf32> to vector<128x8xbf16>
    %c0_52 = arith.constant 0 : index
    %c7 = arith.constant 7 : index
    %c0_53 = arith.constant 0 : index
    %c0_54 = arith.constant 0 : index
    %85 = vector.load %arg5[%c0_52, %c7, %c0_53, %c0_54] : memref<1x9x8x8xbf16, #tpu.memory_space<vmem>>, vector<1x1x8x8xbf16>
    %86 = vector.shape_cast %85 : vector<1x1x8x8xbf16> to vector<8x8xbf16>
    %cst_55 = arith.constant dense<0.000000e+00> : vector<128x8xf32>
    %87 = tpu.matmul %84, %86, %cst_55 {dimension_numbers = #tpu.dot_dimension_numbers<[1], [0], [0], [1], [0, 0, 1, 1], [], []>} : vector<128x8xbf16>, vector<8x8xbf16>, vector<128x8xf32> -> vector<128x8xf32>
    %88 = arith.addf %79, %87 : vector<128x8xf32>
    %c119_i32 = arith.constant 119 : i32
    %89 = tpu.dynamic_rotate %19 by %c119_i32 dim 0 : vector<128x8xf32>, i32 -> vector<128x8xf32>
    %90 = vector.extract_strided_slice %10 {offsets = [0, 8], sizes = [128, 1], strides = [1, 1]} : vector<128x9xf32> to vector<128x1xf32>
    %91 = vector.broadcast %90 : vector<128x1xf32> to vector<128x8xf32>
    %92 = arith.mulf %89, %91 : vector<128x8xf32>
    %93 = arith.truncf %92 : vector<128x8xf32> to vector<128x8xbf16>
    %c0_56 = arith.constant 0 : index
    %c8 = arith.constant 8 : index
    %c0_57 = arith.constant 0 : index
    %c0_58 = arith.constant 0 : index
    %94 = vector.load %arg5[%c0_56, %c8, %c0_57, %c0_58] : memref<1x9x8x8xbf16, #tpu.memory_space<vmem>>, vector<1x1x8x8xbf16>
    %95 = vector.shape_cast %94 : vector<1x1x8x8xbf16> to vector<8x8xbf16>
    %cst_59 = arith.constant dense<0.000000e+00> : vector<128x8xf32>
    %96 = tpu.matmul %93, %95, %cst_59 {dimension_numbers = #tpu.dot_dimension_numbers<[1], [0], [0], [1], [0, 0, 1, 1], [], []>} : vector<128x8xbf16>, vector<8x8xbf16>, vector<128x8xf32> -> vector<128x8xf32>
    %97 = arith.addf %88, %96 : vector<128x8xf32>
    %98 = arith.truncf %97 : vector<128x8xf32> to vector<128x8xbf16>
    %cst_60 = arith.constant dense<0.000000e+00> : vector<128x64xf32>
    %99 = tpu.matmul %98, %12, %cst_60 {dimension_numbers = #tpu.dot_dimension_numbers<[1], [0], [0], [1], [0, 0, 1, 1], [], []>} : vector<128x8xbf16>, vector<8x64xbf16>, vector<128x64xf32> -> vector<128x64xf32>
    %100 = vector.extract_strided_slice %9 {offsets = [0, 8], sizes = [128, 24], strides = [1, 1]} : vector<128x32xbf16> to vector<128x24xbf16>
    %cst_61 = arith.constant dense<0.000000e+00> : vector<128x64xf32>
    %101 = tpu.matmul %100, %14, %cst_61 {dimension_numbers = #tpu.dot_dimension_numbers<[1], [0], [0], [1], [0, 0, 1, 1], [], []>} : vector<128x24xbf16>, vector<24x64xbf16>, vector<128x64xf32> -> vector<128x64xf32>
    %102 = arith.addf %99, %101 : vector<128x64xf32>
    %103 = vector.broadcast %16 : vector<1x64xf32> to vector<128x64xf32>
    %104 = arith.addf %102, %103 : vector<128x64xf32>
    %cst_62 = arith.constant 0.000000e+00 : f32
    %105 = vector.broadcast %cst_62 : f32 to vector<128x64xf32>
    %106 = arith.maximumf %104, %105 : vector<128x64xf32>
    %107 = arith.truncf %106 : vector<128x64xf32> to vector<128x64xbf16>
    %cst_63 = arith.constant dense<0.000000e+00> : vector<128x32xf32>
    %108 = tpu.matmul %107, %18, %cst_63 {dimension_numbers = #tpu.dot_dimension_numbers<[1], [0], [0], [1], [0, 0, 1, 1], [], []>} : vector<128x64xbf16>, vector<64x32xbf16>, vector<128x32xf32> -> vector<128x32xf32>
    %109 = arith.addf %8, %108 : vector<128x32xf32>
    %110 = arith.truncf %109 : vector<128x32xf32> to vector<128x32xbf16>
    %c0_64 = arith.constant 0 : index
    %c0_65 = arith.constant 0 : index
    %c0_66 = arith.constant 0 : index
    %111 = vector.load %arg10[%c0_64, %c0_65, %c0_66] : memref<1x128x32xbf16, #tpu.memory_space<vmem>>, vector<1x128x32xbf16>
    %112 = vector.shape_cast %111 : vector<1x128x32xbf16> to vector<128x32xbf16>
    %113 = vector.shape_cast %110 : vector<128x32xbf16> to vector<1x128x32xbf16>
    tpu.vector_store %arg10[%c0_64, %c0_65, %c0_66], %113 {strides = array<i32>} : memref<1x128x32xbf16, #tpu.memory_space<vmem>>, vector<1x128x32xbf16>,
    return
  }
  func.func @transform_0(%arg0: i32) -> (i32, i32, i32) {
    %c0_i32 = arith.constant 0 : i32
    %c0_i32_0 = arith.constant 0 : i32
    %c0_i32_1 = arith.constant 0 : i32
    return %arg0, %c0_i32, %c0_i32_0 : i32, i32, i32
  }
  func.func @transform_1(%arg0: i32) -> (i32, i32, i32) {
    %c0_i32 = arith.constant 0 : i32
    %c0_i32_0 = arith.constant 0 : i32
    %c0_i32_1 = arith.constant 0 : i32
    return %arg0, %c0_i32, %c0_i32_0 : i32, i32, i32
  }
  func.func @transform_2(%arg0: i32) -> (i32, i32, i32) {
    %c0_i32 = arith.constant 0 : i32
    %c0_i32_0 = arith.constant 0 : i32
    %c0_i32_1 = arith.constant 0 : i32
    return %arg0, %c0_i32, %c0_i32_0 : i32, i32, i32
  }
  func.func @transform_3(%arg0: i32) -> (i32, i32) {
    %c0_i32 = arith.constant 0 : i32
    %c0_i32_0 = arith.constant 0 : i32
    %c0_i32_1 = arith.constant 0 : i32
    return %c0_i32, %c0_i32_0 : i32, i32
  }
  func.func @transform_4(%arg0: i32) -> (i32, i32, i32, i32) {
    %c0_i32 = arith.constant 0 : i32
    %c0_i32_0 = arith.constant 0 : i32
    %c0_i32_1 = arith.constant 0 : i32
    %c0_i32_2 = arith.constant 0 : i32
    return %arg0, %c0_i32, %c0_i32_0, %c0_i32_1 : i32, i32, i32, i32
  }
  func.func @transform_5(%arg0: i32) -> (i32, i32, i32) {
    %c0_i32 = arith.constant 0 : i32
    %c0_i32_0 = arith.constant 0 : i32
    %c0_i32_1 = arith.constant 0 : i32
    return %arg0, %c0_i32, %c0_i32_0 : i32, i32, i32
  }
  func.func @transform_6(%arg0: i32) -> (i32, i32, i32) {
    %c0_i32 = arith.constant 0 : i32
    %c0_i32_0 = arith.constant 0 : i32
    %c0_i32_1 = arith.constant 0 : i32
    return %arg0, %c0_i32, %c0_i32_0 : i32, i32, i32
  }
  func.func @transform_7(%arg0: i32) -> (i32, i32, i32) {
    %c0_i32 = arith.constant 0 : i32
    %c0_i32_0 = arith.constant 0 : i32
    %c0_i32_1 = arith.constant 0 : i32
    return %arg0, %c0_i32, %c0_i32_0 : i32, i32, i32
  }
  func.func @transform_8(%arg0: i32) -> (i32, i32, i32) {
    %c0_i32 = arith.constant 0 : i32
    %c0_i32_0 = arith.constant 0 : i32
    %c0_i32_1 = arith.constant 0 : i32
    return %arg0, %c0_i32, %c0_i32_0 : i32, i32, i32
  }
  func.func @transform_9(%arg0: i32) -> (i32, i32, i32) {
    %c0_i32 = arith.constant 0 : i32
    %c0_i32_0 = arith.constant 0 : i32
    %c0_i32_1 = arith.constant 0 : i32
    return %arg0, %c0_i32, %c0_i32_0 : i32, i32, i32
  }
}

module attributes {stable_mosaic.version = 11 : i64} {
  func.func @_conv_mlp_kernel(%arg0: i32, %arg1: memref<1x32x128xbf16, #tpu.memory_space<vmem>>, %arg2: memref<1x128x64xbf16, #tpu.memory_space<vmem>>, %arg3: memref<1x1x64xf32, #tpu.memory_space<vmem>>, %arg4: memref<32x9xf32, #tpu.memory_space<vmem>>, %arg5: memref<1x9x16x16xbf16, #tpu.memory_space<vmem>>, %arg6: memref<1x16x128xbf16, #tpu.memory_space<vmem>>, %arg7: memref<1x48x128xbf16, #tpu.memory_space<vmem>>, %arg8: memref<1x1x128xf32, #tpu.memory_space<vmem>>, %arg9: memref<1x128x64xbf16, #tpu.memory_space<vmem>>, %arg10: memref<1x32x64xbf16, #tpu.memory_space<vmem>>) attributes {dimension_semantics = [#tpu.dimension_semantics<parallel>], iteration_bounds = array<i64: 2>, scalar_prefetch = 0 : i64, scratch_operands = 0 : i64, tpu.core_type = #tpu.core_type<tc>, window_params = [{transform_indices = @transform_0, window_bounds = array<i64: 1, 32, 128>}, {transform_indices = @transform_1, window_bounds = array<i64: 1, 128, 64>}, {transform_indices = @transform_2, window_bounds = array<i64: 1, 1, 64>}, {pipeline_mode = #tpu.pipeline_mode<synchronous>, transform_indices = @transform_3, window_bounds = array<i64: 32, 9>}, {transform_indices = @transform_4, window_bounds = array<i64: 1, 9, 16, 16>}, {transform_indices = @transform_5, window_bounds = array<i64: 1, 16, 128>}, {transform_indices = @transform_6, window_bounds = array<i64: 1, 48, 128>}, {transform_indices = @transform_7, window_bounds = array<i64: 1, 1, 128>}, {transform_indices = @transform_8, window_bounds = array<i64: 1, 128, 64>}, {transform_indices = @transform_9, window_bounds = array<i64: 1, 32, 64>}]} {
    %c0 = arith.constant 0 : index
    %c0_0 = arith.constant 0 : index
    %c0_1 = arith.constant 0 : index
    %0 = vector.load %arg1[%c0, %c0_0, %c0_1] : memref<1x32x128xbf16, #tpu.memory_space<vmem>>, vector<1x32x128xbf16>
    %1 = vector.shape_cast %0 : vector<1x32x128xbf16> to vector<32x128xbf16>
    %c0_2 = arith.constant 0 : index
    %c0_3 = arith.constant 0 : index
    %c0_4 = arith.constant 0 : index
    %2 = vector.load %arg2[%c0_2, %c0_3, %c0_4] : memref<1x128x64xbf16, #tpu.memory_space<vmem>>, vector<1x128x64xbf16>
    %3 = vector.shape_cast %2 : vector<1x128x64xbf16> to vector<128x64xbf16>
    %cst = arith.constant dense<0.000000e+00> : vector<32x64xf32>
    %4 = tpu.matmul %1, %3, %cst {dimension_numbers = #tpu.dot_dimension_numbers<[1], [0], [0], [1], [0, 0, 1, 1], [], []>} : vector<32x128xbf16>, vector<128x64xbf16>, vector<32x64xf32> -> vector<32x64xf32>
    %c0_5 = arith.constant 0 : index
    %c0_6 = arith.constant 0 : index
    %c0_7 = arith.constant 0 : index
    %5 = vector.load %arg3[%c0_5, %c0_6, %c0_7] : memref<1x1x64xf32, #tpu.memory_space<vmem>>, vector<1x1x64xf32>
    %6 = vector.shape_cast %5 : vector<1x1x64xf32> to vector<1x64xf32>
    %7 = vector.broadcast %6 : vector<1x64xf32> to vector<32x64xf32>
    %8 = arith.addf %4, %7 : vector<32x64xf32>
    %9 = arith.truncf %8 : vector<32x64xf32> to vector<32x64xbf16>
    %c0_8 = arith.constant 0 : index
    %c0_9 = arith.constant 0 : index
    %10 = vector.load %arg4[%c0_8, %c0_9] : memref<32x9xf32, #tpu.memory_space<vmem>>, vector<32x9xf32>
    %c0_10 = arith.constant 0 : index
    %c0_11 = arith.constant 0 : index
    %c0_12 = arith.constant 0 : index
    %11 = vector.load %arg6[%c0_10, %c0_11, %c0_12] : memref<1x16x128xbf16, #tpu.memory_space<vmem>>, vector<1x16x128xbf16>
    %12 = vector.shape_cast %11 : vector<1x16x128xbf16> to vector<16x128xbf16>
    %c0_13 = arith.constant 0 : index
    %c0_14 = arith.constant 0 : index
    %c0_15 = arith.constant 0 : index
    %13 = vector.load %arg7[%c0_13, %c0_14, %c0_15] : memref<1x48x128xbf16, #tpu.memory_space<vmem>>, vector<1x48x128xbf16>
    %14 = vector.shape_cast %13 : vector<1x48x128xbf16> to vector<48x128xbf16>
    %c0_16 = arith.constant 0 : index
    %c0_17 = arith.constant 0 : index
    %c0_18 = arith.constant 0 : index
    %15 = vector.load %arg8[%c0_16, %c0_17, %c0_18] : memref<1x1x128xf32, #tpu.memory_space<vmem>>, vector<1x1x128xf32>
    %16 = vector.shape_cast %15 : vector<1x1x128xf32> to vector<1x128xf32>
    %c0_19 = arith.constant 0 : index
    %c0_20 = arith.constant 0 : index
    %c0_21 = arith.constant 0 : index
    %17 = vector.load %arg9[%c0_19, %c0_20, %c0_21] : memref<1x128x64xbf16, #tpu.memory_space<vmem>>, vector<1x128x64xbf16>
    %18 = vector.shape_cast %17 : vector<1x128x64xbf16> to vector<128x64xbf16>
    %19 = vector.extract_strided_slice %8 {offsets = [0, 0], sizes = [32, 16], strides = [1, 1]} : vector<32x64xf32> to vector<32x16xf32>
    %cst_22 = arith.constant 0.000000e+00 : f32
    %20 = vector.broadcast %cst_22 : f32 to vector<32x16xf32>
    %c5_i32 = arith.constant 5 : i32
    %21 = tpu.dynamic_rotate %19 by %c5_i32 dim 0 : vector<32x16xf32>, i32 -> vector<32x16xf32>
    %22 = vector.extract_strided_slice %10 {offsets = [0, 0], sizes = [32, 1], strides = [1, 1]} : vector<32x9xf32> to vector<32x1xf32>
    %23 = vector.broadcast %22 : vector<32x1xf32> to vector<32x16xf32>
    %24 = arith.mulf %21, %23 : vector<32x16xf32>
    %25 = arith.truncf %24 : vector<32x16xf32> to vector<32x16xbf16>
    %c0_23 = arith.constant 0 : index
    %c0_24 = arith.constant 0 : index
    %c0_25 = arith.constant 0 : index
    %c0_26 = arith.constant 0 : index
    %26 = vector.load %arg5[%c0_23, %c0_24, %c0_25, %c0_26] : memref<1x9x16x16xbf16, #tpu.memory_space<vmem>>, vector<1x1x16x16xbf16>
    %27 = vector.shape_cast %26 : vector<1x1x16x16xbf16> to vector<16x16xbf16>
    %cst_27 = arith.constant dense<0.000000e+00> : vector<32x16xf32>
    %28 = tpu.matmul %25, %27, %cst_27 {dimension_numbers = #tpu.dot_dimension_numbers<[1], [0], [0], [1], [0, 0, 1, 1], [], []>} : vector<32x16xbf16>, vector<16x16xbf16>, vector<32x16xf32> -> vector<32x16xf32>
    %29 = arith.addf %20, %28 : vector<32x16xf32>
    %c4_i32 = arith.constant 4 : i32
    %30 = tpu.dynamic_rotate %19 by %c4_i32 dim 0 : vector<32x16xf32>, i32 -> vector<32x16xf32>
    %31 = vector.extract_strided_slice %10 {offsets = [0, 1], sizes = [32, 1], strides = [1, 1]} : vector<32x9xf32> to vector<32x1xf32>
    %32 = vector.broadcast %31 : vector<32x1xf32> to vector<32x16xf32>
    %33 = arith.mulf %30, %32 : vector<32x16xf32>
    %34 = arith.truncf %33 : vector<32x16xf32> to vector<32x16xbf16>
    %c0_28 = arith.constant 0 : index
    %c1 = arith.constant 1 : index
    %c0_29 = arith.constant 0 : index
    %c0_30 = arith.constant 0 : index
    %35 = vector.load %arg5[%c0_28, %c1, %c0_29, %c0_30] : memref<1x9x16x16xbf16, #tpu.memory_space<vmem>>, vector<1x1x16x16xbf16>
    %36 = vector.shape_cast %35 : vector<1x1x16x16xbf16> to vector<16x16xbf16>
    %cst_31 = arith.constant dense<0.000000e+00> : vector<32x16xf32>
    %37 = tpu.matmul %34, %36, %cst_31 {dimension_numbers = #tpu.dot_dimension_numbers<[1], [0], [0], [1], [0, 0, 1, 1], [], []>} : vector<32x16xbf16>, vector<16x16xbf16>, vector<32x16xf32> -> vector<32x16xf32>
    %38 = arith.addf %29, %37 : vector<32x16xf32>
    %c3_i32 = arith.constant 3 : i32
    %39 = tpu.dynamic_rotate %19 by %c3_i32 dim 0 : vector<32x16xf32>, i32 -> vector<32x16xf32>
    %40 = vector.extract_strided_slice %10 {offsets = [0, 2], sizes = [32, 1], strides = [1, 1]} : vector<32x9xf32> to vector<32x1xf32>
    %41 = vector.broadcast %40 : vector<32x1xf32> to vector<32x16xf32>
    %42 = arith.mulf %39, %41 : vector<32x16xf32>
    %43 = arith.truncf %42 : vector<32x16xf32> to vector<32x16xbf16>
    %c0_32 = arith.constant 0 : index
    %c2 = arith.constant 2 : index
    %c0_33 = arith.constant 0 : index
    %c0_34 = arith.constant 0 : index
    %44 = vector.load %arg5[%c0_32, %c2, %c0_33, %c0_34] : memref<1x9x16x16xbf16, #tpu.memory_space<vmem>>, vector<1x1x16x16xbf16>
    %45 = vector.shape_cast %44 : vector<1x1x16x16xbf16> to vector<16x16xbf16>
    %cst_35 = arith.constant dense<0.000000e+00> : vector<32x16xf32>
    %46 = tpu.matmul %43, %45, %cst_35 {dimension_numbers = #tpu.dot_dimension_numbers<[1], [0], [0], [1], [0, 0, 1, 1], [], []>} : vector<32x16xbf16>, vector<16x16xbf16>, vector<32x16xf32> -> vector<32x16xf32>
    %47 = arith.addf %38, %46 : vector<32x16xf32>
    %c1_i32 = arith.constant 1 : i32
    %48 = tpu.dynamic_rotate %19 by %c1_i32 dim 0 : vector<32x16xf32>, i32 -> vector<32x16xf32>
    %49 = vector.extract_strided_slice %10 {offsets = [0, 3], sizes = [32, 1], strides = [1, 1]} : vector<32x9xf32> to vector<32x1xf32>
    %50 = vector.broadcast %49 : vector<32x1xf32> to vector<32x16xf32>
    %51 = arith.mulf %48, %50 : vector<32x16xf32>
    %52 = arith.truncf %51 : vector<32x16xf32> to vector<32x16xbf16>
    %c0_36 = arith.constant 0 : index
    %c3 = arith.constant 3 : index
    %c0_37 = arith.constant 0 : index
    %c0_38 = arith.constant 0 : index
    %53 = vector.load %arg5[%c0_36, %c3, %c0_37, %c0_38] : memref<1x9x16x16xbf16, #tpu.memory_space<vmem>>, vector<1x1x16x16xbf16>
    %54 = vector.shape_cast %53 : vector<1x1x16x16xbf16> to vector<16x16xbf16>
    %cst_39 = arith.constant dense<0.000000e+00> : vector<32x16xf32>
    %55 = tpu.matmul %52, %54, %cst_39 {dimension_numbers = #tpu.dot_dimension_numbers<[1], [0], [0], [1], [0, 0, 1, 1], [], []>} : vector<32x16xbf16>, vector<16x16xbf16>, vector<32x16xf32> -> vector<32x16xf32>
    %56 = arith.addf %47, %55 : vector<32x16xf32>
    %57 = arith.truncf %19 : vector<32x16xf32> to vector<32x16xbf16>
    %c0_40 = arith.constant 0 : index
    %c4 = arith.constant 4 : index
    %c0_41 = arith.constant 0 : index
    %c0_42 = arith.constant 0 : index
    %58 = vector.load %arg5[%c0_40, %c4, %c0_41, %c0_42] : memref<1x9x16x16xbf16, #tpu.memory_space<vmem>>, vector<1x1x16x16xbf16>
    %59 = vector.shape_cast %58 : vector<1x1x16x16xbf16> to vector<16x16xbf16>
    %cst_43 = arith.constant dense<0.000000e+00> : vector<32x16xf32>
    %60 = tpu.matmul %57, %59, %cst_43 {dimension_numbers = #tpu.dot_dimension_numbers<[1], [0], [0], [1], [0, 0, 1, 1], [], []>} : vector<32x16xbf16>, vector<16x16xbf16>, vector<32x16xf32> -> vector<32x16xf32>
    %61 = arith.addf %56, %60 : vector<32x16xf32>
    %c31_i32 = arith.constant 31 : i32
    %62 = tpu.dynamic_rotate %19 by %c31_i32 dim 0 : vector<32x16xf32>, i32 -> vector<32x16xf32>
    %63 = vector.extract_strided_slice %10 {offsets = [0, 5], sizes = [32, 1], strides = [1, 1]} : vector<32x9xf32> to vector<32x1xf32>
    %64 = vector.broadcast %63 : vector<32x1xf32> to vector<32x16xf32>
    %65 = arith.mulf %62, %64 : vector<32x16xf32>
    %66 = arith.truncf %65 : vector<32x16xf32> to vector<32x16xbf16>
    %c0_44 = arith.constant 0 : index
    %c5 = arith.constant 5 : index
    %c0_45 = arith.constant 0 : index
    %c0_46 = arith.constant 0 : index
    %67 = vector.load %arg5[%c0_44, %c5, %c0_45, %c0_46] : memref<1x9x16x16xbf16, #tpu.memory_space<vmem>>, vector<1x1x16x16xbf16>
    %68 = vector.shape_cast %67 : vector<1x1x16x16xbf16> to vector<16x16xbf16>
    %cst_47 = arith.constant dense<0.000000e+00> : vector<32x16xf32>
    %69 = tpu.matmul %66, %68, %cst_47 {dimension_numbers = #tpu.dot_dimension_numbers<[1], [0], [0], [1], [0, 0, 1, 1], [], []>} : vector<32x16xbf16>, vector<16x16xbf16>, vector<32x16xf32> -> vector<32x16xf32>
    %70 = arith.addf %61, %69 : vector<32x16xf32>
    %c29_i32 = arith.constant 29 : i32
    %71 = tpu.dynamic_rotate %19 by %c29_i32 dim 0 : vector<32x16xf32>, i32 -> vector<32x16xf32>
    %72 = vector.extract_strided_slice %10 {offsets = [0, 6], sizes = [32, 1], strides = [1, 1]} : vector<32x9xf32> to vector<32x1xf32>
    %73 = vector.broadcast %72 : vector<32x1xf32> to vector<32x16xf32>
    %74 = arith.mulf %71, %73 : vector<32x16xf32>
    %75 = arith.truncf %74 : vector<32x16xf32> to vector<32x16xbf16>
    %c0_48 = arith.constant 0 : index
    %c6 = arith.constant 6 : index
    %c0_49 = arith.constant 0 : index
    %c0_50 = arith.constant 0 : index
    %76 = vector.load %arg5[%c0_48, %c6, %c0_49, %c0_50] : memref<1x9x16x16xbf16, #tpu.memory_space<vmem>>, vector<1x1x16x16xbf16>
    %77 = vector.shape_cast %76 : vector<1x1x16x16xbf16> to vector<16x16xbf16>
    %cst_51 = arith.constant dense<0.000000e+00> : vector<32x16xf32>
    %78 = tpu.matmul %75, %77, %cst_51 {dimension_numbers = #tpu.dot_dimension_numbers<[1], [0], [0], [1], [0, 0, 1, 1], [], []>} : vector<32x16xbf16>, vector<16x16xbf16>, vector<32x16xf32> -> vector<32x16xf32>
    %79 = arith.addf %70, %78 : vector<32x16xf32>
    %c28_i32 = arith.constant 28 : i32
    %80 = tpu.dynamic_rotate %19 by %c28_i32 dim 0 : vector<32x16xf32>, i32 -> vector<32x16xf32>
    %81 = vector.extract_strided_slice %10 {offsets = [0, 7], sizes = [32, 1], strides = [1, 1]} : vector<32x9xf32> to vector<32x1xf32>
    %82 = vector.broadcast %81 : vector<32x1xf32> to vector<32x16xf32>
    %83 = arith.mulf %80, %82 : vector<32x16xf32>
    %84 = arith.truncf %83 : vector<32x16xf32> to vector<32x16xbf16>
    %c0_52 = arith.constant 0 : index
    %c7 = arith.constant 7 : index
    %c0_53 = arith.constant 0 : index
    %c0_54 = arith.constant 0 : index
    %85 = vector.load %arg5[%c0_52, %c7, %c0_53, %c0_54] : memref<1x9x16x16xbf16, #tpu.memory_space<vmem>>, vector<1x1x16x16xbf16>
    %86 = vector.shape_cast %85 : vector<1x1x16x16xbf16> to vector<16x16xbf16>
    %cst_55 = arith.constant dense<0.000000e+00> : vector<32x16xf32>
    %87 = tpu.matmul %84, %86, %cst_55 {dimension_numbers = #tpu.dot_dimension_numbers<[1], [0], [0], [1], [0, 0, 1, 1], [], []>} : vector<32x16xbf16>, vector<16x16xbf16>, vector<32x16xf32> -> vector<32x16xf32>
    %88 = arith.addf %79, %87 : vector<32x16xf32>
    %c27_i32 = arith.constant 27 : i32
    %89 = tpu.dynamic_rotate %19 by %c27_i32 dim 0 : vector<32x16xf32>, i32 -> vector<32x16xf32>
    %90 = vector.extract_strided_slice %10 {offsets = [0, 8], sizes = [32, 1], strides = [1, 1]} : vector<32x9xf32> to vector<32x1xf32>
    %91 = vector.broadcast %90 : vector<32x1xf32> to vector<32x16xf32>
    %92 = arith.mulf %89, %91 : vector<32x16xf32>
    %93 = arith.truncf %92 : vector<32x16xf32> to vector<32x16xbf16>
    %c0_56 = arith.constant 0 : index
    %c8 = arith.constant 8 : index
    %c0_57 = arith.constant 0 : index
    %c0_58 = arith.constant 0 : index
    %94 = vector.load %arg5[%c0_56, %c8, %c0_57, %c0_58] : memref<1x9x16x16xbf16, #tpu.memory_space<vmem>>, vector<1x1x16x16xbf16>
    %95 = vector.shape_cast %94 : vector<1x1x16x16xbf16> to vector<16x16xbf16>
    %cst_59 = arith.constant dense<0.000000e+00> : vector<32x16xf32>
    %96 = tpu.matmul %93, %95, %cst_59 {dimension_numbers = #tpu.dot_dimension_numbers<[1], [0], [0], [1], [0, 0, 1, 1], [], []>} : vector<32x16xbf16>, vector<16x16xbf16>, vector<32x16xf32> -> vector<32x16xf32>
    %97 = arith.addf %88, %96 : vector<32x16xf32>
    %98 = arith.truncf %97 : vector<32x16xf32> to vector<32x16xbf16>
    %cst_60 = arith.constant dense<0.000000e+00> : vector<32x128xf32>
    %99 = tpu.matmul %98, %12, %cst_60 {dimension_numbers = #tpu.dot_dimension_numbers<[1], [0], [0], [1], [0, 0, 1, 1], [], []>} : vector<32x16xbf16>, vector<16x128xbf16>, vector<32x128xf32> -> vector<32x128xf32>
    %100 = vector.extract_strided_slice %9 {offsets = [0, 16], sizes = [32, 48], strides = [1, 1]} : vector<32x64xbf16> to vector<32x48xbf16>
    %cst_61 = arith.constant dense<0.000000e+00> : vector<32x128xf32>
    %101 = tpu.matmul %100, %14, %cst_61 {dimension_numbers = #tpu.dot_dimension_numbers<[1], [0], [0], [1], [0, 0, 1, 1], [], []>} : vector<32x48xbf16>, vector<48x128xbf16>, vector<32x128xf32> -> vector<32x128xf32>
    %102 = arith.addf %99, %101 : vector<32x128xf32>
    %103 = vector.broadcast %16 : vector<1x128xf32> to vector<32x128xf32>
    %104 = arith.addf %102, %103 : vector<32x128xf32>
    %cst_62 = arith.constant 0.000000e+00 : f32
    %105 = vector.broadcast %cst_62 : f32 to vector<32x128xf32>
    %106 = arith.maximumf %104, %105 : vector<32x128xf32>
    %107 = arith.truncf %106 : vector<32x128xf32> to vector<32x128xbf16>
    %cst_63 = arith.constant dense<0.000000e+00> : vector<32x64xf32>
    %108 = tpu.matmul %107, %18, %cst_63 {dimension_numbers = #tpu.dot_dimension_numbers<[1], [0], [0], [1], [0, 0, 1, 1], [], []>} : vector<32x128xbf16>, vector<128x64xbf16>, vector<32x64xf32> -> vector<32x64xf32>
    %109 = arith.addf %8, %108 : vector<32x64xf32>
    %110 = arith.truncf %109 : vector<32x64xf32> to vector<32x64xbf16>
    %c0_64 = arith.constant 0 : index
    %c0_65 = arith.constant 0 : index
    %c0_66 = arith.constant 0 : index
    %111 = vector.load %arg10[%c0_64, %c0_65, %c0_66] : memref<1x32x64xbf16, #tpu.memory_space<vmem>>, vector<1x32x64xbf16>
    %112 = vector.shape_cast %111 : vector<1x32x64xbf16> to vector<32x64xbf16>
    %113 = vector.shape_cast %110 : vector<32x64xbf16> to vector<1x32x64xbf16>
    tpu.vector_store %arg10[%c0_64, %c0_65, %c0_66], %113 {strides = array<i32>} : memref<1x32x64xbf16, #tpu.memory_space<vmem>>, vector<1x32x64xbf16>,
    return
  }
  func.func @transform_0(%arg0: i32) -> (i32, i32, i32) {
    %c0_i32 = arith.constant 0 : i32
    %c0_i32_0 = arith.constant 0 : i32
    %c0_i32_1 = arith.constant 0 : i32
    return %arg0, %c0_i32, %c0_i32_0 : i32, i32, i32
  }
  func.func @transform_1(%arg0: i32) -> (i32, i32, i32) {
    %c0_i32 = arith.constant 0 : i32
    %c0_i32_0 = arith.constant 0 : i32
    %c0_i32_1 = arith.constant 0 : i32
    return %arg0, %c0_i32, %c0_i32_0 : i32, i32, i32
  }
  func.func @transform_2(%arg0: i32) -> (i32, i32, i32) {
    %c0_i32 = arith.constant 0 : i32
    %c0_i32_0 = arith.constant 0 : i32
    %c0_i32_1 = arith.constant 0 : i32
    return %arg0, %c0_i32, %c0_i32_0 : i32, i32, i32
  }
  func.func @transform_3(%arg0: i32) -> (i32, i32) {
    %c0_i32 = arith.constant 0 : i32
    %c0_i32_0 = arith.constant 0 : i32
    %c0_i32_1 = arith.constant 0 : i32
    return %c0_i32, %c0_i32_0 : i32, i32
  }
  func.func @transform_4(%arg0: i32) -> (i32, i32, i32, i32) {
    %c0_i32 = arith.constant 0 : i32
    %c0_i32_0 = arith.constant 0 : i32
    %c0_i32_1 = arith.constant 0 : i32
    %c0_i32_2 = arith.constant 0 : i32
    return %arg0, %c0_i32, %c0_i32_0, %c0_i32_1 : i32, i32, i32, i32
  }
  func.func @transform_5(%arg0: i32) -> (i32, i32, i32) {
    %c0_i32 = arith.constant 0 : i32
    %c0_i32_0 = arith.constant 0 : i32
    %c0_i32_1 = arith.constant 0 : i32
    return %arg0, %c0_i32, %c0_i32_0 : i32, i32, i32
  }
  func.func @transform_6(%arg0: i32) -> (i32, i32, i32) {
    %c0_i32 = arith.constant 0 : i32
    %c0_i32_0 = arith.constant 0 : i32
    %c0_i32_1 = arith.constant 0 : i32
    return %arg0, %c0_i32, %c0_i32_0 : i32, i32, i32
  }
  func.func @transform_7(%arg0: i32) -> (i32, i32, i32) {
    %c0_i32 = arith.constant 0 : i32
    %c0_i32_0 = arith.constant 0 : i32
    %c0_i32_1 = arith.constant 0 : i32
    return %arg0, %c0_i32, %c0_i32_0 : i32, i32, i32
  }
  func.func @transform_8(%arg0: i32) -> (i32, i32, i32) {
    %c0_i32 = arith.constant 0 : i32
    %c0_i32_0 = arith.constant 0 : i32
    %c0_i32_1 = arith.constant 0 : i32
    return %arg0, %c0_i32, %c0_i32_0 : i32, i32, i32
  }
  func.func @transform_9(%arg0: i32) -> (i32, i32, i32) {
    %c0_i32 = arith.constant 0 : i32
    %c0_i32_0 = arith.constant 0 : i32
    %c0_i32_1 = arith.constant 0 : i32
    return %arg0, %c0_i32, %c0_i32_0 : i32, i32, i32
  }
}

module attributes {stable_mosaic.version = 11 : i64} {
  func.func @_mlp_kernel(%arg0: i32, %arg1: memref<1x32x64xbf16, #tpu.memory_space<vmem>>, %arg2: memref<32x9xf32, #tpu.memory_space<vmem>>, %arg3: memref<1x9x16x16xbf16, #tpu.memory_space<vmem>>, %arg4: memref<1x16x128xbf16, #tpu.memory_space<vmem>>, %arg5: memref<1x48x128xbf16, #tpu.memory_space<vmem>>, %arg6: memref<1x1x128xf32, #tpu.memory_space<vmem>>, %arg7: memref<1x128x64xbf16, #tpu.memory_space<vmem>>, %arg8: memref<1x32x64xbf16, #tpu.memory_space<vmem>>) attributes {dimension_semantics = [#tpu.dimension_semantics<parallel>], iteration_bounds = array<i64: 2>, scalar_prefetch = 0 : i64, scratch_operands = 0 : i64, tpu.core_type = #tpu.core_type<tc>, window_params = [{transform_indices = @transform_0, window_bounds = array<i64: 1, 32, 64>}, {pipeline_mode = #tpu.pipeline_mode<synchronous>, transform_indices = @transform_1, window_bounds = array<i64: 32, 9>}, {transform_indices = @transform_2, window_bounds = array<i64: 1, 9, 16, 16>}, {transform_indices = @transform_3, window_bounds = array<i64: 1, 16, 128>}, {transform_indices = @transform_4, window_bounds = array<i64: 1, 48, 128>}, {transform_indices = @transform_5, window_bounds = array<i64: 1, 1, 128>}, {transform_indices = @transform_6, window_bounds = array<i64: 1, 128, 64>}, {transform_indices = @transform_7, window_bounds = array<i64: 1, 32, 64>}]} {
    %c0 = arith.constant 0 : index
    %c0_0 = arith.constant 0 : index
    %c0_1 = arith.constant 0 : index
    %0 = vector.load %arg1[%c0, %c0_0, %c0_1] : memref<1x32x64xbf16, #tpu.memory_space<vmem>>, vector<1x32x64xbf16>
    %1 = vector.shape_cast %0 : vector<1x32x64xbf16> to vector<32x64xbf16>
    %2 = arith.extf %1 : vector<32x64xbf16> to vector<32x64xf32>
    %c0_2 = arith.constant 0 : index
    %c0_3 = arith.constant 0 : index
    %3 = vector.load %arg2[%c0_2, %c0_3] : memref<32x9xf32, #tpu.memory_space<vmem>>, vector<32x9xf32>
    %c0_4 = arith.constant 0 : index
    %c0_5 = arith.constant 0 : index
    %c0_6 = arith.constant 0 : index
    %4 = vector.load %arg4[%c0_4, %c0_5, %c0_6] : memref<1x16x128xbf16, #tpu.memory_space<vmem>>, vector<1x16x128xbf16>
    %5 = vector.shape_cast %4 : vector<1x16x128xbf16> to vector<16x128xbf16>
    %c0_7 = arith.constant 0 : index
    %c0_8 = arith.constant 0 : index
    %c0_9 = arith.constant 0 : index
    %6 = vector.load %arg5[%c0_7, %c0_8, %c0_9] : memref<1x48x128xbf16, #tpu.memory_space<vmem>>, vector<1x48x128xbf16>
    %7 = vector.shape_cast %6 : vector<1x48x128xbf16> to vector<48x128xbf16>
    %c0_10 = arith.constant 0 : index
    %c0_11 = arith.constant 0 : index
    %c0_12 = arith.constant 0 : index
    %8 = vector.load %arg6[%c0_10, %c0_11, %c0_12] : memref<1x1x128xf32, #tpu.memory_space<vmem>>, vector<1x1x128xf32>
    %9 = vector.shape_cast %8 : vector<1x1x128xf32> to vector<1x128xf32>
    %c0_13 = arith.constant 0 : index
    %c0_14 = arith.constant 0 : index
    %c0_15 = arith.constant 0 : index
    %10 = vector.load %arg7[%c0_13, %c0_14, %c0_15] : memref<1x128x64xbf16, #tpu.memory_space<vmem>>, vector<1x128x64xbf16>
    %11 = vector.shape_cast %10 : vector<1x128x64xbf16> to vector<128x64xbf16>
    %12 = vector.extract_strided_slice %2 {offsets = [0, 0], sizes = [32, 16], strides = [1, 1]} : vector<32x64xf32> to vector<32x16xf32>
    %cst = arith.constant 0.000000e+00 : f32
    %13 = vector.broadcast %cst : f32 to vector<32x16xf32>
    %c5_i32 = arith.constant 5 : i32
    %14 = tpu.dynamic_rotate %12 by %c5_i32 dim 0 : vector<32x16xf32>, i32 -> vector<32x16xf32>
    %15 = vector.extract_strided_slice %3 {offsets = [0, 0], sizes = [32, 1], strides = [1, 1]} : vector<32x9xf32> to vector<32x1xf32>
    %16 = vector.broadcast %15 : vector<32x1xf32> to vector<32x16xf32>
    %17 = arith.mulf %14, %16 : vector<32x16xf32>
    %18 = arith.truncf %17 : vector<32x16xf32> to vector<32x16xbf16>
    %c0_16 = arith.constant 0 : index
    %c0_17 = arith.constant 0 : index
    %c0_18 = arith.constant 0 : index
    %c0_19 = arith.constant 0 : index
    %19 = vector.load %arg3[%c0_16, %c0_17, %c0_18, %c0_19] : memref<1x9x16x16xbf16, #tpu.memory_space<vmem>>, vector<1x1x16x16xbf16>
    %20 = vector.shape_cast %19 : vector<1x1x16x16xbf16> to vector<16x16xbf16>
    %cst_20 = arith.constant dense<0.000000e+00> : vector<32x16xf32>
    %21 = tpu.matmul %18, %20, %cst_20 {dimension_numbers = #tpu.dot_dimension_numbers<[1], [0], [0], [1], [0, 0, 1, 1], [], []>} : vector<32x16xbf16>, vector<16x16xbf16>, vector<32x16xf32> -> vector<32x16xf32>
    %22 = arith.addf %13, %21 : vector<32x16xf32>
    %c4_i32 = arith.constant 4 : i32
    %23 = tpu.dynamic_rotate %12 by %c4_i32 dim 0 : vector<32x16xf32>, i32 -> vector<32x16xf32>
    %24 = vector.extract_strided_slice %3 {offsets = [0, 1], sizes = [32, 1], strides = [1, 1]} : vector<32x9xf32> to vector<32x1xf32>
    %25 = vector.broadcast %24 : vector<32x1xf32> to vector<32x16xf32>
    %26 = arith.mulf %23, %25 : vector<32x16xf32>
    %27 = arith.truncf %26 : vector<32x16xf32> to vector<32x16xbf16>
    %c0_21 = arith.constant 0 : index
    %c1 = arith.constant 1 : index
    %c0_22 = arith.constant 0 : index
    %c0_23 = arith.constant 0 : index
    %28 = vector.load %arg3[%c0_21, %c1, %c0_22, %c0_23] : memref<1x9x16x16xbf16, #tpu.memory_space<vmem>>, vector<1x1x16x16xbf16>
    %29 = vector.shape_cast %28 : vector<1x1x16x16xbf16> to vector<16x16xbf16>
    %cst_24 = arith.constant dense<0.000000e+00> : vector<32x16xf32>
    %30 = tpu.matmul %27, %29, %cst_24 {dimension_numbers = #tpu.dot_dimension_numbers<[1], [0], [0], [1], [0, 0, 1, 1], [], []>} : vector<32x16xbf16>, vector<16x16xbf16>, vector<32x16xf32> -> vector<32x16xf32>
    %31 = arith.addf %22, %30 : vector<32x16xf32>
    %c3_i32 = arith.constant 3 : i32
    %32 = tpu.dynamic_rotate %12 by %c3_i32 dim 0 : vector<32x16xf32>, i32 -> vector<32x16xf32>
    %33 = vector.extract_strided_slice %3 {offsets = [0, 2], sizes = [32, 1], strides = [1, 1]} : vector<32x9xf32> to vector<32x1xf32>
    %34 = vector.broadcast %33 : vector<32x1xf32> to vector<32x16xf32>
    %35 = arith.mulf %32, %34 : vector<32x16xf32>
    %36 = arith.truncf %35 : vector<32x16xf32> to vector<32x16xbf16>
    %c0_25 = arith.constant 0 : index
    %c2 = arith.constant 2 : index
    %c0_26 = arith.constant 0 : index
    %c0_27 = arith.constant 0 : index
    %37 = vector.load %arg3[%c0_25, %c2, %c0_26, %c0_27] : memref<1x9x16x16xbf16, #tpu.memory_space<vmem>>, vector<1x1x16x16xbf16>
    %38 = vector.shape_cast %37 : vector<1x1x16x16xbf16> to vector<16x16xbf16>
    %cst_28 = arith.constant dense<0.000000e+00> : vector<32x16xf32>
    %39 = tpu.matmul %36, %38, %cst_28 {dimension_numbers = #tpu.dot_dimension_numbers<[1], [0], [0], [1], [0, 0, 1, 1], [], []>} : vector<32x16xbf16>, vector<16x16xbf16>, vector<32x16xf32> -> vector<32x16xf32>
    %40 = arith.addf %31, %39 : vector<32x16xf32>
    %c1_i32 = arith.constant 1 : i32
    %41 = tpu.dynamic_rotate %12 by %c1_i32 dim 0 : vector<32x16xf32>, i32 -> vector<32x16xf32>
    %42 = vector.extract_strided_slice %3 {offsets = [0, 3], sizes = [32, 1], strides = [1, 1]} : vector<32x9xf32> to vector<32x1xf32>
    %43 = vector.broadcast %42 : vector<32x1xf32> to vector<32x16xf32>
    %44 = arith.mulf %41, %43 : vector<32x16xf32>
    %45 = arith.truncf %44 : vector<32x16xf32> to vector<32x16xbf16>
    %c0_29 = arith.constant 0 : index
    %c3 = arith.constant 3 : index
    %c0_30 = arith.constant 0 : index
    %c0_31 = arith.constant 0 : index
    %46 = vector.load %arg3[%c0_29, %c3, %c0_30, %c0_31] : memref<1x9x16x16xbf16, #tpu.memory_space<vmem>>, vector<1x1x16x16xbf16>
    %47 = vector.shape_cast %46 : vector<1x1x16x16xbf16> to vector<16x16xbf16>
    %cst_32 = arith.constant dense<0.000000e+00> : vector<32x16xf32>
    %48 = tpu.matmul %45, %47, %cst_32 {dimension_numbers = #tpu.dot_dimension_numbers<[1], [0], [0], [1], [0, 0, 1, 1], [], []>} : vector<32x16xbf16>, vector<16x16xbf16>, vector<32x16xf32> -> vector<32x16xf32>
    %49 = arith.addf %40, %48 : vector<32x16xf32>
    %50 = arith.truncf %12 : vector<32x16xf32> to vector<32x16xbf16>
    %c0_33 = arith.constant 0 : index
    %c4 = arith.constant 4 : index
    %c0_34 = arith.constant 0 : index
    %c0_35 = arith.constant 0 : index
    %51 = vector.load %arg3[%c0_33, %c4, %c0_34, %c0_35] : memref<1x9x16x16xbf16, #tpu.memory_space<vmem>>, vector<1x1x16x16xbf16>
    %52 = vector.shape_cast %51 : vector<1x1x16x16xbf16> to vector<16x16xbf16>
    %cst_36 = arith.constant dense<0.000000e+00> : vector<32x16xf32>
    %53 = tpu.matmul %50, %52, %cst_36 {dimension_numbers = #tpu.dot_dimension_numbers<[1], [0], [0], [1], [0, 0, 1, 1], [], []>} : vector<32x16xbf16>, vector<16x16xbf16>, vector<32x16xf32> -> vector<32x16xf32>
    %54 = arith.addf %49, %53 : vector<32x16xf32>
    %c31_i32 = arith.constant 31 : i32
    %55 = tpu.dynamic_rotate %12 by %c31_i32 dim 0 : vector<32x16xf32>, i32 -> vector<32x16xf32>
    %56 = vector.extract_strided_slice %3 {offsets = [0, 5], sizes = [32, 1], strides = [1, 1]} : vector<32x9xf32> to vector<32x1xf32>
    %57 = vector.broadcast %56 : vector<32x1xf32> to vector<32x16xf32>
    %58 = arith.mulf %55, %57 : vector<32x16xf32>
    %59 = arith.truncf %58 : vector<32x16xf32> to vector<32x16xbf16>
    %c0_37 = arith.constant 0 : index
    %c5 = arith.constant 5 : index
    %c0_38 = arith.constant 0 : index
    %c0_39 = arith.constant 0 : index
    %60 = vector.load %arg3[%c0_37, %c5, %c0_38, %c0_39] : memref<1x9x16x16xbf16, #tpu.memory_space<vmem>>, vector<1x1x16x16xbf16>
    %61 = vector.shape_cast %60 : vector<1x1x16x16xbf16> to vector<16x16xbf16>
    %cst_40 = arith.constant dense<0.000000e+00> : vector<32x16xf32>
    %62 = tpu.matmul %59, %61, %cst_40 {dimension_numbers = #tpu.dot_dimension_numbers<[1], [0], [0], [1], [0, 0, 1, 1], [], []>} : vector<32x16xbf16>, vector<16x16xbf16>, vector<32x16xf32> -> vector<32x16xf32>
    %63 = arith.addf %54, %62 : vector<32x16xf32>
    %c29_i32 = arith.constant 29 : i32
    %64 = tpu.dynamic_rotate %12 by %c29_i32 dim 0 : vector<32x16xf32>, i32 -> vector<32x16xf32>
    %65 = vector.extract_strided_slice %3 {offsets = [0, 6], sizes = [32, 1], strides = [1, 1]} : vector<32x9xf32> to vector<32x1xf32>
    %66 = vector.broadcast %65 : vector<32x1xf32> to vector<32x16xf32>
    %67 = arith.mulf %64, %66 : vector<32x16xf32>
    %68 = arith.truncf %67 : vector<32x16xf32> to vector<32x16xbf16>
    %c0_41 = arith.constant 0 : index
    %c6 = arith.constant 6 : index
    %c0_42 = arith.constant 0 : index
    %c0_43 = arith.constant 0 : index
    %69 = vector.load %arg3[%c0_41, %c6, %c0_42, %c0_43] : memref<1x9x16x16xbf16, #tpu.memory_space<vmem>>, vector<1x1x16x16xbf16>
    %70 = vector.shape_cast %69 : vector<1x1x16x16xbf16> to vector<16x16xbf16>
    %cst_44 = arith.constant dense<0.000000e+00> : vector<32x16xf32>
    %71 = tpu.matmul %68, %70, %cst_44 {dimension_numbers = #tpu.dot_dimension_numbers<[1], [0], [0], [1], [0, 0, 1, 1], [], []>} : vector<32x16xbf16>, vector<16x16xbf16>, vector<32x16xf32> -> vector<32x16xf32>
    %72 = arith.addf %63, %71 : vector<32x16xf32>
    %c28_i32 = arith.constant 28 : i32
    %73 = tpu.dynamic_rotate %12 by %c28_i32 dim 0 : vector<32x16xf32>, i32 -> vector<32x16xf32>
    %74 = vector.extract_strided_slice %3 {offsets = [0, 7], sizes = [32, 1], strides = [1, 1]} : vector<32x9xf32> to vector<32x1xf32>
    %75 = vector.broadcast %74 : vector<32x1xf32> to vector<32x16xf32>
    %76 = arith.mulf %73, %75 : vector<32x16xf32>
    %77 = arith.truncf %76 : vector<32x16xf32> to vector<32x16xbf16>
    %c0_45 = arith.constant 0 : index
    %c7 = arith.constant 7 : index
    %c0_46 = arith.constant 0 : index
    %c0_47 = arith.constant 0 : index
    %78 = vector.load %arg3[%c0_45, %c7, %c0_46, %c0_47] : memref<1x9x16x16xbf16, #tpu.memory_space<vmem>>, vector<1x1x16x16xbf16>
    %79 = vector.shape_cast %78 : vector<1x1x16x16xbf16> to vector<16x16xbf16>
    %cst_48 = arith.constant dense<0.000000e+00> : vector<32x16xf32>
    %80 = tpu.matmul %77, %79, %cst_48 {dimension_numbers = #tpu.dot_dimension_numbers<[1], [0], [0], [1], [0, 0, 1, 1], [], []>} : vector<32x16xbf16>, vector<16x16xbf16>, vector<32x16xf32> -> vector<32x16xf32>
    %81 = arith.addf %72, %80 : vector<32x16xf32>
    %c27_i32 = arith.constant 27 : i32
    %82 = tpu.dynamic_rotate %12 by %c27_i32 dim 0 : vector<32x16xf32>, i32 -> vector<32x16xf32>
    %83 = vector.extract_strided_slice %3 {offsets = [0, 8], sizes = [32, 1], strides = [1, 1]} : vector<32x9xf32> to vector<32x1xf32>
    %84 = vector.broadcast %83 : vector<32x1xf32> to vector<32x16xf32>
    %85 = arith.mulf %82, %84 : vector<32x16xf32>
    %86 = arith.truncf %85 : vector<32x16xf32> to vector<32x16xbf16>
    %c0_49 = arith.constant 0 : index
    %c8 = arith.constant 8 : index
    %c0_50 = arith.constant 0 : index
    %c0_51 = arith.constant 0 : index
    %87 = vector.load %arg3[%c0_49, %c8, %c0_50, %c0_51] : memref<1x9x16x16xbf16, #tpu.memory_space<vmem>>, vector<1x1x16x16xbf16>
    %88 = vector.shape_cast %87 : vector<1x1x16x16xbf16> to vector<16x16xbf16>
    %cst_52 = arith.constant dense<0.000000e+00> : vector<32x16xf32>
    %89 = tpu.matmul %86, %88, %cst_52 {dimension_numbers = #tpu.dot_dimension_numbers<[1], [0], [0], [1], [0, 0, 1, 1], [], []>} : vector<32x16xbf16>, vector<16x16xbf16>, vector<32x16xf32> -> vector<32x16xf32>
    %90 = arith.addf %81, %89 : vector<32x16xf32>
    %91 = arith.truncf %90 : vector<32x16xf32> to vector<32x16xbf16>
    %cst_53 = arith.constant dense<0.000000e+00> : vector<32x128xf32>
    %92 = tpu.matmul %91, %5, %cst_53 {dimension_numbers = #tpu.dot_dimension_numbers<[1], [0], [0], [1], [0, 0, 1, 1], [], []>} : vector<32x16xbf16>, vector<16x128xbf16>, vector<32x128xf32> -> vector<32x128xf32>
    %93 = vector.extract_strided_slice %1 {offsets = [0, 16], sizes = [32, 48], strides = [1, 1]} : vector<32x64xbf16> to vector<32x48xbf16>
    %cst_54 = arith.constant dense<0.000000e+00> : vector<32x128xf32>
    %94 = tpu.matmul %93, %7, %cst_54 {dimension_numbers = #tpu.dot_dimension_numbers<[1], [0], [0], [1], [0, 0, 1, 1], [], []>} : vector<32x48xbf16>, vector<48x128xbf16>, vector<32x128xf32> -> vector<32x128xf32>
    %95 = arith.addf %92, %94 : vector<32x128xf32>
    %96 = vector.broadcast %9 : vector<1x128xf32> to vector<32x128xf32>
    %97 = arith.addf %95, %96 : vector<32x128xf32>
    %cst_55 = arith.constant 0.000000e+00 : f32
    %98 = vector.broadcast %cst_55 : f32 to vector<32x128xf32>
    %99 = arith.maximumf %97, %98 : vector<32x128xf32>
    %100 = arith.truncf %99 : vector<32x128xf32> to vector<32x128xbf16>
    %cst_56 = arith.constant dense<0.000000e+00> : vector<32x64xf32>
    %101 = tpu.matmul %100, %11, %cst_56 {dimension_numbers = #tpu.dot_dimension_numbers<[1], [0], [0], [1], [0, 0, 1, 1], [], []>} : vector<32x128xbf16>, vector<128x64xbf16>, vector<32x64xf32> -> vector<32x64xf32>
    %102 = arith.addf %2, %101 : vector<32x64xf32>
    %103 = arith.truncf %102 : vector<32x64xf32> to vector<32x64xbf16>
    %c0_57 = arith.constant 0 : index
    %c0_58 = arith.constant 0 : index
    %c0_59 = arith.constant 0 : index
    %104 = vector.load %arg8[%c0_57, %c0_58, %c0_59] : memref<1x32x64xbf16, #tpu.memory_space<vmem>>, vector<1x32x64xbf16>
    %105 = vector.shape_cast %104 : vector<1x32x64xbf16> to vector<32x64xbf16>
    %106 = vector.shape_cast %103 : vector<32x64xbf16> to vector<1x32x64xbf16>
    tpu.vector_store %arg8[%c0_57, %c0_58, %c0_59], %106 {strides = array<i32>} : memref<1x32x64xbf16, #tpu.memory_space<vmem>>, vector<1x32x64xbf16>,
    return
  }
  func.func @transform_0(%arg0: i32) -> (i32, i32, i32) {
    %c0_i32 = arith.constant 0 : i32
    %c0_i32_0 = arith.constant 0 : i32
    %c0_i32_1 = arith.constant 0 : i32
    return %arg0, %c0_i32, %c0_i32_0 : i32, i32, i32
  }
  func.func @transform_1(%arg0: i32) -> (i32, i32) {
    %c0_i32 = arith.constant 0 : i32
    %c0_i32_0 = arith.constant 0 : i32
    %c0_i32_1 = arith.constant 0 : i32
    return %c0_i32, %c0_i32_0 : i32, i32
  }
  func.func @transform_2(%arg0: i32) -> (i32, i32, i32, i32) {
    %c0_i32 = arith.constant 0 : i32
    %c0_i32_0 = arith.constant 0 : i32
    %c0_i32_1 = arith.constant 0 : i32
    %c0_i32_2 = arith.constant 0 : i32
    return %arg0, %c0_i32, %c0_i32_0, %c0_i32_1 : i32, i32, i32, i32
  }
  func.func @transform_3(%arg0: i32) -> (i32, i32, i32) {
    %c0_i32 = arith.constant 0 : i32
    %c0_i32_0 = arith.constant 0 : i32
    %c0_i32_1 = arith.constant 0 : i32
    return %arg0, %c0_i32, %c0_i32_0 : i32, i32, i32
  }
  func.func @transform_4(%arg0: i32) -> (i32, i32, i32) {
    %c0_i32 = arith.constant 0 : i32
    %c0_i32_0 = arith.constant 0 : i32
    %c0_i32_1 = arith.constant 0 : i32
    return %arg0, %c0_i32, %c0_i32_0 : i32, i32, i32
  }
  func.func @transform_5(%arg0: i32) -> (i32, i32, i32) {
    %c0_i32 = arith.constant 0 : i32
    %c0_i32_0 = arith.constant 0 : i32
    %c0_i32_1 = arith.constant 0 : i32
    return %arg0, %c0_i32, %c0_i32_0 : i32, i32, i32
  }
  func.func @transform_6(%arg0: i32) -> (i32, i32, i32) {
    %c0_i32 = arith.constant 0 : i32
    %c0_i32_0 = arith.constant 0 : i32
    %c0_i32_1 = arith.constant 0 : i32
    return %arg0, %c0_i32, %c0_i32_0 : i32, i32, i32
  }
  func.func @transform_7(%arg0: i32) -> (i32, i32, i32) {
    %c0_i32 = arith.constant 0 : i32
    %c0_i32_0 = arith.constant 0 : i32
    %c0_i32_1 = arith.constant 0 : i32
    return %arg0, %c0_i32, %c0_i32_0 : i32, i32, i32
  }
}

module attributes {stable_mosaic.version = 11 : i64} {
  func.func @_conv_mlp_kernel(%arg0: i32, %arg1: memref<1x8x256xbf16, #tpu.memory_space<vmem>>, %arg2: memref<1x256x128xbf16, #tpu.memory_space<vmem>>, %arg3: memref<1x1x128xf32, #tpu.memory_space<vmem>>, %arg4: memref<8x9xf32, #tpu.memory_space<vmem>>, %arg5: memref<1x9x32x32xbf16, #tpu.memory_space<vmem>>, %arg6: memref<1x32x256xbf16, #tpu.memory_space<vmem>>, %arg7: memref<1x96x256xbf16, #tpu.memory_space<vmem>>, %arg8: memref<1x1x256xf32, #tpu.memory_space<vmem>>, %arg9: memref<1x256x128xbf16, #tpu.memory_space<vmem>>, %arg10: memref<1x8x128xbf16, #tpu.memory_space<vmem>>) attributes {dimension_semantics = [#tpu.dimension_semantics<parallel>], iteration_bounds = array<i64: 2>, scalar_prefetch = 0 : i64, scratch_operands = 0 : i64, tpu.core_type = #tpu.core_type<tc>, window_params = [{transform_indices = @transform_0, window_bounds = array<i64: 1, 8, 256>}, {transform_indices = @transform_1, window_bounds = array<i64: 1, 256, 128>}, {transform_indices = @transform_2, window_bounds = array<i64: 1, 1, 128>}, {pipeline_mode = #tpu.pipeline_mode<synchronous>, transform_indices = @transform_3, window_bounds = array<i64: 8, 9>}, {transform_indices = @transform_4, window_bounds = array<i64: 1, 9, 32, 32>}, {transform_indices = @transform_5, window_bounds = array<i64: 1, 32, 256>}, {transform_indices = @transform_6, window_bounds = array<i64: 1, 96, 256>}, {transform_indices = @transform_7, window_bounds = array<i64: 1, 1, 256>}, {transform_indices = @transform_8, window_bounds = array<i64: 1, 256, 128>}, {transform_indices = @transform_9, window_bounds = array<i64: 1, 8, 128>}]} {
    %c0 = arith.constant 0 : index
    %c0_0 = arith.constant 0 : index
    %c0_1 = arith.constant 0 : index
    %0 = vector.load %arg1[%c0, %c0_0, %c0_1] : memref<1x8x256xbf16, #tpu.memory_space<vmem>>, vector<1x8x256xbf16>
    %1 = vector.shape_cast %0 : vector<1x8x256xbf16> to vector<8x256xbf16>
    %c0_2 = arith.constant 0 : index
    %c0_3 = arith.constant 0 : index
    %c0_4 = arith.constant 0 : index
    %2 = vector.load %arg2[%c0_2, %c0_3, %c0_4] : memref<1x256x128xbf16, #tpu.memory_space<vmem>>, vector<1x256x128xbf16>
    %3 = vector.shape_cast %2 : vector<1x256x128xbf16> to vector<256x128xbf16>
    %cst = arith.constant dense<0.000000e+00> : vector<8x128xf32>
    %4 = tpu.matmul %1, %3, %cst {dimension_numbers = #tpu.dot_dimension_numbers<[1], [0], [0], [1], [0, 0, 1, 1], [], []>} : vector<8x256xbf16>, vector<256x128xbf16>, vector<8x128xf32> -> vector<8x128xf32>
    %c0_5 = arith.constant 0 : index
    %c0_6 = arith.constant 0 : index
    %c0_7 = arith.constant 0 : index
    %5 = vector.load %arg3[%c0_5, %c0_6, %c0_7] : memref<1x1x128xf32, #tpu.memory_space<vmem>>, vector<1x1x128xf32>
    %6 = vector.shape_cast %5 : vector<1x1x128xf32> to vector<1x128xf32>
    %7 = vector.broadcast %6 : vector<1x128xf32> to vector<8x128xf32>
    %8 = arith.addf %4, %7 : vector<8x128xf32>
    %9 = arith.truncf %8 : vector<8x128xf32> to vector<8x128xbf16>
    %c0_8 = arith.constant 0 : index
    %c0_9 = arith.constant 0 : index
    %10 = vector.load %arg4[%c0_8, %c0_9] : memref<8x9xf32, #tpu.memory_space<vmem>>, vector<8x9xf32>
    %c0_10 = arith.constant 0 : index
    %c0_11 = arith.constant 0 : index
    %c0_12 = arith.constant 0 : index
    %11 = vector.load %arg6[%c0_10, %c0_11, %c0_12] : memref<1x32x256xbf16, #tpu.memory_space<vmem>>, vector<1x32x256xbf16>
    %12 = vector.shape_cast %11 : vector<1x32x256xbf16> to vector<32x256xbf16>
    %c0_13 = arith.constant 0 : index
    %c0_14 = arith.constant 0 : index
    %c0_15 = arith.constant 0 : index
    %13 = vector.load %arg7[%c0_13, %c0_14, %c0_15] : memref<1x96x256xbf16, #tpu.memory_space<vmem>>, vector<1x96x256xbf16>
    %14 = vector.shape_cast %13 : vector<1x96x256xbf16> to vector<96x256xbf16>
    %c0_16 = arith.constant 0 : index
    %c0_17 = arith.constant 0 : index
    %c0_18 = arith.constant 0 : index
    %15 = vector.load %arg8[%c0_16, %c0_17, %c0_18] : memref<1x1x256xf32, #tpu.memory_space<vmem>>, vector<1x1x256xf32>
    %16 = vector.shape_cast %15 : vector<1x1x256xf32> to vector<1x256xf32>
    %c0_19 = arith.constant 0 : index
    %c0_20 = arith.constant 0 : index
    %c0_21 = arith.constant 0 : index
    %17 = vector.load %arg9[%c0_19, %c0_20, %c0_21] : memref<1x256x128xbf16, #tpu.memory_space<vmem>>, vector<1x256x128xbf16>
    %18 = vector.shape_cast %17 : vector<1x256x128xbf16> to vector<256x128xbf16>
    %19 = vector.extract_strided_slice %8 {offsets = [0, 0], sizes = [8, 32], strides = [1, 1]} : vector<8x128xf32> to vector<8x32xf32>
    %cst_22 = arith.constant 0.000000e+00 : f32
    %20 = vector.broadcast %cst_22 : f32 to vector<8x32xf32>
    %c3_i32 = arith.constant 3 : i32
    %21 = tpu.dynamic_rotate %19 by %c3_i32 dim 0 : vector<8x32xf32>, i32 -> vector<8x32xf32>
    %22 = vector.extract_strided_slice %10 {offsets = [0, 0], sizes = [8, 1], strides = [1, 1]} : vector<8x9xf32> to vector<8x1xf32>
    %23 = vector.broadcast %22 : vector<8x1xf32> to vector<8x32xf32>
    %24 = arith.mulf %21, %23 : vector<8x32xf32>
    %25 = arith.truncf %24 : vector<8x32xf32> to vector<8x32xbf16>
    %c0_23 = arith.constant 0 : index
    %c0_24 = arith.constant 0 : index
    %c0_25 = arith.constant 0 : index
    %c0_26 = arith.constant 0 : index
    %26 = vector.load %arg5[%c0_23, %c0_24, %c0_25, %c0_26] : memref<1x9x32x32xbf16, #tpu.memory_space<vmem>>, vector<1x1x32x32xbf16>
    %27 = vector.shape_cast %26 : vector<1x1x32x32xbf16> to vector<32x32xbf16>
    %cst_27 = arith.constant dense<0.000000e+00> : vector<8x32xf32>
    %28 = tpu.matmul %25, %27, %cst_27 {dimension_numbers = #tpu.dot_dimension_numbers<[1], [0], [0], [1], [0, 0, 1, 1], [], []>} : vector<8x32xbf16>, vector<32x32xbf16>, vector<8x32xf32> -> vector<8x32xf32>
    %29 = arith.addf %20, %28 : vector<8x32xf32>
    %c2_i32 = arith.constant 2 : i32
    %30 = tpu.dynamic_rotate %19 by %c2_i32 dim 0 : vector<8x32xf32>, i32 -> vector<8x32xf32>
    %31 = vector.extract_strided_slice %10 {offsets = [0, 1], sizes = [8, 1], strides = [1, 1]} : vector<8x9xf32> to vector<8x1xf32>
    %32 = vector.broadcast %31 : vector<8x1xf32> to vector<8x32xf32>
    %33 = arith.mulf %30, %32 : vector<8x32xf32>
    %34 = arith.truncf %33 : vector<8x32xf32> to vector<8x32xbf16>
    %c0_28 = arith.constant 0 : index
    %c1 = arith.constant 1 : index
    %c0_29 = arith.constant 0 : index
    %c0_30 = arith.constant 0 : index
    %35 = vector.load %arg5[%c0_28, %c1, %c0_29, %c0_30] : memref<1x9x32x32xbf16, #tpu.memory_space<vmem>>, vector<1x1x32x32xbf16>
    %36 = vector.shape_cast %35 : vector<1x1x32x32xbf16> to vector<32x32xbf16>
    %cst_31 = arith.constant dense<0.000000e+00> : vector<8x32xf32>
    %37 = tpu.matmul %34, %36, %cst_31 {dimension_numbers = #tpu.dot_dimension_numbers<[1], [0], [0], [1], [0, 0, 1, 1], [], []>} : vector<8x32xbf16>, vector<32x32xbf16>, vector<8x32xf32> -> vector<8x32xf32>
    %38 = arith.addf %29, %37 : vector<8x32xf32>
    %c1_i32 = arith.constant 1 : i32
    %39 = tpu.dynamic_rotate %19 by %c1_i32 dim 0 : vector<8x32xf32>, i32 -> vector<8x32xf32>
    %40 = vector.extract_strided_slice %10 {offsets = [0, 2], sizes = [8, 1], strides = [1, 1]} : vector<8x9xf32> to vector<8x1xf32>
    %41 = vector.broadcast %40 : vector<8x1xf32> to vector<8x32xf32>
    %42 = arith.mulf %39, %41 : vector<8x32xf32>
    %43 = arith.truncf %42 : vector<8x32xf32> to vector<8x32xbf16>
    %c0_32 = arith.constant 0 : index
    %c2 = arith.constant 2 : index
    %c0_33 = arith.constant 0 : index
    %c0_34 = arith.constant 0 : index
    %44 = vector.load %arg5[%c0_32, %c2, %c0_33, %c0_34] : memref<1x9x32x32xbf16, #tpu.memory_space<vmem>>, vector<1x1x32x32xbf16>
    %45 = vector.shape_cast %44 : vector<1x1x32x32xbf16> to vector<32x32xbf16>
    %cst_35 = arith.constant dense<0.000000e+00> : vector<8x32xf32>
    %46 = tpu.matmul %43, %45, %cst_35 {dimension_numbers = #tpu.dot_dimension_numbers<[1], [0], [0], [1], [0, 0, 1, 1], [], []>} : vector<8x32xbf16>, vector<32x32xbf16>, vector<8x32xf32> -> vector<8x32xf32>
    %47 = arith.addf %38, %46 : vector<8x32xf32>
    %c1_i32_36 = arith.constant 1 : i32
    %48 = tpu.dynamic_rotate %19 by %c1_i32_36 dim 0 : vector<8x32xf32>, i32 -> vector<8x32xf32>
    %49 = vector.extract_strided_slice %10 {offsets = [0, 3], sizes = [8, 1], strides = [1, 1]} : vector<8x9xf32> to vector<8x1xf32>
    %50 = vector.broadcast %49 : vector<8x1xf32> to vector<8x32xf32>
    %51 = arith.mulf %48, %50 : vector<8x32xf32>
    %52 = arith.truncf %51 : vector<8x32xf32> to vector<8x32xbf16>
    %c0_37 = arith.constant 0 : index
    %c3 = arith.constant 3 : index
    %c0_38 = arith.constant 0 : index
    %c0_39 = arith.constant 0 : index
    %53 = vector.load %arg5[%c0_37, %c3, %c0_38, %c0_39] : memref<1x9x32x32xbf16, #tpu.memory_space<vmem>>, vector<1x1x32x32xbf16>
    %54 = vector.shape_cast %53 : vector<1x1x32x32xbf16> to vector<32x32xbf16>
    %cst_40 = arith.constant dense<0.000000e+00> : vector<8x32xf32>
    %55 = tpu.matmul %52, %54, %cst_40 {dimension_numbers = #tpu.dot_dimension_numbers<[1], [0], [0], [1], [0, 0, 1, 1], [], []>} : vector<8x32xbf16>, vector<32x32xbf16>, vector<8x32xf32> -> vector<8x32xf32>
    %56 = arith.addf %47, %55 : vector<8x32xf32>
    %57 = arith.truncf %19 : vector<8x32xf32> to vector<8x32xbf16>
    %c0_41 = arith.constant 0 : index
    %c4 = arith.constant 4 : index
    %c0_42 = arith.constant 0 : index
    %c0_43 = arith.constant 0 : index
    %58 = vector.load %arg5[%c0_41, %c4, %c0_42, %c0_43] : memref<1x9x32x32xbf16, #tpu.memory_space<vmem>>, vector<1x1x32x32xbf16>
    %59 = vector.shape_cast %58 : vector<1x1x32x32xbf16> to vector<32x32xbf16>
    %cst_44 = arith.constant dense<0.000000e+00> : vector<8x32xf32>
    %60 = tpu.matmul %57, %59, %cst_44 {dimension_numbers = #tpu.dot_dimension_numbers<[1], [0], [0], [1], [0, 0, 1, 1], [], []>} : vector<8x32xbf16>, vector<32x32xbf16>, vector<8x32xf32> -> vector<8x32xf32>
    %61 = arith.addf %56, %60 : vector<8x32xf32>
    %c7_i32 = arith.constant 7 : i32
    %62 = tpu.dynamic_rotate %19 by %c7_i32 dim 0 : vector<8x32xf32>, i32 -> vector<8x32xf32>
    %63 = vector.extract_strided_slice %10 {offsets = [0, 5], sizes = [8, 1], strides = [1, 1]} : vector<8x9xf32> to vector<8x1xf32>
    %64 = vector.broadcast %63 : vector<8x1xf32> to vector<8x32xf32>
    %65 = arith.mulf %62, %64 : vector<8x32xf32>
    %66 = arith.truncf %65 : vector<8x32xf32> to vector<8x32xbf16>
    %c0_45 = arith.constant 0 : index
    %c5 = arith.constant 5 : index
    %c0_46 = arith.constant 0 : index
    %c0_47 = arith.constant 0 : index
    %67 = vector.load %arg5[%c0_45, %c5, %c0_46, %c0_47] : memref<1x9x32x32xbf16, #tpu.memory_space<vmem>>, vector<1x1x32x32xbf16>
    %68 = vector.shape_cast %67 : vector<1x1x32x32xbf16> to vector<32x32xbf16>
    %cst_48 = arith.constant dense<0.000000e+00> : vector<8x32xf32>
    %69 = tpu.matmul %66, %68, %cst_48 {dimension_numbers = #tpu.dot_dimension_numbers<[1], [0], [0], [1], [0, 0, 1, 1], [], []>} : vector<8x32xbf16>, vector<32x32xbf16>, vector<8x32xf32> -> vector<8x32xf32>
    %70 = arith.addf %61, %69 : vector<8x32xf32>
    %c7_i32_49 = arith.constant 7 : i32
    %71 = tpu.dynamic_rotate %19 by %c7_i32_49 dim 0 : vector<8x32xf32>, i32 -> vector<8x32xf32>
    %72 = vector.extract_strided_slice %10 {offsets = [0, 6], sizes = [8, 1], strides = [1, 1]} : vector<8x9xf32> to vector<8x1xf32>
    %73 = vector.broadcast %72 : vector<8x1xf32> to vector<8x32xf32>
    %74 = arith.mulf %71, %73 : vector<8x32xf32>
    %75 = arith.truncf %74 : vector<8x32xf32> to vector<8x32xbf16>
    %c0_50 = arith.constant 0 : index
    %c6 = arith.constant 6 : index
    %c0_51 = arith.constant 0 : index
    %c0_52 = arith.constant 0 : index
    %76 = vector.load %arg5[%c0_50, %c6, %c0_51, %c0_52] : memref<1x9x32x32xbf16, #tpu.memory_space<vmem>>, vector<1x1x32x32xbf16>
    %77 = vector.shape_cast %76 : vector<1x1x32x32xbf16> to vector<32x32xbf16>
    %cst_53 = arith.constant dense<0.000000e+00> : vector<8x32xf32>
    %78 = tpu.matmul %75, %77, %cst_53 {dimension_numbers = #tpu.dot_dimension_numbers<[1], [0], [0], [1], [0, 0, 1, 1], [], []>} : vector<8x32xbf16>, vector<32x32xbf16>, vector<8x32xf32> -> vector<8x32xf32>
    %79 = arith.addf %70, %78 : vector<8x32xf32>
    %c6_i32 = arith.constant 6 : i32
    %80 = tpu.dynamic_rotate %19 by %c6_i32 dim 0 : vector<8x32xf32>, i32 -> vector<8x32xf32>
    %81 = vector.extract_strided_slice %10 {offsets = [0, 7], sizes = [8, 1], strides = [1, 1]} : vector<8x9xf32> to vector<8x1xf32>
    %82 = vector.broadcast %81 : vector<8x1xf32> to vector<8x32xf32>
    %83 = arith.mulf %80, %82 : vector<8x32xf32>
    %84 = arith.truncf %83 : vector<8x32xf32> to vector<8x32xbf16>
    %c0_54 = arith.constant 0 : index
    %c7 = arith.constant 7 : index
    %c0_55 = arith.constant 0 : index
    %c0_56 = arith.constant 0 : index
    %85 = vector.load %arg5[%c0_54, %c7, %c0_55, %c0_56] : memref<1x9x32x32xbf16, #tpu.memory_space<vmem>>, vector<1x1x32x32xbf16>
    %86 = vector.shape_cast %85 : vector<1x1x32x32xbf16> to vector<32x32xbf16>
    %cst_57 = arith.constant dense<0.000000e+00> : vector<8x32xf32>
    %87 = tpu.matmul %84, %86, %cst_57 {dimension_numbers = #tpu.dot_dimension_numbers<[1], [0], [0], [1], [0, 0, 1, 1], [], []>} : vector<8x32xbf16>, vector<32x32xbf16>, vector<8x32xf32> -> vector<8x32xf32>
    %88 = arith.addf %79, %87 : vector<8x32xf32>
    %c5_i32 = arith.constant 5 : i32
    %89 = tpu.dynamic_rotate %19 by %c5_i32 dim 0 : vector<8x32xf32>, i32 -> vector<8x32xf32>
    %90 = vector.extract_strided_slice %10 {offsets = [0, 8], sizes = [8, 1], strides = [1, 1]} : vector<8x9xf32> to vector<8x1xf32>
    %91 = vector.broadcast %90 : vector<8x1xf32> to vector<8x32xf32>
    %92 = arith.mulf %89, %91 : vector<8x32xf32>
    %93 = arith.truncf %92 : vector<8x32xf32> to vector<8x32xbf16>
    %c0_58 = arith.constant 0 : index
    %c8 = arith.constant 8 : index
    %c0_59 = arith.constant 0 : index
    %c0_60 = arith.constant 0 : index
    %94 = vector.load %arg5[%c0_58, %c8, %c0_59, %c0_60] : memref<1x9x32x32xbf16, #tpu.memory_space<vmem>>, vector<1x1x32x32xbf16>
    %95 = vector.shape_cast %94 : vector<1x1x32x32xbf16> to vector<32x32xbf16>
    %cst_61 = arith.constant dense<0.000000e+00> : vector<8x32xf32>
    %96 = tpu.matmul %93, %95, %cst_61 {dimension_numbers = #tpu.dot_dimension_numbers<[1], [0], [0], [1], [0, 0, 1, 1], [], []>} : vector<8x32xbf16>, vector<32x32xbf16>, vector<8x32xf32> -> vector<8x32xf32>
    %97 = arith.addf %88, %96 : vector<8x32xf32>
    %98 = arith.truncf %97 : vector<8x32xf32> to vector<8x32xbf16>
    %cst_62 = arith.constant dense<0.000000e+00> : vector<8x256xf32>
    %99 = tpu.matmul %98, %12, %cst_62 {dimension_numbers = #tpu.dot_dimension_numbers<[1], [0], [0], [1], [0, 0, 1, 1], [], []>} : vector<8x32xbf16>, vector<32x256xbf16>, vector<8x256xf32> -> vector<8x256xf32>
    %100 = vector.extract_strided_slice %9 {offsets = [0, 32], sizes = [8, 96], strides = [1, 1]} : vector<8x128xbf16> to vector<8x96xbf16>
    %cst_63 = arith.constant dense<0.000000e+00> : vector<8x256xf32>
    %101 = tpu.matmul %100, %14, %cst_63 {dimension_numbers = #tpu.dot_dimension_numbers<[1], [0], [0], [1], [0, 0, 1, 1], [], []>} : vector<8x96xbf16>, vector<96x256xbf16>, vector<8x256xf32> -> vector<8x256xf32>
    %102 = arith.addf %99, %101 : vector<8x256xf32>
    %103 = vector.broadcast %16 : vector<1x256xf32> to vector<8x256xf32>
    %104 = arith.addf %102, %103 : vector<8x256xf32>
    %cst_64 = arith.constant 0.000000e+00 : f32
    %105 = vector.broadcast %cst_64 : f32 to vector<8x256xf32>
    %106 = arith.maximumf %104, %105 : vector<8x256xf32>
    %107 = arith.truncf %106 : vector<8x256xf32> to vector<8x256xbf16>
    %cst_65 = arith.constant dense<0.000000e+00> : vector<8x128xf32>
    %108 = tpu.matmul %107, %18, %cst_65 {dimension_numbers = #tpu.dot_dimension_numbers<[1], [0], [0], [1], [0, 0, 1, 1], [], []>} : vector<8x256xbf16>, vector<256x128xbf16>, vector<8x128xf32> -> vector<8x128xf32>
    %109 = arith.addf %8, %108 : vector<8x128xf32>
    %110 = arith.truncf %109 : vector<8x128xf32> to vector<8x128xbf16>
    %c0_66 = arith.constant 0 : index
    %c0_67 = arith.constant 0 : index
    %c0_68 = arith.constant 0 : index
    %111 = vector.load %arg10[%c0_66, %c0_67, %c0_68] : memref<1x8x128xbf16, #tpu.memory_space<vmem>>, vector<1x8x128xbf16>
    %112 = vector.shape_cast %111 : vector<1x8x128xbf16> to vector<8x128xbf16>
    %113 = vector.shape_cast %110 : vector<8x128xbf16> to vector<1x8x128xbf16>
    tpu.vector_store %arg10[%c0_66, %c0_67, %c0_68], %113 {strides = array<i32>} : memref<1x8x128xbf16, #tpu.memory_space<vmem>>, vector<1x8x128xbf16>,
    return
  }
  func.func @transform_0(%arg0: i32) -> (i32, i32, i32) {
    %c0_i32 = arith.constant 0 : i32
    %c0_i32_0 = arith.constant 0 : i32
    %c0_i32_1 = arith.constant 0 : i32
    return %arg0, %c0_i32, %c0_i32_0 : i32, i32, i32
  }
  func.func @transform_1(%arg0: i32) -> (i32, i32, i32) {
    %c0_i32 = arith.constant 0 : i32
    %c0_i32_0 = arith.constant 0 : i32
    %c0_i32_1 = arith.constant 0 : i32
    return %arg0, %c0_i32, %c0_i32_0 : i32, i32, i32
  }
  func.func @transform_2(%arg0: i32) -> (i32, i32, i32) {
    %c0_i32 = arith.constant 0 : i32
    %c0_i32_0 = arith.constant 0 : i32
    %c0_i32_1 = arith.constant 0 : i32
    return %arg0, %c0_i32, %c0_i32_0 : i32, i32, i32
  }
  func.func @transform_3(%arg0: i32) -> (i32, i32) {
    %c0_i32 = arith.constant 0 : i32
    %c0_i32_0 = arith.constant 0 : i32
    %c0_i32_1 = arith.constant 0 : i32
    return %c0_i32, %c0_i32_0 : i32, i32
  }
  func.func @transform_4(%arg0: i32) -> (i32, i32, i32, i32) {
    %c0_i32 = arith.constant 0 : i32
    %c0_i32_0 = arith.constant 0 : i32
    %c0_i32_1 = arith.constant 0 : i32
    %c0_i32_2 = arith.constant 0 : i32
    return %arg0, %c0_i32, %c0_i32_0, %c0_i32_1 : i32, i32, i32, i32
  }
  func.func @transform_5(%arg0: i32) -> (i32, i32, i32) {
    %c0_i32 = arith.constant 0 : i32
    %c0_i32_0 = arith.constant 0 : i32
    %c0_i32_1 = arith.constant 0 : i32
    return %arg0, %c0_i32, %c0_i32_0 : i32, i32, i32
  }
  func.func @transform_6(%arg0: i32) -> (i32, i32, i32) {
    %c0_i32 = arith.constant 0 : i32
    %c0_i32_0 = arith.constant 0 : i32
    %c0_i32_1 = arith.constant 0 : i32
    return %arg0, %c0_i32, %c0_i32_0 : i32, i32, i32
  }
  func.func @transform_7(%arg0: i32) -> (i32, i32, i32) {
    %c0_i32 = arith.constant 0 : i32
    %c0_i32_0 = arith.constant 0 : i32
    %c0_i32_1 = arith.constant 0 : i32
    return %arg0, %c0_i32, %c0_i32_0 : i32, i32, i32
  }
  func.func @transform_8(%arg0: i32) -> (i32, i32, i32) {
    %c0_i32 = arith.constant 0 : i32
    %c0_i32_0 = arith.constant 0 : i32
    %c0_i32_1 = arith.constant 0 : i32
    return %arg0, %c0_i32, %c0_i32_0 : i32, i32, i32
  }
  func.func @transform_9(%arg0: i32) -> (i32, i32, i32) {
    %c0_i32 = arith.constant 0 : i32
    %c0_i32_0 = arith.constant 0 : i32
    %c0_i32_1 = arith.constant 0 : i32
    return %arg0, %c0_i32, %c0_i32_0 : i32, i32, i32
  }
}

module attributes {stable_mosaic.version = 11 : i64} {
  func.func @_conv_mlp_kernel(%arg0: i32, %arg1: memref<1x2x512xbf16, #tpu.memory_space<vmem>>, %arg2: memref<1x512x256xbf16, #tpu.memory_space<vmem>>, %arg3: memref<1x1x256xf32, #tpu.memory_space<vmem>>, %arg4: memref<2x9xf32, #tpu.memory_space<vmem>>, %arg5: memref<1x9x64x64xbf16, #tpu.memory_space<vmem>>, %arg6: memref<1x64x512xbf16, #tpu.memory_space<vmem>>, %arg7: memref<1x192x512xbf16, #tpu.memory_space<vmem>>, %arg8: memref<1x1x512xf32, #tpu.memory_space<vmem>>, %arg9: memref<1x512x256xbf16, #tpu.memory_space<vmem>>, %arg10: memref<1x2x256xbf16, #tpu.memory_space<vmem>>) attributes {dimension_semantics = [#tpu.dimension_semantics<parallel>], iteration_bounds = array<i64: 2>, scalar_prefetch = 0 : i64, scratch_operands = 0 : i64, tpu.core_type = #tpu.core_type<tc>, window_params = [{transform_indices = @transform_0, window_bounds = array<i64: 1, 2, 512>}, {transform_indices = @transform_1, window_bounds = array<i64: 1, 512, 256>}, {transform_indices = @transform_2, window_bounds = array<i64: 1, 1, 256>}, {pipeline_mode = #tpu.pipeline_mode<synchronous>, transform_indices = @transform_3, window_bounds = array<i64: 2, 9>}, {transform_indices = @transform_4, window_bounds = array<i64: 1, 9, 64, 64>}, {transform_indices = @transform_5, window_bounds = array<i64: 1, 64, 512>}, {transform_indices = @transform_6, window_bounds = array<i64: 1, 192, 512>}, {transform_indices = @transform_7, window_bounds = array<i64: 1, 1, 512>}, {transform_indices = @transform_8, window_bounds = array<i64: 1, 512, 256>}, {transform_indices = @transform_9, window_bounds = array<i64: 1, 2, 256>}]} {
    %c0 = arith.constant 0 : index
    %c0_0 = arith.constant 0 : index
    %c0_1 = arith.constant 0 : index
    %0 = vector.load %arg1[%c0, %c0_0, %c0_1] : memref<1x2x512xbf16, #tpu.memory_space<vmem>>, vector<1x2x512xbf16>
    %1 = vector.shape_cast %0 : vector<1x2x512xbf16> to vector<2x512xbf16>
    %c0_2 = arith.constant 0 : index
    %c0_3 = arith.constant 0 : index
    %c0_4 = arith.constant 0 : index
    %2 = vector.load %arg2[%c0_2, %c0_3, %c0_4] : memref<1x512x256xbf16, #tpu.memory_space<vmem>>, vector<1x512x256xbf16>
    %3 = vector.shape_cast %2 : vector<1x512x256xbf16> to vector<512x256xbf16>
    %cst = arith.constant dense<0.000000e+00> : vector<2x256xf32>
    %4 = tpu.matmul %1, %3, %cst {dimension_numbers = #tpu.dot_dimension_numbers<[1], [0], [0], [1], [0, 0, 1, 1], [], []>} : vector<2x512xbf16>, vector<512x256xbf16>, vector<2x256xf32> -> vector<2x256xf32>
    %c0_5 = arith.constant 0 : index
    %c0_6 = arith.constant 0 : index
    %c0_7 = arith.constant 0 : index
    %5 = vector.load %arg3[%c0_5, %c0_6, %c0_7] : memref<1x1x256xf32, #tpu.memory_space<vmem>>, vector<1x1x256xf32>
    %6 = vector.shape_cast %5 : vector<1x1x256xf32> to vector<1x256xf32>
    %7 = vector.broadcast %6 : vector<1x256xf32> to vector<2x256xf32>
    %8 = arith.addf %4, %7 : vector<2x256xf32>
    %9 = arith.truncf %8 : vector<2x256xf32> to vector<2x256xbf16>
    %c0_8 = arith.constant 0 : index
    %c0_9 = arith.constant 0 : index
    %c0_10 = arith.constant 0 : index
    %10 = vector.load %arg6[%c0_8, %c0_9, %c0_10] : memref<1x64x512xbf16, #tpu.memory_space<vmem>>, vector<1x64x512xbf16>
    %11 = vector.shape_cast %10 : vector<1x64x512xbf16> to vector<64x512xbf16>
    %c0_11 = arith.constant 0 : index
    %c0_12 = arith.constant 0 : index
    %c0_13 = arith.constant 0 : index
    %12 = vector.load %arg7[%c0_11, %c0_12, %c0_13] : memref<1x192x512xbf16, #tpu.memory_space<vmem>>, vector<1x192x512xbf16>
    %13 = vector.shape_cast %12 : vector<1x192x512xbf16> to vector<192x512xbf16>
    %c0_14 = arith.constant 0 : index
    %c0_15 = arith.constant 0 : index
    %c0_16 = arith.constant 0 : index
    %14 = vector.load %arg8[%c0_14, %c0_15, %c0_16] : memref<1x1x512xf32, #tpu.memory_space<vmem>>, vector<1x1x512xf32>
    %15 = vector.shape_cast %14 : vector<1x1x512xf32> to vector<1x512xf32>
    %c0_17 = arith.constant 0 : index
    %c0_18 = arith.constant 0 : index
    %c0_19 = arith.constant 0 : index
    %16 = vector.load %arg9[%c0_17, %c0_18, %c0_19] : memref<1x512x256xbf16, #tpu.memory_space<vmem>>, vector<1x512x256xbf16>
    %17 = vector.shape_cast %16 : vector<1x512x256xbf16> to vector<512x256xbf16>
    %18 = vector.extract_strided_slice %8 {offsets = [0, 0], sizes = [2, 64], strides = [1, 1]} : vector<2x256xf32> to vector<2x64xf32>
    %cst_20 = arith.constant 0.000000e+00 : f32
    %19 = vector.broadcast %cst_20 : f32 to vector<2x64xf32>
    %20 = arith.truncf %18 : vector<2x64xf32> to vector<2x64xbf16>
    %c0_21 = arith.constant 0 : index
    %c4 = arith.constant 4 : index
    %c0_22 = arith.constant 0 : index
    %c0_23 = arith.constant 0 : index
    %21 = vector.load %arg5[%c0_21, %c4, %c0_22, %c0_23] : memref<1x9x64x64xbf16, #tpu.memory_space<vmem>>, vector<1x1x64x64xbf16>
    %22 = vector.shape_cast %21 : vector<1x1x64x64xbf16> to vector<64x64xbf16>
    %cst_24 = arith.constant dense<0.000000e+00> : vector<2x64xf32>
    %23 = tpu.matmul %20, %22, %cst_24 {dimension_numbers = #tpu.dot_dimension_numbers<[1], [0], [0], [1], [0, 0, 1, 1], [], []>} : vector<2x64xbf16>, vector<64x64xbf16>, vector<2x64xf32> -> vector<2x64xf32>
    %24 = arith.addf %19, %23 : vector<2x64xf32>
    %25 = arith.truncf %24 : vector<2x64xf32> to vector<2x64xbf16>
    %cst_25 = arith.constant dense<0.000000e+00> : vector<2x512xf32>
    %26 = tpu.matmul %25, %11, %cst_25 {dimension_numbers = #tpu.dot_dimension_numbers<[1], [0], [0], [1], [0, 0, 1, 1], [], []>} : vector<2x64xbf16>, vector<64x512xbf16>, vector<2x512xf32> -> vector<2x512xf32>
    %27 = vector.extract_strided_slice %9 {offsets = [0, 64], sizes = [2, 192], strides = [1, 1]} : vector<2x256xbf16> to vector<2x192xbf16>
    %cst_26 = arith.constant dense<0.000000e+00> : vector<2x512xf32>
    %28 = tpu.matmul %27, %13, %cst_26 {dimension_numbers = #tpu.dot_dimension_numbers<[1], [0], [0], [1], [0, 0, 1, 1], [], []>} : vector<2x192xbf16>, vector<192x512xbf16>, vector<2x512xf32> -> vector<2x512xf32>
    %29 = arith.addf %26, %28 : vector<2x512xf32>
    %30 = vector.broadcast %15 : vector<1x512xf32> to vector<2x512xf32>
    %31 = arith.addf %29, %30 : vector<2x512xf32>
    %cst_27 = arith.constant 0.000000e+00 : f32
    %32 = vector.broadcast %cst_27 : f32 to vector<2x512xf32>
    %33 = arith.maximumf %31, %32 : vector<2x512xf32>
    %34 = arith.truncf %33 : vector<2x512xf32> to vector<2x512xbf16>
    %cst_28 = arith.constant dense<0.000000e+00> : vector<2x256xf32>
    %35 = tpu.matmul %34, %17, %cst_28 {dimension_numbers = #tpu.dot_dimension_numbers<[1], [0], [0], [1], [0, 0, 1, 1], [], []>} : vector<2x512xbf16>, vector<512x256xbf16>, vector<2x256xf32> -> vector<2x256xf32>
    %36 = arith.addf %8, %35 : vector<2x256xf32>
    %37 = arith.truncf %36 : vector<2x256xf32> to vector<2x256xbf16>
    %c0_29 = arith.constant 0 : index
    %c0_30 = arith.constant 0 : index
    %c0_31 = arith.constant 0 : index
    %38 = vector.load %arg10[%c0_29, %c0_30, %c0_31] : memref<1x2x256xbf16, #tpu.memory_space<vmem>>, vector<1x2x256xbf16>
    %39 = vector.shape_cast %38 : vector<1x2x256xbf16> to vector<2x256xbf16>
    %40 = vector.shape_cast %37 : vector<2x256xbf16> to vector<1x2x256xbf16>
    tpu.vector_store %arg10[%c0_29, %c0_30, %c0_31], %40 {strides = array<i32>} : memref<1x2x256xbf16, #tpu.memory_space<vmem>>, vector<1x2x256xbf16>,
    return
  }
  func.func @transform_0(%arg0: i32) -> (i32, i32, i32) {
    %c0_i32 = arith.constant 0 : i32
    %c0_i32_0 = arith.constant 0 : i32
    %c0_i32_1 = arith.constant 0 : i32
    return %arg0, %c0_i32, %c0_i32_0 : i32, i32, i32
  }
  func.func @transform_1(%arg0: i32) -> (i32, i32, i32) {
    %c0_i32 = arith.constant 0 : i32
    %c0_i32_0 = arith.constant 0 : i32
    %c0_i32_1 = arith.constant 0 : i32
    return %arg0, %c0_i32, %c0_i32_0 : i32, i32, i32
  }
  func.func @transform_2(%arg0: i32) -> (i32, i32, i32) {
    %c0_i32 = arith.constant 0 : i32
    %c0_i32_0 = arith.constant 0 : i32
    %c0_i32_1 = arith.constant 0 : i32
    return %arg0, %c0_i32, %c0_i32_0 : i32, i32, i32
  }
  func.func @transform_3(%arg0: i32) -> (i32, i32) {
    %c0_i32 = arith.constant 0 : i32
    %c0_i32_0 = arith.constant 0 : i32
    %c0_i32_1 = arith.constant 0 : i32
    return %c0_i32, %c0_i32_0 : i32, i32
  }
  func.func @transform_4(%arg0: i32) -> (i32, i32, i32, i32) {
    %c0_i32 = arith.constant 0 : i32
    %c0_i32_0 = arith.constant 0 : i32
    %c0_i32_1 = arith.constant 0 : i32
    %c0_i32_2 = arith.constant 0 : i32
    return %arg0, %c0_i32, %c0_i32_0, %c0_i32_1 : i32, i32, i32, i32
  }
  func.func @transform_5(%arg0: i32) -> (i32, i32, i32) {
    %c0_i32 = arith.constant 0 : i32
    %c0_i32_0 = arith.constant 0 : i32
    %c0_i32_1 = arith.constant 0 : i32
    return %arg0, %c0_i32, %c0_i32_0 : i32, i32, i32
  }
  func.func @transform_6(%arg0: i32) -> (i32, i32, i32) {
    %c0_i32 = arith.constant 0 : i32
    %c0_i32_0 = arith.constant 0 : i32
    %c0_i32_1 = arith.constant 0 : i32
    return %arg0, %c0_i32, %c0_i32_0 : i32, i32, i32
  }
  func.func @transform_7(%arg0: i32) -> (i32, i32, i32) {
    %c0_i32 = arith.constant 0 : i32
    %c0_i32_0 = arith.constant 0 : i32
    %c0_i32_1 = arith.constant 0 : i32
    return %arg0, %c0_i32, %c0_i32_0 : i32, i32, i32
  }
  func.func @transform_8(%arg0: i32) -> (i32, i32, i32) {
    %c0_i32 = arith.constant 0 : i32
    %c0_i32_0 = arith.constant 0 : i32
    %c0_i32_1 = arith.constant 0 : i32
    return %arg0, %c0_i32, %c0_i32_0 : i32, i32, i32
  }
  func.func @transform_9(%arg0: i32) -> (i32, i32, i32) {
    %c0_i32 = arith.constant 0 : i32
    %c0_i32_0 = arith.constant 0 : i32
    %c0_i32_1 = arith.constant 0 : i32
    return %arg0, %c0_i32, %c0_i32_0 : i32, i32, i32
  }
}

</mosaic_0001>

<llo_original>
// kernel: generate_feats_forward.5
$region0: #{generate_feats_forward.5}
  #allocation0 [shape = 'u32[]', space=smem, size = 0x4, offset = 0x4, fixed_abs, tag = 'smem constant byte address 0x4 - core index']
  #allocation1 [shape = 'u32[144,128]{1,0:T(1,128)}', space=vmem, size = 0x12000, scoped, tag = 'internal scratch']
  %s0 = inlined_call_operand.vmem [shape: bf16[2,128,48], index: 0, kind: input, shape index: {}]
  %s1 = inlined_call_operand.vmem [shape: bf16[2,48,32], index: 1, kind: input, shape index: {}]
  %s2 = inlined_call_operand.vmem [shape: f32[2,1,32], index: 2, kind: input, shape index: {}]
  %s3 = inlined_call_operand.vmem [shape: f32[128,9], index: 3, kind: input, shape index: {}]
  %s4 = inlined_call_operand.vmem [shape: bf16[2,9,8,8], index: 4, kind: input, shape index: {}]
  %s5 = inlined_call_operand.vmem [shape: bf16[2,8,64], index: 5, kind: input, shape index: {}]
  %s6 = inlined_call_operand.vmem [shape: bf16[2,24,64], index: 6, kind: input, shape index: {}]
  %s7 = inlined_call_operand.vmem [shape: f32[2,1,64], index: 7, kind: input, shape index: {}]
  %s8 = inlined_call_operand.vmem [shape: bf16[2,64,32], index: 8, kind: input, shape index: {}]
  %s9 = inlined_call_operand.vmem [shape: bf16[2,128,32], index: 9, kind: output, shape index: {}]
  %s10 = sld [smem:[#allocation0]]
  $region69: #{generate_feats_forward.5} parent=0
    _
  %s12 = ssub.s32 1, %s10
  %s13 = scalar_select 0, %s12, %s10
  loop: start=0, step=1, limit=4
  $region2: #{generate_feats_forward.5} parent=0 // loop_pre_header
    _
  $region3: #{generate_feats_forward.5} parent=0 // loop_header
    %s15 = sphi 0, %s19
    %p16 = scmp.ge.s32.totalorder %s15, 4
    %s25 = sphi 0, %s27
    %s28 = sphi 0, %s25
    %s29 = sphi 0, %s28
    %s45 = sphi 0, %s29
    %s51 = sphi 0, %s53
    %s54 = sphi 0, %s51
    %s55 = sphi 0, %s54
    %s71 = sphi 0, %s55
    %s77 = sphi 0, %s79
    %s80 = sphi 0, %s77
    %s81 = sphi 0, %s80
    %s97 = sphi 0, %s81
    %s101 = sphi 0, %s101
    %s103 = sphi 0, %s101
    %s104 = sphi 0, %s103
    %s118 = sphi 0, %s104
    %s124 = sphi 0, %s126
    %s127 = sphi 0, %s124
    %s128 = sphi 0, %s127
    %s144 = sphi 0, %s128
    %s150 = sphi 0, %s152
    %s153 = sphi 0, %s150
    %s154 = sphi 0, %s153
    %s170 = sphi 0, %s154
    %s176 = sphi 0, %s178
    %s179 = sphi 0, %s176
    %s180 = sphi 0, %s179
    %s196 = sphi 0, %s180
    %s202 = sphi 0, %s204
    %s205 = sphi 0, %s202
    %s206 = sphi 0, %s205
    %s222 = sphi 0, %s206
    %s228 = sphi 0, %s230
    %s231 = sphi 0, %s228
    %s232 = sphi 0, %s231
    %s248 = sphi 0, %s232
    %s254 = sphi 0, %s256
    %s257 = sphi 0, %s254
    %s258 = sphi 0, %s257
    %s274 = sphi 0, %s258
  $region4: #{generate_feats_forward.5} parent=0 // loop_header_branch
    %18 = sbr.rel (%p16) target = $region8
  $region5: #{generate_feats_forward.5} parent=0 // loop_body
    %s20 = ssub.s32 %s15, 1
    %s21 = ssub.s32 %s15, 2
    %s22 = sadd.s32 %s15, 1
    %s23 = ssub.s32 %s15, %s22
    %p24 = scmp.eq.s32.totalorder %s23, 0
    %s26 = sadd.s32 %s25, 1
    %s27 = scalar_select %p24, %s25, %s26
    %p30 = pneg %p24
    %p31 = scmp.eq.s32.totalorder %s15, 1
    %p32 = por %p30, %p31
    %p33 = scmp.ne.s32.totalorder %s25, %s28
    %p34 = scmp.eq.s32.totalorder %s15, 0
    %p35 = por %p33, %p34
    %p36 = scmp.ne.s32.totalorder %s25, %s28
    %p37 = scmp.eq.s32.totalorder %s20, 1
    %p38 = por %p36, %p37
    %p39 = scmp.ne.s32.totalorder %s28, %s29
    %p40 = scmp.eq.s32.totalorder %s20, 0
    %p41 = por %p39, %p40
    %p42 = scmp.ne.s32.totalorder %s28, %s29
    %p43 = scmp.eq.s32.totalorder %s21, 1
    %p44 = por %p42, %p43
    %p46 = scmp.ne.s32.totalorder %s29, %s45
    %p47 = scmp.eq.s32.totalorder %s21, 0
    %p48 = por %p46, %p47
    %s49 = ssub.s32 %s15, %s22
    %p50 = scmp.eq.s32.totalorder %s49, 0
    %s52 = sadd.s32 %s51, 1
    %s53 = scalar_select %p50, %s51, %s52
    %p56 = pneg %p50
    %p57 = scmp.eq.s32.totalorder %s15, 1
    %p58 = por %p56, %p57
    %p59 = scmp.ne.s32.totalorder %s51, %s54
    %p60 = scmp.eq.s32.totalorder %s15, 0
    %p61 = por %p59, %p60
    %p62 = scmp.ne.s32.totalorder %s51, %s54
    %p63 = scmp.eq.s32.totalorder %s20, 1
    %p64 = por %p62, %p63
    %p65 = scmp.ne.s32.totalorder %s54, %s55
    %p66 = scmp.eq.s32.totalorder %s20, 0
    %p67 = por %p65, %p66
    %p68 = scmp.ne.s32.totalorder %s54, %s55
    %p69 = scmp.eq.s32.totalorder %s21, 1
    %p70 = por %p68, %p69
    %p72 = scmp.ne.s32.totalorder %s55, %s71
    %p73 = scmp.eq.s32.totalorder %s21, 0
    %p74 = por %p72, %p73
    %s75 = ssub.s32 %s15, %s22
    %p76 = scmp.eq.s32.totalorder %s75, 0
    %s78 = sadd.s32 %s77, 1
    %s79 = scalar_select %p76, %s77, %s78
    %p82 = pneg %p76
    %p83 = scmp.eq.s32.totalorder %s15, 1
    %p84 = por %p82, %p83
    %p85 = scmp.ne.s32.totalorder %s77, %s80
    %p86 = scmp.eq.s32.totalorder %s15, 0
    %p87 = por %p85, %p86
    %p88 = scmp.ne.s32.totalorder %s77, %s80
    %p89 = scmp.eq.s32.totalorder %s20, 1
    %p90 = por %p88, %p89
    %p91 = scmp.ne.s32.totalorder %s80, %s81
    %p92 = scmp.eq.s32.totalorder %s20, 0
    %p93 = por %p91, %p92
    %p94 = scmp.ne.s32.totalorder %s80, %s81
    %p95 = scmp.eq.s32.totalorder %s21, 1
    %p96 = por %p94, %p95
    %p98 = scmp.ne.s32.totalorder %s81, %s97
    %p99 = scmp.eq.s32.totalorder %s21, 0
    %p100 = por %p98, %p99
    %s102 = sadd.s32 %s101, 1
    %p105 = scmp.eq.s32.totalorder %s15, 1
    %p106 = scmp.ne.s32.totalorder %s101, %s103
    %p107 = scmp.eq.s32.totalorder %s15, 0
    %p108 = por %p106, %p107
    %p109 = scmp.ne.s32.totalorder %s101, %s103
    %p110 = scmp.eq.s32.totalorder %s20, 1
    %p111 = por %p109, %p110
    %p112 = scmp.ne.s32.totalorder %s103, %s104
    %p113 = scmp.eq.s32.totalorder %s20, 0
    %p114 = por %p112, %p113
    %p115 = scmp.ne.s32.totalorder %s103, %s104
    %p116 = scmp.eq.s32.totalorder %s21, 1
    %p117 = por %p115, %p116
    %p119 = scmp.ne.s32.totalorder %s104, %s118
    %p120 = scmp.eq.s32.totalorder %s21, 0
    %p121 = por %p119, %p120
    %s122 = ssub.s32 %s15, %s22
    %p123 = scmp.eq.s32.totalorder %s122, 0
    %s125 = sadd.s32 %s124, 1
    %s126 = scalar_select %p123, %s124, %s125
    %p129 = pneg %p123
    %p130 = scmp.eq.s32.totalorder %s15, 1
    %p131 = por %p129, %p130
    %p132 = scmp.ne.s32.totalorder %s124, %s127
    %p133 = scmp.eq.s32.totalorder %s15, 0
    %p134 = por %p132, %p133
    %p135 = scmp.ne.s32.totalorder %s124, %s127
    %p136 = scmp.eq.s32.totalorder %s20, 1
    %p137 = por %p135, %p136
    %p138 = scmp.ne.s32.totalorder %s127, %s128
    %p139 = scmp.eq.s32.totalorder %s20, 0
    %p140 = por %p138, %p139
    %p141 = scmp.ne.s32.totalorder %s127, %s128
    %p142 = scmp.eq.s32.totalorder %s21, 1
    %p143 = por %p141, %p142
    %p145 = scmp.ne.s32.totalorder %s128, %s144
    %p146 = scmp.eq.s32.totalorder %s21, 0
    %p147 = por %p145, %p146
    %s148 = ssub.s32 %s15, %s22
    %p149 = scmp.eq.s32.totalorder %s148, 0
    %s151 = sadd.s32 %s150, 1
    %s152 = scalar_select %p149, %s150, %s151
    %p155 = pneg %p149
    %p156 = scmp.eq.s32.totalorder %s15, 1
    %p157 = por %p155, %p156
    %p158 = scmp.ne.s32.totalorder %s150, %s153
    %p159 = scmp.eq.s32.totalorder %s15, 0
    %p160 = por %p158, %p159
    %p161 = scmp.ne.s32.totalorder %s150, %s153
    %p162 = scmp.eq.s32.totalorder %s20, 1
    %p163 = por %p161, %p162
    %p164 = scmp.ne.s32.totalorder %s153, %s154
    %p165 = scmp.eq.s32.totalorder %s20, 0
    %p166 = por %p164, %p165
    %p167 = scmp.ne.s32.totalorder %s153, %s154
    %p168 = scmp.eq.s32.totalorder %s21, 1
    %p169 = por %p167, %p168
    %p171 = scmp.ne.s32.totalorder %s154, %s170
    %p172 = scmp.eq.s32.totalorder %s21, 0
    %p173 = por %p171, %p172
    %s174 = ssub.s32 %s15, %s22
    %p175 = scmp.eq.s32.totalorder %s174, 0
    %s177 = sadd.s32 %s176, 1
    %s178 = scalar_select %p175, %s176, %s177
    %p181 = pneg %p175
    %p182 = scmp.eq.s32.totalorder %s15, 1
    %p183 = por %p181, %p182
    %p184 = scmp.ne.s32.totalorder %s176, %s179
    %p185 = scmp.eq.s32.totalorder %s15, 0
    %p186 = por %p184, %p185
    %p187 = scmp.ne.s32.totalorder %s176, %s179
    %p188 = scmp.eq.s32.totalorder %s20, 1
    %p189 = por %p187, %p188
    %p190 = scmp.ne.s32.totalorder %s179, %s180
    %p191 = scmp.eq.s32.totalorder %s20, 0
    %p192 = por %p190, %p191
    %p193 = scmp.ne.s32.totalorder %s179, %s180
    %p194 = scmp.eq.s32.totalorder %s21, 1
    %p195 = por %p193, %p194
    %p197 = scmp.ne.s32.totalorder %s180, %s196
    %p198 = scmp.eq.s32.totalorder %s21, 0
    %p199 = por %p197, %p198
    %s200 = ssub.s32 %s15, %s22
    %p201 = scmp.eq.s32.totalorder %s200, 0
    %s203 = sadd.s32 %s202, 1
    %s204 = scalar_select %p201, %s202, %s203
    %p207 = pneg %p201
    %p208 = scmp.eq.s32.totalorder %s15, 1
    %p209 = por %p207, %p208
    %p210 = scmp.ne.s32.totalorder %s202, %s205
    %p211 = scmp.eq.s32.totalorder %s15, 0
    %p212 = por %p210, %p211
    %p213 = scmp.ne.s32.totalorder %s202, %s205
    %p214 = scmp.eq.s32.totalorder %s20, 1
    %p215 = por %p213, %p214
    %p216 = scmp.ne.s32.totalorder %s205, %s206
    %p217 = scmp.eq.s32.totalorder %s20, 0
    %p218 = por %p216, %p217
    %p219 = scmp.ne.s32.totalorder %s205, %s206
    %p220 = scmp.eq.s32.totalorder %s21, 1
    %p221 = por %p219, %p220
    %p223 = scmp.ne.s32.totalorder %s206, %s222
    %p224 = scmp.eq.s32.totalorder %s21, 0
    %p225 = por %p223, %p224
    %s226 = ssub.s32 %s15, %s22
    %p227 = scmp.eq.s32.totalorder %s226, 0
    %s229 = sadd.s32 %s228, 1
    %s230 = scalar_select %p227, %s228, %s229
    %p233 = pneg %p227
    %p234 = scmp.eq.s32.totalorder %s15, 1
    %p235 = por %p233, %p234
    %p236 = scmp.ne.s32.totalorder %s228, %s231
    %p237 = scmp.eq.s32.totalorder %s15, 0
    %p238 = por %p236, %p237
    %p239 = scmp.ne.s32.totalorder %s228, %s231
    %p240 = scmp.eq.s32.totalorder %s20, 1
    %p241 = por %p239, %p240
    %p242 = scmp.ne.s32.totalorder %s231, %s232
    %p243 = scmp.eq.s32.totalorder %s20, 0
    %p244 = por %p242, %p243
    %p245 = scmp.ne.s32.totalorder %s231, %s232
    %p246 = scmp.eq.s32.totalorder %s21, 1
    %p247 = por %p245, %p246
    %p249 = scmp.ne.s32.totalorder %s232, %s248
    %p250 = scmp.eq.s32.totalorder %s21, 0
    %p251 = por %p249, %p250
    %s252 = ssub.s32 %s15, %s22
    %p253 = scmp.eq.s32.totalorder %s252, 0
    %s255 = sadd.s32 %s254, 1
    %s256 = scalar_select %p253, %s254, %s255
    %p259 = pneg %p253
    %p260 = scmp.eq.s32.totalorder %s15, 1
    %p261 = por %p259, %p260
    %p262 = scmp.ne.s32.totalorder %s254, %s257
    %p263 = scmp.eq.s32.totalorder %s15, 0
    %p264 = por %p262, %p263
    %p265 = scmp.ne.s32.totalorder %s254, %s257
    %p266 = scmp.eq.s32.totalorder %s20, 1
    %p267 = por %p265, %p266
    %p268 = scmp.ne.s32.totalorder %s257, %s258
    %p269 = scmp.eq.s32.totalorder %s20, 0
    %p270 = por %p268, %p269
    %p271 = scmp.ne.s32.totalorder %s257, %s258
    %p272 = scmp.eq.s32.totalorder %s21, 1
    %p273 = por %p271, %p272
    %p275 = scmp.ne.s32.totalorder %s258, %s274
    %p276 = scmp.eq.s32.totalorder %s21, 0
    %p277 = por %p275, %p276
    %p278 = scmp.le.s32.totalorder 1, %s15
    %p279 = scmp.lt.s32.totalorder %s15, 3
    %p280 = pnand %p278, %p279
    %p281 = pneg %p280
    // Predicated region
    $region9: #{generate_feats_forward.5} parent=5 // pred_check
      _
    $region10: #{generate_feats_forward.5} parent=5 // pred_check_branch
      %283 = sbr.rel (%p280) target = $region12
    $region11: #{generate_feats_forward.5} parent=5 // pred_region
      %s284 = ssub.s32 %s15, 1
      // Predicated region
      $region13: #{generate_feats_forward.5} parent=11 // pred_check
        %p285 = pneg %p114
      $region14: #{generate_feats_forward.5} parent=11 // pred_check_branch
        %287 = sbr.rel (%p285) target = $region16
      $region15: #{generate_feats_forward.5} parent=11 // pred_region
        _
      $region16: #{generate_feats_forward.5} parent=11 // pred_fallthru
        _
    $region12: #{generate_feats_forward.5} parent=5 // pred_fallthru
      _
    %p288 = scmp.lt.s32.totalorder %s15, 2
    // Predicated region
    $region17: #{generate_feats_forward.5} parent=5 // pred_check
      %p289 = pneg %p288
    $region18: #{generate_feats_forward.5} parent=5 // pred_check_branch
      %291 = sbr.rel (%p289) target = $region20
    $region19: #{generate_feats_forward.5} parent=5 // pred_region
      // Predicated region
      $region21: #{generate_feats_forward.5} parent=19 // pred_check
        %p292 = pneg %p35
      $region22: #{generate_feats_forward.5} parent=19 // pred_check_branch
        %294 = sbr.rel (%p292) target = $region24
      $region23: #{generate_feats_forward.5} parent=19 // pred_region
        %p295 = scmp.lt.s32.totalorder %s15, 1
        %s296 = scalar_select %p295, %s15, 1
        %s297 = smul.addr %s296, 16
        %s298 = smul.addr %s297, 4
        %s299 = scalar_lea.vmem %s0, %s298
      $region24: #{generate_feats_forward.5} parent=19 // pred_fallthru
        _
      // Predicated region
      $region25: #{generate_feats_forward.5} parent=19 // pred_check
        %p300 = pneg %p61
      $region26: #{generate_feats_forward.5} parent=19 // pred_check_branch
        %302 = sbr.rel (%p300) target = $region28
      $region27: #{generate_feats_forward.5} parent=19 // pred_region
        %p303 = scmp.lt.s32.totalorder %s15, 1
        %s304 = scalar_select %p303, %s15, 1
        %s305 = smul.addr %s304, 6
        %s306 = smul.addr %s305, 4
        %s307 = scalar_lea.vmem %s1, %s306
      $region28: #{generate_feats_forward.5} parent=19 // pred_fallthru
        _
      // Predicated region
      $region29: #{generate_feats_forward.5} parent=19 // pred_check
        %p308 = pneg %p87
      $region30: #{generate_feats_forward.5} parent=19 // pred_check_branch
        %310 = sbr.rel (%p308) target = $region32
      $region31: #{generate_feats_forward.5} parent=19 // pred_region
        %p311 = scmp.lt.s32.totalorder %s15, 1
        %s312 = scalar_select %p311, %s15, 1
        %s313 = scalar_lea.vmem %s2, %s312
      $region32: #{generate_feats_forward.5} parent=19 // pred_fallthru
        _
      // Predicated region
      $region33: #{generate_feats_forward.5} parent=19 // pred_check
        %p314 = pneg %p134
      $region34: #{generate_feats_forward.5} parent=19 // pred_check_branch
        %316 = sbr.rel (%p314) target = $region36
      $region35: #{generate_feats_forward.5} parent=19 // pred_region
        %p317 = scmp.lt.s32.totalorder %s15, 1
        %s318 = scalar_select %p317, %s15, 1
        %s319 = smul.addr %s318, 9
        %s320 = smul.addr %s319, 4
        %s321 = scalar_lea.vmem %s4, %s320
      $region36: #{generate_feats_forward.5} parent=19 // pred_fallthru
        _
      // Predicated region
      $region37: #{generate_feats_forward.5} parent=19 // pred_check
        %p322 = pneg %p160
      $region38: #{generate_feats_forward.5} parent=19 // pred_check_branch
        %324 = sbr.rel (%p322) target = $region40
      $region39: #{generate_feats_forward.5} parent=19 // pred_region
        %p325 = scmp.lt.s32.totalorder %s15, 1
        %s326 = scalar_select %p325, %s15, 1
        %s327 = smul.addr %s326, 4
        %s328 = scalar_lea.vmem %s5, %s327
      $region40: #{generate_feats_forward.5} parent=19 // pred_fallthru
        _
      // Predicated region
      $region41: #{generate_feats_forward.5} parent=19 // pred_check
        %p329 = pneg %p186
      $region42: #{generate_feats_forward.5} parent=19 // pred_check_branch
        %331 = sbr.rel (%p329) target = $region44
      $region43: #{generate_feats_forward.5} parent=19 // pred_region
        %p332 = scmp.lt.s32.totalorder %s15, 1
        %s333 = scalar_select %p332, %s15, 1
        %s334 = smul.addr %s333, 3
        %s335 = smul.addr %s334, 4
        %s336 = scalar_lea.vmem %s6, %s335
      $region44: #{generate_feats_forward.5} parent=19 // pred_fallthru
        _
      // Predicated region
      $region45: #{generate_feats_forward.5} parent=19 // pred_check
        %p337 = pneg %p212
      $region46: #{generate_feats_forward.5} parent=19 // pred_check_branch
        %339 = sbr.rel (%p337) target = $region48
      $region47: #{generate_feats_forward.5} parent=19 // pred_region
        %p340 = scmp.lt.s32.totalorder %s15, 1
        %s341 = scalar_select %p340, %s15, 1
        %s342 = scalar_lea.vmem %s7, %s341
      $region48: #{generate_feats_forward.5} parent=19 // pred_fallthru
        _
      // Predicated region
      $region49: #{generate_feats_forward.5} parent=19 // pred_check
        %p343 = pneg %p238
      $region50: #{generate_feats_forward.5} parent=19 // pred_check_branch
        %345 = sbr.rel (%p343) target = $region52
      $region51: #{generate_feats_forward.5} parent=19 // pred_region
        %p346 = scmp.lt.s32.totalorder %s15, 1
        %s347 = scalar_select %p346, %s15, 1
        %s348 = smul.addr %s347, 8
        %s349 = smul.addr %s348, 4
        %s350 = scalar_lea.vmem %s8, %s349
      $region52: #{generate_feats_forward.5} parent=19 // pred_fallthru
        _
    $region20: #{generate_feats_forward.5} parent=5 // pred_fallthru
      _
    %p351 = scmp.le.s32.totalorder 1, %s15
    %p352 = scmp.lt.s32.totalorder %s15, 3
    %p353 = pnand %p351, %p352
    %p354 = pneg %p353
    // Predicated region
    $region53: #{generate_feats_forward.5} parent=5 // pred_check
      _
    $region54: #{generate_feats_forward.5} parent=5 // pred_check_branch
      %356 = sbr.rel (%p353) target = $region56
    $region55: #{generate_feats_forward.5} parent=5 // pred_region
      %s357 = ssub.s32 %s15, 1
      %p358 = scmp.lt.s32.totalorder %s20, 1
      %s359 = scalar_select %p358, %s20, 1
      %s360 = smul.addr %s359, 16
      %s361 = smul.addr %s360, 4
      %s362 = scalar_lea.vmem %s0, %s361
      %p363 = pneg %p41
      %p364 = pneg %p38
      %p365 = scmp.lt.s32.totalorder %s20, 1
      %s366 = scalar_select %p365, %s20, 1
      %s367 = smul.addr %s366, 6
      %s368 = smul.addr %s367, 4
      %s369 = scalar_lea.vmem %s1, %s368
      %p370 = pneg %p67
      %p371 = pneg %p64
      %p372 = scmp.lt.s32.totalorder %s20, 1
      %s373 = scalar_select %p372, %s20, 1
      %s374 = scalar_lea.vmem %s2, %s373
      %p375 = pneg %p93
      %p376 = pneg %p90
      %p377 = pneg %p114
      %p378 = pneg %p111
      %p379 = scmp.lt.s32.totalorder %s20, 1
      %s380 = scalar_select %p379, %s20, 1
      %s381 = smul.addr %s380, 9
      %s382 = smul.addr %s381, 4
      %s383 = scalar_lea.vmem %s4, %s382
      %p384 = pneg %p140
      %p385 = pneg %p137
      %p386 = scmp.lt.s32.totalorder %s20, 1
      %s387 = scalar_select %p386, %s20, 1
      %s388 = smul.addr %s387, 4
      %s389 = scalar_lea.vmem %s5, %s388
      %p390 = pneg %p166
      %p391 = pneg %p163
      %p392 = scmp.lt.s32.totalorder %s20, 1
      %s393 = scalar_select %p392, %s20, 1
      %s394 = smul.addr %s393, 3
      %s395 = smul.addr %s394, 4
      %s396 = scalar_lea.vmem %s6, %s395
      %p397 = pneg %p192
      %p398 = pneg %p189
      %p399 = scmp.lt.s32.totalorder %s20, 1
      %s400 = scalar_select %p399, %s20, 1
      %s401 = scalar_lea.vmem %s7, %s400
      %p402 = pneg %p218
      %p403 = pneg %p215
      %p404 = scmp.lt.s32.totalorder %s20, 1
      %s405 = scalar_select %p404, %s20, 1
      %s406 = smul.addr %s405, 8
      %s407 = smul.addr %s406, 4
      %s408 = scalar_lea.vmem %s8, %s407
      %p409 = pneg %p244
      %p410 = pneg %p241
      %p411 = pneg %p270
      %p412 = pneg %p267
      %p413 = scmp.lt.s32.totalorder %s20, 1
      %s414 = scalar_select %p413, %s20, 1
      %s415 = smul.addr %s414, 16
      %s416 = smul.addr %s415, 4
      %s417 = scalar_lea.vmem %s9, %s416
      %p418 = scmp.lt.s32.totalorder %s20, 1
      %s419 = scalar_select %p418, %s20, 1
      %s420 = smul.addr %s419, 16
      %s421 = smul.addr %s420, 4
      %s422 = scalar_lea.vmem %s0, %s421
      %p423 = scmp.lt.s32.totalorder %s20, 1
      %s424 = scalar_select %p423, %s20, 1
      %s425 = smul.addr %s424, 6
      %s426 = smul.addr %s425, 4
      %s427 = scalar_lea.vmem %s1, %s426
      %p428 = scmp.lt.s32.totalorder %s20, 1
      %s429 = scalar_select %p428, %s20, 1
      %s430 = scalar_lea.vmem %s2, %s429
      %p431 = scmp.lt.s32.totalorder %s20, 1
      %s432 = scalar_select %p431, %s20, 1
      %s433 = smul.addr %s432, 9
      %s434 = smul.addr %s433, 4
      %s435 = scalar_lea.vmem %s4, %s434
      %p436 = scmp.lt.s32.totalorder %s20, 1
      %s437 = scalar_select %p436, %s20, 1
      %s438 = smul.addr %s437, 4
      %s439 = scalar_lea.vmem %s5, %s438
      %p440 = scmp.lt.s32.totalorder %s20, 1
      %s441 = scalar_select %p440, %s20, 1
      %s442 = smul.addr %s441, 3
      %s443 = smul.addr %s442, 4
      %s444 = scalar_lea.vmem %s6, %s443
      %p445 = scmp.lt.s32.totalorder %s20, 1
      %s446 = scalar_select %p445, %s20, 1
      %s447 = scalar_lea.vmem %s7, %s446
      %p448 = scmp.lt.s32.totalorder %s20, 1
      %s449 = scalar_select %p448, %s20, 1
      %s450 = smul.addr %s449, 8
      %s451 = smul.addr %s450, 4
      %s452 = scalar_lea.vmem %s8, %s451
      %p453 = scmp.lt.s32.totalorder %s20, 1
      %s454 = scalar_select %p453, %s20, 1
      %s455 = smul.addr %s454, 16
      %s456 = smul.addr %s455, 4
      %s457 = scalar_lea.vmem %s9, %s456
      %v459 = vld [vmem:[%s422] sm:$0xf]
      %v460 = vld [vmem:[%s422 + $0x4] sm:$0xf]
      %v461 = vld [vmem:[%s422 + $0x8] sm:$0xf]
      %v462 = vld [vmem:[%s422 + $0xc] sm:$0xf]
      %v463 = vld [vmem:[%s422 + $0x10] sm:$0xf]
      %v464 = vld [vmem:[%s422 + $0x14] sm:$0xf]
      %v465 = vld [vmem:[%s422 + $0x18] sm:$0xf]
      %v466 = vld [vmem:[%s422 + $0x1c] sm:$0xf]
      %v467 = vld [vmem:[%s422 + $0x20] sm:$0xf]
      %v468 = vld [vmem:[%s422 + $0x24] sm:$0xf]
      %v469 = vld [vmem:[%s422 + $0x28] sm:$0xf]
      %v470 = vld [vmem:[%s422 + $0x2c] sm:$0xf]
      %v471 = vld [vmem:[%s422 + $0x30] sm:$0xf]
      %v472 = vld [vmem:[%s422 + $0x34] sm:$0xf]
      %v473 = vld [vmem:[%s422 + $0x38] sm:$0xf]
      %v474 = vld [vmem:[%s422 + $0x3c] sm:$0xf]
      %v475 = vld [vmem:[%s427] sm:$0xf]
      %v476 = vld [vmem:[%s427 + $0x4] sm:$0xf]
      %v477 = vld [vmem:[%s427 + $0x8] sm:$0xf]
      %v478 = vld [vmem:[%s427 + $0xc] sm:$0xf]
      %v479 = vld [vmem:[%s427 + $0x10] sm:$0xf]
      %v480 = vld [vmem:[%s427 + $0x14] sm:$0xf]
      %v481 = vld [vmem:[%s430] sm:$0x1]
      %v483 = vlaneseq
      %v484 = vshrl.u32 %v483, 7
      %v485 = vsub.s32 0, %v484
      %v486 = vrot.slane %v481, %v485
      %v504 = vunpack.c.l.b16 %v459
      %v505 = vunpack.c.l.b16 %v460
      %v506 = vunpack.c.l.b16 %v461
      %v507 = vunpack.c.l.b16 %v462
      %v508 = vunpack.c.l.b16 %v463
      %v509 = vunpack.c.l.b16 %v464
      %v510 = vunpack.c.l.b16 %v465
      %v511 = vunpack.c.l.b16 %v466
      %v512 = vunpack.c.l.b16 %v467
      %v513 = vunpack.c.l.b16 %v468
      %v514 = vunpack.c.l.b16 %v469
      %v515 = vunpack.c.l.b16 %v470
      %v516 = vunpack.c.l.b16 %v471
      %v517 = vunpack.c.l.b16 %v472
      %v518 = vunpack.c.l.b16 %v473
      %v519 = vunpack.c.l.b16 %v474
      %v520 = vpack.c.b16 %v505, %v504
      %v521 = vpack.c.b16 %v507, %v506
      %v522 = vpack.c.b16 %v509, %v508
      %v523 = vpack.c.b16 %v511, %v510
      %v524 = vpack.c.b16 %v513, %v512
      %v525 = vpack.c.b16 %v515, %v514
      %v526 = vpack.c.b16 %v517, %v516
      %v527 = vpack.c.b16 %v519, %v518
      %v534 = vunpack.c.l.b16 %v475
      %v535 = vunpack.c.l.b16 %v476
      %v536 = vunpack.c.l.b16 %v477
      %v537 = vunpack.c.l.b16 %v478
      %v538 = vunpack.c.l.b16 %v479
      %v539 = vunpack.c.l.b16 %v480
      %v540 = vpack.c.b16 %v535, %v534
      %v541 = vpack.c.b16 %v537, %v536
      %v542 = vpack.c.b16 %v539, %v538
      %vm546 = vcmask 392192
      %v548 = vsel %vm546, %v520, 0
      %v551 = vsel %vm546, %v521, 0
      %v554 = vsel %vm546, %v522, 0
      %v557 = vsel %vm546, %v523, 0
      %v560 = vsel %vm546, %v524, 0
      %v563 = vsel %vm546, %v525, 0
      %v566 = vsel %vm546, %v526, 0
      %v569 = vsel %vm546, %v527, 0
      %571 = vmatprep.subr.bf16.mxu0 0
      %572 = vmatpush1.bf16.msra.mxu0 %v540
      %573 = vmatprep.subr.bf16.mxu0 0
      %574 = vmatpush1.bf16.msra.mxu0 %v541
      %575 = vmatprep.subr.bf16.mxu0 0
      %576 = vmatpush1.bf16.msra.mxu0 %v542
      %577 = vmatprep.subr.bf16.mxu0 0
      %578 = vmatpush1.bf16.msra.mxu0 0
      %579 = vmatprep.subr.bf16.mxu0 0
      %580 = vmatpush1.bf16.msra.mxu0 0
      %581 = vmatprep.subr.bf16.mxu0 0
      %582 = vmatpush1.bf16.msra.mxu0 0
      %583 = vmatprep.subr.bf16.mxu0 0
      %584 = vmatpush1.bf16.msra.mxu0 0
      %585 = vmatprep.subr.bf16.mxu0 0
      %586 = vmatpush1.bf16.msra.mxu0 0
      %587 = vmatprep.subr.bf16.mxu0 0
      %588 = vmatpush1.bf16.msra.mxu0 0
      %589 = vmatprep.subr.bf16.mxu0 0
      %590 = vmatpush1.bf16.msra.mxu0 0
      %591 = vmatprep.subr.bf16.mxu0 0
      %592 = vmatpush1.bf16.msra.mxu0 0
      %593 = vmatprep.subr.bf16.mxu0 0
      %594 = vmatpush1.bf16.msra.mxu0 0
      %595 = vmatprep.subr.bf16.mxu0 0
      %596 = vmatpush1.bf16.msra.mxu0 0
      %597 = vmatprep.subr.bf16.mxu0 0
      %598 = vmatpush1.bf16.msra.mxu0 0
      %599 = vmatprep.subr.bf16.mxu0 0
      %600 = vmatpush1.bf16.msra.mxu0 0
      %601 = vmatprep.subr.bf16.mxu0 0
      %602 = vmatpush1.bf16.msra.mxu0 0
      %603 = vmatprep.mubr.bf16.mxu0 0
      %604 = vmatmul.mubr.bf16.gmra.mrb[0].mxu0 %v548
      %v605 = vpop.f32.mrb[0].mxu0
      %v606 = vadd.f32 %v486, %v605
      %v607 = vpop.f32.mrb[0].mxu0
      %v608 = vpop.f32.mrb[0].mxu0
      %v609 = vadd.f32 %v486, %v608
      %v610 = vpop.f32.mrb[0].mxu0
      %611 = vmatprep.mubr.bf16.mxu0 0
      %612 = vmatmul.mubr.bf16.gmra.mrb[0].mxu0 %v551
      %v613 = vpop.f32.mrb[0].mxu0
      %v614 = vadd.f32 %v486, %v613
      %v615 = vpop.f32.mrb[0].mxu0
      %v616 = vpop.f32.mrb[0].mxu0
      %v617 = vadd.f32 %v486, %v616
      %v618 = vpop.f32.mrb[0].mxu0
      %619 = vmatprep.mubr.bf16.mxu0 0
      %620 = vmatmul.mubr.bf16.gmra.mrb[0].mxu0 %v554
      %v621 = vpop.f32.mrb[0].mxu0
      %v622 = vadd.f32 %v486, %v621
      %v623 = vpop.f32.mrb[0].mxu0
      %v624 = vpop.f32.mrb[0].mxu0
      %v625 = vadd.f32 %v486, %v624
      %v626 = vpop.f32.mrb[0].mxu0
      %627 = vmatprep.mubr.bf16.mxu0 0
      %628 = vmatmul.mubr.bf16.gmra.mrb[0].mxu0 %v557
      %v629 = vpop.f32.mrb[0].mxu0
      %v630 = vadd.f32 %v486, %v629
      %v631 = vpop.f32.mrb[0].mxu0
      %v632 = vpop.f32.mrb[0].mxu0
      %v633 = vadd.f32 %v486, %v632
      %v634 = vpop.f32.mrb[0].mxu0
      %635 = vmatprep.mubr.bf16.mxu0 0
      %636 = vmatmul.mubr.bf16.gmra.mrb[0].mxu0 %v560
      %v637 = vpop.f32.mrb[0].mxu0
      %v638 = vadd.f32 %v486, %v637
      %v639 = vpop.f32.mrb[0].mxu0
      %v640 = vpop.f32.mrb[0].mxu0
      %v641 = vadd.f32 %v486, %v640
      %v642 = vpop.f32.mrb[0].mxu0
      %643 = vmatprep.mubr.bf16.mxu0 0
      %644 = vmatmul.mubr.bf16.gmra.mrb[0].mxu0 %v563
      %v645 = vpop.f32.mrb[0].mxu0
      %v646 = vadd.f32 %v486, %v645
      %v647 = vpop.f32.mrb[0].mxu0
      %v648 = vpop.f32.mrb[0].mxu0
      %v649 = vadd.f32 %v486, %v648
      %v650 = vpop.f32.mrb[0].mxu0
      %651 = vmatprep.mubr.bf16.mxu0 0
      %652 = vmatmul.mubr.bf16.gmra.mrb[0].mxu0 %v566
      %v653 = vpop.f32.mrb[0].mxu0
      %v654 = vadd.f32 %v486, %v653
      %v655 = vpop.f32.mrb[0].mxu0
      %v656 = vpop.f32.mrb[0].mxu0
      %v657 = vadd.f32 %v486, %v656
      %v658 = vpop.f32.mrb[0].mxu0
      %659 = vmatprep.mubr.bf16.mxu0 0
      %660 = vmatmul.mubr.bf16.gmra.mrb[0].mxu0 %v569
      %v661 = vpop.f32.mrb[0].mxu0
      %v662 = vadd.f32 %v486, %v661
      %v663 = vpop.f32.mrb[0].mxu0
      %v664 = vpop.f32.mrb[0].mxu0
      %v665 = vadd.f32 %v486, %v664
      %v666 = vpop.f32.mrb[0].mxu0
      %667 = vdwg.mxu0
      %v668 = vpack.c.bf16 %v609, %v606
      %v669 = vpack.c.bf16 %v617, %v614
      %v670 = vpack.c.bf16 %v625, %v622
      %v671 = vpack.c.bf16 %v633, %v630
      %v672 = vpack.c.bf16 %v641, %v638
      %v673 = vpack.c.bf16 %v649, %v646
      %v674 = vpack.c.bf16 %v657, %v654
      %v675 = vpack.c.bf16 %v665, %v662
      %v676 = vld [vmem:[%s3] sm:$0xff]
      %v677 = vld [vmem:[%s3 + $0x8] sm:$0xff]
      %v678 = vld [vmem:[%s3 + $0x10] sm:$0xff]
      %v679 = vld [vmem:[%s3 + $0x18] sm:$0xff]
      %v680 = vld [vmem:[%s3 + $0x20] sm:$0xff]
      %v681 = vld [vmem:[%s3 + $0x28] sm:$0xff]
      %v682 = vld [vmem:[%s3 + $0x30] sm:$0xff]
      %v683 = vld [vmem:[%s3 + $0x38] sm:$0xff]
      %v684 = vld [vmem:[%s3 + $0x40] sm:$0xff]
      %v685 = vld [vmem:[%s3 + $0x48] sm:$0xff]
      %v686 = vld [vmem:[%s3 + $0x50] sm:$0xff]
      %v687 = vld [vmem:[%s3 + $0x58] sm:$0xff]
      %v688 = vld [vmem:[%s3 + $0x60] sm:$0xff]
      %v689 = vld [vmem:[%s3 + $0x68] sm:$0xff]
      %v690 = vld [vmem:[%s3 + $0x70] sm:$0xff]
      %v691 = vld [vmem:[%s3 + $0x78] sm:$0xff]
      %v692 = vld [vmem:[%s439] sm:$0xf]
      %v693 = vld [vmem:[%s444] sm:$0xf]
      %v694 = vld [vmem:[%s444 + $0x4] sm:$0xf]
      %v695 = vld [vmem:[%s444 + $0x8] sm:$0xf]
      %v696 = vld [vmem:[%s447] sm:$0x1]
      %v697 = vld [vmem:[%s452] sm:$0xf]
      %v698 = vld [vmem:[%s452 + $0x4] sm:$0xf]
      %v699 = vld [vmem:[%s452 + $0x8] sm:$0xf]
      %v700 = vld [vmem:[%s452 + $0xc] sm:$0xf]
      %v701 = vld [vmem:[%s452 + $0x10] sm:$0xf]
      %v702 = vld [vmem:[%s452 + $0x14] sm:$0xf]
      %v703 = vld [vmem:[%s452 + $0x18] sm:$0xf]
      %v704 = vld [vmem:[%s452 + $0x1c] sm:$0xf]
      %v705 = vrot.slane %v606, 7
      %v706 = vrot.slane %v609, 7
      %v707 = vrot.slane %v614, 7
      %v708 = vrot.slane %v617, 7
      %v709 = vrot.slane %v622, 7
      %v710 = vrot.slane %v625, 7
      %v711 = vrot.slane %v630, 7
      %v712 = vrot.slane %v633, 7
      %v713 = vrot.slane %v638, 7
      %v714 = vrot.slane %v641, 7
      %v715 = vrot.slane %v646, 7
      %v716 = vrot.slane %v649, 7
      %v717 = vrot.slane %v654, 7
      %v718 = vrot.slane %v657, 7
      %v719 = vrot.slane %v662, 7
      %v720 = vrot.slane %v665, 7
      %v721 = vlaneseq
      %v722 = vshrl.u32 %v721, 7
      %vm723 = vcmp.lt.s32.totalorder %v722, 1
      %v724 = vsel %vm723, %v719, %v720
      %v725 = vsel %vm723, %v718, %v719
      %v726 = vsel %vm723, %v717, %v718
      %v727 = vsel %vm723, %v716, %v717
      %v728 = vsel %vm723, %v715, %v716
      %v729 = vsel %vm723, %v714, %v715
      %v730 = vsel %vm723, %v713, %v714
      %v731 = vsel %vm723, %v712, %v713
      %v732 = vsel %vm723, %v711, %v712
      %v733 = vsel %vm723, %v710, %v711
      %v734 = vsel %vm723, %v709, %v710
      %v735 = vsel %vm723, %v708, %v709
      %v736 = vsel %vm723, %v707, %v708
      %v737 = vsel %vm723, %v706, %v707
      %v738 = vsel %vm723, %v705, %v706
      %v739 = vsel %vm723, %v720, %v705
      %741 = vset.pattern.permute.xlu0 0
      %742 = vperm.xlu0 %741, %v676
      %v743 = vpop.permute.xlu0 %742
      %746 = vset.pattern.permute.xlu0 0
      %747 = vperm.xlu0 %746, %v677
      %v748 = vpop.permute.xlu0 %747
      %751 = vset.pattern.permute.xlu0 0
      %752 = vperm.xlu0 %751, %v678
      %v753 = vpop.permute.xlu0 %752
      %756 = vset.pattern.permute.xlu0 0
      %757 = vperm.xlu0 %756, %v679
      %v758 = vpop.permute.xlu0 %757
      %761 = vset.pattern.permute.xlu0 0
      %762 = vperm.xlu0 %761, %v680
      %v763 = vpop.permute.xlu0 %762
      %766 = vset.pattern.permute.xlu0 0
      %767 = vperm.xlu0 %766, %v681
      %v768 = vpop.permute.xlu0 %767
      %771 = vset.pattern.permute.xlu0 0
      %772 = vperm.xlu0 %771, %v682
      %v773 = vpop.permute.xlu0 %772
      %776 = vset.pattern.permute.xlu0 0
      %777 = vperm.xlu0 %776, %v683
      %v778 = vpop.permute.xlu0 %777
      %781 = vset.pattern.permute.xlu0 0
      %782 = vperm.xlu0 %781, %v684
      %v783 = vpop.permute.xlu0 %782
      %786 = vset.pattern.permute.xlu0 0
      %787 = vperm.xlu0 %786, %v685
      %v788 = vpop.permute.xlu0 %787
      %791 = vset.pattern.permute.xlu0 0
      %792 = vperm.xlu0 %791, %v686
      %v793 = vpop.permute.xlu0 %792
      %796 = vset.pattern.permute.xlu0 0
      %797 = vperm.xlu0 %796, %v687
      %v798 = vpop.permute.xlu0 %797
      %801 = vset.pattern.permute.xlu0 0
      %802 = vperm.xlu0 %801, %v688
      %v803 = vpop.permute.xlu0 %802
      %806 = vset.pattern.permute.xlu0 0
      %807 = vperm.xlu0 %806, %v689
      %v808 = vpop.permute.xlu0 %807
      %811 = vset.pattern.permute.xlu0 0
      %812 = vperm.xlu0 %811, %v690
      %v813 = vpop.permute.xlu0 %812
      %816 = vset.pattern.permute.xlu0 0
      %817 = vperm.xlu0 %816, %v691
      %v818 = vpop.permute.xlu0 %817
      %v820 = vmul.f32 %v724, %v743
      %v821 = vmul.f32 %v739, %v748
      %v822 = vmul.f32 %v738, %v753
      %v823 = vmul.f32 %v737, %v758
      %v824 = vmul.f32 %v736, %v763
      %v825 = vmul.f32 %v735, %v768
      %v826 = vmul.f32 %v734, %v773
      %v827 = vmul.f32 %v733, %v778
      %v828 = vmul.f32 %v732, %v783
      %v829 = vmul.f32 %v731, %v788
      %v830 = vmul.f32 %v730, %v793
      %v831 = vmul.f32 %v729, %v798
      %v832 = vmul.f32 %v728, %v803
      %v833 = vmul.f32 %v727, %v808
      %v834 = vmul.f32 %v726, %v813
      %v835 = vmul.f32 %v725, %v818
      %v836 = vpack.c.bf16 %v821, %v820
      %v837 = vpack.c.bf16 %v823, %v822
      %v838 = vpack.c.bf16 %v825, %v824
      %v839 = vpack.c.bf16 %v827, %v826
      %v840 = vpack.c.bf16 %v829, %v828
      %v841 = vpack.c.bf16 %v831, %v830
      %v842 = vpack.c.bf16 %v833, %v832
      %v843 = vpack.c.bf16 %v835, %v834
      %v844 = vld [vmem:[%s435] sm:$0xf]
      %845 = vset.pattern.permute.xlu0 1
      %846 = vperm.xlu0 %845, %v676
      %v847 = vpop.permute.xlu0 %846
      %849 = vset.pattern.permute.xlu0 1
      %850 = vperm.xlu0 %849, %v677
      %v851 = vpop.permute.xlu0 %850
      %853 = vset.pattern.permute.xlu0 1
      %854 = vperm.xlu0 %853, %v678
      %v855 = vpop.permute.xlu0 %854
      %857 = vset.pattern.permute.xlu0 1
      %858 = vperm.xlu0 %857, %v679
      %v859 = vpop.permute.xlu0 %858
      %861 = vset.pattern.permute.xlu0 1
      %862 = vperm.xlu0 %861, %v680
      %v863 = vpop.permute.xlu0 %862
      %865 = vset.pattern.permute.xlu0 1
      %866 = vperm.xlu0 %865, %v681
      %v867 = vpop.permute.xlu0 %866
      %869 = vset.pattern.permute.xlu0 1
      %870 = vperm.xlu0 %869, %v682
      %v871 = vpop.permute.xlu0 %870
      %873 = vset.pattern.permute.xlu0 1
      %874 = vperm.xlu0 %873, %v683
      %v875 = vpop.permute.xlu0 %874
      %877 = vset.pattern.permute.xlu0 1
      %878 = vperm.xlu0 %877, %v684
      %v879 = vpop.permute.xlu0 %878
      %881 = vset.pattern.permute.xlu0 1
      %882 = vperm.xlu0 %881, %v685
      %v883 = vpop.permute.xlu0 %882
      %885 = vset.pattern.permute.xlu0 1
      %886 = vperm.xlu0 %885, %v686
      %v887 = vpop.permute.xlu0 %886
      %889 = vset.pattern.permute.xlu0 1
      %890 = vperm.xlu0 %889, %v687
      %v891 = vpop.permute.xlu0 %890
      %893 = vset.pattern.permute.xlu0 1
      %894 = vperm.xlu0 %893, %v688
      %v895 = vpop.permute.xlu0 %894
      %897 = vset.pattern.permute.xlu0 1
      %898 = vperm.xlu0 %897, %v689
      %v899 = vpop.permute.xlu0 %898
      %901 = vset.pattern.permute.xlu0 1
      %902 = vperm.xlu0 %901, %v690
      %v903 = vpop.permute.xlu0 %902
      %905 = vset.pattern.permute.xlu0 1
      %906 = vperm.xlu0 %905, %v691
      %v907 = vpop.permute.xlu0 %906
      %v909 = vmul.f32 %v665, %v847
      %v910 = vmul.f32 %v606, %v851
      %v911 = vmul.f32 %v609, %v855
      %v912 = vmul.f32 %v614, %v859
      %v913 = vmul.f32 %v617, %v863
      %v914 = vmul.f32 %v622, %v867
      %v915 = vmul.f32 %v625, %v871
      %v916 = vmul.f32 %v630, %v875
      %v917 = vmul.f32 %v633, %v879
      %v918 = vmul.f32 %v638, %v883
      %v919 = vmul.f32 %v641, %v887
      %v920 = vmul.f32 %v646, %v891
      %v921 = vmul.f32 %v649, %v895
      %v922 = vmul.f32 %v654, %v899
      %v923 = vmul.f32 %v657, %v903
      %v924 = vmul.f32 %v662, %v907
      %v925 = vpack.c.bf16 %v910, %v909
      %v926 = vpack.c.bf16 %v912, %v911
      %v927 = vpack.c.bf16 %v914, %v913
      %v928 = vpack.c.bf16 %v916, %v915
      %v929 = vpack.c.bf16 %v918, %v917
      %v930 = vpack.c.bf16 %v920, %v919
      %v931 = vpack.c.bf16 %v922, %v921
      %v932 = vpack.c.bf16 %v924, %v923
      %s933 = scalar_lea.vmem %s435, 4
      %v934 = vld [vmem:[%s933] sm:$0xf]
      %vm935 = vcmask 64512
      %v937 = vsel %vm935, %v925, 0
      %v940 = vsel %vm935, %v926, 0
      %v943 = vsel %vm935, %v927, 0
      %v946 = vsel %vm935, %v928, 0
      %v949 = vsel %vm935, %v929, 0
      %v952 = vsel %vm935, %v930, 0
      %v955 = vsel %vm935, %v931, 0
      %v958 = vsel %vm935, %v932, 0
      %vm960 = vcmask 1043456
      %v962 = vsel %vm960, %v934, 0
      %964 = vmatprep.subr.bf16.mxu0 0
      %965 = vmatpush1.bf16.msra.mxu0 %v962
      %966 = vmatprep.subr.bf16.mxu0 0
      %967 = vmatpush1.bf16.msra.mxu0 0
      %968 = vmatprep.subr.bf16.mxu0 0
      %969 = vmatpush1.bf16.msra.mxu0 0
      %970 = vmatprep.subr.bf16.mxu0 0
      %971 = vmatpush1.bf16.msra.mxu0 0
      %972 = vmatprep.subr.bf16.mxu0 0
      %973 = vmatpush1.bf16.msra.mxu0 0
      %974 = vmatprep.subr.bf16.mxu0 0
      %975 = vmatpush1.bf16.msra.mxu0 0
      %976 = vmatprep.subr.bf16.mxu0 0
      %977 = vmatpush1.bf16.msra.mxu0 0
      %978 = vmatprep.subr.bf16.mxu0 0
      %979 = vmatpush1.bf16.msra.mxu0 0
      %980 = vmatprep.subr.bf16.mxu0 0
      %981 = vmatpush1.bf16.msra.mxu0 0
      %982 = vmatprep.subr.bf16.mxu0 0
      %983 = vmatpush1.bf16.msra.mxu0 0
      %984 = vmatprep.subr.bf16.mxu0 0
      %985 = vmatpush1.bf16.msra.mxu0 0
      %986 = vmatprep.subr.bf16.mxu0 0
      %987 = vmatpush1.bf16.msra.mxu0 0
      %988 = vmatprep.subr.bf16.mxu0 0
      %989 = vmatpush1.bf16.msra.mxu0 0
      %990 = vmatprep.subr.bf16.mxu0 0
      %991 = vmatpush1.bf16.msra.mxu0 0
      %992 = vmatprep.subr.bf16.mxu0 0
      %993 = vmatpush1.bf16.msra.mxu0 0
      %994 = vmatprep.subr.bf16.mxu0 0
      %995 = vmatpush1.bf16.msra.mxu0 0
      %996 = vmatprep.mubr.bf16.mxu0 0
      %997 = vmatmul.mubr.bf16.gmra.mrb[0].mxu0 %v937
      %v998 = vpop.f32.mrb[0].mxu0
      %v999 = vadd.f32 0.0, %v998
      %v1000 = vpop.f32.mrb[0].mxu0
      %v1001 = vpop.f32.mrb[0].mxu0
      %v1002 = vadd.f32 0.0, %v1001
      %v1003 = vpop.f32.mrb[0].mxu0
      %1004 = vmatprep.mubr.bf16.mxu0 0
      %1005 = vmatmul.mubr.bf16.gmra.mrb[0].mxu0 %v940
      %v1006 = vpop.f32.mrb[0].mxu0
      %v1007 = vadd.f32 0.0, %v1006
      %v1008 = vpop.f32.mrb[0].mxu0
      %v1009 = vpop.f32.mrb[0].mxu0
      %v1010 = vadd.f32 0.0, %v1009
      %v1011 = vpop.f32.mrb[0].mxu0
      %1012 = vmatprep.mubr.bf16.mxu0 0
      %1013 = vmatmul.mubr.bf16.gmra.mrb[0].mxu0 %v943
      %v1014 = vpop.f32.mrb[0].mxu0
      %v1015 = vadd.f32 0.0, %v1014
      %v1016 = vpop.f32.mrb[0].mxu0
      %v1017 = vpop.f32.mrb[0].mxu0
      %v1018 = vadd.f32 0.0, %v1017
      %v1019 = vpop.f32.mrb[0].mxu0
      %1020 = vmatprep.mubr.bf16.mxu0 0
      %1021 = vmatmul.mubr.bf16.gmra.mrb[0].mxu0 %v946
      %v1022 = vpop.f32.mrb[0].mxu0
      %v1023 = vadd.f32 0.0, %v1022
      %v1024 = vpop.f32.mrb[0].mxu0
      %v1025 = vpop.f32.mrb[0].mxu0
      %v1026 = vadd.f32 0.0, %v1025
      %v1027 = vpop.f32.mrb[0].mxu0
      %1028 = vmatprep.mubr.bf16.mxu0 0
      %1029 = vmatmul.mubr.bf16.gmra.mrb[0].mxu0 %v949
      %v1030 = vpop.f32.mrb[0].mxu0
      %v1031 = vadd.f32 0.0, %v1030
      %v1032 = vpop.f32.mrb[0].mxu0
      %v1033 = vpop.f32.mrb[0].mxu0
      %v1034 = vadd.f32 0.0, %v1033
      %v1035 = vpop.f32.mrb[0].mxu0
      %1036 = vmatprep.mubr.bf16.mxu0 0
      %1037 = vmatmul.mubr.bf16.gmra.mrb[0].mxu0 %v952
      %v1038 = vpop.f32.mrb[0].mxu0
      %v1039 = vadd.f32 0.0, %v1038
      %v1040 = vpop.f32.mrb[0].mxu0
      %v1041 = vpop.f32.mrb[0].mxu0
      %v1042 = vadd.f32 0.0, %v1041
      %v1043 = vpop.f32.mrb[0].mxu0
      %1044 = vmatprep.mubr.bf16.mxu0 0
      %1045 = vmatmul.mubr.bf16.gmra.mrb[0].mxu0 %v955
      %v1046 = vpop.f32.mrb[0].mxu0
      %v1047 = vadd.f32 0.0, %v1046
      %v1048 = vpop.f32.mrb[0].mxu0
      %v1049 = vpop.f32.mrb[0].mxu0
      %v1050 = vadd.f32 0.0, %v1049
      %v1051 = vpop.f32.mrb[0].mxu0
      %1052 = vmatprep.mubr.bf16.mxu0 0
      %1053 = vmatmul.mubr.bf16.gmra.mrb[0].mxu0 %v958
      %v1054 = vpop.f32.mrb[0].mxu0
      %v1055 = vadd.f32 0.0, %v1054
      %v1056 = vpop.f32.mrb[0].mxu0
      %v1057 = vpop.f32.mrb[0].mxu0
      %v1058 = vadd.f32 0.0, %v1057
      %v1059 = vpop.f32.mrb[0].mxu0
      %1060 = vdwg.mxu0
      %v1062 = vsel %vm935, %v836, 0
      %v1065 = vsel %vm935, %v837, 0
      %v1068 = vsel %vm935, %v838, 0
      %v1071 = vsel %vm935, %v839, 0
      %v1074 = vsel %vm935, %v840, 0
      %v1077 = vsel %vm935, %v841, 0
      %v1080 = vsel %vm935, %v842, 0
      %v1083 = vsel %vm935, %v843, 0
      %v1086 = vsel %vm960, %v844, 0
      %1088 = vmatprep.subr.bf16.mxu0 0
      %1089 = vmatpush1.bf16.msra.mxu0 %v1086
      %1090 = vmatprep.subr.bf16.mxu0 0
      %1091 = vmatpush1.bf16.msra.mxu0 0
      %1092 = vmatprep.subr.bf16.mxu0 0
      %1093 = vmatpush1.bf16.msra.mxu0 0
      %1094 = vmatprep.subr.bf16.mxu0 0
      %1095 = vmatpush1.bf16.msra.mxu0 0
      %1096 = vmatprep.subr.bf16.mxu0 0
      %1097 = vmatpush1.bf16.msra.mxu0 0
      %1098 = vmatprep.subr.bf16.mxu0 0
      %1099 = vmatpush1.bf16.msra.mxu0 0
      %1100 = vmatprep.subr.bf16.mxu0 0
      %1101 = vmatpush1.bf16.msra.mxu0 0
      %1102 = vmatprep.subr.bf16.mxu0 0
      %1103 = vmatpush1.bf16.msra.mxu0 0
      %1104 = vmatprep.subr.bf16.mxu0 0
      %1105 = vmatpush1.bf16.msra.mxu0 0
      %1106 = vmatprep.subr.bf16.mxu0 0
      %1107 = vmatpush1.bf16.msra.mxu0 0
      %1108 = vmatprep.subr.bf16.mxu0 0
      %1109 = vmatpush1.bf16.msra.mxu0 0
      %1110 = vmatprep.subr.bf16.mxu0 0
      %1111 = vmatpush1.bf16.msra.mxu0 0
      %1112 = vmatprep.subr.bf16.mxu0 0
      %1113 = vmatpush1.bf16.msra.mxu0 0
      %1114 = vmatprep.subr.bf16.mxu0 0
      %1115 = vmatpush1.bf16.msra.mxu0 0
      %1116 = vmatprep.subr.bf16.mxu0 0
      %1117 = vmatpush1.bf16.msra.mxu0 0
      %1118 = vmatprep.subr.bf16.mxu0 0
      %1119 = vmatpush1.bf16.msra.mxu0 0
      %1120 = vmatprep.mubr.bf16.mxu0 0
      %1121 = vmatmul.mubr.bf16.gmra.mrb[0].mxu0 %v1062
      %v1122 = vpop.f32.mrb[0].mxu0
      %v1123 = vadd.f32 %v999, %v1122
      %v1124 = vpop.f32.mrb[0].mxu0
      %v1125 = vpop.f32.mrb[0].mxu0
      %v1126 = vadd.f32 %v1002, %v1125
      %v1127 = vpop.f32.mrb[0].mxu0
      %1128 = vmatprep.mubr.bf16.mxu0 0
      %1129 = vmatmul.mubr.bf16.gmra.mrb[0].mxu0 %v1065
      %v1130 = vpop.f32.mrb[0].mxu0
      %v1131 = vadd.f32 %v1007, %v1130
      %v1132 = vpop.f32.mrb[0].mxu0
      %v1133 = vpop.f32.mrb[0].mxu0
      %v1134 = vadd.f32 %v1010, %v1133
      %v1135 = vpop.f32.mrb[0].mxu0
      %1136 = vmatprep.mubr.bf16.mxu0 0
      %1137 = vmatmul.mubr.bf16.gmra.mrb[0].mxu0 %v1068
      %v1138 = vpop.f32.mrb[0].mxu0
      %v1139 = vadd.f32 %v1015, %v1138
      %v1140 = vpop.f32.mrb[0].mxu0
      %v1141 = vpop.f32.mrb[0].mxu0
      %v1142 = vadd.f32 %v1018, %v1141
      %v1143 = vpop.f32.mrb[0].mxu0
      %1144 = vmatprep.mubr.bf16.mxu0 0
      %1145 = vmatmul.mubr.bf16.gmra.mrb[0].mxu0 %v1071
      %v1146 = vpop.f32.mrb[0].mxu0
      %v1147 = vadd.f32 %v1023, %v1146
      %v1148 = vpop.f32.mrb[0].mxu0
      %v1149 = vpop.f32.mrb[0].mxu0
      %v1150 = vadd.f32 %v1026, %v1149
      %v1151 = vpop.f32.mrb[0].mxu0
      %1152 = vmatprep.mubr.bf16.mxu0 0
      %1153 = vmatmul.mubr.bf16.gmra.mrb[0].mxu0 %v1074
      %v1154 = vpop.f32.mrb[0].mxu0
      %v1155 = vadd.f32 %v1031, %v1154
      %v1156 = vpop.f32.mrb[0].mxu0
      %v1157 = vpop.f32.mrb[0].mxu0
      %v1158 = vadd.f32 %v1034, %v1157
      %v1159 = vpop.f32.mrb[0].mxu0
      %1160 = vmatprep.mubr.bf16.mxu0 0
      %1161 = vmatmul.mubr.bf16.gmra.mrb[0].mxu0 %v1077
      %v1162 = vpop.f32.mrb[0].mxu0
      %v1163 = vadd.f32 %v1039, %v1162
      %v1164 = vpop.f32.mrb[0].mxu0
      %v1165 = vpop.f32.mrb[0].mxu0
      %v1166 = vadd.f32 %v1042, %v1165
      %v1167 = vpop.f32.mrb[0].mxu0
      %1168 = vmatprep.mubr.bf16.mxu0 0
      %1169 = vmatmul.mubr.bf16.gmra.mrb[0].mxu0 %v1080
      %v1170 = vpop.f32.mrb[0].mxu0
      %v1171 = vadd.f32 %v1047, %v1170
      %v1172 = vpop.f32.mrb[0].mxu0
      %v1173 = vpop.f32.mrb[0].mxu0
      %v1174 = vadd.f32 %v1050, %v1173
      %v1175 = vpop.f32.mrb[0].mxu0
      %1176 = vmatprep.mubr.bf16.mxu0 0
      %1177 = vmatmul.mubr.bf16.gmra.mrb[0].mxu0 %v1083
      %v1178 = vpop.f32.mrb[0].mxu0
      %v1179 = vadd.f32 %v1055, %v1178
      %v1180 = vpop.f32.mrb[0].mxu0
      %v1181 = vpop.f32.mrb[0].mxu0
      %v1182 = vadd.f32 %v1058, %v1181
      %v1183 = vpop.f32.mrb[0].mxu0
      %1184 = vdwg.mxu0
      %v1185 = vrot.slane %v606, 1
      %v1186 = vrot.slane %v609, 1
      %v1187 = vrot.slane %v614, 1
      %v1188 = vrot.slane %v617, 1
      %v1189 = vrot.slane %v622, 1
      %v1190 = vrot.slane %v625, 1
      %v1191 = vrot.slane %v630, 1
      %v1192 = vrot.slane %v633, 1
      %v1193 = vrot.slane %v638, 1
      %v1194 = vrot.slane %v641, 1
      %v1195 = vrot.slane %v646, 1
      %v1196 = vrot.slane %v649, 1
      %v1197 = vrot.slane %v654, 1
      %v1198 = vrot.slane %v657, 1
      %v1199 = vrot.slane %v662, 1
      %v1200 = vrot.slane %v665, 1
      %vm1201 = vcmp.lt.s32.totalorder %v722, 7
      %v1202 = vsel %vm1201, %v1199, %v1200
      %v1203 = vsel %vm1201, %v1198, %v1199
      %v1204 = vsel %vm1201, %v1197, %v1198
      %v1205 = vsel %vm1201, %v1196, %v1197
      %v1206 = vsel %vm1201, %v1195, %v1196
      %v1207 = vsel %vm1201, %v1194, %v1195
      %v1208 = vsel %vm1201, %v1193, %v1194
      %v1209 = vsel %vm1201, %v1192, %v1193
      %v1210 = vsel %vm1201, %v1191, %v1192
      %v1211 = vsel %vm1201, %v1190, %v1191
      %v1212 = vsel %vm1201, %v1189, %v1190
      %v1213 = vsel %vm1201, %v1188, %v1189
      %v1214 = vsel %vm1201, %v1187, %v1188
      %v1215 = vsel %vm1201, %v1186, %v1187
      %v1216 = vsel %vm1201, %v1185, %v1186
      %v1217 = vsel %vm1201, %v1200, %v1185
      %1218 = vset.pattern.permute.xlu0 2
      %1219 = vperm.xlu0 %1218, %v676
      %v1220 = vpop.permute.xlu0 %1219
      %1222 = vset.pattern.permute.xlu0 2
      %1223 = vperm.xlu0 %1222, %v677
      %v1224 = vpop.permute.xlu0 %1223
      %1226 = vset.pattern.permute.xlu0 2
      %1227 = vperm.xlu0 %1226, %v678
      %v1228 = vpop.permute.xlu0 %1227
      %1230 = vset.pattern.permute.xlu0 2
      %1231 = vperm.xlu0 %1230, %v679
      %v1232 = vpop.permute.xlu0 %1231
      %1234 = vset.pattern.permute.xlu0 2
      %1235 = vperm.xlu0 %1234, %v680
      %v1236 = vpop.permute.xlu0 %1235
      %1238 = vset.pattern.permute.xlu0 2
      %1239 = vperm.xlu0 %1238, %v681
      %v1240 = vpop.permute.xlu0 %1239
      %1242 = vset.pattern.permute.xlu0 2
      %1243 = vperm.xlu0 %1242, %v682
      %v1244 = vpop.permute.xlu0 %1243
      %1246 = vset.pattern.permute.xlu0 2
      %1247 = vperm.xlu0 %1246, %v683
      %v1248 = vpop.permute.xlu0 %1247
      %1250 = vset.pattern.permute.xlu0 2
      %1251 = vperm.xlu0 %1250, %v684
      %v1252 = vpop.permute.xlu0 %1251
      %1254 = vset.pattern.permute.xlu0 2
      %1255 = vperm.xlu0 %1254, %v685
      %v1256 = vpop.permute.xlu0 %1255
      %1258 = vset.pattern.permute.xlu0 2
      %1259 = vperm.xlu0 %1258, %v686
      %v1260 = vpop.permute.xlu0 %1259
      %1262 = vset.pattern.permute.xlu0 2
      %1263 = vperm.xlu0 %1262, %v687
      %v1264 = vpop.permute.xlu0 %1263
      %1266 = vset.pattern.permute.xlu0 2
      %1267 = vperm.xlu0 %1266, %v688
      %v1268 = vpop.permute.xlu0 %1267
      %1270 = vset.pattern.permute.xlu0 2
      %1271 = vperm.xlu0 %1270, %v689
      %v1272 = vpop.permute.xlu0 %1271
      %1274 = vset.pattern.permute.xlu0 2
      %1275 = vperm.xlu0 %1274, %v690
      %v1276 = vpop.permute.xlu0 %1275
      %1278 = vset.pattern.permute.xlu0 2
      %1279 = vperm.xlu0 %1278, %v691
      %v1280 = vpop.permute.xlu0 %1279
      %v1282 = vmul.f32 %v1217, %v1220
      %v1283 = vmul.f32 %v1216, %v1224
      %v1284 = vmul.f32 %v1215, %v1228
      %v1285 = vmul.f32 %v1214, %v1232
      %v1286 = vmul.f32 %v1213, %v1236
      %v1287 = vmul.f32 %v1212, %v1240
      %v1288 = vmul.f32 %v1211, %v1244
      %v1289 = vmul.f32 %v1210, %v1248
      %v1290 = vmul.f32 %v1209, %v1252
      %v1291 = vmul.f32 %v1208, %v1256
      %v1292 = vmul.f32 %v1207, %v1260
      %v1293 = vmul.f32 %v1206, %v1264
      %v1294 = vmul.f32 %v1205, %v1268
      %v1295 = vmul.f32 %v1204, %v1272
      %v1296 = vmul.f32 %v1203, %v1276
      %v1297 = vmul.f32 %v1202, %v1280
      %v1298 = vpack.c.bf16 %v1283, %v1282
      %v1299 = vpack.c.bf16 %v1285, %v1284
      %v1300 = vpack.c.bf16 %v1287, %v1286
      %v1301 = vpack.c.bf16 %v1289, %v1288
      %v1302 = vpack.c.bf16 %v1291, %v1290
      %v1303 = vpack.c.bf16 %v1293, %v1292
      %v1304 = vpack.c.bf16 %v1295, %v1294
      %v1305 = vpack.c.bf16 %v1297, %v1296
      %s1306 = scalar_lea.vmem %s435, 8
      %v1307 = vld [vmem:[%s1306] sm:$0xf]
      %v1309 = vsel %vm935, %v1298, 0
      %v1312 = vsel %vm935, %v1299, 0
      %v1315 = vsel %vm935, %v1300, 0
      %v1318 = vsel %vm935, %v1301, 0
      %v1321 = vsel %vm935, %v1302, 0
      %v1324 = vsel %vm935, %v1303, 0
      %v1327 = vsel %vm935, %v1304, 0
      %v1330 = vsel %vm935, %v1305, 0
      %v1333 = vsel %vm960, %v1307, 0
      %1335 = vmatprep.subr.bf16.mxu0 0
      %1336 = vmatpush1.bf16.msra.mxu0 %v1333
      %1337 = vmatprep.subr.bf16.mxu0 0
      %1338 = vmatpush1.bf16.msra.mxu0 0
      %1339 = vmatprep.subr.bf16.mxu0 0
      %1340 = vmatpush1.bf16.msra.mxu0 0
      %1341 = vmatprep.subr.bf16.mxu0 0
      %1342 = vmatpush1.bf16.msra.mxu0 0
      %1343 = vmatprep.subr.bf16.mxu0 0
      %1344 = vmatpush1.bf16.msra.mxu0 0
      %1345 = vmatprep.subr.bf16.mxu0 0
      %1346 = vmatpush1.bf16.msra.mxu0 0
      %1347 = vmatprep.subr.bf16.mxu0 0
      %1348 = vmatpush1.bf16.msra.mxu0 0
      %1349 = vmatprep.subr.bf16.mxu0 0
      %1350 = vmatpush1.bf16.msra.mxu0 0
      %1351 = vmatprep.subr.bf16.mxu0 0
      %1352 = vmatpush1.bf16.msra.mxu0 0
      %1353 = vmatprep.subr.bf16.mxu0 0
      %1354 = vmatpush1.bf16.msra.mxu0 0
      %1355 = vmatprep.subr.bf16.mxu0 0
      %1356 = vmatpush1.bf16.msra.mxu0 0
      %1357 = vmatprep.subr.bf16.mxu0 0
      %1358 = vmatpush1.bf16.msra.mxu0 0
      %1359 = vmatprep.subr.bf16.mxu0 0
      %1360 = vmatpush1.bf16.msra.mxu0 0
      %1361 = vmatprep.subr.bf16.mxu0 0
      %1362 = vmatpush1.bf16.msra.mxu0 0
      %1363 = vmatprep.subr.bf16.mxu0 0
      %1364 = vmatpush1.bf16.msra.mxu0 0
      %1365 = vmatprep.subr.bf16.mxu0 0
      %1366 = vmatpush1.bf16.msra.mxu0 0
      %1367 = vmatprep.mubr.bf16.mxu0 0
      %1368 = vmatmul.mubr.bf16.gmra.mrb[0].mxu0 %v1309
      %v1369 = vpop.f32.mrb[0].mxu0
      %v1370 = vadd.f32 0.0, %v1369
      %v1371 = vpop.f32.mrb[0].mxu0
      %v1372 = vpop.f32.mrb[0].mxu0
      %v1373 = vadd.f32 0.0, %v1372
      %v1374 = vpop.f32.mrb[0].mxu0
      %1375 = vmatprep.mubr.bf16.mxu0 0
      %1376 = vmatmul.mubr.bf16.gmra.mrb[0].mxu0 %v1312
      %v1377 = vpop.f32.mrb[0].mxu0
      %v1378 = vadd.f32 0.0, %v1377
      %v1379 = vpop.f32.mrb[0].mxu0
      %v1380 = vpop.f32.mrb[0].mxu0
      %v1381 = vadd.f32 0.0, %v1380
      %v1382 = vpop.f32.mrb[0].mxu0
      %1383 = vmatprep.mubr.bf16.mxu0 0
      %1384 = vmatmul.mubr.bf16.gmra.mrb[0].mxu0 %v1315
      %v1385 = vpop.f32.mrb[0].mxu0
      %v1386 = vadd.f32 0.0, %v1385
      %v1387 = vpop.f32.mrb[0].mxu0
      %v1388 = vpop.f32.mrb[0].mxu0
      %v1389 = vadd.f32 0.0, %v1388
      %v1390 = vpop.f32.mrb[0].mxu0
      %1391 = vmatprep.mubr.bf16.mxu0 0
      %1392 = vmatmul.mubr.bf16.gmra.mrb[0].mxu0 %v1318
      %v1393 = vpop.f32.mrb[0].mxu0
      %v1394 = vadd.f32 0.0, %v1393
      %v1395 = vpop.f32.mrb[0].mxu0
      %v1396 = vpop.f32.mrb[0].mxu0
      %v1397 = vadd.f32 0.0, %v1396
      %v1398 = vpop.f32.mrb[0].mxu0
      %1399 = vmatprep.mubr.bf16.mxu0 0
      %1400 = vmatmul.mubr.bf16.gmra.mrb[0].mxu0 %v1321
      %v1401 = vpop.f32.mrb[0].mxu0
      %v1402 = vadd.f32 0.0, %v1401
      %v1403 = vpop.f32.mrb[0].mxu0
      %v1404 = vpop.f32.mrb[0].mxu0
      %v1405 = vadd.f32 0.0, %v1404
      %v1406 = vpop.f32.mrb[0].mxu0
      %1407 = vmatprep.mubr.bf16.mxu0 0
      %1408 = vmatmul.mubr.bf16.gmra.mrb[0].mxu0 %v1324
      %v1409 = vpop.f32.mrb[0].mxu0
      %v1410 = vadd.f32 0.0, %v1409
      %v1411 = vpop.f32.mrb[0].mxu0
      %v1412 = vpop.f32.mrb[0].mxu0
      %v1413 = vadd.f32 0.0, %v1412
      %v1414 = vpop.f32.mrb[0].mxu0
      %1415 = vmatprep.mubr.bf16.mxu0 0
      %1416 = vmatmul.mubr.bf16.gmra.mrb[0].mxu0 %v1327
      %v1417 = vpop.f32.mrb[0].mxu0
      %v1418 = vadd.f32 0.0, %v1417
      %v1419 = vpop.f32.mrb[0].mxu0
      %v1420 = vpop.f32.mrb[0].mxu0
      %v1421 = vadd.f32 0.0, %v1420
      %v1422 = vpop.f32.mrb[0].mxu0
      %1423 = vmatprep.mubr.bf16.mxu0 0
      %1424 = vmatmul.mubr.bf16.gmra.mrb[0].mxu0 %v1330
      %v1425 = vpop.f32.mrb[0].mxu0
      %v1426 = vadd.f32 0.0, %v1425
      %v1427 = vpop.f32.mrb[0].mxu0
      %v1428 = vpop.f32.mrb[0].mxu0
      %v1429 = vadd.f32 0.0, %v1428
      %v1430 = vpop.f32.mrb[0].mxu0
      %1431 = vdwg.mxu0
      %v1432 = vadd.f32 %v1123, %v1370
      %v1433 = vadd.f32 %v1126, %v1373
      %v1434 = vadd.f32 %v1131, %v1378
      %v1435 = vadd.f32 %v1134, %v1381
      %v1436 = vadd.f32 %v1139, %v1386
      %v1437 = vadd.f32 %v1142, %v1389
      %v1438 = vadd.f32 %v1147, %v1394
      %v1439 = vadd.f32 %v1150, %v1397
      %v1440 = vadd.f32 %v1155, %v1402
      %v1441 = vadd.f32 %v1158, %v1405
      %v1442 = vadd.f32 %v1163, %v1410
      %v1443 = vadd.f32 %v1166, %v1413
      %v1444 = vadd.f32 %v1171, %v1418
      %v1445 = vadd.f32 %v1174, %v1421
      %v1446 = vadd.f32 %v1179, %v1426
      %v1447 = vadd.f32 %v1182, %v1429
      %1448 = vset.pattern.permute.xlu0 3
      %1449 = vperm.xlu0 %1448, %v676
      %v1450 = vpop.permute.xlu0 %1449
      %1452 = vset.pattern.permute.xlu0 3
      %1453 = vperm.xlu0 %1452, %v677
      %v1454 = vpop.permute.xlu0 %1453
      %1456 = vset.pattern.permute.xlu0 3
      %1457 = vperm.xlu0 %1456, %v678
      %v1458 = vpop.permute.xlu0 %1457
      %1460 = vset.pattern.permute.xlu0 3
      %1461 = vperm.xlu0 %1460, %v679
      %v1462 = vpop.permute.xlu0 %1461
      %1464 = vset.pattern.permute.xlu0 3
      %1465 = vperm.xlu0 %1464, %v680
      %v1466 = vpop.permute.xlu0 %1465
      %1468 = vset.pattern.permute.xlu0 3
      %1469 = vperm.xlu0 %1468, %v681
      %v1470 = vpop.permute.xlu0 %1469
      %1472 = vset.pattern.permute.xlu0 3
      %1473 = vperm.xlu0 %1472, %v682
      %v1474 = vpop.permute.xlu0 %1473
      %1476 = vset.pattern.permute.xlu0 3
      %1477 = vperm.xlu0 %1476, %v683
      %v1478 = vpop.permute.xlu0 %1477
      %1480 = vset.pattern.permute.xlu0 3
      %1481 = vperm.xlu0 %1480, %v684
      %v1482 = vpop.permute.xlu0 %1481
      %1484 = vset.pattern.permute.xlu0 3
      %1485 = vperm.xlu0 %1484, %v685
      %v1486 = vpop.permute.xlu0 %1485
      %1488 = vset.pattern.permute.xlu0 3
      %1489 = vperm.xlu0 %1488, %v686
      %v1490 = vpop.permute.xlu0 %1489
      %1492 = vset.pattern.permute.xlu0 3
      %1493 = vperm.xlu0 %1492, %v687
      %v1494 = vpop.permute.xlu0 %1493
      %1496 = vset.pattern.permute.xlu0 3
      %1497 = vperm.xlu0 %1496, %v688
      %v1498 = vpop.permute.xlu0 %1497
      %1500 = vset.pattern.permute.xlu0 3
      %1501 = vperm.xlu0 %1500, %v689
      %v1502 = vpop.permute.xlu0 %1501
      %1504 = vset.pattern.permute.xlu0 3
      %1505 = vperm.xlu0 %1504, %v690
      %v1506 = vpop.permute.xlu0 %1505
      %1508 = vset.pattern.permute.xlu0 3
      %1509 = vperm.xlu0 %1508, %v691
      %v1510 = vpop.permute.xlu0 %1509
      %v1512 = vmul.f32 %v739, %v1450
      %v1513 = vmul.f32 %v738, %v1454
      %v1514 = vmul.f32 %v737, %v1458
      %v1515 = vmul.f32 %v736, %v1462
      %v1516 = vmul.f32 %v735, %v1466
      %v1517 = vmul.f32 %v734, %v1470
      %v1518 = vmul.f32 %v733, %v1474
      %v1519 = vmul.f32 %v732, %v1478
      %v1520 = vmul.f32 %v731, %v1482
      %v1521 = vmul.f32 %v730, %v1486
      %v1522 = vmul.f32 %v729, %v1490
      %v1523 = vmul.f32 %v728, %v1494
      %v1524 = vmul.f32 %v727, %v1498
      %v1525 = vmul.f32 %v726, %v1502
      %v1526 = vmul.f32 %v725, %v1506
      %v1527 = vmul.f32 %v724, %v1510
      %v1528 = vpack.c.bf16 %v1513, %v1512
      %v1529 = vpack.c.bf16 %v1515, %v1514
      %v1530 = vpack.c.bf16 %v1517, %v1516
      %v1531 = vpack.c.bf16 %v1519, %v1518
      %v1532 = vpack.c.bf16 %v1521, %v1520
      %v1533 = vpack.c.bf16 %v1523, %v1522
      %v1534 = vpack.c.bf16 %v1525, %v1524
      %v1535 = vpack.c.bf16 %v1527, %v1526
      %s1536 = scalar_lea.vmem %s435, 12
      %v1537 = vld [vmem:[%s1536] sm:$0xf]
      %v1539 = vsel %vm935, %v1528, 0
      %v1542 = vsel %vm935, %v1529, 0
      %v1545 = vsel %vm935, %v1530, 0
      %v1548 = vsel %vm935, %v1531, 0
      %v1551 = vsel %vm935, %v1532, 0
      %v1554 = vsel %vm935, %v1533, 0
      %v1557 = vsel %vm935, %v1534, 0
      %v1560 = vsel %vm935, %v1535, 0
      %v1563 = vsel %vm960, %v1537, 0
      %1565 = vmatprep.subr.bf16.mxu0 0
      %1566 = vmatpush1.bf16.msra.mxu0 %v1563
      %1567 = vmatprep.subr.bf16.mxu0 0
      %1568 = vmatpush1.bf16.msra.mxu0 0
      %1569 = vmatprep.subr.bf16.mxu0 0
      %1570 = vmatpush1.bf16.msra.mxu0 0
      %1571 = vmatprep.subr.bf16.mxu0 0
      %1572 = vmatpush1.bf16.msra.mxu0 0
      %1573 = vmatprep.subr.bf16.mxu0 0
      %1574 = vmatpush1.bf16.msra.mxu0 0
      %1575 = vmatprep.subr.bf16.mxu0 0
      %1576 = vmatpush1.bf16.msra.mxu0 0
      %1577 = vmatprep.subr.bf16.mxu0 0
      %1578 = vmatpush1.bf16.msra.mxu0 0
      %1579 = vmatprep.subr.bf16.mxu0 0
      %1580 = vmatpush1.bf16.msra.mxu0 0
      %1581 = vmatprep.subr.bf16.mxu0 0
      %1582 = vmatpush1.bf16.msra.mxu0 0
      %1583 = vmatprep.subr.bf16.mxu0 0
      %1584 = vmatpush1.bf16.msra.mxu0 0
      %1585 = vmatprep.subr.bf16.mxu0 0
      %1586 = vmatpush1.bf16.msra.mxu0 0
      %1587 = vmatprep.subr.bf16.mxu0 0
      %1588 = vmatpush1.bf16.msra.mxu0 0
      %1589 = vmatprep.subr.bf16.mxu0 0
      %1590 = vmatpush1.bf16.msra.mxu0 0
      %1591 = vmatprep.subr.bf16.mxu0 0
      %1592 = vmatpush1.bf16.msra.mxu0 0
      %1593 = vmatprep.subr.bf16.mxu0 0
      %1594 = vmatpush1.bf16.msra.mxu0 0
      %1595 = vmatprep.subr.bf16.mxu0 0
      %1596 = vmatpush1.bf16.msra.mxu0 0
      %1597 = vmatprep.mubr.bf16.mxu0 0
      %1598 = vmatmul.mubr.bf16.gmra.mrb[0].mxu0 %v1539
      %v1599 = vpop.f32.mrb[0].mxu0
      %v1600 = vadd.f32 0.0, %v1599
      %v1601 = vpop.f32.mrb[0].mxu0
      %v1602 = vpop.f32.mrb[0].mxu0
      %v1603 = vadd.f32 0.0, %v1602
      %v1604 = vpop.f32.mrb[0].mxu0
      %1605 = vmatprep.mubr.bf16.mxu0 0
      %1606 = vmatmul.mubr.bf16.gmra.mrb[0].mxu0 %v1542
      %v1607 = vpop.f32.mrb[0].mxu0
      %v1608 = vadd.f32 0.0, %v1607
      %v1609 = vpop.f32.mrb[0].mxu0
      %v1610 = vpop.f32.mrb[0].mxu0
      %v1611 = vadd.f32 0.0, %v1610
      %v1612 = vpop.f32.mrb[0].mxu0
      %1613 = vmatprep.mubr.bf16.mxu0 0
      %1614 = vmatmul.mubr.bf16.gmra.mrb[0].mxu0 %v1545
      %v1615 = vpop.f32.mrb[0].mxu0
      %v1616 = vadd.f32 0.0, %v1615
      %v1617 = vpop.f32.mrb[0].mxu0
      %v1618 = vpop.f32.mrb[0].mxu0
      %v1619 = vadd.f32 0.0, %v1618
      %v1620 = vpop.f32.mrb[0].mxu0
      %1621 = vmatprep.mubr.bf16.mxu0 0
      %1622 = vmatmul.mubr.bf16.gmra.mrb[0].mxu0 %v1548
      %v1623 = vpop.f32.mrb[0].mxu0
      %v1624 = vadd.f32 0.0, %v1623
      %v1625 = vpop.f32.mrb[0].mxu0
      %v1626 = vpop.f32.mrb[0].mxu0
      %v1627 = vadd.f32 0.0, %v1626
      %v1628 = vpop.f32.mrb[0].mxu0
      %1629 = vmatprep.mubr.bf16.mxu0 0
      %1630 = vmatmul.mubr.bf16.gmra.mrb[0].mxu0 %v1551
      %v1631 = vpop.f32.mrb[0].mxu0
      %v1632 = vadd.f32 0.0, %v1631
      %v1633 = vpop.f32.mrb[0].mxu0
      %v1634 = vpop.f32.mrb[0].mxu0
      %v1635 = vadd.f32 0.0, %v1634
      %v1636 = vpop.f32.mrb[0].mxu0
      %1637 = vmatprep.mubr.bf16.mxu0 0
      %1638 = vmatmul.mubr.bf16.gmra.mrb[0].mxu0 %v1554
      %v1639 = vpop.f32.mrb[0].mxu0
      %v1640 = vadd.f32 0.0, %v1639
      %v1641 = vpop.f32.mrb[0].mxu0
      %v1642 = vpop.f32.mrb[0].mxu0
      %v1643 = vadd.f32 0.0, %v1642
      %v1644 = vpop.f32.mrb[0].mxu0
      %1645 = vmatprep.mubr.bf16.mxu0 0
      %1646 = vmatmul.mubr.bf16.gmra.mrb[0].mxu0 %v1557
      %v1647 = vpop.f32.mrb[0].mxu0
      %v1648 = vadd.f32 0.0, %v1647
      %v1649 = vpop.f32.mrb[0].mxu0
      %v1650 = vpop.f32.mrb[0].mxu0
      %v1651 = vadd.f32 0.0, %v1650
      %v1652 = vpop.f32.mrb[0].mxu0
      %1653 = vmatprep.mubr.bf16.mxu0 0
      %1654 = vmatmul.mubr.bf16.gmra.mrb[0].mxu0 %v1560
      %v1655 = vpop.f32.mrb[0].mxu0
      %v1656 = vadd.f32 0.0, %v1655
      %v1657 = vpop.f32.mrb[0].mxu0
      %v1658 = vpop.f32.mrb[0].mxu0
      %v1659 = vadd.f32 0.0, %v1658
      %v1660 = vpop.f32.mrb[0].mxu0
      %1661 = vdwg.mxu0
      %v1662 = vadd.f32 %v1432, %v1600
      %v1663 = vadd.f32 %v1433, %v1603
      %v1664 = vadd.f32 %v1434, %v1608
      %v1665 = vadd.f32 %v1435, %v1611
      %v1666 = vadd.f32 %v1436, %v1616
      %v1667 = vadd.f32 %v1437, %v1619
      %v1668 = vadd.f32 %v1438, %v1624
      %v1669 = vadd.f32 %v1439, %v1627
      %v1670 = vadd.f32 %v1440, %v1632
      %v1671 = vadd.f32 %v1441, %v1635
      %v1672 = vadd.f32 %v1442, %v1640
      %v1673 = vadd.f32 %v1443, %v1643
      %v1674 = vadd.f32 %v1444, %v1648
      %v1675 = vadd.f32 %v1445, %v1651
      %v1676 = vadd.f32 %v1446, %v1656
      %v1677 = vadd.f32 %v1447, %v1659
      %s1678 = scalar_lea.vmem %s435, 16
      %v1679 = vld [vmem:[%s1678] sm:$0xf]
      %v1681 = vsel %vm935, %v668, 0
      %v1684 = vsel %vm935, %v669, 0
      %v1687 = vsel %vm935, %v670, 0
      %v1690 = vsel %vm935, %v671, 0
      %v1693 = vsel %vm935, %v672, 0
      %v1696 = vsel %vm935, %v673, 0
      %v1699 = vsel %vm935, %v674, 0
      %v1702 = vsel %vm935, %v675, 0
      %v1705 = vsel %vm960, %v1679, 0
      %1707 = vmatprep.subr.bf16.mxu0 0
      %1708 = vmatpush1.bf16.msra.mxu0 %v1705
      %1709 = vmatprep.subr.bf16.mxu0 0
      %1710 = vmatpush1.bf16.msra.mxu0 0
      %1711 = vmatprep.subr.bf16.mxu0 0
      %1712 = vmatpush1.bf16.msra.mxu0 0
      %1713 = vmatprep.subr.bf16.mxu0 0
      %1714 = vmatpush1.bf16.msra.mxu0 0
      %1715 = vmatprep.subr.bf16.mxu0 0
      %1716 = vmatpush1.bf16.msra.mxu0 0
      %1717 = vmatprep.subr.bf16.mxu0 0
      %1718 = vmatpush1.bf16.msra.mxu0 0
      %1719 = vmatprep.subr.bf16.mxu0 0
      %1720 = vmatpush1.bf16.msra.mxu0 0
      %1721 = vmatprep.subr.bf16.mxu0 0
      %1722 = vmatpush1.bf16.msra.mxu0 0
      %1723 = vmatprep.subr.bf16.mxu0 0
      %1724 = vmatpush1.bf16.msra.mxu0 0
      %1725 = vmatprep.subr.bf16.mxu0 0
      %1726 = vmatpush1.bf16.msra.mxu0 0
      %1727 = vmatprep.subr.bf16.mxu0 0
      %1728 = vmatpush1.bf16.msra.mxu0 0
      %1729 = vmatprep.subr.bf16.mxu0 0
      %1730 = vmatpush1.bf16.msra.mxu0 0
      %1731 = vmatprep.subr.bf16.mxu0 0
      %1732 = vmatpush1.bf16.msra.mxu0 0
      %1733 = vmatprep.subr.bf16.mxu0 0
      %1734 = vmatpush1.bf16.msra.mxu0 0
      %1735 = vmatprep.subr.bf16.mxu0 0
      %1736 = vmatpush1.bf16.msra.mxu0 0
      %1737 = vmatprep.subr.bf16.mxu0 0
      %1738 = vmatpush1.bf16.msra.mxu0 0
      %1739 = vmatprep.mubr.bf16.mxu0 0
      %1740 = vmatmul.mubr.bf16.gmra.mrb[0].mxu0 %v1681
      %v1741 = vpop.f32.mrb[0].mxu0
      %v1742 = vadd.f32 0.0, %v1741
      %v1743 = vpop.f32.mrb[0].mxu0
      %v1744 = vpop.f32.mrb[0].mxu0
      %v1745 = vadd.f32 0.0, %v1744
      %v1746 = vpop.f32.mrb[0].mxu0
      %1747 = vmatprep.mubr.bf16.mxu0 0
      %1748 = vmatmul.mubr.bf16.gmra.mrb[0].mxu0 %v1684
      %v1749 = vpop.f32.mrb[0].mxu0
      %v1750 = vadd.f32 0.0, %v1749
      %v1751 = vpop.f32.mrb[0].mxu0
      %v1752 = vpop.f32.mrb[0].mxu0
      %v1753 = vadd.f32 0.0, %v1752
      %v1754 = vpop.f32.mrb[0].mxu0
      %1755 = vmatprep.mubr.bf16.mxu0 0
      %1756 = vmatmul.mubr.bf16.gmra.mrb[0].mxu0 %v1687
      %v1757 = vpop.f32.mrb[0].mxu0
      %v1758 = vadd.f32 0.0, %v1757
      %v1759 = vpop.f32.mrb[0].mxu0
      %v1760 = vpop.f32.mrb[0].mxu0
      %v1761 = vadd.f32 0.0, %v1760
      %v1762 = vpop.f32.mrb[0].mxu0
      %1763 = vmatprep.mubr.bf16.mxu0 0
      %1764 = vmatmul.mubr.bf16.gmra.mrb[0].mxu0 %v1690
      %v1765 = vpop.f32.mrb[0].mxu0
      %v1766 = vadd.f32 0.0, %v1765
      %v1767 = vpop.f32.mrb[0].mxu0
      %v1768 = vpop.f32.mrb[0].mxu0
      %v1769 = vadd.f32 0.0, %v1768
      %v1770 = vpop.f32.mrb[0].mxu0
      %1771 = vmatprep.mubr.bf16.mxu0 0
      %1772 = vmatmul.mubr.bf16.gmra.mrb[0].mxu0 %v1693
      %v1773 = vpop.f32.mrb[0].mxu0
      %v1774 = vadd.f32 0.0, %v1773
      %v1775 = vpop.f32.mrb[0].mxu0
      %v1776 = vpop.f32.mrb[0].mxu0
      %v1777 = vadd.f32 0.0, %v1776
      %v1778 = vpop.f32.mrb[0].mxu0
      %1779 = vmatprep.mubr.bf16.mxu0 0
      %1780 = vmatmul.mubr.bf16.gmra.mrb[0].mxu0 %v1696
      %v1781 = vpop.f32.mrb[0].mxu0
      %v1782 = vadd.f32 0.0, %v1781
      %v1783 = vpop.f32.mrb[0].mxu0
      %v1784 = vpop.f32.mrb[0].mxu0
      %v1785 = vadd.f32 0.0, %v1784
      %v1786 = vpop.f32.mrb[0].mxu0
      %1787 = vmatprep.mubr.bf16.mxu0 0
      %1788 = vmatmul.mubr.bf16.gmra.mrb[0].mxu0 %v1699
      %v1789 = vpop.f32.mrb[0].mxu0
      %v1790 = vadd.f32 0.0, %v1789
      %v1791 = vpop.f32.mrb[0].mxu0
      %v1792 = vpop.f32.mrb[0].mxu0
      %v1793 = vadd.f32 0.0, %v1792
      %v1794 = vpop.f32.mrb[0].mxu0
      %1795 = vmatprep.mubr.bf16.mxu0 0
      %1796 = vmatmul.mubr.bf16.gmra.mrb[0].mxu0 %v1702
      %v1797 = vpop.f32.mrb[0].mxu0
      %v1798 = vadd.f32 0.0, %v1797
      %v1799 = vpop.f32.mrb[0].mxu0
      %v1800 = vpop.f32.mrb[0].mxu0
      %v1801 = vadd.f32 0.0, %v1800
      %v1802 = vpop.f32.mrb[0].mxu0
      %1803 = vdwg.mxu0
      %v1804 = vadd.f32 %v1662, %v1742
      %v1805 = vadd.f32 %v1663, %v1745
      %v1806 = vadd.f32 %v1664, %v1750
      %v1807 = vadd.f32 %v1665, %v1753
      %v1808 = vadd.f32 %v1666, %v1758
      %v1809 = vadd.f32 %v1667, %v1761
      %v1810 = vadd.f32 %v1668, %v1766
      %v1811 = vadd.f32 %v1669, %v1769
      %v1812 = vadd.f32 %v1670, %v1774
      %v1813 = vadd.f32 %v1671, %v1777
      %v1814 = vadd.f32 %v1672, %v1782
      %v1815 = vadd.f32 %v1673, %v1785
      %v1816 = vadd.f32 %v1674, %v1790
      %v1817 = vadd.f32 %v1675, %v1793
      %v1818 = vadd.f32 %v1676, %v1798
      %v1819 = vadd.f32 %v1677, %v1801
      %1820 = vset.pattern.permute.xlu0 5
      %1821 = vperm.xlu0 %1820, %v676
      %v1822 = vpop.permute.xlu0 %1821
      %1824 = vset.pattern.permute.xlu0 5
      %1825 = vperm.xlu0 %1824, %v677
      %v1826 = vpop.permute.xlu0 %1825
      %1828 = vset.pattern.permute.xlu0 5
      %1829 = vperm.xlu0 %1828, %v678
      %v1830 = vpop.permute.xlu0 %1829
      %1832 = vset.pattern.permute.xlu0 5
      %1833 = vperm.xlu0 %1832, %v679
      %v1834 = vpop.permute.xlu0 %1833
      %1836 = vset.pattern.permute.xlu0 5
      %1837 = vperm.xlu0 %1836, %v680
      %v1838 = vpop.permute.xlu0 %1837
      %1840 = vset.pattern.permute.xlu0 5
      %1841 = vperm.xlu0 %1840, %v681
      %v1842 = vpop.permute.xlu0 %1841
      %1844 = vset.pattern.permute.xlu0 5
      %1845 = vperm.xlu0 %1844, %v682
      %v1846 = vpop.permute.xlu0 %1845
      %1848 = vset.pattern.permute.xlu0 5
      %1849 = vperm.xlu0 %1848, %v683
      %v1850 = vpop.permute.xlu0 %1849
      %1852 = vset.pattern.permute.xlu0 5
      %1853 = vperm.xlu0 %1852, %v684
      %v1854 = vpop.permute.xlu0 %1853
      %1856 = vset.pattern.permute.xlu0 5
      %1857 = vperm.xlu0 %1856, %v685
      %v1858 = vpop.permute.xlu0 %1857
      %1860 = vset.pattern.permute.xlu0 5
      %1861 = vperm.xlu0 %1860, %v686
      %v1862 = vpop.permute.xlu0 %1861
      %1864 = vset.pattern.permute.xlu0 5
      %1865 = vperm.xlu0 %1864, %v687
      %v1866 = vpop.permute.xlu0 %1865
      %1868 = vset.pattern.permute.xlu0 5
      %1869 = vperm.xlu0 %1868, %v688
      %v1870 = vpop.permute.xlu0 %1869
      %1872 = vset.pattern.permute.xlu0 5
      %1873 = vperm.xlu0 %1872, %v689
      %v1874 = vpop.permute.xlu0 %1873
      %1876 = vset.pattern.permute.xlu0 5
      %1877 = vperm.xlu0 %1876, %v690
      %v1878 = vpop.permute.xlu0 %1877
      %1880 = vset.pattern.permute.xlu0 5
      %1881 = vperm.xlu0 %1880, %v691
      %v1882 = vpop.permute.xlu0 %1881
      %v1884 = vmul.f32 %v1216, %v1822
      %v1885 = vmul.f32 %v1215, %v1826
      %v1886 = vmul.f32 %v1214, %v1830
      %v1887 = vmul.f32 %v1213, %v1834
      %v1888 = vmul.f32 %v1212, %v1838
      %v1889 = vmul.f32 %v1211, %v1842
      %v1890 = vmul.f32 %v1210, %v1846
      %v1891 = vmul.f32 %v1209, %v1850
      %v1892 = vmul.f32 %v1208, %v1854
      %v1893 = vmul.f32 %v1207, %v1858
      %v1894 = vmul.f32 %v1206, %v1862
      %v1895 = vmul.f32 %v1205, %v1866
      %v1896 = vmul.f32 %v1204, %v1870
      %v1897 = vmul.f32 %v1203, %v1874
      %v1898 = vmul.f32 %v1202, %v1878
      %v1899 = vmul.f32 %v1217, %v1882
      %v1900 = vpack.c.bf16 %v1885, %v1884
      %v1901 = vpack.c.bf16 %v1887, %v1886
      %v1902 = vpack.c.bf16 %v1889, %v1888
      %v1903 = vpack.c.bf16 %v1891, %v1890
      %v1904 = vpack.c.bf16 %v1893, %v1892
      %v1905 = vpack.c.bf16 %v1895, %v1894
      %v1906 = vpack.c.bf16 %v1897, %v1896
      %v1907 = vpack.c.bf16 %v1899, %v1898
      %s1908 = scalar_lea.vmem %s435, 20
      %v1909 = vld [vmem:[%s1908] sm:$0xf]
      %v1911 = vsel %vm935, %v1900, 0
      %v1914 = vsel %vm935, %v1901, 0
      %v1917 = vsel %vm935, %v1902, 0
      %v1920 = vsel %vm935, %v1903, 0
      %v1923 = vsel %vm935, %v1904, 0
      %v1926 = vsel %vm935, %v1905, 0
      %v1929 = vsel %vm935, %v1906, 0
      %v1932 = vsel %vm935, %v1907, 0
      %v1935 = vsel %vm960, %v1909, 0
      %1937 = vmatprep.subr.bf16.mxu0 0
      %1938 = vmatpush1.bf16.msra.mxu0 %v1935
      %1939 = vmatprep.subr.bf16.mxu0 0
      %1940 = vmatpush1.bf16.msra.mxu0 0
      %1941 = vmatprep.subr.bf16.mxu0 0
      %1942 = vmatpush1.bf16.msra.mxu0 0
      %1943 = vmatprep.subr.bf16.mxu0 0
      %1944 = vmatpush1.bf16.msra.mxu0 0
      %1945 = vmatprep.subr.bf16.mxu0 0
      %1946 = vmatpush1.bf16.msra.mxu0 0
      %1947 = vmatprep.subr.bf16.mxu0 0
      %1948 = vmatpush1.bf16.msra.mxu0 0
      %1949 = vmatprep.subr.bf16.mxu0 0
      %1950 = vmatpush1.bf16.msra.mxu0 0
      %1951 = vmatprep.subr.bf16.mxu0 0
      %1952 = vmatpush1.bf16.msra.mxu0 0
      %1953 = vmatprep.subr.bf16.mxu0 0
      %1954 = vmatpush1.bf16.msra.mxu0 0
      %1955 = vmatprep.subr.bf16.mxu0 0
      %1956 = vmatpush1.bf16.msra.mxu0 0
      %1957 = vmatprep.subr.bf16.mxu0 0
      %1958 = vmatpush1.bf16.msra.mxu0 0
      %1959 = vmatprep.subr.bf16.mxu0 0
      %1960 = vmatpush1.bf16.msra.mxu0 0
      %1961 = vmatprep.subr.bf16.mxu0 0
      %1962 = vmatpush1.bf16.msra.mxu0 0
      %1963 = vmatprep.subr.bf16.mxu0 0
      %1964 = vmatpush1.bf16.msra.mxu0 0
      %1965 = vmatprep.subr.bf16.mxu0 0
      %1966 = vmatpush1.bf16.msra.mxu0 0
      %1967 = vmatprep.subr.bf16.mxu0 0
      %1968 = vmatpush1.bf16.msra.mxu0 0
      %1969 = vmatprep.mubr.bf16.mxu0 0
      %1970 = vmatmul.mubr.bf16.gmra.mrb[0].mxu0 %v1911
      %v1971 = vpop.f32.mrb[0].mxu0
      %v1972 = vadd.f32 0.0, %v1971
      %v1973 = vpop.f32.mrb[0].mxu0
      %v1974 = vpop.f32.mrb[0].mxu0
      %v1975 = vadd.f32 0.0, %v1974
      %v1976 = vpop.f32.mrb[0].mxu0
      %1977 = vmatprep.mubr.bf16.mxu0 0
      %1978 = vmatmul.mubr.bf16.gmra.mrb[0].mxu0 %v1914
      %v1979 = vpop.f32.mrb[0].mxu0
      %v1980 = vadd.f32 0.0, %v1979
      %v1981 = vpop.f32.mrb[0].mxu0
      %v1982 = vpop.f32.mrb[0].mxu0
      %v1983 = vadd.f32 0.0, %v1982
      %v1984 = vpop.f32.mrb[0].mxu0
      %1985 = vmatprep.mubr.bf16.mxu0 0
      %1986 = vmatmul.mubr.bf16.gmra.mrb[0].mxu0 %v1917
      %v1987 = vpop.f32.mrb[0].mxu0
      %v1988 = vadd.f32 0.0, %v1987
      %v1989 = vpop.f32.mrb[0].mxu0
      %v1990 = vpop.f32.mrb[0].mxu0
      %v1991 = vadd.f32 0.0, %v1990
      %v1992 = vpop.f32.mrb[0].mxu0
      %1993 = vmatprep.mubr.bf16.mxu0 0
      %1994 = vmatmul.mubr.bf16.gmra.mrb[0].mxu0 %v1920
      %v1995 = vpop.f32.mrb[0].mxu0
      %v1996 = vadd.f32 0.0, %v1995
      %v1997 = vpop.f32.mrb[0].mxu0
      %v1998 = vpop.f32.mrb[0].mxu0
      %v1999 = vadd.f32 0.0, %v1998
      %v2000 = vpop.f32.mrb[0].mxu0
      %2001 = vmatprep.mubr.bf16.mxu0 0
      %2002 = vmatmul.mubr.bf16.gmra.mrb[0].mxu0 %v1923
      %v2003 = vpop.f32.mrb[0].mxu0
      %v2004 = vadd.f32 0.0, %v2003
      %v2005 = vpop.f32.mrb[0].mxu0
      %v2006 = vpop.f32.mrb[0].mxu0
      %v2007 = vadd.f32 0.0, %v2006
      %v2008 = vpop.f32.mrb[0].mxu0
      %2009 = vmatprep.mubr.bf16.mxu0 0
      %2010 = vmatmul.mubr.bf16.gmra.mrb[0].mxu0 %v1926
      %v2011 = vpop.f32.mrb[0].mxu0
      %v2012 = vadd.f32 0.0, %v2011
      %v2013 = vpop.f32.mrb[0].mxu0
      %v2014 = vpop.f32.mrb[0].mxu0
      %v2015 = vadd.f32 0.0, %v2014
      %v2016 = vpop.f32.mrb[0].mxu0
      %2017 = vmatprep.mubr.bf16.mxu0 0
      %2018 = vmatmul.mubr.bf16.gmra.mrb[0].mxu0 %v1929
      %v2019 = vpop.f32.mrb[0].mxu0
      %v2020 = vadd.f32 0.0, %v2019
      %v2021 = vpop.f32.mrb[0].mxu0
      %v2022 = vpop.f32.mrb[0].mxu0
      %v2023 = vadd.f32 0.0, %v2022
      %v2024 = vpop.f32.mrb[0].mxu0
      %2025 = vmatprep.mubr.bf16.mxu0 0
      %2026 = vmatmul.mubr.bf16.gmra.mrb[0].mxu0 %v1932
      %v2027 = vpop.f32.mrb[0].mxu0
      %v2028 = vadd.f32 0.0, %v2027
      %v2029 = vpop.f32.mrb[0].mxu0
      %v2030 = vpop.f32.mrb[0].mxu0
      %v2031 = vadd.f32 0.0, %v2030
      %v2032 = vpop.f32.mrb[0].mxu0
      %2033 = vdwg.mxu0
      %v2034 = vadd.f32 %v1804, %v1972
      %v2035 = vadd.f32 %v1805, %v1975
      %v2036 = vadd.f32 %v1806, %v1980
      %v2037 = vadd.f32 %v1807, %v1983
      %v2038 = vadd.f32 %v1808, %v1988
      %v2039 = vadd.f32 %v1809, %v1991
      %v2040 = vadd.f32 %v1810, %v1996
      %v2041 = vadd.f32 %v1811, %v1999
      %v2042 = vadd.f32 %v1812, %v2004
      %v2043 = vadd.f32 %v1813, %v2007
      %v2044 = vadd.f32 %v1814, %v2012
      %v2045 = vadd.f32 %v1815, %v2015
      %v2046 = vadd.f32 %v1816, %v2020
      %v2047 = vadd.f32 %v1817, %v2023
      %v2048 = vadd.f32 %v1818, %v2028
      %v2049 = vadd.f32 %v1819, %v2031
      %2050 = vset.pattern.permute.xlu0 6
      %2051 = vperm.xlu0 %2050, %v676
      %v2052 = vpop.permute.xlu0 %2051
      %2054 = vset.pattern.permute.xlu0 6
      %2055 = vperm.xlu0 %2054, %v677
      %v2056 = vpop.permute.xlu0 %2055
      %2058 = vset.pattern.permute.xlu0 6
      %2059 = vperm.xlu0 %2058, %v678
      %v2060 = vpop.permute.xlu0 %2059
      %2062 = vset.pattern.permute.xlu0 6
      %2063 = vperm.xlu0 %2062, %v679
      %v2064 = vpop.permute.xlu0 %2063
      %2066 = vset.pattern.permute.xlu0 6
      %2067 = vperm.xlu0 %2066, %v680
      %v2068 = vpop.permute.xlu0 %2067
      %2070 = vset.pattern.permute.xlu0 6
      %2071 = vperm.xlu0 %2070, %v681
      %v2072 = vpop.permute.xlu0 %2071
      %2074 = vset.pattern.permute.xlu0 6
      %2075 = vperm.xlu0 %2074, %v682
      %v2076 = vpop.permute.xlu0 %2075
      %2078 = vset.pattern.permute.xlu0 6
      %2079 = vperm.xlu0 %2078, %v683
      %v2080 = vpop.permute.xlu0 %2079
      %2082 = vset.pattern.permute.xlu0 6
      %2083 = vperm.xlu0 %2082, %v684
      %v2084 = vpop.permute.xlu0 %2083
      %2086 = vset.pattern.permute.xlu0 6
      %2087 = vperm.xlu0 %2086, %v685
      %v2088 = vpop.permute.xlu0 %2087
      %2090 = vset.pattern.permute.xlu0 6
      %2091 = vperm.xlu0 %2090, %v686
      %v2092 = vpop.permute.xlu0 %2091
      %2094 = vset.pattern.permute.xlu0 6
      %2095 = vperm.xlu0 %2094, %v687
      %v2096 = vpop.permute.xlu0 %2095
      %2098 = vset.pattern.permute.xlu0 6
      %2099 = vperm.xlu0 %2098, %v688
      %v2100 = vpop.permute.xlu0 %2099
      %2102 = vset.pattern.permute.xlu0 6
      %2103 = vperm.xlu0 %2102, %v689
      %v2104 = vpop.permute.xlu0 %2103
      %2106 = vset.pattern.permute.xlu0 6
      %2107 = vperm.xlu0 %2106, %v690
      %v2108 = vpop.permute.xlu0 %2107
      %2110 = vset.pattern.permute.xlu0 6
      %2111 = vperm.xlu0 %2110, %v691
      %v2112 = vpop.permute.xlu0 %2111
      %v2114 = vmul.f32 %v738, %v2052
      %v2115 = vmul.f32 %v737, %v2056
      %v2116 = vmul.f32 %v736, %v2060
      %v2117 = vmul.f32 %v735, %v2064
      %v2118 = vmul.f32 %v734, %v2068
      %v2119 = vmul.f32 %v733, %v2072
      %v2120 = vmul.f32 %v732, %v2076
      %v2121 = vmul.f32 %v731, %v2080
      %v2122 = vmul.f32 %v730, %v2084
      %v2123 = vmul.f32 %v729, %v2088
      %v2124 = vmul.f32 %v728, %v2092
      %v2125 = vmul.f32 %v727, %v2096
      %v2126 = vmul.f32 %v726, %v2100
      %v2127 = vmul.f32 %v725, %v2104
      %v2128 = vmul.f32 %v724, %v2108
      %v2129 = vmul.f32 %v739, %v2112
      %v2130 = vpack.c.bf16 %v2115, %v2114
      %v2131 = vpack.c.bf16 %v2117, %v2116
      %v2132 = vpack.c.bf16 %v2119, %v2118
      %v2133 = vpack.c.bf16 %v2121, %v2120
      %v2134 = vpack.c.bf16 %v2123, %v2122
      %v2135 = vpack.c.bf16 %v2125, %v2124
      %v2136 = vpack.c.bf16 %v2127, %v2126
      %v2137 = vpack.c.bf16 %v2129, %v2128
      %s2138 = scalar_lea.vmem %s435, 24
      %v2139 = vld [vmem:[%s2138] sm:$0xf]
      %v2141 = vsel %vm935, %v2130, 0
      %v2144 = vsel %vm935, %v2131, 0
      %v2147 = vsel %vm935, %v2132, 0
      %v2150 = vsel %vm935, %v2133, 0
      %v2153 = vsel %vm935, %v2134, 0
      %v2156 = vsel %vm935, %v2135, 0
      %v2159 = vsel %vm935, %v2136, 0
      %v2162 = vsel %vm935, %v2137, 0
      %v2165 = vsel %vm960, %v2139, 0
      %2167 = vmatprep.subr.bf16.mxu0 0
      %2168 = vmatpush1.bf16.msra.mxu0 %v2165
      %2169 = vmatprep.subr.bf16.mxu0 0
      %2170 = vmatpush1.bf16.msra.mxu0 0
      %2171 = vmatprep.subr.bf16.mxu0 0
      %2172 = vmatpush1.bf16.msra.mxu0 0
      %2173 = vmatprep.subr.bf16.mxu0 0
      %2174 = vmatpush1.bf16.msra.mxu0 0
      %2175 = vmatprep.subr.bf16.mxu0 0
      %2176 = vmatpush1.bf16.msra.mxu0 0
      %2177 = vmatprep.subr.bf16.mxu0 0
      %2178 = vmatpush1.bf16.msra.mxu0 0
      %2179 = vmatprep.subr.bf16.mxu0 0
      %2180 = vmatpush1.bf16.msra.mxu0 0
      %2181 = vmatprep.subr.bf16.mxu0 0
      %2182 = vmatpush1.bf16.msra.mxu0 0
      %2183 = vmatprep.subr.bf16.mxu0 0
      %2184 = vmatpush1.bf16.msra.mxu0 0
      %2185 = vmatprep.subr.bf16.mxu0 0
      %2186 = vmatpush1.bf16.msra.mxu0 0
      %2187 = vmatprep.subr.bf16.mxu0 0
      %2188 = vmatpush1.bf16.msra.mxu0 0
      %2189 = vmatprep.subr.bf16.mxu0 0
      %2190 = vmatpush1.bf16.msra.mxu0 0
      %2191 = vmatprep.subr.bf16.mxu0 0
      %2192 = vmatpush1.bf16.msra.mxu0 0
      %2193 = vmatprep.subr.bf16.mxu0 0
      %2194 = vmatpush1.bf16.msra.mxu0 0
      %2195 = vmatprep.subr.bf16.mxu0 0
      %2196 = vmatpush1.bf16.msra.mxu0 0
      %2197 = vmatprep.subr.bf16.mxu0 0
      %2198 = vmatpush1.bf16.msra.mxu0 0
      %2199 = vmatprep.mubr.bf16.mxu0 0
      %2200 = vmatmul.mubr.bf16.gmra.mrb[0].mxu0 %v2141
      %v2201 = vpop.f32.mrb[0].mxu0
      %v2202 = vadd.f32 0.0, %v2201
      %v2203 = vpop.f32.mrb[0].mxu0
      %v2204 = vpop.f32.mrb[0].mxu0
      %v2205 = vadd.f32 0.0, %v2204
      %v2206 = vpop.f32.mrb[0].mxu0
      %2207 = vmatprep.mubr.bf16.mxu0 0
      %2208 = vmatmul.mubr.bf16.gmra.mrb[0].mxu0 %v2144
      %v2209 = vpop.f32.mrb[0].mxu0
      %v2210 = vadd.f32 0.0, %v2209
      %v2211 = vpop.f32.mrb[0].mxu0
      %v2212 = vpop.f32.mrb[0].mxu0
      %v2213 = vadd.f32 0.0, %v2212
      %v2214 = vpop.f32.mrb[0].mxu0
      %2215 = vmatprep.mubr.bf16.mxu0 0
      %2216 = vmatmul.mubr.bf16.gmra.mrb[0].mxu0 %v2147
      %v2217 = vpop.f32.mrb[0].mxu0
      %v2218 = vadd.f32 0.0, %v2217
      %v2219 = vpop.f32.mrb[0].mxu0
      %v2220 = vpop.f32.mrb[0].mxu0
      %v2221 = vadd.f32 0.0, %v2220
      %v2222 = vpop.f32.mrb[0].mxu0
      %2223 = vmatprep.mubr.bf16.mxu0 0
      %2224 = vmatmul.mubr.bf16.gmra.mrb[0].mxu0 %v2150
      %v2225 = vpop.f32.mrb[0].mxu0
      %v2226 = vadd.f32 0.0, %v2225
      %v2227 = vpop.f32.mrb[0].mxu0
      %v2228 = vpop.f32.mrb[0].mxu0
      %v2229 = vadd.f32 0.0, %v2228
      %v2230 = vpop.f32.mrb[0].mxu0
      %2231 = vmatprep.mubr.bf16.mxu0 0
      %2232 = vmatmul.mubr.bf16.gmra.mrb[0].mxu0 %v2153
      %v2233 = vpop.f32.mrb[0].mxu0
      %v2234 = vadd.f32 0.0, %v2233
      %v2235 = vpop.f32.mrb[0].mxu0
      %v2236 = vpop.f32.mrb[0].mxu0
      %v2237 = vadd.f32 0.0, %v2236
      %v2238 = vpop.f32.mrb[0].mxu0
      %2239 = vmatprep.mubr.bf16.mxu0 0
      %2240 = vmatmul.mubr.bf16.gmra.mrb[0].mxu0 %v2156
      %v2241 = vpop.f32.mrb[0].mxu0
      %v2242 = vadd.f32 0.0, %v2241
      %v2243 = vpop.f32.mrb[0].mxu0
      %v2244 = vpop.f32.mrb[0].mxu0
      %v2245 = vadd.f32 0.0, %v2244
      %v2246 = vpop.f32.mrb[0].mxu0
      %2247 = vmatprep.mubr.bf16.mxu0 0
      %2248 = vmatmul.mubr.bf16.gmra.mrb[0].mxu0 %v2159
      %v2249 = vpop.f32.mrb[0].mxu0
      %v2250 = vadd.f32 0.0, %v2249
      %v2251 = vpop.f32.mrb[0].mxu0
      %v2252 = vpop.f32.mrb[0].mxu0
      %v2253 = vadd.f32 0.0, %v2252
      %v2254 = vpop.f32.mrb[0].mxu0
      %2255 = vmatprep.mubr.bf16.mxu0 0
      %2256 = vmatmul.mubr.bf16.gmra.mrb[0].mxu0 %v2162
      %v2257 = vpop.f32.mrb[0].mxu0
      %v2258 = vadd.f32 0.0, %v2257
      %v2259 = vpop.f32.mrb[0].mxu0
      %v2260 = vpop.f32.mrb[0].mxu0
      %v2261 = vadd.f32 0.0, %v2260
      %v2262 = vpop.f32.mrb[0].mxu0
      %2263 = vdwg.mxu0
      %v2264 = vadd.f32 %v2034, %v2202
      %v2265 = vadd.f32 %v2035, %v2205
      %v2266 = vadd.f32 %v2036, %v2210
      %v2267 = vadd.f32 %v2037, %v2213
      %v2268 = vadd.f32 %v2038, %v2218
      %v2269 = vadd.f32 %v2039, %v2221
      %v2270 = vadd.f32 %v2040, %v2226
      %v2271 = vadd.f32 %v2041, %v2229
      %v2272 = vadd.f32 %v2042, %v2234
      %v2273 = vadd.f32 %v2043, %v2237
      %v2274 = vadd.f32 %v2044, %v2242
      %v2275 = vadd.f32 %v2045, %v2245
      %v2276 = vadd.f32 %v2046, %v2250
      %v2277 = vadd.f32 %v2047, %v2253
      %v2278 = vadd.f32 %v2048, %v2258
      %v2279 = vadd.f32 %v2049, %v2261
      %2280 = vset.pattern.permute.xlu0 7
      %2281 = vperm.xlu0 %2280, %v676
      %v2282 = vpop.permute.xlu0 %2281
      %2284 = vset.pattern.permute.xlu0 7
      %2285 = vperm.xlu0 %2284, %v677
      %v2286 = vpop.permute.xlu0 %2285
      %2288 = vset.pattern.permute.xlu0 7
      %2289 = vperm.xlu0 %2288, %v678
      %v2290 = vpop.permute.xlu0 %2289
      %2292 = vset.pattern.permute.xlu0 7
      %2293 = vperm.xlu0 %2292, %v679
      %v2294 = vpop.permute.xlu0 %2293
      %2296 = vset.pattern.permute.xlu0 7
      %2297 = vperm.xlu0 %2296, %v680
      %v2298 = vpop.permute.xlu0 %2297
      %2300 = vset.pattern.permute.xlu0 7
      %2301 = vperm.xlu0 %2300, %v681
      %v2302 = vpop.permute.xlu0 %2301
      %2304 = vset.pattern.permute.xlu0 7
      %2305 = vperm.xlu0 %2304, %v682
      %v2306 = vpop.permute.xlu0 %2305
      %2308 = vset.pattern.permute.xlu0 7
      %2309 = vperm.xlu0 %2308, %v683
      %v2310 = vpop.permute.xlu0 %2309
      %2312 = vset.pattern.permute.xlu0 7
      %2313 = vperm.xlu0 %2312, %v684
      %v2314 = vpop.permute.xlu0 %2313
      %2316 = vset.pattern.permute.xlu0 7
      %2317 = vperm.xlu0 %2316, %v685
      %v2318 = vpop.permute.xlu0 %2317
      %2320 = vset.pattern.permute.xlu0 7
      %2321 = vperm.xlu0 %2320, %v686
      %v2322 = vpop.permute.xlu0 %2321
      %2324 = vset.pattern.permute.xlu0 7
      %2325 = vperm.xlu0 %2324, %v687
      %v2326 = vpop.permute.xlu0 %2325
      %2328 = vset.pattern.permute.xlu0 7
      %2329 = vperm.xlu0 %2328, %v688
      %v2330 = vpop.permute.xlu0 %2329
      %2332 = vset.pattern.permute.xlu0 7
      %2333 = vperm.xlu0 %2332, %v689
      %v2334 = vpop.permute.xlu0 %2333
      %2336 = vset.pattern.permute.xlu0 7
      %2337 = vperm.xlu0 %2336, %v690
      %v2338 = vpop.permute.xlu0 %2337
      %2340 = vset.pattern.permute.xlu0 7
      %2341 = vperm.xlu0 %2340, %v691
      %v2342 = vpop.permute.xlu0 %2341
      %v2344 = vmul.f32 %v609, %v2282
      %v2345 = vmul.f32 %v614, %v2286
      %v2346 = vmul.f32 %v617, %v2290
      %v2347 = vmul.f32 %v622, %v2294
      %v2348 = vmul.f32 %v625, %v2298
      %v2349 = vmul.f32 %v630, %v2302
      %v2350 = vmul.f32 %v633, %v2306
      %v2351 = vmul.f32 %v638, %v2310
      %v2352 = vmul.f32 %v641, %v2314
      %v2353 = vmul.f32 %v646, %v2318
      %v2354 = vmul.f32 %v649, %v2322
      %v2355 = vmul.f32 %v654, %v2326
      %v2356 = vmul.f32 %v657, %v2330
      %v2357 = vmul.f32 %v662, %v2334
      %v2358 = vmul.f32 %v665, %v2338
      %v2359 = vmul.f32 %v606, %v2342
      %v2360 = vpack.c.bf16 %v2345, %v2344
      %v2361 = vpack.c.bf16 %v2347, %v2346
      %v2362 = vpack.c.bf16 %v2349, %v2348
      %v2363 = vpack.c.bf16 %v2351, %v2350
      %v2364 = vpack.c.bf16 %v2353, %v2352
      %v2365 = vpack.c.bf16 %v2355, %v2354
      %v2366 = vpack.c.bf16 %v2357, %v2356
      %v2367 = vpack.c.bf16 %v2359, %v2358
      %s2368 = scalar_lea.vmem %s435, 28
      %v2369 = vld [vmem:[%s2368] sm:$0xf]
      %v2371 = vsel %vm935, %v2360, 0
      %v2374 = vsel %vm935, %v2361, 0
      %v2377 = vsel %vm935, %v2362, 0
      %v2380 = vsel %vm935, %v2363, 0
      %v2383 = vsel %vm935, %v2364, 0
      %v2386 = vsel %vm935, %v2365, 0
      %v2389 = vsel %vm935, %v2366, 0
      %v2392 = vsel %vm935, %v2367, 0
      %v2395 = vsel %vm960, %v2369, 0
      %2397 = vmatprep.subr.bf16.mxu0 0
      %2398 = vmatpush1.bf16.msra.mxu0 %v2395
      %2399 = vmatprep.subr.bf16.mxu0 0
      %2400 = vmatpush1.bf16.msra.mxu0 0
      %2401 = vmatprep.subr.bf16.mxu0 0
      %2402 = vmatpush1.bf16.msra.mxu0 0
      %2403 = vmatprep.subr.bf16.mxu0 0
      %2404 = vmatpush1.bf16.msra.mxu0 0
      %2405 = vmatprep.subr.bf16.mxu0 0
      %2406 = vmatpush1.bf16.msra.mxu0 0
      %2407 = vmatprep.subr.bf16.mxu0 0
      %2408 = vmatpush1.bf16.msra.mxu0 0
      %2409 = vmatprep.subr.bf16.mxu0 0
      %2410 = vmatpush1.bf16.msra.mxu0 0
      %2411 = vmatprep.subr.bf16.mxu0 0
      %2412 = vmatpush1.bf16.msra.mxu0 0
      %2413 = vmatprep.subr.bf16.mxu0 0
      %2414 = vmatpush1.bf16.msra.mxu0 0
      %2415 = vmatprep.subr.bf16.mxu0 0
      %2416 = vmatpush1.bf16.msra.mxu0 0
      %2417 = vmatprep.subr.bf16.mxu0 0
      %2418 = vmatpush1.bf16.msra.mxu0 0
      %2419 = vmatprep.subr.bf16.mxu0 0
      %2420 = vmatpush1.bf16.msra.mxu0 0
      %2421 = vmatprep.subr.bf16.mxu0 0
      %2422 = vmatpush1.bf16.msra.mxu0 0
      %2423 = vmatprep.subr.bf16.mxu0 0
      %2424 = vmatpush1.bf16.msra.mxu0 0
      %2425 = vmatprep.subr.bf16.mxu0 0
      %2426 = vmatpush1.bf16.msra.mxu0 0
      %2427 = vmatprep.subr.bf16.mxu0 0
      %2428 = vmatpush1.bf16.msra.mxu0 0
      %2429 = vmatprep.mubr.bf16.mxu0 0
      %2430 = vmatmul.mubr.bf16.gmra.mrb[0].mxu0 %v2371
      %v2431 = vpop.f32.mrb[0].mxu0
      %v2432 = vadd.f32 0.0, %v2431
      %v2433 = vpop.f32.mrb[0].mxu0
      %v2434 = vpop.f32.mrb[0].mxu0
      %v2435 = vadd.f32 0.0, %v2434
      %v2436 = vpop.f32.mrb[0].mxu0
      %2437 = vmatprep.mubr.bf16.mxu0 0
      %2438 = vmatmul.mubr.bf16.gmra.mrb[0].mxu0 %v2374
      %v2439 = vpop.f32.mrb[0].mxu0
      %v2440 = vadd.f32 0.0, %v2439
      %v2441 = vpop.f32.mrb[0].mxu0
      %v2442 = vpop.f32.mrb[0].mxu0
      %v2443 = vadd.f32 0.0, %v2442
      %v2444 = vpop.f32.mrb[0].mxu0
      %2445 = vmatprep.mubr.bf16.mxu0 0
      %2446 = vmatmul.mubr.bf16.gmra.mrb[0].mxu0 %v2377
      %v2447 = vpop.f32.mrb[0].mxu0
      %v2448 = vadd.f32 0.0, %v2447
      %v2449 = vpop.f32.mrb[0].mxu0
      %v2450 = vpop.f32.mrb[0].mxu0
      %v2451 = vadd.f32 0.0, %v2450
      %v2452 = vpop.f32.mrb[0].mxu0
      %2453 = vmatprep.mubr.bf16.mxu0 0
      %2454 = vmatmul.mubr.bf16.gmra.mrb[0].mxu0 %v2380
      %v2455 = vpop.f32.mrb[0].mxu0
      %v2456 = vadd.f32 0.0, %v2455
      %v2457 = vpop.f32.mrb[0].mxu0
      %v2458 = vpop.f32.mrb[0].mxu0
      %v2459 = vadd.f32 0.0, %v2458
      %v2460 = vpop.f32.mrb[0].mxu0
      %2461 = vmatprep.mubr.bf16.mxu0 0
      %2462 = vmatmul.mubr.bf16.gmra.mrb[0].mxu0 %v2383
      %v2463 = vpop.f32.mrb[0].mxu0
      %v2464 = vadd.f32 0.0, %v2463
      %v2465 = vpop.f32.mrb[0].mxu0
      %v2466 = vpop.f32.mrb[0].mxu0
      %v2467 = vadd.f32 0.0, %v2466
      %v2468 = vpop.f32.mrb[0].mxu0
      %2469 = vmatprep.mubr.bf16.mxu0 0
      %2470 = vmatmul.mubr.bf16.gmra.mrb[0].mxu0 %v2386
      %v2471 = vpop.f32.mrb[0].mxu0
      %v2472 = vadd.f32 0.0, %v2471
      %v2473 = vpop.f32.mrb[0].mxu0
      %v2474 = vpop.f32.mrb[0].mxu0
      %v2475 = vadd.f32 0.0, %v2474
      %v2476 = vpop.f32.mrb[0].mxu0
      %2477 = vmatprep.mubr.bf16.mxu0 0
      %2478 = vmatmul.mubr.bf16.gmra.mrb[0].mxu0 %v2389
      %v2479 = vpop.f32.mrb[0].mxu0
      %v2480 = vadd.f32 0.0, %v2479
      %v2481 = vpop.f32.mrb[0].mxu0
      %v2482 = vpop.f32.mrb[0].mxu0
      %v2483 = vadd.f32 0.0, %v2482
      %v2484 = vpop.f32.mrb[0].mxu0
      %2485 = vmatprep.mubr.bf16.mxu0 0
      %2486 = vmatmul.mubr.bf16.gmra.mrb[0].mxu0 %v2392
      %v2487 = vpop.f32.mrb[0].mxu0
      %v2488 = vadd.f32 0.0, %v2487
      %v2489 = vpop.f32.mrb[0].mxu0
      %v2490 = vpop.f32.mrb[0].mxu0
      %v2491 = vadd.f32 0.0, %v2490
      %v2492 = vpop.f32.mrb[0].mxu0
      %2493 = vdwg.mxu0
      %v2494 = vadd.f32 %v2264, %v2432
      %v2495 = vadd.f32 %v2265, %v2435
      %v2496 = vadd.f32 %v2266, %v2440
      %v2497 = vadd.f32 %v2267, %v2443
      %v2498 = vadd.f32 %v2268, %v2448
      %v2499 = vadd.f32 %v2269, %v2451
      %v2500 = vadd.f32 %v2270, %v2456
      %v2501 = vadd.f32 %v2271, %v2459
      %v2502 = vadd.f32 %v2272, %v2464
      %v2503 = vadd.f32 %v2273, %v2467
      %v2504 = vadd.f32 %v2274, %v2472
      %v2505 = vadd.f32 %v2275, %v2475
      %v2506 = vadd.f32 %v2276, %v2480
      %v2507 = vadd.f32 %v2277, %v2483
      %v2508 = vadd.f32 %v2278, %v2488
      %v2509 = vadd.f32 %v2279, %v2491
      %2510 = vset.pattern.permute.xlu0 8
      %2511 = vperm.xlu0 %2510, %v676
      %v2512 = vpop.permute.xlu0 %2511
      %2514 = vset.pattern.permute.xlu0 8
      %2515 = vperm.xlu0 %2514, %v677
      %v2516 = vpop.permute.xlu0 %2515
      %2518 = vset.pattern.permute.xlu0 8
      %2519 = vperm.xlu0 %2518, %v678
      %v2520 = vpop.permute.xlu0 %2519
      %2522 = vset.pattern.permute.xlu0 8
      %2523 = vperm.xlu0 %2522, %v679
      %v2524 = vpop.permute.xlu0 %2523
      %2526 = vset.pattern.permute.xlu0 8
      %2527 = vperm.xlu0 %2526, %v680
      %v2528 = vpop.permute.xlu0 %2527
      %2530 = vset.pattern.permute.xlu0 8
      %2531 = vperm.xlu0 %2530, %v681
      %v2532 = vpop.permute.xlu0 %2531
      %2534 = vset.pattern.permute.xlu0 8
      %2535 = vperm.xlu0 %2534, %v682
      %v2536 = vpop.permute.xlu0 %2535
      %2538 = vset.pattern.permute.xlu0 8
      %2539 = vperm.xlu0 %2538, %v683
      %v2540 = vpop.permute.xlu0 %2539
      %2542 = vset.pattern.permute.xlu0 8
      %2543 = vperm.xlu0 %2542, %v684
      %v2544 = vpop.permute.xlu0 %2543
      %2546 = vset.pattern.permute.xlu0 8
      %2547 = vperm.xlu0 %2546, %v685
      %v2548 = vpop.permute.xlu0 %2547
      %2550 = vset.pattern.permute.xlu0 8
      %2551 = vperm.xlu0 %2550, %v686
      %v2552 = vpop.permute.xlu0 %2551
      %2554 = vset.pattern.permute.xlu0 8
      %2555 = vperm.xlu0 %2554, %v687
      %v2556 = vpop.permute.xlu0 %2555
      %2558 = vset.pattern.permute.xlu0 8
      %2559 = vperm.xlu0 %2558, %v688
      %v2560 = vpop.permute.xlu0 %2559
      %2562 = vset.pattern.permute.xlu0 8
      %2563 = vperm.xlu0 %2562, %v689
      %v2564 = vpop.permute.xlu0 %2563
      %2566 = vset.pattern.permute.xlu0 8
      %2567 = vperm.xlu0 %2566, %v690
      %v2568 = vpop.permute.xlu0 %2567
      %2570 = vset.pattern.permute.xlu0 8
      %2571 = vperm.xlu0 %2570, %v691
      %v2572 = vpop.permute.xlu0 %2571
      %v2574 = vmul.f32 %v1215, %v2512
      %v2575 = vmul.f32 %v1214, %v2516
      %v2576 = vmul.f32 %v1213, %v2520
      %v2577 = vmul.f32 %v1212, %v2524
      %v2578 = vmul.f32 %v1211, %v2528
      %v2579 = vmul.f32 %v1210, %v2532
      %v2580 = vmul.f32 %v1209, %v2536
      %v2581 = vmul.f32 %v1208, %v2540
      %v2582 = vmul.f32 %v1207, %v2544
      %v2583 = vmul.f32 %v1206, %v2548
      %v2584 = vmul.f32 %v1205, %v2552
      %v2585 = vmul.f32 %v1204, %v2556
      %v2586 = vmul.f32 %v1203, %v2560
      %v2587 = vmul.f32 %v1202, %v2564
      %v2588 = vmul.f32 %v1217, %v2568
      %v2589 = vmul.f32 %v1216, %v2572
      %v2590 = vpack.c.bf16 %v2575, %v2574
      %v2591 = vpack.c.bf16 %v2577, %v2576
      %v2592 = vpack.c.bf16 %v2579, %v2578
      %v2593 = vpack.c.bf16 %v2581, %v2580
      %v2594 = vpack.c.bf16 %v2583, %v2582
      %v2595 = vpack.c.bf16 %v2585, %v2584
      %v2596 = vpack.c.bf16 %v2587, %v2586
      %v2597 = vpack.c.bf16 %v2589, %v2588
      %s2598 = scalar_lea.vmem %s435, 32
      %v2599 = vld [vmem:[%s2598] sm:$0xf]
      %v2601 = vsel %vm935, %v2590, 0
      %v2604 = vsel %vm935, %v2591, 0
      %v2607 = vsel %vm935, %v2592, 0
      %v2610 = vsel %vm935, %v2593, 0
      %v2613 = vsel %vm935, %v2594, 0
      %v2616 = vsel %vm935, %v2595, 0
      %v2619 = vsel %vm935, %v2596, 0
      %v2622 = vsel %vm935, %v2597, 0
      %v2625 = vsel %vm960, %v2599, 0
      %2627 = vmatprep.subr.bf16.mxu0 0
      %2628 = vmatpush1.bf16.msra.mxu0 %v2625
      %2629 = vmatprep.subr.bf16.mxu0 0
      %2630 = vmatpush1.bf16.msra.mxu0 0
      %2631 = vmatprep.subr.bf16.mxu0 0
      %2632 = vmatpush1.bf16.msra.mxu0 0
      %2633 = vmatprep.subr.bf16.mxu0 0
      %2634 = vmatpush1.bf16.msra.mxu0 0
      %2635 = vmatprep.subr.bf16.mxu0 0
      %2636 = vmatpush1.bf16.msra.mxu0 0
      %2637 = vmatprep.subr.bf16.mxu0 0
      %2638 = vmatpush1.bf16.msra.mxu0 0
      %2639 = vmatprep.subr.bf16.mxu0 0
      %2640 = vmatpush1.bf16.msra.mxu0 0
      %2641 = vmatprep.subr.bf16.mxu0 0
      %2642 = vmatpush1.bf16.msra.mxu0 0
      %2643 = vmatprep.subr.bf16.mxu0 0
      %2644 = vmatpush1.bf16.msra.mxu0 0
      %2645 = vmatprep.subr.bf16.mxu0 0
      %2646 = vmatpush1.bf16.msra.mxu0 0
      %2647 = vmatprep.subr.bf16.mxu0 0
      %2648 = vmatpush1.bf16.msra.mxu0 0
      %2649 = vmatprep.subr.bf16.mxu0 0
      %2650 = vmatpush1.bf16.msra.mxu0 0
      %2651 = vmatprep.subr.bf16.mxu0 0
      %2652 = vmatpush1.bf16.msra.mxu0 0
      %2653 = vmatprep.subr.bf16.mxu0 0
      %2654 = vmatpush1.bf16.msra.mxu0 0
      %2655 = vmatprep.subr.bf16.mxu0 0
      %2656 = vmatpush1.bf16.msra.mxu0 0
      %2657 = vmatprep.subr.bf16.mxu0 0
      %2658 = vmatpush1.bf16.msra.mxu0 0
      %2659 = vmatprep.mubr.bf16.mxu0 0
      %2660 = vmatmul.mubr.bf16.gmra.mrb[0].mxu0 %v2601
      %v2661 = vpop.f32.mrb[0].mxu0
      %v2662 = vadd.f32 0.0, %v2661
      %v2663 = vpop.f32.mrb[0].mxu0
      %v2664 = vpop.f32.mrb[0].mxu0
      %v2665 = vadd.f32 0.0, %v2664
      %v2666 = vpop.f32.mrb[0].mxu0
      %2667 = vmatprep.mubr.bf16.mxu0 0
      %2668 = vmatmul.mubr.bf16.gmra.mrb[0].mxu0 %v2604
      %v2669 = vpop.f32.mrb[0].mxu0
      %v2670 = vadd.f32 0.0, %v2669
      %v2671 = vpop.f32.mrb[0].mxu0
      %v2672 = vpop.f32.mrb[0].mxu0
      %v2673 = vadd.f32 0.0, %v2672
      %v2674 = vpop.f32.mrb[0].mxu0
      %2675 = vmatprep.mubr.bf16.mxu0 0
      %2676 = vmatmul.mubr.bf16.gmra.mrb[0].mxu0 %v2607
      %v2677 = vpop.f32.mrb[0].mxu0
      %v2678 = vadd.f32 0.0, %v2677
      %v2679 = vpop.f32.mrb[0].mxu0
      %v2680 = vpop.f32.mrb[0].mxu0
      %v2681 = vadd.f32 0.0, %v2680
      %v2682 = vpop.f32.mrb[0].mxu0
      %2683 = vmatprep.mubr.bf16.mxu0 0
      %2684 = vmatmul.mubr.bf16.gmra.mrb[0].mxu0 %v2610
      %v2685 = vpop.f32.mrb[0].mxu0
      %v2686 = vadd.f32 0.0, %v2685
      %v2687 = vpop.f32.mrb[0].mxu0
      %v2688 = vpop.f32.mrb[0].mxu0
      %v2689 = vadd.f32 0.0, %v2688
      %v2690 = vpop.f32.mrb[0].mxu0
      %2691 = vmatprep.mubr.bf16.mxu0 0
      %2692 = vmatmul.mubr.bf16.gmra.mrb[0].mxu0 %v2613
      %v2693 = vpop.f32.mrb[0].mxu0
      %v2694 = vadd.f32 0.0, %v2693
      %v2695 = vpop.f32.mrb[0].mxu0
      %v2696 = vpop.f32.mrb[0].mxu0
      %v2697 = vadd.f32 0.0, %v2696
      %v2698 = vpop.f32.mrb[0].mxu0
      %2699 = vmatprep.mubr.bf16.mxu0 0
      %2700 = vmatmul.mubr.bf16.gmra.mrb[0].mxu0 %v2616
      %v2701 = vpop.f32.mrb[0].mxu0
      %v2702 = vadd.f32 0.0, %v2701
      %v2703 = vpop.f32.mrb[0].mxu0
      %v2704 = vpop.f32.mrb[0].mxu0
      %v2705 = vadd.f32 0.0, %v2704
      %v2706 = vpop.f32.mrb[0].mxu0
      %2707 = vmatprep.mubr.bf16.mxu0 0
      %2708 = vmatmul.mubr.bf16.gmra.mrb[0].mxu0 %v2619
      %v2709 = vpop.f32.mrb[0].mxu0
      %v2710 = vadd.f32 0.0, %v2709
      %v2711 = vpop.f32.mrb[0].mxu0
      %v2712 = vpop.f32.mrb[0].mxu0
      %v2713 = vadd.f32 0.0, %v2712
      %v2714 = vpop.f32.mrb[0].mxu0
      %2715 = vmatprep.mubr.bf16.mxu0 0
      %2716 = vmatmul.mubr.bf16.gmra.mrb[0].mxu0 %v2622
      %v2717 = vpop.f32.mrb[0].mxu0
      %v2718 = vadd.f32 0.0, %v2717
      %v2719 = vpop.f32.mrb[0].mxu0
      %v2720 = vpop.f32.mrb[0].mxu0
      %v2721 = vadd.f32 0.0, %v2720
      %v2722 = vpop.f32.mrb[0].mxu0
      %2723 = vdwg.mxu0
      %v2724 = vadd.f32 %v2494, %v2662
      %v2725 = vadd.f32 %v2495, %v2665
      %v2726 = vadd.f32 %v2496, %v2670
      %v2727 = vadd.f32 %v2497, %v2673
      %v2728 = vadd.f32 %v2498, %v2678
      %v2729 = vadd.f32 %v2499, %v2681
      %v2730 = vadd.f32 %v2500, %v2686
      %v2731 = vadd.f32 %v2501, %v2689
      %v2732 = vadd.f32 %v2502, %v2694
      %v2733 = vadd.f32 %v2503, %v2697
      %v2734 = vadd.f32 %v2504, %v2702
      %v2735 = vadd.f32 %v2505, %v2705
      %v2736 = vadd.f32 %v2506, %v2710
      %v2737 = vadd.f32 %v2507, %v2713
      %v2738 = vadd.f32 %v2508, %v2718
      %v2739 = vadd.f32 %v2509, %v2721
      %v2740 = vpack.c.bf16 %v2725, %v2724
      %v2741 = vpack.c.bf16 %v2727, %v2726
      %v2742 = vpack.c.bf16 %v2729, %v2728
      %v2743 = vpack.c.bf16 %v2731, %v2730
      %v2744 = vpack.c.bf16 %v2733, %v2732
      %v2745 = vpack.c.bf16 %v2735, %v2734
      %v2746 = vpack.c.bf16 %v2737, %v2736
      %v2747 = vpack.c.bf16 %v2739, %v2738
      %2756 = vrot.lane.b32.xlu0 %v668, 120
      %v2757 = vpop.permute.xlu0 %2756
      %2758 = vrot.lane.b32.xlu0 %v669, 120
      %v2759 = vpop.permute.xlu0 %2758
      %2760 = vrot.lane.b32.xlu0 %v670, 120
      %v2761 = vpop.permute.xlu0 %2760
      %2762 = vrot.lane.b32.xlu0 %v671, 120
      %v2763 = vpop.permute.xlu0 %2762
      %2764 = vrot.lane.b32.xlu0 %v672, 120
      %v2765 = vpop.permute.xlu0 %2764
      %2766 = vrot.lane.b32.xlu0 %v673, 120
      %v2767 = vpop.permute.xlu0 %2766
      %2768 = vrot.lane.b32.xlu0 %v674, 120
      %v2769 = vpop.permute.xlu0 %2768
      %2770 = vrot.lane.b32.xlu0 %v675, 120
      %v2771 = vpop.permute.xlu0 %2770
      %v2775 = vunpack.c.l.b16 %v693
      %v2776 = vunpack.c.l.b16 %v694
      %v2777 = vunpack.c.l.b16 %v695
      %v2778 = vpack.c.b16 %v2776, %v2775
      %v2779 = vpack.c.b16 %v2777, %v2777
      %vm2781 = vcmask 195584
      %v2783 = vsel %vm2781, %v2757, 0
      %v2786 = vsel %vm2781, %v2759, 0
      %v2789 = vsel %vm2781, %v2761, 0
      %v2792 = vsel %vm2781, %v2763, 0
      %v2795 = vsel %vm2781, %v2765, 0
      %v2798 = vsel %vm2781, %v2767, 0
      %v2801 = vsel %vm2781, %v2769, 0
      %v2804 = vsel %vm2781, %v2771, 0
      %v2807 = vsel %vm960, %v2779, 0
      %2809 = vmatprep.subr.bf16.mxu0 0
      %2810 = vmatpush1.bf16.msra.mxu0 %v2778
      %2811 = vmatprep.subr.bf16.mxu0 0
      %2812 = vmatpush1.bf16.msra.mxu0 %v2807
      %2813 = vmatprep.subr.bf16.mxu0 0
      %2814 = vmatpush1.bf16.msra.mxu0 0
      %2815 = vmatprep.subr.bf16.mxu0 0
      %2816 = vmatpush1.bf16.msra.mxu0 0
      %2817 = vmatprep.subr.bf16.mxu0 0
      %2818 = vmatpush1.bf16.msra.mxu0 0
      %2819 = vmatprep.subr.bf16.mxu0 0
      %2820 = vmatpush1.bf16.msra.mxu0 0
      %2821 = vmatprep.subr.bf16.mxu0 0
      %2822 = vmatpush1.bf16.msra.mxu0 0
      %2823 = vmatprep.subr.bf16.mxu0 0
      %2824 = vmatpush1.bf16.msra.mxu0 0
      %2825 = vmatprep.subr.bf16.mxu0 0
      %2826 = vmatpush1.bf16.msra.mxu0 0
      %2827 = vmatprep.subr.bf16.mxu0 0
      %2828 = vmatpush1.bf16.msra.mxu0 0
      %2829 = vmatprep.subr.bf16.mxu0 0
      %2830 = vmatpush1.bf16.msra.mxu0 0
      %2831 = vmatprep.subr.bf16.mxu0 0
      %2832 = vmatpush1.bf16.msra.mxu0 0
      %2833 = vmatprep.subr.bf16.mxu0 0
      %2834 = vmatpush1.bf16.msra.mxu0 0
      %2835 = vmatprep.subr.bf16.mxu0 0
      %2836 = vmatpush1.bf16.msra.mxu0 0
      %2837 = vmatprep.subr.bf16.mxu0 0
      %2838 = vmatpush1.bf16.msra.mxu0 0
      %2839 = vmatprep.subr.bf16.mxu0 0
      %2840 = vmatpush1.bf16.msra.mxu0 0
      %2841 = vmatprep.mubr.bf16.mxu0 0
      %2842 = vmatmul.mubr.bf16.gmra.mrb[0].mxu0 %v2783
      %v2843 = vpop.f32.mrb[0].mxu0
      %v2844 = vadd.f32 0.0, %v2843
      %v2845 = vpop.f32.mrb[0].mxu0
      %v2846 = vpop.f32.mrb[0].mxu0
      %v2847 = vadd.f32 0.0, %v2846
      %v2848 = vpop.f32.mrb[0].mxu0
      %2849 = vmatprep.mubr.bf16.mxu0 0
      %2850 = vmatmul.mubr.bf16.gmra.mrb[0].mxu0 %v2786
      %v2851 = vpop.f32.mrb[0].mxu0
      %v2852 = vadd.f32 0.0, %v2851
      %v2853 = vpop.f32.mrb[0].mxu0
      %v2854 = vpop.f32.mrb[0].mxu0
      %v2855 = vadd.f32 0.0, %v2854
      %v2856 = vpop.f32.mrb[0].mxu0
      %2857 = vmatprep.mubr.bf16.mxu0 0
      %2858 = vmatmul.mubr.bf16.gmra.mrb[0].mxu0 %v2789
      %v2859 = vpop.f32.mrb[0].mxu0
      %v2860 = vadd.f32 0.0, %v2859
      %v2861 = vpop.f32.mrb[0].mxu0
      %v2862 = vpop.f32.mrb[0].mxu0
      %v2863 = vadd.f32 0.0, %v2862
      %v2864 = vpop.f32.mrb[0].mxu0
      %2865 = vmatprep.mubr.bf16.mxu0 0
      %2866 = vmatmul.mubr.bf16.gmra.mrb[0].mxu0 %v2792
      %v2867 = vpop.f32.mrb[0].mxu0
      %v2868 = vadd.f32 0.0, %v2867
      %v2869 = vpop.f32.mrb[0].mxu0
      %v2870 = vpop.f32.mrb[0].mxu0
      %v2871 = vadd.f32 0.0, %v2870
      %v2872 = vpop.f32.mrb[0].mxu0
      %2873 = vmatprep.mubr.bf16.mxu0 0
      %2874 = vmatmul.mubr.bf16.gmra.mrb[0].mxu0 %v2795
      %v2875 = vpop.f32.mrb[0].mxu0
      %v2876 = vadd.f32 0.0, %v2875
      %v2877 = vpop.f32.mrb[0].mxu0
      %v2878 = vpop.f32.mrb[0].mxu0
      %v2879 = vadd.f32 0.0, %v2878
      %v2880 = vpop.f32.mrb[0].mxu0
      %2881 = vmatprep.mubr.bf16.mxu0 0
      %2882 = vmatmul.mubr.bf16.gmra.mrb[0].mxu0 %v2798
      %v2883 = vpop.f32.mrb[0].mxu0
      %v2884 = vadd.f32 0.0, %v2883
      %v2885 = vpop.f32.mrb[0].mxu0
      %v2886 = vpop.f32.mrb[0].mxu0
      %v2887 = vadd.f32 0.0, %v2886
      %v2888 = vpop.f32.mrb[0].mxu0
      %2889 = vmatprep.mubr.bf16.mxu0 0
      %2890 = vmatmul.mubr.bf16.gmra.mrb[0].mxu0 %v2801
      %v2891 = vpop.f32.mrb[0].mxu0
      %v2892 = vadd.f32 0.0, %v2891
      %v2893 = vpop.f32.mrb[0].mxu0
      %v2894 = vpop.f32.mrb[0].mxu0
      %v2895 = vadd.f32 0.0, %v2894
      %v2896 = vpop.f32.mrb[0].mxu0
      %2897 = vmatprep.mubr.bf16.mxu0 0
      %2898 = vmatmul.mubr.bf16.gmra.mrb[0].mxu0 %v2804
      %v2899 = vpop.f32.mrb[0].mxu0
      %v2900 = vadd.f32 0.0, %v2899
      %v2901 = vpop.f32.mrb[0].mxu0
      %v2902 = vpop.f32.mrb[0].mxu0
      %v2903 = vadd.f32 0.0, %v2902
      %v2904 = vpop.f32.mrb[0].mxu0
      %2905 = vdwg.mxu0
      %v2907 = vsel %vm935, %v2740, 0
      %v2910 = vsel %vm935, %v2741, 0
      %v2913 = vsel %vm935, %v2742, 0
      %v2916 = vsel %vm935, %v2743, 0
      %v2919 = vsel %vm935, %v2744, 0
      %v2922 = vsel %vm935, %v2745, 0
      %v2925 = vsel %vm935, %v2746, 0
      %v2928 = vsel %vm935, %v2747, 0
      %v2931 = vsel %vm960, %v692, 0
      %2933 = vmatprep.subr.bf16.mxu0 0
      %2934 = vmatpush1.bf16.msra.mxu0 %v2931
      %2935 = vmatprep.subr.bf16.mxu0 0
      %2936 = vmatpush1.bf16.msra.mxu0 0
      %2937 = vmatprep.subr.bf16.mxu0 0
      %2938 = vmatpush1.bf16.msra.mxu0 0
      %2939 = vmatprep.subr.bf16.mxu0 0
      %2940 = vmatpush1.bf16.msra.mxu0 0
      %2941 = vmatprep.subr.bf16.mxu0 0
      %2942 = vmatpush1.bf16.msra.mxu0 0
      %2943 = vmatprep.subr.bf16.mxu0 0
      %2944 = vmatpush1.bf16.msra.mxu0 0
      %2945 = vmatprep.subr.bf16.mxu0 0
      %2946 = vmatpush1.bf16.msra.mxu0 0
      %2947 = vmatprep.subr.bf16.mxu0 0
      %2948 = vmatpush1.bf16.msra.mxu0 0
      %2949 = vmatprep.subr.bf16.mxu0 0
      %2950 = vmatpush1.bf16.msra.mxu0 0
      %2951 = vmatprep.subr.bf16.mxu0 0
      %2952 = vmatpush1.bf16.msra.mxu0 0
      %2953 = vmatprep.subr.bf16.mxu0 0
      %2954 = vmatpush1.bf16.msra.mxu0 0
      %2955 = vmatprep.subr.bf16.mxu0 0
      %2956 = vmatpush1.bf16.msra.mxu0 0
      %2957 = vmatprep.subr.bf16.mxu0 0
      %2958 = vmatpush1.bf16.msra.mxu0 0
      %2959 = vmatprep.subr.bf16.mxu0 0
      %2960 = vmatpush1.bf16.msra.mxu0 0
      %2961 = vmatprep.subr.bf16.mxu0 0
      %2962 = vmatpush1.bf16.msra.mxu0 0
      %2963 = vmatprep.subr.bf16.mxu0 0
      %2964 = vmatpush1.bf16.msra.mxu0 0
      %2965 = vmatprep.mubr.bf16.mxu0 0
      %2966 = vmatmul.mubr.bf16.gmra.mrb[0].mxu0 %v2907
      %v2967 = vpop.f32.mrb[0].mxu0
      %v2968 = vadd.f32 %v2844, %v2967
      %v2969 = vpop.f32.mrb[0].mxu0
      %v2970 = vpop.f32.mrb[0].mxu0
      %v2971 = vadd.f32 %v2847, %v2970
      %v2972 = vpop.f32.mrb[0].mxu0
      %2973 = vmatprep.mubr.bf16.mxu0 0
      %2974 = vmatmul.mubr.bf16.gmra.mrb[0].mxu0 %v2910
      %v2975 = vpop.f32.mrb[0].mxu0
      %v2976 = vadd.f32 %v2852, %v2975
      %v2977 = vpop.f32.mrb[0].mxu0
      %v2978 = vpop.f32.mrb[0].mxu0
      %v2979 = vadd.f32 %v2855, %v2978
      %v2980 = vpop.f32.mrb[0].mxu0
      %2981 = vmatprep.mubr.bf16.mxu0 0
      %2982 = vmatmul.mubr.bf16.gmra.mrb[0].mxu0 %v2913
      %v2983 = vpop.f32.mrb[0].mxu0
      %v2984 = vadd.f32 %v2860, %v2983
      %v2985 = vpop.f32.mrb[0].mxu0
      %v2986 = vpop.f32.mrb[0].mxu0
      %v2987 = vadd.f32 %v2863, %v2986
      %v2988 = vpop.f32.mrb[0].mxu0
      %2989 = vmatprep.mubr.bf16.mxu0 0
      %2990 = vmatmul.mubr.bf16.gmra.mrb[0].mxu0 %v2916
      %v2991 = vpop.f32.mrb[0].mxu0
      %v2992 = vadd.f32 %v2868, %v2991
      %v2993 = vpop.f32.mrb[0].mxu0
      %v2994 = vpop.f32.mrb[0].mxu0
      %v2995 = vadd.f32 %v2871, %v2994
      %v2996 = vpop.f32.mrb[0].mxu0
      %2997 = vmatprep.mubr.bf16.mxu0 0
      %2998 = vmatmul.mubr.bf16.gmra.mrb[0].mxu0 %v2919
      %v2999 = vpop.f32.mrb[0].mxu0
      %v3000 = vadd.f32 %v2876, %v2999
      %v3001 = vpop.f32.mrb[0].mxu0
      %v3002 = vpop.f32.mrb[0].mxu0
      %v3003 = vadd.f32 %v2879, %v3002
      %v3004 = vpop.f32.mrb[0].mxu0
      %3005 = vmatprep.mubr.bf16.mxu0 0
      %3006 = vmatmul.mubr.bf16.gmra.mrb[0].mxu0 %v2922
      %v3007 = vpop.f32.mrb[0].mxu0
      %v3008 = vadd.f32 %v2884, %v3007
      %v3009 = vpop.f32.mrb[0].mxu0
      %v3010 = vpop.f32.mrb[0].mxu0
      %v3011 = vadd.f32 %v2887, %v3010
      %v3012 = vpop.f32.mrb[0].mxu0
      %3013 = vmatprep.mubr.bf16.mxu0 0
      %3014 = vmatmul.mubr.bf16.gmra.mrb[0].mxu0 %v2925
      %v3015 = vpop.f32.mrb[0].mxu0
      %v3016 = vadd.f32 %v2892, %v3015
      %v3017 = vpop.f32.mrb[0].mxu0
      %v3018 = vpop.f32.mrb[0].mxu0
      %v3019 = vadd.f32 %v2895, %v3018
      %v3020 = vpop.f32.mrb[0].mxu0
      %3021 = vmatprep.mubr.bf16.mxu0 0
      %3022 = vmatmul.mubr.bf16.gmra.mrb[0].mxu0 %v2928
      %v3023 = vpop.f32.mrb[0].mxu0
      %v3024 = vadd.f32 %v2900, %v3023
      %v3025 = vpop.f32.mrb[0].mxu0
      %v3026 = vpop.f32.mrb[0].mxu0
      %v3027 = vadd.f32 %v2903, %v3026
      %v3028 = vpop.f32.mrb[0].mxu0
      %3029 = vdwg.mxu0
      %v3031 = vlaneseq
      %v3032 = vshrl.u32 %v3031, 7
      %v3033 = vsub.s32 0, %v3032
      %v3034 = vrot.slane %v696, %v3033
      %v3036 = vadd.f32 %v2968, %v3034
      %v3037 = vadd.f32 %v2971, %v3034
      %v3038 = vadd.f32 %v2976, %v3034
      %v3039 = vadd.f32 %v2979, %v3034
      %v3040 = vadd.f32 %v2984, %v3034
      %v3041 = vadd.f32 %v2987, %v3034
      %v3042 = vadd.f32 %v2992, %v3034
      %v3043 = vadd.f32 %v2995, %v3034
      %v3044 = vadd.f32 %v3000, %v3034
      %v3045 = vadd.f32 %v3003, %v3034
      %v3046 = vadd.f32 %v3008, %v3034
      %v3047 = vadd.f32 %v3011, %v3034
      %v3048 = vadd.f32 %v3016, %v3034
      %v3049 = vadd.f32 %v3019, %v3034
      %v3050 = vadd.f32 %v3024, %v3034
      %v3051 = vadd.f32 %v3027, %v3034
      %v3052 = vmax.f32 %v3036, 0.0
      %v3053 = vmax.f32 %v3037, 0.0
      %v3054 = vmax.f32 %v3038, 0.0
      %v3055 = vmax.f32 %v3039, 0.0
      %v3056 = vmax.f32 %v3040, 0.0
      %v3057 = vmax.f32 %v3041, 0.0
      %v3058 = vmax.f32 %v3042, 0.0
      %v3059 = vmax.f32 %v3043, 0.0
      %v3060 = vmax.f32 %v3044, 0.0
      %v3061 = vmax.f32 %v3045, 0.0
      %v3062 = vmax.f32 %v3046, 0.0
      %v3063 = vmax.f32 %v3047, 0.0
      %v3064 = vmax.f32 %v3048, 0.0
      %v3065 = vmax.f32 %v3049, 0.0
      %v3066 = vmax.f32 %v3050, 0.0
      %v3067 = vmax.f32 %v3051, 0.0
      %v3068 = vpack.c.bf16 %v3053, %v3052
      %v3069 = vpack.c.bf16 %v3055, %v3054
      %v3070 = vpack.c.bf16 %v3057, %v3056
      %v3071 = vpack.c.bf16 %v3059, %v3058
      %v3072 = vpack.c.bf16 %v3061, %v3060
      %v3073 = vpack.c.bf16 %v3063, %v3062
      %v3074 = vpack.c.bf16 %v3065, %v3064
      %v3075 = vpack.c.bf16 %v3067, %v3066
      %v3084 = vunpack.c.l.b16 %v697
      %v3085 = vunpack.c.l.b16 %v698
      %v3086 = vunpack.c.l.b16 %v699
      %v3087 = vunpack.c.l.b16 %v700
      %v3088 = vunpack.c.l.b16 %v701
      %v3089 = vunpack.c.l.b16 %v702
      %v3090 = vunpack.c.l.b16 %v703
      %v3091 = vunpack.c.l.b16 %v704
      %v3092 = vpack.c.b16 %v3085, %v3084
      %v3093 = vpack.c.b16 %v3087, %v3086
      %v3094 = vpack.c.b16 %v3089, %v3088
      %v3095 = vpack.c.b16 %v3091, %v3090
      %vm3100 = vcmask 523264
      %v3102 = vsel %vm3100, %v3068, 0
      %v3105 = vsel %vm3100, %v3069, 0
      %v3108 = vsel %vm3100, %v3070, 0
      %v3111 = vsel %vm3100, %v3071, 0
      %v3114 = vsel %vm3100, %v3072, 0
      %v3117 = vsel %vm3100, %v3073, 0
      %v3120 = vsel %vm3100, %v3074, 0
      %v3123 = vsel %vm3100, %v3075, 0
      %3125 = vmatprep.subr.bf16.mxu0 0
      %3126 = vmatpush1.bf16.msra.mxu0 %v3092
      %3127 = vmatprep.subr.bf16.mxu0 0
      %3128 = vmatpush1.bf16.msra.mxu0 %v3093
      %3129 = vmatprep.subr.bf16.mxu0 0
      %3130 = vmatpush1.bf16.msra.mxu0 %v3094
      %3131 = vmatprep.subr.bf16.mxu0 0
      %3132 = vmatpush1.bf16.msra.mxu0 %v3095
      %3133 = vmatprep.subr.bf16.mxu0 0
      %3134 = vmatpush1.bf16.msra.mxu0 0
      %3135 = vmatprep.subr.bf16.mxu0 0
      %3136 = vmatpush1.bf16.msra.mxu0 0
      %3137 = vmatprep.subr.bf16.mxu0 0
      %3138 = vmatpush1.bf16.msra.mxu0 0
      %3139 = vmatprep.subr.bf16.mxu0 0
      %3140 = vmatpush1.bf16.msra.mxu0 0
      %3141 = vmatprep.subr.bf16.mxu0 0
      %3142 = vmatpush1.bf16.msra.mxu0 0
      %3143 = vmatprep.subr.bf16.mxu0 0
      %3144 = vmatpush1.bf16.msra.mxu0 0
      %3145 = vmatprep.subr.bf16.mxu0 0
      %3146 = vmatpush1.bf16.msra.mxu0 0
      %3147 = vmatprep.subr.bf16.mxu0 0
      %3148 = vmatpush1.bf16.msra.mxu0 0
      %3149 = vmatprep.subr.bf16.mxu0 0
      %3150 = vmatpush1.bf16.msra.mxu0 0
      %3151 = vmatprep.subr.bf16.mxu0 0
      %3152 = vmatpush1.bf16.msra.mxu0 0
      %3153 = vmatprep.subr.bf16.mxu0 0
      %3154 = vmatpush1.bf16.msra.mxu0 0
      %3155 = vmatprep.subr.bf16.mxu0 0
      %3156 = vmatpush1.bf16.msra.mxu0 0
      %3157 = vmatprep.mubr.bf16.mxu0 0
      %3158 = vmatmul.mubr.bf16.gmra.mrb[0].mxu0 %v3102
      %v3159 = vpop.f32.mrb[0].mxu0
      %v3160 = vadd.f32 0.0, %v3159
      %v3161 = vpop.f32.mrb[0].mxu0
      %v3162 = vpop.f32.mrb[0].mxu0
      %v3163 = vadd.f32 0.0, %v3162
      %v3164 = vpop.f32.mrb[0].mxu0
      %3165 = vmatprep.mubr.bf16.mxu0 0
      %3166 = vmatmul.mubr.bf16.gmra.mrb[0].mxu0 %v3105
      %v3167 = vpop.f32.mrb[0].mxu0
      %v3168 = vadd.f32 0.0, %v3167
      %v3169 = vpop.f32.mrb[0].mxu0
      %v3170 = vpop.f32.mrb[0].mxu0
      %v3171 = vadd.f32 0.0, %v3170
      %v3172 = vpop.f32.mrb[0].mxu0
      %3173 = vmatprep.mubr.bf16.mxu0 0
      %3174 = vmatmul.mubr.bf16.gmra.mrb[0].mxu0 %v3108
      %v3175 = vpop.f32.mrb[0].mxu0
      %v3176 = vadd.f32 0.0, %v3175
      %v3177 = vpop.f32.mrb[0].mxu0
      %v3178 = vpop.f32.mrb[0].mxu0
      %v3179 = vadd.f32 0.0, %v3178
      %v3180 = vpop.f32.mrb[0].mxu0
      %3181 = vmatprep.mubr.bf16.mxu0 0
      %3182 = vmatmul.mubr.bf16.gmra.mrb[0].mxu0 %v3111
      %v3183 = vpop.f32.mrb[0].mxu0
      %v3184 = vadd.f32 0.0, %v3183
      %v3185 = vpop.f32.mrb[0].mxu0
      %v3186 = vpop.f32.mrb[0].mxu0
      %v3187 = vadd.f32 0.0, %v3186
      %v3188 = vpop.f32.mrb[0].mxu0
      %3189 = vmatprep.mubr.bf16.mxu0 0
      %3190 = vmatmul.mubr.bf16.gmra.mrb[0].mxu0 %v3114
      %v3191 = vpop.f32.mrb[0].mxu0
      %v3192 = vadd.f32 0.0, %v3191
      %v3193 = vpop.f32.mrb[0].mxu0
      %v3194 = vpop.f32.mrb[0].mxu0
      %v3195 = vadd.f32 0.0, %v3194
      %v3196 = vpop.f32.mrb[0].mxu0
      %3197 = vmatprep.mubr.bf16.mxu0 0
      %3198 = vmatmul.mubr.bf16.gmra.mrb[0].mxu0 %v3117
      %v3199 = vpop.f32.mrb[0].mxu0
      %v3200 = vadd.f32 0.0, %v3199
      %v3201 = vpop.f32.mrb[0].mxu0
      %v3202 = vpop.f32.mrb[0].mxu0
      %v3203 = vadd.f32 0.0, %v3202
      %v3204 = vpop.f32.mrb[0].mxu0
      %3205 = vmatprep.mubr.bf16.mxu0 0
      %3206 = vmatmul.mubr.bf16.gmra.mrb[0].mxu0 %v3120
      %v3207 = vpop.f32.mrb[0].mxu0
      %v3208 = vadd.f32 0.0, %v3207
      %v3209 = vpop.f32.mrb[0].mxu0
      %v3210 = vpop.f32.mrb[0].mxu0
      %v3211 = vadd.f32 0.0, %v3210
      %v3212 = vpop.f32.mrb[0].mxu0
      %3213 = vmatprep.mubr.bf16.mxu0 0
      %3214 = vmatmul.mubr.bf16.gmra.mrb[0].mxu0 %v3123
      %v3215 = vpop.f32.mrb[0].mxu0
      %v3216 = vadd.f32 0.0, %v3215
      %v3217 = vpop.f32.mrb[0].mxu0
      %v3218 = vpop.f32.mrb[0].mxu0
      %v3219 = vadd.f32 0.0, %v3218
      %v3220 = vpop.f32.mrb[0].mxu0
      %3221 = vdwg.mxu0
      %v3222 = vadd.f32 %v606, %v3160
      %v3223 = vadd.f32 %v609, %v3163
      %v3224 = vadd.f32 %v614, %v3168
      %v3225 = vadd.f32 %v617, %v3171
      %v3226 = vadd.f32 %v622, %v3176
      %v3227 = vadd.f32 %v625, %v3179
      %v3228 = vadd.f32 %v630, %v3184
      %v3229 = vadd.f32 %v633, %v3187
      %v3230 = vadd.f32 %v638, %v3192
      %v3231 = vadd.f32 %v641, %v3195
      %v3232 = vadd.f32 %v646, %v3200
      %v3233 = vadd.f32 %v649, %v3203
      %v3234 = vadd.f32 %v654, %v3208
      %v3235 = vadd.f32 %v657, %v3211
      %v3236 = vadd.f32 %v662, %v3216
      %v3237 = vadd.f32 %v665, %v3219
      %v3238 = vpack.c.bf16 %v3223, %v3222
      %v3239 = vpack.c.bf16 %v3225, %v3224
      %v3240 = vpack.c.bf16 %v3227, %v3226
      %v3241 = vpack.c.bf16 %v3229, %v3228
      %v3242 = vpack.c.bf16 %v3231, %v3230
      %v3243 = vpack.c.bf16 %v3233, %v3232
      %v3244 = vpack.c.bf16 %v3235, %v3234
      %v3245 = vpack.c.bf16 %v3237, %v3236
      %v3254 = vunpack.c.l.b16 %v3238
      %v3255 = vunpack.c.h.b16 %v3238
      %v3256 = vunpack.c.l.b16 %v3239
      %v3257 = vunpack.c.h.b16 %v3239
      %v3258 = vunpack.c.l.b16 %v3240
      %v3259 = vunpack.c.h.b16 %v3240
      %v3260 = vunpack.c.l.b16 %v3241
      %v3261 = vunpack.c.h.b16 %v3241
      %v3262 = vunpack.c.l.b16 %v3242
      %v3263 = vunpack.c.h.b16 %v3242
      %v3264 = vunpack.c.l.b16 %v3243
      %v3265 = vunpack.c.h.b16 %v3243
      %v3266 = vunpack.c.l.b16 %v3244
      %v3267 = vunpack.c.h.b16 %v3244
      %v3268 = vunpack.c.l.b16 %v3245
      %v3269 = vunpack.c.h.b16 %v3245
      %v3270 = vpack.c.b16 %v3254, %v3254
      %v3271 = vpack.c.b16 %v3255, %v3255
      %v3272 = vpack.c.b16 %v3256, %v3256
      %v3273 = vpack.c.b16 %v3257, %v3257
      %v3274 = vpack.c.b16 %v3258, %v3258
      %v3275 = vpack.c.b16 %v3259, %v3259
      %v3276 = vpack.c.b16 %v3260, %v3260
      %v3277 = vpack.c.b16 %v3261, %v3261
      %v3278 = vpack.c.b16 %v3262, %v3262
      %v3279 = vpack.c.b16 %v3263, %v3263
      %v3280 = vpack.c.b16 %v3264, %v3264
      %v3281 = vpack.c.b16 %v3265, %v3265
      %v3282 = vpack.c.b16 %v3266, %v3266
      %v3283 = vpack.c.b16 %v3267, %v3267
      %v3284 = vpack.c.b16 %v3268, %v3268
      %v3285 = vpack.c.b16 %v3269, %v3269
      %vm3302 = vcmask 257024
      %3303 = vst.msk [vmem:[%s457] sm:$0xf] %vm3302, %v3270
      %3304 = vst.msk [vmem:[%s457 + $0x4] sm:$0xf] %vm3302, %v3271
      %3305 = vst.msk [vmem:[%s457 + $0x8] sm:$0xf] %vm3302, %v3272
      %3306 = vst.msk [vmem:[%s457 + $0xc] sm:$0xf] %vm3302, %v3273
      %3307 = vst.msk [vmem:[%s457 + $0x10] sm:$0xf] %vm3302, %v3274
      %3308 = vst.msk [vmem:[%s457 + $0x14] sm:$0xf] %vm3302, %v3275
      %3309 = vst.msk [vmem:[%s457 + $0x18] sm:$0xf] %vm3302, %v3276
      %3310 = vst.msk [vmem:[%s457 + $0x1c] sm:$0xf] %vm3302, %v3277
      %3311 = vst.msk [vmem:[%s457 + $0x20] sm:$0xf] %vm3302, %v3278
      %3312 = vst.msk [vmem:[%s457 + $0x24] sm:$0xf] %vm3302, %v3279
      %3313 = vst.msk [vmem:[%s457 + $0x28] sm:$0xf] %vm3302, %v3280
      %3314 = vst.msk [vmem:[%s457 + $0x2c] sm:$0xf] %vm3302, %v3281
      %3315 = vst.msk [vmem:[%s457 + $0x30] sm:$0xf] %vm3302, %v3282
      %3316 = vst.msk [vmem:[%s457 + $0x34] sm:$0xf] %vm3302, %v3283
      %3317 = vst.msk [vmem:[%s457 + $0x38] sm:$0xf] %vm3302, %v3284
      %3318 = vst.msk [vmem:[%s457 + $0x3c] sm:$0xf] %vm3302, %v3285
      %p3319 = scmp.lt.s32.totalorder %s20, 1
      %s3320 = scalar_select %p3319, %s20, 1
      %s3321 = smul.addr %s3320, 16
      %s3322 = smul.addr %s3321, 4
      %s3323 = scalar_lea.vmem %s9, %s3322
      // Predicated region
      $region57: #{generate_feats_forward.5} parent=55 // pred_check
        %p3324 = pneg %p267
      $region58: #{generate_feats_forward.5} parent=55 // pred_check_branch
        %3326 = sbr.rel (%p3324) target = $region60
      $region59: #{generate_feats_forward.5} parent=55 // pred_region
        _
      $region60: #{generate_feats_forward.5} parent=55 // pred_fallthru
        _
    $region56: #{generate_feats_forward.5} parent=5 // pred_fallthru
      _
    %p3327 = scmp.le.s32.totalorder 2, %s15
    // Predicated region
    $region61: #{generate_feats_forward.5} parent=5 // pred_check
      %p3328 = pneg %p3327
    $region62: #{generate_feats_forward.5} parent=5 // pred_check_branch
      %3330 = sbr.rel (%p3328) target = $region64
    $region63: #{generate_feats_forward.5} parent=5 // pred_region
      %s3331 = ssub.s32 %s15, 2
      // Predicated region
      $region65: #{generate_feats_forward.5} parent=63 // pred_check
        %p3332 = pneg %p273
      $region66: #{generate_feats_forward.5} parent=63 // pred_check_branch
        %3334 = sbr.rel (%p3332) target = $region68
      $region67: #{generate_feats_forward.5} parent=63 // pred_region
        %p3335 = scmp.lt.s32.totalorder %s21, 1
        %s3336 = scalar_select %p3335, %s21, 1
        %s3337 = smul.addr %s3336, 16
        %s3338 = smul.addr %s3337, 4
        %s3339 = scalar_lea.vmem %s9, %s3338
      $region68: #{generate_feats_forward.5} parent=63 // pred_fallthru
        _
    $region64: #{generate_feats_forward.5} parent=5 // pred_fallthru
      _
  $region6: #{generate_feats_forward.5} parent=0 // loop_footer
    %s19 = sadd.s32 1, %s15
  $region7: #{generate_feats_forward.5} parent=0 // loop_footer_branch
    %14 = sbr.rel target = $region3
  $region8: #{generate_feats_forward.5} parent=0 // loop_exit
    _

// kernel: generate_feats_forward.6
$region0: #{generate_feats_forward.6}
  #allocation0 [shape = 'u32[]', space=smem, size = 0x4, offset = 0x4, fixed_abs, tag = 'smem constant byte address 0x4 - core index']
  #allocation1 [shape = 'u32[144,128]{1,0:T(1,128)}', space=vmem, size = 0x12000, scoped, tag = 'internal scratch']
  %s0 = inlined_call_operand.vmem [shape: bf16[2,32,128], index: 0, kind: input, shape index: {}]
  %s1 = inlined_call_operand.vmem [shape: bf16[2,128,64], index: 1, kind: input, shape index: {}]
  %s2 = inlined_call_operand.vmem [shape: f32[2,1,64], index: 2, kind: input, shape index: {}]
  %s3 = inlined_call_operand.vmem [shape: f32[32,9], index: 3, kind: input, shape index: {}]
  %s4 = inlined_call_operand.vmem [shape: bf16[2,9,16,16], index: 4, kind: input, shape index: {}]
  %s5 = inlined_call_operand.vmem [shape: bf16[2,16,128], index: 5, kind: input, shape index: {}]
  %s6 = inlined_call_operand.vmem [shape: bf16[2,48,128], index: 6, kind: input, shape index: {}]
  %s7 = inlined_call_operand.vmem [shape: f32[2,1,128], index: 7, kind: input, shape index: {}]
  %s8 = inlined_call_operand.vmem [shape: bf16[2,128,64], index: 8, kind: input, shape index: {}]
  %s9 = inlined_call_operand.vmem [shape: bf16[2,32,64], index: 9, kind: output, shape index: {}]
  %s10 = sld [smem:[#allocation0]]
  $region69: #{generate_feats_forward.6} parent=0
    _
  %s12 = ssub.s32 1, %s10
  %s13 = scalar_select 0, %s12, %s10
  loop: start=0, step=1, limit=4
  $region2: #{generate_feats_forward.6} parent=0 // loop_pre_header
    _
  $region3: #{generate_feats_forward.6} parent=0 // loop_header
    %s15 = sphi 0, %s19
    %p16 = scmp.ge.s32.totalorder %s15, 4
    %s25 = sphi 0, %s27
    %s28 = sphi 0, %s25
    %s29 = sphi 0, %s28
    %s45 = sphi 0, %s29
    %s51 = sphi 0, %s53
    %s54 = sphi 0, %s51
    %s55 = sphi 0, %s54
    %s71 = sphi 0, %s55
    %s77 = sphi 0, %s79
    %s80 = sphi 0, %s77
    %s81 = sphi 0, %s80
    %s97 = sphi 0, %s81
    %s101 = sphi 0, %s101
    %s103 = sphi 0, %s101
    %s104 = sphi 0, %s103
    %s118 = sphi 0, %s104
    %s124 = sphi 0, %s126
    %s127 = sphi 0, %s124
    %s128 = sphi 0, %s127
    %s144 = sphi 0, %s128
    %s150 = sphi 0, %s152
    %s153 = sphi 0, %s150
    %s154 = sphi 0, %s153
    %s170 = sphi 0, %s154
    %s176 = sphi 0, %s178
    %s179 = sphi 0, %s176
    %s180 = sphi 0, %s179
    %s196 = sphi 0, %s180
    %s202 = sphi 0, %s204
    %s205 = sphi 0, %s202
    %s206 = sphi 0, %s205
    %s222 = sphi 0, %s206
    %s228 = sphi 0, %s230
    %s231 = sphi 0, %s228
    %s232 = sphi 0, %s231
    %s248 = sphi 0, %s232
    %s254 = sphi 0, %s256
    %s257 = sphi 0, %s254
    %s258 = sphi 0, %s257
    %s274 = sphi 0, %s258
  $region4: #{generate_feats_forward.6} parent=0 // loop_header_branch
    %18 = sbr.rel (%p16) target = $region8
  $region5: #{generate_feats_forward.6} parent=0 // loop_body
    %s20 = ssub.s32 %s15, 1
    %s21 = ssub.s32 %s15, 2
    %s22 = sadd.s32 %s15, 1
    %s23 = ssub.s32 %s15, %s22
    %p24 = scmp.eq.s32.totalorder %s23, 0
    %s26 = sadd.s32 %s25, 1
    %s27 = scalar_select %p24, %s25, %s26
    %p30 = pneg %p24
    %p31 = scmp.eq.s32.totalorder %s15, 1
    %p32 = por %p30, %p31
    %p33 = scmp.ne.s32.totalorder %s25, %s28
    %p34 = scmp.eq.s32.totalorder %s15, 0
    %p35 = por %p33, %p34
    %p36 = scmp.ne.s32.totalorder %s25, %s28
    %p37 = scmp.eq.s32.totalorder %s20, 1
    %p38 = por %p36, %p37
    %p39 = scmp.ne.s32.totalorder %s28, %s29
    %p40 = scmp.eq.s32.totalorder %s20, 0
    %p41 = por %p39, %p40
    %p42 = scmp.ne.s32.totalorder %s28, %s29
    %p43 = scmp.eq.s32.totalorder %s21, 1
    %p44 = por %p42, %p43
    %p46 = scmp.ne.s32.totalorder %s29, %s45
    %p47 = scmp.eq.s32.totalorder %s21, 0
    %p48 = por %p46, %p47
    %s49 = ssub.s32 %s15, %s22
    %p50 = scmp.eq.s32.totalorder %s49, 0
    %s52 = sadd.s32 %s51, 1
    %s53 = scalar_select %p50, %s51, %s52
    %p56 = pneg %p50
    %p57 = scmp.eq.s32.totalorder %s15, 1
    %p58 = por %p56, %p57
    %p59 = scmp.ne.s32.totalorder %s51, %s54
    %p60 = scmp.eq.s32.totalorder %s15, 0
    %p61 = por %p59, %p60
    %p62 = scmp.ne.s32.totalorder %s51, %s54
    %p63 = scmp.eq.s32.totalorder %s20, 1
    %p64 = por %p62, %p63
    %p65 = scmp.ne.s32.totalorder %s54, %s55
    %p66 = scmp.eq.s32.totalorder %s20, 0
    %p67 = por %p65, %p66
    %p68 = scmp.ne.s32.totalorder %s54, %s55
    %p69 = scmp.eq.s32.totalorder %s21, 1
    %p70 = por %p68, %p69
    %p72 = scmp.ne.s32.totalorder %s55, %s71
    %p73 = scmp.eq.s32.totalorder %s21, 0
    %p74 = por %p72, %p73
    %s75 = ssub.s32 %s15, %s22
    %p76 = scmp.eq.s32.totalorder %s75, 0
    %s78 = sadd.s32 %s77, 1
    %s79 = scalar_select %p76, %s77, %s78
    %p82 = pneg %p76
    %p83 = scmp.eq.s32.totalorder %s15, 1
    %p84 = por %p82, %p83
    %p85 = scmp.ne.s32.totalorder %s77, %s80
    %p86 = scmp.eq.s32.totalorder %s15, 0
    %p87 = por %p85, %p86
    %p88 = scmp.ne.s32.totalorder %s77, %s80
    %p89 = scmp.eq.s32.totalorder %s20, 1
    %p90 = por %p88, %p89
    %p91 = scmp.ne.s32.totalorder %s80, %s81
    %p92 = scmp.eq.s32.totalorder %s20, 0
    %p93 = por %p91, %p92
    %p94 = scmp.ne.s32.totalorder %s80, %s81
    %p95 = scmp.eq.s32.totalorder %s21, 1
    %p96 = por %p94, %p95
    %p98 = scmp.ne.s32.totalorder %s81, %s97
    %p99 = scmp.eq.s32.totalorder %s21, 0
    %p100 = por %p98, %p99
    %s102 = sadd.s32 %s101, 1
    %p105 = scmp.eq.s32.totalorder %s15, 1
    %p106 = scmp.ne.s32.totalorder %s101, %s103
    %p107 = scmp.eq.s32.totalorder %s15, 0
    %p108 = por %p106, %p107
    %p109 = scmp.ne.s32.totalorder %s101, %s103
    %p110 = scmp.eq.s32.totalorder %s20, 1
    %p111 = por %p109, %p110
    %p112 = scmp.ne.s32.totalorder %s103, %s104
    %p113 = scmp.eq.s32.totalorder %s20, 0
    %p114 = por %p112, %p113
    %p115 = scmp.ne.s32.totalorder %s103, %s104
    %p116 = scmp.eq.s32.totalorder %s21, 1
    %p117 = por %p115, %p116
    %p119 = scmp.ne.s32.totalorder %s104, %s118
    %p120 = scmp.eq.s32.totalorder %s21, 0
    %p121 = por %p119, %p120
    %s122 = ssub.s32 %s15, %s22
    %p123 = scmp.eq.s32.totalorder %s122, 0
    %s125 = sadd.s32 %s124, 1
    %s126 = scalar_select %p123, %s124, %s125
    %p129 = pneg %p123
    %p130 = scmp.eq.s32.totalorder %s15, 1
    %p131 = por %p129, %p130
    %p132 = scmp.ne.s32.totalorder %s124, %s127
    %p133 = scmp.eq.s32.totalorder %s15, 0
    %p134 = por %p132, %p133
    %p135 = scmp.ne.s32.totalorder %s124, %s127
    %p136 = scmp.eq.s32.totalorder %s20, 1
    %p137 = por %p135, %p136
    %p138 = scmp.ne.s32.totalorder %s127, %s128
    %p139 = scmp.eq.s32.totalorder %s20, 0
    %p140 = por %p138, %p139
    %p141 = scmp.ne.s32.totalorder %s127, %s128
    %p142 = scmp.eq.s32.totalorder %s21, 1
    %p143 = por %p141, %p142
    %p145 = scmp.ne.s32.totalorder %s128, %s144
    %p146 = scmp.eq.s32.totalorder %s21, 0
    %p147 = por %p145, %p146
    %s148 = ssub.s32 %s15, %s22
    %p149 = scmp.eq.s32.totalorder %s148, 0
    %s151 = sadd.s32 %s150, 1
    %s152 = scalar_select %p149, %s150, %s151
    %p155 = pneg %p149
    %p156 = scmp.eq.s32.totalorder %s15, 1
    %p157 = por %p155, %p156
    %p158 = scmp.ne.s32.totalorder %s150, %s153
    %p159 = scmp.eq.s32.totalorder %s15, 0
    %p160 = por %p158, %p159
    %p161 = scmp.ne.s32.totalorder %s150, %s153
    %p162 = scmp.eq.s32.totalorder %s20, 1
    %p163 = por %p161, %p162
    %p164 = scmp.ne.s32.totalorder %s153, %s154
    %p165 = scmp.eq.s32.totalorder %s20, 0
    %p166 = por %p164, %p165
    %p167 = scmp.ne.s32.totalorder %s153, %s154
    %p168 = scmp.eq.s32.totalorder %s21, 1
    %p169 = por %p167, %p168
    %p171 = scmp.ne.s32.totalorder %s154, %s170
    %p172 = scmp.eq.s32.totalorder %s21, 0
    %p173 = por %p171, %p172
    %s174 = ssub.s32 %s15, %s22
    %p175 = scmp.eq.s32.totalorder %s174, 0
    %s177 = sadd.s32 %s176, 1
    %s178 = scalar_select %p175, %s176, %s177
    %p181 = pneg %p175
    %p182 = scmp.eq.s32.totalorder %s15, 1
    %p183 = por %p181, %p182
    %p184 = scmp.ne.s32.totalorder %s176, %s179
    %p185 = scmp.eq.s32.totalorder %s15, 0
    %p186 = por %p184, %p185
    %p187 = scmp.ne.s32.totalorder %s176, %s179
    %p188 = scmp.eq.s32.totalorder %s20, 1
    %p189 = por %p187, %p188
    %p190 = scmp.ne.s32.totalorder %s179, %s180
    %p191 = scmp.eq.s32.totalorder %s20, 0
    %p192 = por %p190, %p191
    %p193 = scmp.ne.s32.totalorder %s179, %s180
    %p194 = scmp.eq.s32.totalorder %s21, 1
    %p195 = por %p193, %p194
    %p197 = scmp.ne.s32.totalorder %s180, %s196
    %p198 = scmp.eq.s32.totalorder %s21, 0
    %p199 = por %p197, %p198
    %s200 = ssub.s32 %s15, %s22
    %p201 = scmp.eq.s32.totalorder %s200, 0
    %s203 = sadd.s32 %s202, 1
    %s204 = scalar_select %p201, %s202, %s203
    %p207 = pneg %p201
    %p208 = scmp.eq.s32.totalorder %s15, 1
    %p209 = por %p207, %p208
    %p210 = scmp.ne.s32.totalorder %s202, %s205
    %p211 = scmp.eq.s32.totalorder %s15, 0
    %p212 = por %p210, %p211
    %p213 = scmp.ne.s32.totalorder %s202, %s205
    %p214 = scmp.eq.s32.totalorder %s20, 1
    %p215 = por %p213, %p214
    %p216 = scmp.ne.s32.totalorder %s205, %s206
    %p217 = scmp.eq.s32.totalorder %s20, 0
    %p218 = por %p216, %p217
    %p219 = scmp.ne.s32.totalorder %s205, %s206
    %p220 = scmp.eq.s32.totalorder %s21, 1
    %p221 = por %p219, %p220
    %p223 = scmp.ne.s32.totalorder %s206, %s222
    %p224 = scmp.eq.s32.totalorder %s21, 0
    %p225 = por %p223, %p224
    %s226 = ssub.s32 %s15, %s22
    %p227 = scmp.eq.s32.totalorder %s226, 0
    %s229 = sadd.s32 %s228, 1
    %s230 = scalar_select %p227, %s228, %s229
    %p233 = pneg %p227
    %p234 = scmp.eq.s32.totalorder %s15, 1
    %p235 = por %p233, %p234
    %p236 = scmp.ne.s32.totalorder %s228, %s231
    %p237 = scmp.eq.s32.totalorder %s15, 0
    %p238 = por %p236, %p237
    %p239 = scmp.ne.s32.totalorder %s228, %s231
    %p240 = scmp.eq.s32.totalorder %s20, 1
    %p241 = por %p239, %p240
    %p242 = scmp.ne.s32.totalorder %s231, %s232
    %p243 = scmp.eq.s32.totalorder %s20, 0
    %p244 = por %p242, %p243
    %p245 = scmp.ne.s32.totalorder %s231, %s232
    %p246 = scmp.eq.s32.totalorder %s21, 1
    %p247 = por %p245, %p246
    %p249 = scmp.ne.s32.totalorder %s232, %s248
    %p250 = scmp.eq.s32.totalorder %s21, 0
    %p251 = por %p249, %p250
    %s252 = ssub.s32 %s15, %s22
    %p253 = scmp.eq.s32.totalorder %s252, 0
    %s255 = sadd.s32 %s254, 1
    %s256 = scalar_select %p253, %s254, %s255
    %p259 = pneg %p253
    %p260 = scmp.eq.s32.totalorder %s15, 1
    %p261 = por %p259, %p260
    %p262 = scmp.ne.s32.totalorder %s254, %s257
    %p263 = scmp.eq.s32.totalorder %s15, 0
    %p264 = por %p262, %p263
    %p265 = scmp.ne.s32.totalorder %s254, %s257
    %p266 = scmp.eq.s32.totalorder %s20, 1
    %p267 = por %p265, %p266
    %p268 = scmp.ne.s32.totalorder %s257, %s258
    %p269 = scmp.eq.s32.totalorder %s20, 0
    %p270 = por %p268, %p269
    %p271 = scmp.ne.s32.totalorder %s257, %s258
    %p272 = scmp.eq.s32.totalorder %s21, 1
    %p273 = por %p271, %p272
    %p275 = scmp.ne.s32.totalorder %s258, %s274
    %p276 = scmp.eq.s32.totalorder %s21, 0
    %p277 = por %p275, %p276
    %p278 = scmp.le.s32.totalorder 1, %s15
    %p279 = scmp.lt.s32.totalorder %s15, 3
    %p280 = pnand %p278, %p279
    %p281 = pneg %p280
    // Predicated region
    $region9: #{generate_feats_forward.6} parent=5 // pred_check
      _
    $region10: #{generate_feats_forward.6} parent=5 // pred_check_branch
      %283 = sbr.rel (%p280) target = $region12
    $region11: #{generate_feats_forward.6} parent=5 // pred_region
      %s284 = ssub.s32 %s15, 1
      // Predicated region
      $region13: #{generate_feats_forward.6} parent=11 // pred_check
        %p285 = pneg %p114
      $region14: #{generate_feats_forward.6} parent=11 // pred_check_branch
        %287 = sbr.rel (%p285) target = $region16
      $region15: #{generate_feats_forward.6} parent=11 // pred_region
        _
      $region16: #{generate_feats_forward.6} parent=11 // pred_fallthru
        _
    $region12: #{generate_feats_forward.6} parent=5 // pred_fallthru
      _
    %p288 = scmp.lt.s32.totalorder %s15, 2
    // Predicated region
    $region17: #{generate_feats_forward.6} parent=5 // pred_check
      %p289 = pneg %p288
    $region18: #{generate_feats_forward.6} parent=5 // pred_check_branch
      %291 = sbr.rel (%p289) target = $region20
    $region19: #{generate_feats_forward.6} parent=5 // pred_region
      // Predicated region
      $region21: #{generate_feats_forward.6} parent=19 // pred_check
        %p292 = pneg %p35
      $region22: #{generate_feats_forward.6} parent=19 // pred_check_branch
        %294 = sbr.rel (%p292) target = $region24
      $region23: #{generate_feats_forward.6} parent=19 // pred_region
        %p295 = scmp.lt.s32.totalorder %s15, 1
        %s296 = scalar_select %p295, %s15, 1
        %s297 = smul.addr %s296, 4
        %s298 = smul.addr %s297, 4
        %s299 = scalar_lea.vmem %s0, %s298
      $region24: #{generate_feats_forward.6} parent=19 // pred_fallthru
        _
      // Predicated region
      $region25: #{generate_feats_forward.6} parent=19 // pred_check
        %p300 = pneg %p61
      $region26: #{generate_feats_forward.6} parent=19 // pred_check_branch
        %302 = sbr.rel (%p300) target = $region28
      $region27: #{generate_feats_forward.6} parent=19 // pred_region
        %p303 = scmp.lt.s32.totalorder %s15, 1
        %s304 = scalar_select %p303, %s15, 1
        %s305 = smul.addr %s304, 16
        %s306 = smul.addr %s305, 4
        %s307 = scalar_lea.vmem %s1, %s306
      $region28: #{generate_feats_forward.6} parent=19 // pred_fallthru
        _
      // Predicated region
      $region29: #{generate_feats_forward.6} parent=19 // pred_check
        %p308 = pneg %p87
      $region30: #{generate_feats_forward.6} parent=19 // pred_check_branch
        %310 = sbr.rel (%p308) target = $region32
      $region31: #{generate_feats_forward.6} parent=19 // pred_region
        %p311 = scmp.lt.s32.totalorder %s15, 1
        %s312 = scalar_select %p311, %s15, 1
        %s313 = scalar_lea.vmem %s2, %s312
      $region32: #{generate_feats_forward.6} parent=19 // pred_fallthru
        _
      // Predicated region
      $region33: #{generate_feats_forward.6} parent=19 // pred_check
        %p314 = pneg %p134
      $region34: #{generate_feats_forward.6} parent=19 // pred_check_branch
        %316 = sbr.rel (%p314) target = $region36
      $region35: #{generate_feats_forward.6} parent=19 // pred_region
        %p317 = scmp.lt.s32.totalorder %s15, 1
        %s318 = scalar_select %p317, %s15, 1
        %s319 = smul.addr %s318, 18
        %s320 = smul.addr %s319, 4
        %s321 = scalar_lea.vmem %s4, %s320
      $region36: #{generate_feats_forward.6} parent=19 // pred_fallthru
        _
      // Predicated region
      $region37: #{generate_feats_forward.6} parent=19 // pred_check
        %p322 = pneg %p160
      $region38: #{generate_feats_forward.6} parent=19 // pred_check_branch
        %324 = sbr.rel (%p322) target = $region40
      $region39: #{generate_feats_forward.6} parent=19 // pred_region
        %p325 = scmp.lt.s32.totalorder %s15, 1
        %s326 = scalar_select %p325, %s15, 1
        %s327 = smul.addr %s326, 2
        %s328 = smul.addr %s327, 4
        %s329 = scalar_lea.vmem %s5, %s328
      $region40: #{generate_feats_forward.6} parent=19 // pred_fallthru
        _
      // Predicated region
      $region41: #{generate_feats_forward.6} parent=19 // pred_check
        %p330 = pneg %p186
      $region42: #{generate_feats_forward.6} parent=19 // pred_check_branch
        %332 = sbr.rel (%p330) target = $region44
      $region43: #{generate_feats_forward.6} parent=19 // pred_region
        %p333 = scmp.lt.s32.totalorder %s15, 1
        %s334 = scalar_select %p333, %s15, 1
        %s335 = smul.addr %s334, 6
        %s336 = smul.addr %s335, 4
        %s337 = scalar_lea.vmem %s6, %s336
      $region44: #{generate_feats_forward.6} parent=19 // pred_fallthru
        _
      // Predicated region
      $region45: #{generate_feats_forward.6} parent=19 // pred_check
        %p338 = pneg %p212
      $region46: #{generate_feats_forward.6} parent=19 // pred_check_branch
        %340 = sbr.rel (%p338) target = $region48
      $region47: #{generate_feats_forward.6} parent=19 // pred_region
        %p341 = scmp.lt.s32.totalorder %s15, 1
        %s342 = scalar_select %p341, %s15, 1
        %s343 = scalar_lea.vmem %s7, %s342
      $region48: #{generate_feats_forward.6} parent=19 // pred_fallthru
        _
      // Predicated region
      $region49: #{generate_feats_forward.6} parent=19 // pred_check
        %p344 = pneg %p238
      $region50: #{generate_feats_forward.6} parent=19 // pred_check_branch
        %346 = sbr.rel (%p344) target = $region52
      $region51: #{generate_feats_forward.6} parent=19 // pred_region
        %p347 = scmp.lt.s32.totalorder %s15, 1
        %s348 = scalar_select %p347, %s15, 1
        %s349 = smul.addr %s348, 16
        %s350 = smul.addr %s349, 4
        %s351 = scalar_lea.vmem %s8, %s350
      $region52: #{generate_feats_forward.6} parent=19 // pred_fallthru
        _
    $region20: #{generate_feats_forward.6} parent=5 // pred_fallthru
      _
    %p352 = scmp.le.s32.totalorder 1, %s15
    %p353 = scmp.lt.s32.totalorder %s15, 3
    %p354 = pnand %p352, %p353
    %p355 = pneg %p354
    // Predicated region
    $region53: #{generate_feats_forward.6} parent=5 // pred_check
      _
    $region54: #{generate_feats_forward.6} parent=5 // pred_check_branch
      %357 = sbr.rel (%p354) target = $region56
    $region55: #{generate_feats_forward.6} parent=5 // pred_region
      %s358 = ssub.s32 %s15, 1
      %p359 = scmp.lt.s32.totalorder %s20, 1
      %s360 = scalar_select %p359, %s20, 1
      %s361 = smul.addr %s360, 4
      %s362 = smul.addr %s361, 4
      %s363 = scalar_lea.vmem %s0, %s362
      %p364 = pneg %p41
      %p365 = pneg %p38
      %p366 = scmp.lt.s32.totalorder %s20, 1
      %s367 = scalar_select %p366, %s20, 1
      %s368 = smul.addr %s367, 16
      %s369 = smul.addr %s368, 4
      %s370 = scalar_lea.vmem %s1, %s369
      %p371 = pneg %p67
      %p372 = pneg %p64
      %p373 = scmp.lt.s32.totalorder %s20, 1
      %s374 = scalar_select %p373, %s20, 1
      %s375 = scalar_lea.vmem %s2, %s374
      %p376 = pneg %p93
      %p377 = pneg %p90
      %p378 = pneg %p114
      %p379 = pneg %p111
      %p380 = scmp.lt.s32.totalorder %s20, 1
      %s381 = scalar_select %p380, %s20, 1
      %s382 = smul.addr %s381, 18
      %s383 = smul.addr %s382, 4
      %s384 = scalar_lea.vmem %s4, %s383
      %p385 = pneg %p140
      %p386 = pneg %p137
      %p387 = scmp.lt.s32.totalorder %s20, 1
      %s388 = scalar_select %p387, %s20, 1
      %s389 = smul.addr %s388, 2
      %s390 = smul.addr %s389, 4
      %s391 = scalar_lea.vmem %s5, %s390
      %p392 = pneg %p166
      %p393 = pneg %p163
      %p394 = scmp.lt.s32.totalorder %s20, 1
      %s395 = scalar_select %p394, %s20, 1
      %s396 = smul.addr %s395, 6
      %s397 = smul.addr %s396, 4
      %s398 = scalar_lea.vmem %s6, %s397
      %p399 = pneg %p192
      %p400 = pneg %p189
      %p401 = scmp.lt.s32.totalorder %s20, 1
      %s402 = scalar_select %p401, %s20, 1
      %s403 = scalar_lea.vmem %s7, %s402
      %p404 = pneg %p218
      %p405 = pneg %p215
      %p406 = scmp.lt.s32.totalorder %s20, 1
      %s407 = scalar_select %p406, %s20, 1
      %s408 = smul.addr %s407, 16
      %s409 = smul.addr %s408, 4
      %s410 = scalar_lea.vmem %s8, %s409
      %p411 = pneg %p244
      %p412 = pneg %p241
      %p413 = pneg %p270
      %p414 = pneg %p267
      %p415 = scmp.lt.s32.totalorder %s20, 1
      %s416 = scalar_select %p415, %s20, 1
      %s417 = smul.addr %s416, 4
      %s418 = smul.addr %s417, 4
      %s419 = scalar_lea.vmem %s9, %s418
      %p420 = scmp.lt.s32.totalorder %s20, 1
      %s421 = scalar_select %p420, %s20, 1
      %s422 = smul.addr %s421, 4
      %s423 = smul.addr %s422, 4
      %s424 = scalar_lea.vmem %s0, %s423
      %p425 = scmp.lt.s32.totalorder %s20, 1
      %s426 = scalar_select %p425, %s20, 1
      %s427 = smul.addr %s426, 16
      %s428 = smul.addr %s427, 4
      %s429 = scalar_lea.vmem %s1, %s428
      %p430 = scmp.lt.s32.totalorder %s20, 1
      %s431 = scalar_select %p430, %s20, 1
      %s432 = scalar_lea.vmem %s2, %s431
      %p433 = scmp.lt.s32.totalorder %s20, 1
      %s434 = scalar_select %p433, %s20, 1
      %s435 = smul.addr %s434, 18
      %s436 = smul.addr %s435, 4
      %s437 = scalar_lea.vmem %s4, %s436
      %p438 = scmp.lt.s32.totalorder %s20, 1
      %s439 = scalar_select %p438, %s20, 1
      %s440 = smul.addr %s439, 2
      %s441 = smul.addr %s440, 4
      %s442 = scalar_lea.vmem %s5, %s441
      %p443 = scmp.lt.s32.totalorder %s20, 1
      %s444 = scalar_select %p443, %s20, 1
      %s445 = smul.addr %s444, 6
      %s446 = smul.addr %s445, 4
      %s447 = scalar_lea.vmem %s6, %s446
      %p448 = scmp.lt.s32.totalorder %s20, 1
      %s449 = scalar_select %p448, %s20, 1
      %s450 = scalar_lea.vmem %s7, %s449
      %p451 = scmp.lt.s32.totalorder %s20, 1
      %s452 = scalar_select %p451, %s20, 1
      %s453 = smul.addr %s452, 16
      %s454 = smul.addr %s453, 4
      %s455 = scalar_lea.vmem %s8, %s454
      %p456 = scmp.lt.s32.totalorder %s20, 1
      %s457 = scalar_select %p456, %s20, 1
      %s458 = smul.addr %s457, 4
      %s459 = smul.addr %s458, 4
      %s460 = scalar_lea.vmem %s9, %s459
      %v462 = vld [vmem:[%s424] sm:$0xf]
      %v463 = vld [vmem:[%s424 + $0x4] sm:$0xf]
      %v464 = vld [vmem:[%s424 + $0x8] sm:$0xf]
      %v465 = vld [vmem:[%s424 + $0xc] sm:$0xf]
      %v466 = vld [vmem:[%s429] sm:$0xf]
      %v467 = vld [vmem:[%s429 + $0x4] sm:$0xf]
      %v468 = vld [vmem:[%s429 + $0x8] sm:$0xf]
      %v469 = vld [vmem:[%s429 + $0xc] sm:$0xf]
      %v470 = vld [vmem:[%s429 + $0x10] sm:$0xf]
      %v471 = vld [vmem:[%s429 + $0x14] sm:$0xf]
      %v472 = vld [vmem:[%s429 + $0x18] sm:$0xf]
      %v473 = vld [vmem:[%s429 + $0x1c] sm:$0xf]
      %v474 = vld [vmem:[%s429 + $0x20] sm:$0xf]
      %v475 = vld [vmem:[%s429 + $0x24] sm:$0xf]
      %v476 = vld [vmem:[%s429 + $0x28] sm:$0xf]
      %v477 = vld [vmem:[%s429 + $0x2c] sm:$0xf]
      %v478 = vld [vmem:[%s429 + $0x30] sm:$0xf]
      %v479 = vld [vmem:[%s429 + $0x34] sm:$0xf]
      %v480 = vld [vmem:[%s429 + $0x38] sm:$0xf]
      %v481 = vld [vmem:[%s429 + $0x3c] sm:$0xf]
      %v482 = vld [vmem:[%s432] sm:$0x1]
      %v484 = vlaneseq
      %v485 = vshrl.u32 %v484, 7
      %v486 = vsub.s32 0, %v485
      %v487 = vrot.slane %v482, %v486
      %v493 = vunpack.c.l.b16 %v462
      %v494 = vunpack.c.l.b16 %v463
      %v495 = vunpack.c.l.b16 %v464
      %v496 = vunpack.c.l.b16 %v465
      %v497 = vpack.c.b16 %v494, %v493
      %v498 = vpack.c.b16 %v496, %v495
      %v517 = vunpack.c.l.b16 %v466
      %v518 = vunpack.c.l.b16 %v467
      %v519 = vunpack.c.l.b16 %v468
      %v520 = vunpack.c.l.b16 %v469
      %v521 = vunpack.c.l.b16 %v470
      %v522 = vunpack.c.l.b16 %v471
      %v523 = vunpack.c.l.b16 %v472
      %v524 = vunpack.c.l.b16 %v473
      %v525 = vunpack.c.l.b16 %v474
      %v526 = vunpack.c.l.b16 %v475
      %v527 = vunpack.c.l.b16 %v476
      %v528 = vunpack.c.l.b16 %v477
      %v529 = vunpack.c.l.b16 %v478
      %v530 = vunpack.c.l.b16 %v479
      %v531 = vunpack.c.l.b16 %v480
      %v532 = vunpack.c.l.b16 %v481
      %v533 = vpack.c.b16 %v518, %v517
      %v534 = vpack.c.b16 %v520, %v519
      %v535 = vpack.c.b16 %v522, %v521
      %v536 = vpack.c.b16 %v524, %v523
      %v537 = vpack.c.b16 %v526, %v525
      %v538 = vpack.c.b16 %v528, %v527
      %v539 = vpack.c.b16 %v530, %v529
      %v540 = vpack.c.b16 %v532, %v531
      %549 = vmatprep.subr.bf16.mxu0 0
      %550 = vmatpush1.bf16.msra.mxu0 %v533
      %551 = vmatprep.subr.bf16.mxu0 0
      %552 = vmatpush1.bf16.msra.mxu0 %v534
      %553 = vmatprep.subr.bf16.mxu0 0
      %554 = vmatpush1.bf16.msra.mxu0 %v535
      %555 = vmatprep.subr.bf16.mxu0 0
      %556 = vmatpush1.bf16.msra.mxu0 %v536
      %557 = vmatprep.subr.bf16.mxu0 0
      %558 = vmatpush1.bf16.msra.mxu0 %v537
      %559 = vmatprep.subr.bf16.mxu0 0
      %560 = vmatpush1.bf16.msra.mxu0 %v538
      %561 = vmatprep.subr.bf16.mxu0 0
      %562 = vmatpush1.bf16.msra.mxu0 %v539
      %563 = vmatprep.subr.bf16.mxu0 0
      %564 = vmatpush1.bf16.msra.mxu0 %v540
      %565 = vmatprep.subr.bf16.mxu0 0
      %566 = vmatpush1.bf16.msra.mxu0 0
      %567 = vmatprep.subr.bf16.mxu0 0
      %568 = vmatpush1.bf16.msra.mxu0 0
      %569 = vmatprep.subr.bf16.mxu0 0
      %570 = vmatpush1.bf16.msra.mxu0 0
      %571 = vmatprep.subr.bf16.mxu0 0
      %572 = vmatpush1.bf16.msra.mxu0 0
      %573 = vmatprep.subr.bf16.mxu0 0
      %574 = vmatpush1.bf16.msra.mxu0 0
      %575 = vmatprep.subr.bf16.mxu0 0
      %576 = vmatpush1.bf16.msra.mxu0 0
      %577 = vmatprep.subr.bf16.mxu0 0
      %578 = vmatpush1.bf16.msra.mxu0 0
      %579 = vmatprep.subr.bf16.mxu0 0
      %580 = vmatpush1.bf16.msra.mxu0 0
      %581 = vmatprep.mubr.bf16.mxu0 0
      %582 = vmatmul.mubr.bf16.gmra.mrb[0].mxu0 %v497
      %v583 = vpop.f32.mrb[0].mxu0
      %v584 = vadd.f32 %v487, %v583
      %v585 = vpop.f32.mrb[0].mxu0
      %v586 = vpop.f32.mrb[0].mxu0
      %v587 = vadd.f32 %v487, %v586
      %v588 = vpop.f32.mrb[0].mxu0
      %589 = vmatprep.mubr.bf16.mxu0 0
      %590 = vmatmul.mubr.bf16.gmra.mrb[0].mxu0 %v498
      %v591 = vpop.f32.mrb[0].mxu0
      %v592 = vadd.f32 %v487, %v591
      %v593 = vpop.f32.mrb[0].mxu0
      %v594 = vpop.f32.mrb[0].mxu0
      %v595 = vadd.f32 %v487, %v594
      %v596 = vpop.f32.mrb[0].mxu0
      %597 = vdwg.mxu0
      %v598 = vpack.c.bf16 %v587, %v584
      %v599 = vpack.c.bf16 %v595, %v592
      %v600 = vld [vmem:[%s3] sm:$0xff]
      %v601 = vld [vmem:[%s3 + $0x8] sm:$0xff]
      %v602 = vld [vmem:[%s3 + $0x10] sm:$0xff]
      %v603 = vld [vmem:[%s3 + $0x18] sm:$0xff]
      %v604 = vld [vmem:[%s442] sm:$0xf]
      %v605 = vld [vmem:[%s442 + $0x4] sm:$0xf]
      %v606 = vld [vmem:[%s447] sm:$0xf]
      %v607 = vld [vmem:[%s447 + $0x4] sm:$0xf]
      %v608 = vld [vmem:[%s447 + $0x8] sm:$0xf]
      %v609 = vld [vmem:[%s447 + $0xc] sm:$0xf]
      %v610 = vld [vmem:[%s447 + $0x10] sm:$0xf]
      %v611 = vld [vmem:[%s447 + $0x14] sm:$0xf]
      %v612 = vld [vmem:[%s450] sm:$0x1]
      %v613 = vld [vmem:[%s455] sm:$0xf]
      %v614 = vld [vmem:[%s455 + $0x4] sm:$0xf]
      %v615 = vld [vmem:[%s455 + $0x8] sm:$0xf]
      %v616 = vld [vmem:[%s455 + $0xc] sm:$0xf]
      %v617 = vld [vmem:[%s455 + $0x10] sm:$0xf]
      %v618 = vld [vmem:[%s455 + $0x14] sm:$0xf]
      %v619 = vld [vmem:[%s455 + $0x18] sm:$0xf]
      %v620 = vld [vmem:[%s455 + $0x1c] sm:$0xf]
      %v621 = vld [vmem:[%s455 + $0x20] sm:$0xf]
      %v622 = vld [vmem:[%s455 + $0x24] sm:$0xf]
      %v623 = vld [vmem:[%s455 + $0x28] sm:$0xf]
      %v624 = vld [vmem:[%s455 + $0x2c] sm:$0xf]
      %v625 = vld [vmem:[%s455 + $0x30] sm:$0xf]
      %v626 = vld [vmem:[%s455 + $0x34] sm:$0xf]
      %v627 = vld [vmem:[%s455 + $0x38] sm:$0xf]
      %v628 = vld [vmem:[%s455 + $0x3c] sm:$0xf]
      %v629 = vrot.slane %v584, 3
      %v630 = vrot.slane %v587, 3
      %v631 = vrot.slane %v592, 3
      %v632 = vrot.slane %v595, 3
      %v633 = vlaneseq
      %v634 = vshrl.u32 %v633, 7
      %vm635 = vcmp.lt.s32.totalorder %v634, 5
      %v636 = vsel %vm635, %v631, %v632
      %v637 = vsel %vm635, %v630, %v631
      %v638 = vsel %vm635, %v629, %v630
      %v639 = vsel %vm635, %v632, %v629
      %641 = vset.pattern.permute.xlu0 0
      %642 = vperm.xlu0 %641, %v600
      %v643 = vpop.permute.xlu0 %642
      %646 = vset.pattern.permute.xlu0 0
      %647 = vperm.xlu0 %646, %v601
      %v648 = vpop.permute.xlu0 %647
      %651 = vset.pattern.permute.xlu0 0
      %652 = vperm.xlu0 %651, %v602
      %v653 = vpop.permute.xlu0 %652
      %656 = vset.pattern.permute.xlu0 0
      %657 = vperm.xlu0 %656, %v603
      %v658 = vpop.permute.xlu0 %657
      %v660 = vmul.f32 %v639, %v643
      %v661 = vmul.f32 %v638, %v648
      %v662 = vmul.f32 %v637, %v653
      %v663 = vmul.f32 %v636, %v658
      %v664 = vpack.c.bf16 %v661, %v660
      %v665 = vpack.c.bf16 %v663, %v662
      %v666 = vld [vmem:[%s437] sm:$0xf]
      %v667 = vld [vmem:[%s437 + $0x4] sm:$0xf]
      %v668 = vrot.slane %v584, 4
      %v669 = vrot.slane %v587, 4
      %v670 = vrot.slane %v592, 4
      %v671 = vrot.slane %v595, 4
      %vm672 = vcmp.lt.s32.totalorder %v634, 4
      %v673 = vsel %vm672, %v670, %v671
      %v674 = vsel %vm672, %v669, %v670
      %v675 = vsel %vm672, %v668, %v669
      %v676 = vsel %vm672, %v671, %v668
      %677 = vset.pattern.permute.xlu0 1
      %678 = vperm.xlu0 %677, %v600
      %v679 = vpop.permute.xlu0 %678
      %681 = vset.pattern.permute.xlu0 1
      %682 = vperm.xlu0 %681, %v601
      %v683 = vpop.permute.xlu0 %682
      %685 = vset.pattern.permute.xlu0 1
      %686 = vperm.xlu0 %685, %v602
      %v687 = vpop.permute.xlu0 %686
      %689 = vset.pattern.permute.xlu0 1
      %690 = vperm.xlu0 %689, %v603
      %v691 = vpop.permute.xlu0 %690
      %v693 = vmul.f32 %v676, %v679
      %v694 = vmul.f32 %v675, %v683
      %v695 = vmul.f32 %v674, %v687
      %v696 = vmul.f32 %v673, %v691
      %v697 = vpack.c.bf16 %v694, %v693
      %v698 = vpack.c.bf16 %v696, %v695
      %s699 = scalar_lea.vmem %s437, 8
      %v700 = vld [vmem:[%s699] sm:$0xf]
      %v701 = vld [vmem:[%s699 + $0x4] sm:$0xf]
      %v704 = vunpack.c.l.b16 %v700
      %v705 = vunpack.c.l.b16 %v701
      %v706 = vpack.c.b16 %v705, %v704
      %vm708 = vcmask 130048
      %v710 = vsel %vm708, %v697, 0
      %v713 = vsel %vm708, %v698, 0
      %715 = vmatprep.subr.bf16.mxu0 0
      %716 = vmatpush1.bf16.msra.mxu0 %v706
      %717 = vmatprep.subr.bf16.mxu0 0
      %718 = vmatpush1.bf16.msra.mxu0 0
      %719 = vmatprep.subr.bf16.mxu0 0
      %720 = vmatpush1.bf16.msra.mxu0 0
      %721 = vmatprep.subr.bf16.mxu0 0
      %722 = vmatpush1.bf16.msra.mxu0 0
      %723 = vmatprep.subr.bf16.mxu0 0
      %724 = vmatpush1.bf16.msra.mxu0 0
      %725 = vmatprep.subr.bf16.mxu0 0
      %726 = vmatpush1.bf16.msra.mxu0 0
      %727 = vmatprep.subr.bf16.mxu0 0
      %728 = vmatpush1.bf16.msra.mxu0 0
      %729 = vmatprep.subr.bf16.mxu0 0
      %730 = vmatpush1.bf16.msra.mxu0 0
      %731 = vmatprep.subr.bf16.mxu0 0
      %732 = vmatpush1.bf16.msra.mxu0 0
      %733 = vmatprep.subr.bf16.mxu0 0
      %734 = vmatpush1.bf16.msra.mxu0 0
      %735 = vmatprep.subr.bf16.mxu0 0
      %736 = vmatpush1.bf16.msra.mxu0 0
      %737 = vmatprep.subr.bf16.mxu0 0
      %738 = vmatpush1.bf16.msra.mxu0 0
      %739 = vmatprep.subr.bf16.mxu0 0
      %740 = vmatpush1.bf16.msra.mxu0 0
      %741 = vmatprep.subr.bf16.mxu0 0
      %742 = vmatpush1.bf16.msra.mxu0 0
      %743 = vmatprep.subr.bf16.mxu0 0
      %744 = vmatpush1.bf16.msra.mxu0 0
      %745 = vmatprep.subr.bf16.mxu0 0
      %746 = vmatpush1.bf16.msra.mxu0 0
      %747 = vmatprep.mubr.bf16.mxu0 0
      %748 = vmatmul.mubr.bf16.gmra.mrb[0].mxu0 %v710
      %v749 = vpop.f32.mrb[0].mxu0
      %v750 = vadd.f32 0.0, %v749
      %v751 = vpop.f32.mrb[0].mxu0
      %v752 = vpop.f32.mrb[0].mxu0
      %v753 = vadd.f32 0.0, %v752
      %v754 = vpop.f32.mrb[0].mxu0
      %755 = vmatprep.mubr.bf16.mxu0 0
      %756 = vmatmul.mubr.bf16.gmra.mrb[0].mxu0 %v713
      %v757 = vpop.f32.mrb[0].mxu0
      %v758 = vadd.f32 0.0, %v757
      %v759 = vpop.f32.mrb[0].mxu0
      %v760 = vpop.f32.mrb[0].mxu0
      %v761 = vadd.f32 0.0, %v760
      %v762 = vpop.f32.mrb[0].mxu0
      %763 = vdwg.mxu0
      %v766 = vunpack.c.l.b16 %v666
      %v767 = vunpack.c.l.b16 %v667
      %v768 = vpack.c.b16 %v767, %v766
      %v771 = vsel %vm708, %v664, 0
      %v774 = vsel %vm708, %v665, 0
      %776 = vmatprep.subr.bf16.mxu0 0
      %777 = vmatpush1.bf16.msra.mxu0 %v768
      %778 = vmatprep.subr.bf16.mxu0 0
      %779 = vmatpush1.bf16.msra.mxu0 0
      %780 = vmatprep.subr.bf16.mxu0 0
      %781 = vmatpush1.bf16.msra.mxu0 0
      %782 = vmatprep.subr.bf16.mxu0 0
      %783 = vmatpush1.bf16.msra.mxu0 0
      %784 = vmatprep.subr.bf16.mxu0 0
      %785 = vmatpush1.bf16.msra.mxu0 0
      %786 = vmatprep.subr.bf16.mxu0 0
      %787 = vmatpush1.bf16.msra.mxu0 0
      %788 = vmatprep.subr.bf16.mxu0 0
      %789 = vmatpush1.bf16.msra.mxu0 0
      %790 = vmatprep.subr.bf16.mxu0 0
      %791 = vmatpush1.bf16.msra.mxu0 0
      %792 = vmatprep.subr.bf16.mxu0 0
      %793 = vmatpush1.bf16.msra.mxu0 0
      %794 = vmatprep.subr.bf16.mxu0 0
      %795 = vmatpush1.bf16.msra.mxu0 0
      %796 = vmatprep.subr.bf16.mxu0 0
      %797 = vmatpush1.bf16.msra.mxu0 0
      %798 = vmatprep.subr.bf16.mxu0 0
      %799 = vmatpush1.bf16.msra.mxu0 0
      %800 = vmatprep.subr.bf16.mxu0 0
      %801 = vmatpush1.bf16.msra.mxu0 0
      %802 = vmatprep.subr.bf16.mxu0 0
      %803 = vmatpush1.bf16.msra.mxu0 0
      %804 = vmatprep.subr.bf16.mxu0 0
      %805 = vmatpush1.bf16.msra.mxu0 0
      %806 = vmatprep.subr.bf16.mxu0 0
      %807 = vmatpush1.bf16.msra.mxu0 0
      %808 = vmatprep.mubr.bf16.mxu0 0
      %809 = vmatmul.mubr.bf16.gmra.mrb[0].mxu0 %v771
      %v810 = vpop.f32.mrb[0].mxu0
      %v811 = vadd.f32 %v750, %v810
      %v812 = vpop.f32.mrb[0].mxu0
      %v813 = vpop.f32.mrb[0].mxu0
      %v814 = vadd.f32 %v753, %v813
      %v815 = vpop.f32.mrb[0].mxu0
      %816 = vmatprep.mubr.bf16.mxu0 0
      %817 = vmatmul.mubr.bf16.gmra.mrb[0].mxu0 %v774
      %v818 = vpop.f32.mrb[0].mxu0
      %v819 = vadd.f32 %v758, %v818
      %v820 = vpop.f32.mrb[0].mxu0
      %v821 = vpop.f32.mrb[0].mxu0
      %v822 = vadd.f32 %v761, %v821
      %v823 = vpop.f32.mrb[0].mxu0
      %824 = vdwg.mxu0
      %v825 = vrot.slane %v584, 5
      %v826 = vrot.slane %v587, 5
      %v827 = vrot.slane %v592, 5
      %v828 = vrot.slane %v595, 5
      %vm829 = vcmp.lt.s32.totalorder %v634, 3
      %v830 = vsel %vm829, %v827, %v828
      %v831 = vsel %vm829, %v826, %v827
      %v832 = vsel %vm829, %v825, %v826
      %v833 = vsel %vm829, %v828, %v825
      %834 = vset.pattern.permute.xlu0 2
      %835 = vperm.xlu0 %834, %v600
      %v836 = vpop.permute.xlu0 %835
      %838 = vset.pattern.permute.xlu0 2
      %839 = vperm.xlu0 %838, %v601
      %v840 = vpop.permute.xlu0 %839
      %842 = vset.pattern.permute.xlu0 2
      %843 = vperm.xlu0 %842, %v602
      %v844 = vpop.permute.xlu0 %843
      %846 = vset.pattern.permute.xlu0 2
      %847 = vperm.xlu0 %846, %v603
      %v848 = vpop.permute.xlu0 %847
      %v850 = vmul.f32 %v833, %v836
      %v851 = vmul.f32 %v832, %v840
      %v852 = vmul.f32 %v831, %v844
      %v853 = vmul.f32 %v830, %v848
      %v854 = vpack.c.bf16 %v851, %v850
      %v855 = vpack.c.bf16 %v853, %v852
      %s856 = scalar_lea.vmem %s437, 16
      %v857 = vld [vmem:[%s856] sm:$0xf]
      %v858 = vld [vmem:[%s856 + $0x4] sm:$0xf]
      %v861 = vunpack.c.l.b16 %v857
      %v862 = vunpack.c.l.b16 %v858
      %v863 = vpack.c.b16 %v862, %v861
      %v866 = vsel %vm708, %v854, 0
      %v869 = vsel %vm708, %v855, 0
      %871 = vmatprep.subr.bf16.mxu0 0
      %872 = vmatpush1.bf16.msra.mxu0 %v863
      %873 = vmatprep.subr.bf16.mxu0 0
      %874 = vmatpush1.bf16.msra.mxu0 0
      %875 = vmatprep.subr.bf16.mxu0 0
      %876 = vmatpush1.bf16.msra.mxu0 0
      %877 = vmatprep.subr.bf16.mxu0 0
      %878 = vmatpush1.bf16.msra.mxu0 0
      %879 = vmatprep.subr.bf16.mxu0 0
      %880 = vmatpush1.bf16.msra.mxu0 0
      %881 = vmatprep.subr.bf16.mxu0 0
      %882 = vmatpush1.bf16.msra.mxu0 0
      %883 = vmatprep.subr.bf16.mxu0 0
      %884 = vmatpush1.bf16.msra.mxu0 0
      %885 = vmatprep.subr.bf16.mxu0 0
      %886 = vmatpush1.bf16.msra.mxu0 0
      %887 = vmatprep.subr.bf16.mxu0 0
      %888 = vmatpush1.bf16.msra.mxu0 0
      %889 = vmatprep.subr.bf16.mxu0 0
      %890 = vmatpush1.bf16.msra.mxu0 0
      %891 = vmatprep.subr.bf16.mxu0 0
      %892 = vmatpush1.bf16.msra.mxu0 0
      %893 = vmatprep.subr.bf16.mxu0 0
      %894 = vmatpush1.bf16.msra.mxu0 0
      %895 = vmatprep.subr.bf16.mxu0 0
      %896 = vmatpush1.bf16.msra.mxu0 0
      %897 = vmatprep.subr.bf16.mxu0 0
      %898 = vmatpush1.bf16.msra.mxu0 0
      %899 = vmatprep.subr.bf16.mxu0 0
      %900 = vmatpush1.bf16.msra.mxu0 0
      %901 = vmatprep.subr.bf16.mxu0 0
      %902 = vmatpush1.bf16.msra.mxu0 0
      %903 = vmatprep.mubr.bf16.mxu0 0
      %904 = vmatmul.mubr.bf16.gmra.mrb[0].mxu0 %v866
      %v905 = vpop.f32.mrb[0].mxu0
      %v906 = vadd.f32 0.0, %v905
      %v907 = vpop.f32.mrb[0].mxu0
      %v908 = vpop.f32.mrb[0].mxu0
      %v909 = vadd.f32 0.0, %v908
      %v910 = vpop.f32.mrb[0].mxu0
      %911 = vmatprep.mubr.bf16.mxu0 0
      %912 = vmatmul.mubr.bf16.gmra.mrb[0].mxu0 %v869
      %v913 = vpop.f32.mrb[0].mxu0
      %v914 = vadd.f32 0.0, %v913
      %v915 = vpop.f32.mrb[0].mxu0
      %v916 = vpop.f32.mrb[0].mxu0
      %v917 = vadd.f32 0.0, %v916
      %v918 = vpop.f32.mrb[0].mxu0
      %919 = vdwg.mxu0
      %v920 = vadd.f32 %v811, %v906
      %v921 = vadd.f32 %v814, %v909
      %v922 = vadd.f32 %v819, %v914
      %v923 = vadd.f32 %v822, %v917
      %v924 = vrot.slane %v584, 7
      %v925 = vrot.slane %v587, 7
      %v926 = vrot.slane %v592, 7
      %v927 = vrot.slane %v595, 7
      %vm928 = vcmp.lt.s32.totalorder %v634, 1
      %v929 = vsel %vm928, %v926, %v927
      %v930 = vsel %vm928, %v925, %v926
      %v931 = vsel %vm928, %v924, %v925
      %v932 = vsel %vm928, %v927, %v924
      %933 = vset.pattern.permute.xlu0 3
      %934 = vperm.xlu0 %933, %v600
      %v935 = vpop.permute.xlu0 %934
      %937 = vset.pattern.permute.xlu0 3
      %938 = vperm.xlu0 %937, %v601
      %v939 = vpop.permute.xlu0 %938
      %941 = vset.pattern.permute.xlu0 3
      %942 = vperm.xlu0 %941, %v602
      %v943 = vpop.permute.xlu0 %942
      %945 = vset.pattern.permute.xlu0 3
      %946 = vperm.xlu0 %945, %v603
      %v947 = vpop.permute.xlu0 %946
      %v949 = vmul.f32 %v932, %v935
      %v950 = vmul.f32 %v931, %v939
      %v951 = vmul.f32 %v930, %v943
      %v952 = vmul.f32 %v929, %v947
      %v953 = vpack.c.bf16 %v950, %v949
      %v954 = vpack.c.bf16 %v952, %v951
      %s955 = scalar_lea.vmem %s437, 24
      %v956 = vld [vmem:[%s955] sm:$0xf]
      %v957 = vld [vmem:[%s955 + $0x4] sm:$0xf]
      %v960 = vunpack.c.l.b16 %v956
      %v961 = vunpack.c.l.b16 %v957
      %v962 = vpack.c.b16 %v961, %v960
      %v965 = vsel %vm708, %v953, 0
      %v968 = vsel %vm708, %v954, 0
      %970 = vmatprep.subr.bf16.mxu0 0
      %971 = vmatpush1.bf16.msra.mxu0 %v962
      %972 = vmatprep.subr.bf16.mxu0 0
      %973 = vmatpush1.bf16.msra.mxu0 0
      %974 = vmatprep.subr.bf16.mxu0 0
      %975 = vmatpush1.bf16.msra.mxu0 0
      %976 = vmatprep.subr.bf16.mxu0 0
      %977 = vmatpush1.bf16.msra.mxu0 0
      %978 = vmatprep.subr.bf16.mxu0 0
      %979 = vmatpush1.bf16.msra.mxu0 0
      %980 = vmatprep.subr.bf16.mxu0 0
      %981 = vmatpush1.bf16.msra.mxu0 0
      %982 = vmatprep.subr.bf16.mxu0 0
      %983 = vmatpush1.bf16.msra.mxu0 0
      %984 = vmatprep.subr.bf16.mxu0 0
      %985 = vmatpush1.bf16.msra.mxu0 0
      %986 = vmatprep.subr.bf16.mxu0 0
      %987 = vmatpush1.bf16.msra.mxu0 0
      %988 = vmatprep.subr.bf16.mxu0 0
      %989 = vmatpush1.bf16.msra.mxu0 0
      %990 = vmatprep.subr.bf16.mxu0 0
      %991 = vmatpush1.bf16.msra.mxu0 0
      %992 = vmatprep.subr.bf16.mxu0 0
      %993 = vmatpush1.bf16.msra.mxu0 0
      %994 = vmatprep.subr.bf16.mxu0 0
      %995 = vmatpush1.bf16.msra.mxu0 0
      %996 = vmatprep.subr.bf16.mxu0 0
      %997 = vmatpush1.bf16.msra.mxu0 0
      %998 = vmatprep.subr.bf16.mxu0 0
      %999 = vmatpush1.bf16.msra.mxu0 0
      %1000 = vmatprep.subr.bf16.mxu0 0
      %1001 = vmatpush1.bf16.msra.mxu0 0
      %1002 = vmatprep.mubr.bf16.mxu0 0
      %1003 = vmatmul.mubr.bf16.gmra.mrb[0].mxu0 %v965
      %v1004 = vpop.f32.mrb[0].mxu0
      %v1005 = vadd.f32 0.0, %v1004
      %v1006 = vpop.f32.mrb[0].mxu0
      %v1007 = vpop.f32.mrb[0].mxu0
      %v1008 = vadd.f32 0.0, %v1007
      %v1009 = vpop.f32.mrb[0].mxu0
      %1010 = vmatprep.mubr.bf16.mxu0 0
      %1011 = vmatmul.mubr.bf16.gmra.mrb[0].mxu0 %v968
      %v1012 = vpop.f32.mrb[0].mxu0
      %v1013 = vadd.f32 0.0, %v1012
      %v1014 = vpop.f32.mrb[0].mxu0
      %v1015 = vpop.f32.mrb[0].mxu0
      %v1016 = vadd.f32 0.0, %v1015
      %v1017 = vpop.f32.mrb[0].mxu0
      %1018 = vdwg.mxu0
      %v1019 = vadd.f32 %v920, %v1005
      %v1020 = vadd.f32 %v921, %v1008
      %v1021 = vadd.f32 %v922, %v1013
      %v1022 = vadd.f32 %v923, %v1016
      %s1023 = scalar_lea.vmem %s437, 32
      %v1024 = vld [vmem:[%s1023] sm:$0xf]
      %v1025 = vld [vmem:[%s1023 + $0x4] sm:$0xf]
      %v1028 = vunpack.c.l.b16 %v1024
      %v1029 = vunpack.c.l.b16 %v1025
      %v1030 = vpack.c.b16 %v1029, %v1028
      %v1033 = vsel %vm708, %v598, 0
      %v1036 = vsel %vm708, %v599, 0
      %1038 = vmatprep.subr.bf16.mxu0 0
      %1039 = vmatpush1.bf16.msra.mxu0 %v1030
      %1040 = vmatprep.subr.bf16.mxu0 0
      %1041 = vmatpush1.bf16.msra.mxu0 0
      %1042 = vmatprep.subr.bf16.mxu0 0
      %1043 = vmatpush1.bf16.msra.mxu0 0
      %1044 = vmatprep.subr.bf16.mxu0 0
      %1045 = vmatpush1.bf16.msra.mxu0 0
      %1046 = vmatprep.subr.bf16.mxu0 0
      %1047 = vmatpush1.bf16.msra.mxu0 0
      %1048 = vmatprep.subr.bf16.mxu0 0
      %1049 = vmatpush1.bf16.msra.mxu0 0
      %1050 = vmatprep.subr.bf16.mxu0 0
      %1051 = vmatpush1.bf16.msra.mxu0 0
      %1052 = vmatprep.subr.bf16.mxu0 0
      %1053 = vmatpush1.bf16.msra.mxu0 0
      %1054 = vmatprep.subr.bf16.mxu0 0
      %1055 = vmatpush1.bf16.msra.mxu0 0
      %1056 = vmatprep.subr.bf16.mxu0 0
      %1057 = vmatpush1.bf16.msra.mxu0 0
      %1058 = vmatprep.subr.bf16.mxu0 0
      %1059 = vmatpush1.bf16.msra.mxu0 0
      %1060 = vmatprep.subr.bf16.mxu0 0
      %1061 = vmatpush1.bf16.msra.mxu0 0
      %1062 = vmatprep.subr.bf16.mxu0 0
      %1063 = vmatpush1.bf16.msra.mxu0 0
      %1064 = vmatprep.subr.bf16.mxu0 0
      %1065 = vmatpush1.bf16.msra.mxu0 0
      %1066 = vmatprep.subr.bf16.mxu0 0
      %1067 = vmatpush1.bf16.msra.mxu0 0
      %1068 = vmatprep.subr.bf16.mxu0 0
      %1069 = vmatpush1.bf16.msra.mxu0 0
      %1070 = vmatprep.mubr.bf16.mxu0 0
      %1071 = vmatmul.mubr.bf16.gmra.mrb[0].mxu0 %v1033
      %v1072 = vpop.f32.mrb[0].mxu0
      %v1073 = vadd.f32 0.0, %v1072
      %v1074 = vpop.f32.mrb[0].mxu0
      %v1075 = vpop.f32.mrb[0].mxu0
      %v1076 = vadd.f32 0.0, %v1075
      %v1077 = vpop.f32.mrb[0].mxu0
      %1078 = vmatprep.mubr.bf16.mxu0 0
      %1079 = vmatmul.mubr.bf16.gmra.mrb[0].mxu0 %v1036
      %v1080 = vpop.f32.mrb[0].mxu0
      %v1081 = vadd.f32 0.0, %v1080
      %v1082 = vpop.f32.mrb[0].mxu0
      %v1083 = vpop.f32.mrb[0].mxu0
      %v1084 = vadd.f32 0.0, %v1083
      %v1085 = vpop.f32.mrb[0].mxu0
      %1086 = vdwg.mxu0
      %v1087 = vadd.f32 %v1019, %v1073
      %v1088 = vadd.f32 %v1020, %v1076
      %v1089 = vadd.f32 %v1021, %v1081
      %v1090 = vadd.f32 %v1022, %v1084
      %v1091 = vrot.slane %v584, 1
      %v1092 = vrot.slane %v587, 1
      %v1093 = vrot.slane %v592, 1
      %v1094 = vrot.slane %v595, 1
      %vm1095 = vcmp.lt.s32.totalorder %v634, 7
      %v1096 = vsel %vm1095, %v1093, %v1094
      %v1097 = vsel %vm1095, %v1092, %v1093
      %v1098 = vsel %vm1095, %v1091, %v1092
      %v1099 = vsel %vm1095, %v1094, %v1091
      %1100 = vset.pattern.permute.xlu0 5
      %1101 = vperm.xlu0 %1100, %v600
      %v1102 = vpop.permute.xlu0 %1101
      %1104 = vset.pattern.permute.xlu0 5
      %1105 = vperm.xlu0 %1104, %v601
      %v1106 = vpop.permute.xlu0 %1105
      %1108 = vset.pattern.permute.xlu0 5
      %1109 = vperm.xlu0 %1108, %v602
      %v1110 = vpop.permute.xlu0 %1109
      %1112 = vset.pattern.permute.xlu0 5
      %1113 = vperm.xlu0 %1112, %v603
      %v1114 = vpop.permute.xlu0 %1113
      %v1116 = vmul.f32 %v1098, %v1102
      %v1117 = vmul.f32 %v1097, %v1106
      %v1118 = vmul.f32 %v1096, %v1110
      %v1119 = vmul.f32 %v1099, %v1114
      %v1120 = vpack.c.bf16 %v1117, %v1116
      %v1121 = vpack.c.bf16 %v1119, %v1118
      %s1122 = scalar_lea.vmem %s437, 40
      %v1123 = vld [vmem:[%s1122] sm:$0xf]
      %v1124 = vld [vmem:[%s1122 + $0x4] sm:$0xf]
      %v1127 = vunpack.c.l.b16 %v1123
      %v1128 = vunpack.c.l.b16 %v1124
      %v1129 = vpack.c.b16 %v1128, %v1127
      %v1132 = vsel %vm708, %v1120, 0
      %v1135 = vsel %vm708, %v1121, 0
      %1137 = vmatprep.subr.bf16.mxu0 0
      %1138 = vmatpush1.bf16.msra.mxu0 %v1129
      %1139 = vmatprep.subr.bf16.mxu0 0
      %1140 = vmatpush1.bf16.msra.mxu0 0
      %1141 = vmatprep.subr.bf16.mxu0 0
      %1142 = vmatpush1.bf16.msra.mxu0 0
      %1143 = vmatprep.subr.bf16.mxu0 0
      %1144 = vmatpush1.bf16.msra.mxu0 0
      %1145 = vmatprep.subr.bf16.mxu0 0
      %1146 = vmatpush1.bf16.msra.mxu0 0
      %1147 = vmatprep.subr.bf16.mxu0 0
      %1148 = vmatpush1.bf16.msra.mxu0 0
      %1149 = vmatprep.subr.bf16.mxu0 0
      %1150 = vmatpush1.bf16.msra.mxu0 0
      %1151 = vmatprep.subr.bf16.mxu0 0
      %1152 = vmatpush1.bf16.msra.mxu0 0
      %1153 = vmatprep.subr.bf16.mxu0 0
      %1154 = vmatpush1.bf16.msra.mxu0 0
      %1155 = vmatprep.subr.bf16.mxu0 0
      %1156 = vmatpush1.bf16.msra.mxu0 0
      %1157 = vmatprep.subr.bf16.mxu0 0
      %1158 = vmatpush1.bf16.msra.mxu0 0
      %1159 = vmatprep.subr.bf16.mxu0 0
      %1160 = vmatpush1.bf16.msra.mxu0 0
      %1161 = vmatprep.subr.bf16.mxu0 0
      %1162 = vmatpush1.bf16.msra.mxu0 0
      %1163 = vmatprep.subr.bf16.mxu0 0
      %1164 = vmatpush1.bf16.msra.mxu0 0
      %1165 = vmatprep.subr.bf16.mxu0 0
      %1166 = vmatpush1.bf16.msra.mxu0 0
      %1167 = vmatprep.subr.bf16.mxu0 0
      %1168 = vmatpush1.bf16.msra.mxu0 0
      %1169 = vmatprep.mubr.bf16.mxu0 0
      %1170 = vmatmul.mubr.bf16.gmra.mrb[0].mxu0 %v1132
      %v1171 = vpop.f32.mrb[0].mxu0
      %v1172 = vadd.f32 0.0, %v1171
      %v1173 = vpop.f32.mrb[0].mxu0
      %v1174 = vpop.f32.mrb[0].mxu0
      %v1175 = vadd.f32 0.0, %v1174
      %v1176 = vpop.f32.mrb[0].mxu0
      %1177 = vmatprep.mubr.bf16.mxu0 0
      %1178 = vmatmul.mubr.bf16.gmra.mrb[0].mxu0 %v1135
      %v1179 = vpop.f32.mrb[0].mxu0
      %v1180 = vadd.f32 0.0, %v1179
      %v1181 = vpop.f32.mrb[0].mxu0
      %v1182 = vpop.f32.mrb[0].mxu0
      %v1183 = vadd.f32 0.0, %v1182
      %v1184 = vpop.f32.mrb[0].mxu0
      %1185 = vdwg.mxu0
      %v1186 = vadd.f32 %v1087, %v1172
      %v1187 = vadd.f32 %v1088, %v1175
      %v1188 = vadd.f32 %v1089, %v1180
      %v1189 = vadd.f32 %v1090, %v1183
      %1190 = vset.pattern.permute.xlu0 6
      %1191 = vperm.xlu0 %1190, %v600
      %v1192 = vpop.permute.xlu0 %1191
      %1194 = vset.pattern.permute.xlu0 6
      %1195 = vperm.xlu0 %1194, %v601
      %v1196 = vpop.permute.xlu0 %1195
      %1198 = vset.pattern.permute.xlu0 6
      %1199 = vperm.xlu0 %1198, %v602
      %v1200 = vpop.permute.xlu0 %1199
      %1202 = vset.pattern.permute.xlu0 6
      %1203 = vperm.xlu0 %1202, %v603
      %v1204 = vpop.permute.xlu0 %1203
      %v1206 = vmul.f32 %v638, %v1192
      %v1207 = vmul.f32 %v637, %v1196
      %v1208 = vmul.f32 %v636, %v1200
      %v1209 = vmul.f32 %v639, %v1204
      %v1210 = vpack.c.bf16 %v1207, %v1206
      %v1211 = vpack.c.bf16 %v1209, %v1208
      %s1212 = scalar_lea.vmem %s437, 48
      %v1213 = vld [vmem:[%s1212] sm:$0xf]
      %v1214 = vld [vmem:[%s1212 + $0x4] sm:$0xf]
      %v1217 = vunpack.c.l.b16 %v1213
      %v1218 = vunpack.c.l.b16 %v1214
      %v1219 = vpack.c.b16 %v1218, %v1217
      %v1222 = vsel %vm708, %v1210, 0
      %v1225 = vsel %vm708, %v1211, 0
      %1227 = vmatprep.subr.bf16.mxu0 0
      %1228 = vmatpush1.bf16.msra.mxu0 %v1219
      %1229 = vmatprep.subr.bf16.mxu0 0
      %1230 = vmatpush1.bf16.msra.mxu0 0
      %1231 = vmatprep.subr.bf16.mxu0 0
      %1232 = vmatpush1.bf16.msra.mxu0 0
      %1233 = vmatprep.subr.bf16.mxu0 0
      %1234 = vmatpush1.bf16.msra.mxu0 0
      %1235 = vmatprep.subr.bf16.mxu0 0
      %1236 = vmatpush1.bf16.msra.mxu0 0
      %1237 = vmatprep.subr.bf16.mxu0 0
      %1238 = vmatpush1.bf16.msra.mxu0 0
      %1239 = vmatprep.subr.bf16.mxu0 0
      %1240 = vmatpush1.bf16.msra.mxu0 0
      %1241 = vmatprep.subr.bf16.mxu0 0
      %1242 = vmatpush1.bf16.msra.mxu0 0
      %1243 = vmatprep.subr.bf16.mxu0 0
      %1244 = vmatpush1.bf16.msra.mxu0 0
      %1245 = vmatprep.subr.bf16.mxu0 0
      %1246 = vmatpush1.bf16.msra.mxu0 0
      %1247 = vmatprep.subr.bf16.mxu0 0
      %1248 = vmatpush1.bf16.msra.mxu0 0
      %1249 = vmatprep.subr.bf16.mxu0 0
      %1250 = vmatpush1.bf16.msra.mxu0 0
      %1251 = vmatprep.subr.bf16.mxu0 0
      %1252 = vmatpush1.bf16.msra.mxu0 0
      %1253 = vmatprep.subr.bf16.mxu0 0
      %1254 = vmatpush1.bf16.msra.mxu0 0
      %1255 = vmatprep.subr.bf16.mxu0 0
      %1256 = vmatpush1.bf16.msra.mxu0 0
      %1257 = vmatprep.subr.bf16.mxu0 0
      %1258 = vmatpush1.bf16.msra.mxu0 0
      %1259 = vmatprep.mubr.bf16.mxu0 0
      %1260 = vmatmul.mubr.bf16.gmra.mrb[0].mxu0 %v1222
      %v1261 = vpop.f32.mrb[0].mxu0
      %v1262 = vadd.f32 0.0, %v1261
      %v1263 = vpop.f32.mrb[0].mxu0
      %v1264 = vpop.f32.mrb[0].mxu0
      %v1265 = vadd.f32 0.0, %v1264
      %v1266 = vpop.f32.mrb[0].mxu0
      %1267 = vmatprep.mubr.bf16.mxu0 0
      %1268 = vmatmul.mubr.bf16.gmra.mrb[0].mxu0 %v1225
      %v1269 = vpop.f32.mrb[0].mxu0
      %v1270 = vadd.f32 0.0, %v1269
      %v1271 = vpop.f32.mrb[0].mxu0
      %v1272 = vpop.f32.mrb[0].mxu0
      %v1273 = vadd.f32 0.0, %v1272
      %v1274 = vpop.f32.mrb[0].mxu0
      %1275 = vdwg.mxu0
      %v1276 = vadd.f32 %v1186, %v1262
      %v1277 = vadd.f32 %v1187, %v1265
      %v1278 = vadd.f32 %v1188, %v1270
      %v1279 = vadd.f32 %v1189, %v1273
      %1280 = vset.pattern.permute.xlu0 7
      %1281 = vperm.xlu0 %1280, %v600
      %v1282 = vpop.permute.xlu0 %1281
      %1284 = vset.pattern.permute.xlu0 7
      %1285 = vperm.xlu0 %1284, %v601
      %v1286 = vpop.permute.xlu0 %1285
      %1288 = vset.pattern.permute.xlu0 7
      %1289 = vperm.xlu0 %1288, %v602
      %v1290 = vpop.permute.xlu0 %1289
      %1292 = vset.pattern.permute.xlu0 7
      %1293 = vperm.xlu0 %1292, %v603
      %v1294 = vpop.permute.xlu0 %1293
      %v1296 = vmul.f32 %v675, %v1282
      %v1297 = vmul.f32 %v674, %v1286
      %v1298 = vmul.f32 %v673, %v1290
      %v1299 = vmul.f32 %v676, %v1294
      %v1300 = vpack.c.bf16 %v1297, %v1296
      %v1301 = vpack.c.bf16 %v1299, %v1298
      %s1302 = scalar_lea.vmem %s437, 56
      %v1303 = vld [vmem:[%s1302] sm:$0xf]
      %v1304 = vld [vmem:[%s1302 + $0x4] sm:$0xf]
      %v1307 = vunpack.c.l.b16 %v1303
      %v1308 = vunpack.c.l.b16 %v1304
      %v1309 = vpack.c.b16 %v1308, %v1307
      %v1312 = vsel %vm708, %v1300, 0
      %v1315 = vsel %vm708, %v1301, 0
      %1317 = vmatprep.subr.bf16.mxu0 0
      %1318 = vmatpush1.bf16.msra.mxu0 %v1309
      %1319 = vmatprep.subr.bf16.mxu0 0
      %1320 = vmatpush1.bf16.msra.mxu0 0
      %1321 = vmatprep.subr.bf16.mxu0 0
      %1322 = vmatpush1.bf16.msra.mxu0 0
      %1323 = vmatprep.subr.bf16.mxu0 0
      %1324 = vmatpush1.bf16.msra.mxu0 0
      %1325 = vmatprep.subr.bf16.mxu0 0
      %1326 = vmatpush1.bf16.msra.mxu0 0
      %1327 = vmatprep.subr.bf16.mxu0 0
      %1328 = vmatpush1.bf16.msra.mxu0 0
      %1329 = vmatprep.subr.bf16.mxu0 0
      %1330 = vmatpush1.bf16.msra.mxu0 0
      %1331 = vmatprep.subr.bf16.mxu0 0
      %1332 = vmatpush1.bf16.msra.mxu0 0
      %1333 = vmatprep.subr.bf16.mxu0 0
      %1334 = vmatpush1.bf16.msra.mxu0 0
      %1335 = vmatprep.subr.bf16.mxu0 0
      %1336 = vmatpush1.bf16.msra.mxu0 0
      %1337 = vmatprep.subr.bf16.mxu0 0
      %1338 = vmatpush1.bf16.msra.mxu0 0
      %1339 = vmatprep.subr.bf16.mxu0 0
      %1340 = vmatpush1.bf16.msra.mxu0 0
      %1341 = vmatprep.subr.bf16.mxu0 0
      %1342 = vmatpush1.bf16.msra.mxu0 0
      %1343 = vmatprep.subr.bf16.mxu0 0
      %1344 = vmatpush1.bf16.msra.mxu0 0
      %1345 = vmatprep.subr.bf16.mxu0 0
      %1346 = vmatpush1.bf16.msra.mxu0 0
      %1347 = vmatprep.subr.bf16.mxu0 0
      %1348 = vmatpush1.bf16.msra.mxu0 0
      %1349 = vmatprep.mubr.bf16.mxu0 0
      %1350 = vmatmul.mubr.bf16.gmra.mrb[0].mxu0 %v1312
      %v1351 = vpop.f32.mrb[0].mxu0
      %v1352 = vadd.f32 0.0, %v1351
      %v1353 = vpop.f32.mrb[0].mxu0
      %v1354 = vpop.f32.mrb[0].mxu0
      %v1355 = vadd.f32 0.0, %v1354
      %v1356 = vpop.f32.mrb[0].mxu0
      %1357 = vmatprep.mubr.bf16.mxu0 0
      %1358 = vmatmul.mubr.bf16.gmra.mrb[0].mxu0 %v1315
      %v1359 = vpop.f32.mrb[0].mxu0
      %v1360 = vadd.f32 0.0, %v1359
      %v1361 = vpop.f32.mrb[0].mxu0
      %v1362 = vpop.f32.mrb[0].mxu0
      %v1363 = vadd.f32 0.0, %v1362
      %v1364 = vpop.f32.mrb[0].mxu0
      %1365 = vdwg.mxu0
      %v1366 = vadd.f32 %v1276, %v1352
      %v1367 = vadd.f32 %v1277, %v1355
      %v1368 = vadd.f32 %v1278, %v1360
      %v1369 = vadd.f32 %v1279, %v1363
      %1370 = vset.pattern.permute.xlu0 8
      %1371 = vperm.xlu0 %1370, %v600
      %v1372 = vpop.permute.xlu0 %1371
      %1374 = vset.pattern.permute.xlu0 8
      %1375 = vperm.xlu0 %1374, %v601
      %v1376 = vpop.permute.xlu0 %1375
      %1378 = vset.pattern.permute.xlu0 8
      %1379 = vperm.xlu0 %1378, %v602
      %v1380 = vpop.permute.xlu0 %1379
      %1382 = vset.pattern.permute.xlu0 8
      %1383 = vperm.xlu0 %1382, %v603
      %v1384 = vpop.permute.xlu0 %1383
      %v1386 = vmul.f32 %v832, %v1372
      %v1387 = vmul.f32 %v831, %v1376
      %v1388 = vmul.f32 %v830, %v1380
      %v1389 = vmul.f32 %v833, %v1384
      %v1390 = vpack.c.bf16 %v1387, %v1386
      %v1391 = vpack.c.bf16 %v1389, %v1388
      %s1392 = scalar_lea.vmem %s437, 64
      %v1393 = vld [vmem:[%s1392] sm:$0xf]
      %v1394 = vld [vmem:[%s1392 + $0x4] sm:$0xf]
      %v1397 = vunpack.c.l.b16 %v1393
      %v1398 = vunpack.c.l.b16 %v1394
      %v1399 = vpack.c.b16 %v1398, %v1397
      %v1402 = vsel %vm708, %v1390, 0
      %v1405 = vsel %vm708, %v1391, 0
      %1407 = vmatprep.subr.bf16.mxu0 0
      %1408 = vmatpush1.bf16.msra.mxu0 %v1399
      %1409 = vmatprep.subr.bf16.mxu0 0
      %1410 = vmatpush1.bf16.msra.mxu0 0
      %1411 = vmatprep.subr.bf16.mxu0 0
      %1412 = vmatpush1.bf16.msra.mxu0 0
      %1413 = vmatprep.subr.bf16.mxu0 0
      %1414 = vmatpush1.bf16.msra.mxu0 0
      %1415 = vmatprep.subr.bf16.mxu0 0
      %1416 = vmatpush1.bf16.msra.mxu0 0
      %1417 = vmatprep.subr.bf16.mxu0 0
      %1418 = vmatpush1.bf16.msra.mxu0 0
      %1419 = vmatprep.subr.bf16.mxu0 0
      %1420 = vmatpush1.bf16.msra.mxu0 0
      %1421 = vmatprep.subr.bf16.mxu0 0
      %1422 = vmatpush1.bf16.msra.mxu0 0
      %1423 = vmatprep.subr.bf16.mxu0 0
      %1424 = vmatpush1.bf16.msra.mxu0 0
      %1425 = vmatprep.subr.bf16.mxu0 0
      %1426 = vmatpush1.bf16.msra.mxu0 0
      %1427 = vmatprep.subr.bf16.mxu0 0
      %1428 = vmatpush1.bf16.msra.mxu0 0
      %1429 = vmatprep.subr.bf16.mxu0 0
      %1430 = vmatpush1.bf16.msra.mxu0 0
      %1431 = vmatprep.subr.bf16.mxu0 0
      %1432 = vmatpush1.bf16.msra.mxu0 0
      %1433 = vmatprep.subr.bf16.mxu0 0
      %1434 = vmatpush1.bf16.msra.mxu0 0
      %1435 = vmatprep.subr.bf16.mxu0 0
      %1436 = vmatpush1.bf16.msra.mxu0 0
      %1437 = vmatprep.subr.bf16.mxu0 0
      %1438 = vmatpush1.bf16.msra.mxu0 0
      %1439 = vmatprep.mubr.bf16.mxu0 0
      %1440 = vmatmul.mubr.bf16.gmra.mrb[0].mxu0 %v1402
      %v1441 = vpop.f32.mrb[0].mxu0
      %v1442 = vadd.f32 0.0, %v1441
      %v1443 = vpop.f32.mrb[0].mxu0
      %v1444 = vpop.f32.mrb[0].mxu0
      %v1445 = vadd.f32 0.0, %v1444
      %v1446 = vpop.f32.mrb[0].mxu0
      %1447 = vmatprep.mubr.bf16.mxu0 0
      %1448 = vmatmul.mubr.bf16.gmra.mrb[0].mxu0 %v1405
      %v1449 = vpop.f32.mrb[0].mxu0
      %v1450 = vadd.f32 0.0, %v1449
      %v1451 = vpop.f32.mrb[0].mxu0
      %v1452 = vpop.f32.mrb[0].mxu0
      %v1453 = vadd.f32 0.0, %v1452
      %v1454 = vpop.f32.mrb[0].mxu0
      %1455 = vdwg.mxu0
      %v1456 = vadd.f32 %v1366, %v1442
      %v1457 = vadd.f32 %v1367, %v1445
      %v1458 = vadd.f32 %v1368, %v1450
      %v1459 = vadd.f32 %v1369, %v1453
      %v1460 = vpack.c.bf16 %v1457, %v1456
      %v1461 = vpack.c.bf16 %v1459, %v1458
      %1464 = vrot.lane.b32.xlu0 %v598, 112
      %v1465 = vpop.permute.xlu0 %1464
      %1466 = vrot.lane.b32.xlu0 %v599, 112
      %v1467 = vpop.permute.xlu0 %1466
      %v1474 = vunpack.c.l.b16 %v606
      %v1475 = vunpack.c.l.b16 %v607
      %v1476 = vunpack.c.l.b16 %v608
      %v1477 = vunpack.c.l.b16 %v609
      %v1478 = vunpack.c.l.b16 %v610
      %v1479 = vunpack.c.l.b16 %v611
      %v1480 = vpack.c.b16 %v1475, %v1474
      %v1481 = vpack.c.b16 %v1477, %v1476
      %v1482 = vpack.c.b16 %v1479, %v1478
      %vm1486 = vcmask 392192
      %v1488 = vsel %vm1486, %v1465, 0
      %v1491 = vsel %vm1486, %v1467, 0
      %1493 = vmatprep.subr.bf16.mxu0 0
      %1494 = vmatpush1.bf16.msra.mxu0 %v1480
      %1495 = vmatprep.subr.bf16.mxu0 0
      %1496 = vmatpush1.bf16.msra.mxu0 %v1481
      %1497 = vmatprep.subr.bf16.mxu0 0
      %1498 = vmatpush1.bf16.msra.mxu0 %v1482
      %1499 = vmatprep.subr.bf16.mxu0 0
      %1500 = vmatpush1.bf16.msra.mxu0 0
      %1501 = vmatprep.subr.bf16.mxu0 0
      %1502 = vmatpush1.bf16.msra.mxu0 0
      %1503 = vmatprep.subr.bf16.mxu0 0
      %1504 = vmatpush1.bf16.msra.mxu0 0
      %1505 = vmatprep.subr.bf16.mxu0 0
      %1506 = vmatpush1.bf16.msra.mxu0 0
      %1507 = vmatprep.subr.bf16.mxu0 0
      %1508 = vmatpush1.bf16.msra.mxu0 0
      %1509 = vmatprep.subr.bf16.mxu0 0
      %1510 = vmatpush1.bf16.msra.mxu0 0
      %1511 = vmatprep.subr.bf16.mxu0 0
      %1512 = vmatpush1.bf16.msra.mxu0 0
      %1513 = vmatprep.subr.bf16.mxu0 0
      %1514 = vmatpush1.bf16.msra.mxu0 0
      %1515 = vmatprep.subr.bf16.mxu0 0
      %1516 = vmatpush1.bf16.msra.mxu0 0
      %1517 = vmatprep.subr.bf16.mxu0 0
      %1518 = vmatpush1.bf16.msra.mxu0 0
      %1519 = vmatprep.subr.bf16.mxu0 0
      %1520 = vmatpush1.bf16.msra.mxu0 0
      %1521 = vmatprep.subr.bf16.mxu0 0
      %1522 = vmatpush1.bf16.msra.mxu0 0
      %1523 = vmatprep.subr.bf16.mxu0 0
      %1524 = vmatpush1.bf16.msra.mxu0 0
      %1525 = vmatprep.mubr.bf16.mxu0 0
      %1526 = vmatmul.mubr.bf16.gmra.mrb[0].mxu0 %v1488
      %v1527 = vpop.f32.mrb[0].mxu0
      %v1528 = vadd.f32 0.0, %v1527
      %v1529 = vpop.f32.mrb[0].mxu0
      %v1530 = vpop.f32.mrb[0].mxu0
      %v1531 = vadd.f32 0.0, %v1530
      %v1532 = vpop.f32.mrb[0].mxu0
      %1533 = vmatprep.mubr.bf16.mxu0 0
      %1534 = vmatmul.mubr.bf16.gmra.mrb[0].mxu0 %v1491
      %v1535 = vpop.f32.mrb[0].mxu0
      %v1536 = vadd.f32 0.0, %v1535
      %v1537 = vpop.f32.mrb[0].mxu0
      %v1538 = vpop.f32.mrb[0].mxu0
      %v1539 = vadd.f32 0.0, %v1538
      %v1540 = vpop.f32.mrb[0].mxu0
      %1541 = vdwg.mxu0
      %v1544 = vunpack.c.l.b16 %v604
      %v1545 = vunpack.c.l.b16 %v605
      %v1546 = vpack.c.b16 %v1545, %v1544
      %v1549 = vsel %vm708, %v1460, 0
      %v1552 = vsel %vm708, %v1461, 0
      %1554 = vmatprep.subr.bf16.mxu0 0
      %1555 = vmatpush1.bf16.msra.mxu0 %v1546
      %1556 = vmatprep.subr.bf16.mxu0 0
      %1557 = vmatpush1.bf16.msra.mxu0 0
      %1558 = vmatprep.subr.bf16.mxu0 0
      %1559 = vmatpush1.bf16.msra.mxu0 0
      %1560 = vmatprep.subr.bf16.mxu0 0
      %1561 = vmatpush1.bf16.msra.mxu0 0
      %1562 = vmatprep.subr.bf16.mxu0 0
      %1563 = vmatpush1.bf16.msra.mxu0 0
      %1564 = vmatprep.subr.bf16.mxu0 0
      %1565 = vmatpush1.bf16.msra.mxu0 0
      %1566 = vmatprep.subr.bf16.mxu0 0
      %1567 = vmatpush1.bf16.msra.mxu0 0
      %1568 = vmatprep.subr.bf16.mxu0 0
      %1569 = vmatpush1.bf16.msra.mxu0 0
      %1570 = vmatprep.subr.bf16.mxu0 0
      %1571 = vmatpush1.bf16.msra.mxu0 0
      %1572 = vmatprep.subr.bf16.mxu0 0
      %1573 = vmatpush1.bf16.msra.mxu0 0
      %1574 = vmatprep.subr.bf16.mxu0 0
      %1575 = vmatpush1.bf16.msra.mxu0 0
      %1576 = vmatprep.subr.bf16.mxu0 0
      %1577 = vmatpush1.bf16.msra.mxu0 0
      %1578 = vmatprep.subr.bf16.mxu0 0
      %1579 = vmatpush1.bf16.msra.mxu0 0
      %1580 = vmatprep.subr.bf16.mxu0 0
      %1581 = vmatpush1.bf16.msra.mxu0 0
      %1582 = vmatprep.subr.bf16.mxu0 0
      %1583 = vmatpush1.bf16.msra.mxu0 0
      %1584 = vmatprep.subr.bf16.mxu0 0
      %1585 = vmatpush1.bf16.msra.mxu0 0
      %1586 = vmatprep.mubr.bf16.mxu0 0
      %1587 = vmatmul.mubr.bf16.gmra.mrb[0].mxu0 %v1549
      %v1588 = vpop.f32.mrb[0].mxu0
      %v1589 = vadd.f32 %v1528, %v1588
      %v1590 = vpop.f32.mrb[0].mxu0
      %v1591 = vpop.f32.mrb[0].mxu0
      %v1592 = vadd.f32 %v1531, %v1591
      %v1593 = vpop.f32.mrb[0].mxu0
      %1594 = vmatprep.mubr.bf16.mxu0 0
      %1595 = vmatmul.mubr.bf16.gmra.mrb[0].mxu0 %v1552
      %v1596 = vpop.f32.mrb[0].mxu0
      %v1597 = vadd.f32 %v1536, %v1596
      %v1598 = vpop.f32.mrb[0].mxu0
      %v1599 = vpop.f32.mrb[0].mxu0
      %v1600 = vadd.f32 %v1539, %v1599
      %v1601 = vpop.f32.mrb[0].mxu0
      %1602 = vdwg.mxu0
      %v1604 = vlaneseq
      %v1605 = vshrl.u32 %v1604, 7
      %v1606 = vsub.s32 0, %v1605
      %v1607 = vrot.slane %v612, %v1606
      %v1609 = vadd.f32 %v1589, %v1607
      %v1610 = vadd.f32 %v1592, %v1607
      %v1611 = vadd.f32 %v1597, %v1607
      %v1612 = vadd.f32 %v1600, %v1607
      %v1613 = vmax.f32 %v1609, 0.0
      %v1614 = vmax.f32 %v1610, 0.0
      %v1615 = vmax.f32 %v1611, 0.0
      %v1616 = vmax.f32 %v1612, 0.0
      %v1617 = vpack.c.bf16 %v1614, %v1613
      %v1618 = vpack.c.bf16 %v1616, %v1615
      %v1635 = vunpack.c.l.b16 %v613
      %v1636 = vunpack.c.l.b16 %v614
      %v1637 = vunpack.c.l.b16 %v615
      %v1638 = vunpack.c.l.b16 %v616
      %v1639 = vunpack.c.l.b16 %v617
      %v1640 = vunpack.c.l.b16 %v618
      %v1641 = vunpack.c.l.b16 %v619
      %v1642 = vunpack.c.l.b16 %v620
      %v1643 = vunpack.c.l.b16 %v621
      %v1644 = vunpack.c.l.b16 %v622
      %v1645 = vunpack.c.l.b16 %v623
      %v1646 = vunpack.c.l.b16 %v624
      %v1647 = vunpack.c.l.b16 %v625
      %v1648 = vunpack.c.l.b16 %v626
      %v1649 = vunpack.c.l.b16 %v627
      %v1650 = vunpack.c.l.b16 %v628
      %v1651 = vpack.c.b16 %v1636, %v1635
      %v1652 = vpack.c.b16 %v1638, %v1637
      %v1653 = vpack.c.b16 %v1640, %v1639
      %v1654 = vpack.c.b16 %v1642, %v1641
      %v1655 = vpack.c.b16 %v1644, %v1643
      %v1656 = vpack.c.b16 %v1646, %v1645
      %v1657 = vpack.c.b16 %v1648, %v1647
      %v1658 = vpack.c.b16 %v1650, %v1649
      %1667 = vmatprep.subr.bf16.mxu0 0
      %1668 = vmatpush1.bf16.msra.mxu0 %v1651
      %1669 = vmatprep.subr.bf16.mxu0 0
      %1670 = vmatpush1.bf16.msra.mxu0 %v1652
      %1671 = vmatprep.subr.bf16.mxu0 0
      %1672 = vmatpush1.bf16.msra.mxu0 %v1653
      %1673 = vmatprep.subr.bf16.mxu0 0
      %1674 = vmatpush1.bf16.msra.mxu0 %v1654
      %1675 = vmatprep.subr.bf16.mxu0 0
      %1676 = vmatpush1.bf16.msra.mxu0 %v1655
      %1677 = vmatprep.subr.bf16.mxu0 0
      %1678 = vmatpush1.bf16.msra.mxu0 %v1656
      %1679 = vmatprep.subr.bf16.mxu0 0
      %1680 = vmatpush1.bf16.msra.mxu0 %v1657
      %1681 = vmatprep.subr.bf16.mxu0 0
      %1682 = vmatpush1.bf16.msra.mxu0 %v1658
      %1683 = vmatprep.subr.bf16.mxu0 0
      %1684 = vmatpush1.bf16.msra.mxu0 0
      %1685 = vmatprep.subr.bf16.mxu0 0
      %1686 = vmatpush1.bf16.msra.mxu0 0
      %1687 = vmatprep.subr.bf16.mxu0 0
      %1688 = vmatpush1.bf16.msra.mxu0 0
      %1689 = vmatprep.subr.bf16.mxu0 0
      %1690 = vmatpush1.bf16.msra.mxu0 0
      %1691 = vmatprep.subr.bf16.mxu0 0
      %1692 = vmatpush1.bf16.msra.mxu0 0
      %1693 = vmatprep.subr.bf16.mxu0 0
      %1694 = vmatpush1.bf16.msra.mxu0 0
      %1695 = vmatprep.subr.bf16.mxu0 0
      %1696 = vmatpush1.bf16.msra.mxu0 0
      %1697 = vmatprep.subr.bf16.mxu0 0
      %1698 = vmatpush1.bf16.msra.mxu0 0
      %1699 = vmatprep.mubr.bf16.mxu0 0
      %1700 = vmatmul.mubr.bf16.gmra.mrb[0].mxu0 %v1617
      %v1701 = vpop.f32.mrb[0].mxu0
      %v1702 = vadd.f32 0.0, %v1701
      %v1703 = vpop.f32.mrb[0].mxu0
      %v1704 = vpop.f32.mrb[0].mxu0
      %v1705 = vadd.f32 0.0, %v1704
      %v1706 = vpop.f32.mrb[0].mxu0
      %1707 = vmatprep.mubr.bf16.mxu0 0
      %1708 = vmatmul.mubr.bf16.gmra.mrb[0].mxu0 %v1618
      %v1709 = vpop.f32.mrb[0].mxu0
      %v1710 = vadd.f32 0.0, %v1709
      %v1711 = vpop.f32.mrb[0].mxu0
      %v1712 = vpop.f32.mrb[0].mxu0
      %v1713 = vadd.f32 0.0, %v1712
      %v1714 = vpop.f32.mrb[0].mxu0
      %1715 = vdwg.mxu0
      %v1716 = vadd.f32 %v584, %v1702
      %v1717 = vadd.f32 %v587, %v1705
      %v1718 = vadd.f32 %v592, %v1710
      %v1719 = vadd.f32 %v595, %v1713
      %v1720 = vpack.c.bf16 %v1717, %v1716
      %v1721 = vpack.c.bf16 %v1719, %v1718
      %v1724 = vunpack.c.l.b16 %v1720
      %v1725 = vunpack.c.h.b16 %v1720
      %v1726 = vunpack.c.l.b16 %v1721
      %v1727 = vunpack.c.h.b16 %v1721
      %v1728 = vpack.c.b16 %v1724, %v1724
      %v1729 = vpack.c.b16 %v1725, %v1725
      %v1730 = vpack.c.b16 %v1726, %v1726
      %v1731 = vpack.c.b16 %v1727, %v1727
      %vm1736 = vcmask 519168
      %1737 = vst.msk [vmem:[%s460] sm:$0xf] %vm1736, %v1728
      %1738 = vst.msk [vmem:[%s460 + $0x4] sm:$0xf] %vm1736, %v1729
      %1739 = vst.msk [vmem:[%s460 + $0x8] sm:$0xf] %vm1736, %v1730
      %1740 = vst.msk [vmem:[%s460 + $0xc] sm:$0xf] %vm1736, %v1731
      %p1741 = scmp.lt.s32.totalorder %s20, 1
      %s1742 = scalar_select %p1741, %s20, 1
      %s1743 = smul.addr %s1742, 4
      %s1744 = smul.addr %s1743, 4
      %s1745 = scalar_lea.vmem %s9, %s1744
      // Predicated region
      $region57: #{generate_feats_forward.6} parent=55 // pred_check
        %p1746 = pneg %p267
      $region58: #{generate_feats_forward.6} parent=55 // pred_check_branch
        %1748 = sbr.rel (%p1746) target = $region60
      $region59: #{generate_feats_forward.6} parent=55 // pred_region
        _
      $region60: #{generate_feats_forward.6} parent=55 // pred_fallthru
        _
    $region56: #{generate_feats_forward.6} parent=5 // pred_fallthru
      _
    %p1749 = scmp.le.s32.totalorder 2, %s15
    // Predicated region
    $region61: #{generate_feats_forward.6} parent=5 // pred_check
      %p1750 = pneg %p1749
    $region62: #{generate_feats_forward.6} parent=5 // pred_check_branch
      %1752 = sbr.rel (%p1750) target = $region64
    $region63: #{generate_feats_forward.6} parent=5 // pred_region
      %s1753 = ssub.s32 %s15, 2
      // Predicated region
      $region65: #{generate_feats_forward.6} parent=63 // pred_check
        %p1754 = pneg %p273
      $region66: #{generate_feats_forward.6} parent=63 // pred_check_branch
        %1756 = sbr.rel (%p1754) target = $region68
      $region67: #{generate_feats_forward.6} parent=63 // pred_region
        %p1757 = scmp.lt.s32.totalorder %s21, 1
        %s1758 = scalar_select %p1757, %s21, 1
        %s1759 = smul.addr %s1758, 4
        %s1760 = smul.addr %s1759, 4
        %s1761 = scalar_lea.vmem %s9, %s1760
      $region68: #{generate_feats_forward.6} parent=63 // pred_fallthru
        _
    $region64: #{generate_feats_forward.6} parent=5 // pred_fallthru
      _
  $region6: #{generate_feats_forward.6} parent=0 // loop_footer
    %s19 = sadd.s32 1, %s15
  $region7: #{generate_feats_forward.6} parent=0 // loop_footer_branch
    %14 = sbr.rel target = $region3
  $region8: #{generate_feats_forward.6} parent=0 // loop_exit
    _

// kernel: generate_feats_forward.7
$region0: #{generate_feats_forward.7}
  #allocation0 [shape = 'u32[]', space=smem, size = 0x4, offset = 0x4, fixed_abs, tag = 'smem constant byte address 0x4 - core index']
  #allocation1 [shape = 'u32[144,128]{1,0:T(1,128)}', space=vmem, size = 0x12000, scoped, tag = 'internal scratch']
  %s0 = inlined_call_operand.vmem [shape: bf16[2,32,64], index: 0, kind: input, shape index: {}, may-alias: {0,7}]
  %s1 = inlined_call_operand.vmem [shape: f32[32,9], index: 1, kind: input, shape index: {}]
  %s2 = inlined_call_operand.vmem [shape: bf16[2,9,16,16], index: 2, kind: input, shape index: {}]
  %s3 = inlined_call_operand.vmem [shape: bf16[2,16,128], index: 3, kind: input, shape index: {}]
  %s4 = inlined_call_operand.vmem [shape: bf16[2,48,128], index: 4, kind: input, shape index: {}]
  %s5 = inlined_call_operand.vmem [shape: f32[2,1,128], index: 5, kind: input, shape index: {}]
  %s6 = inlined_call_operand.vmem [shape: bf16[2,128,64], index: 6, kind: input, shape index: {}]
  %s7 = inlined_call_operand.vmem [shape: bf16[2,32,64], index: 7, kind: output, shape index: {}, may-alias: {0,7}]
  %s8 = sld [smem:[#allocation0]]
  $region61: #{generate_feats_forward.7} parent=0
    _
  %s10 = ssub.s32 1, %s8
  %s11 = scalar_select 0, %s10, %s8
  loop: start=0, step=1, limit=4
  $region2: #{generate_feats_forward.7} parent=0 // loop_pre_header
    _
  $region3: #{generate_feats_forward.7} parent=0 // loop_header
    %s13 = sphi 0, %s17
    %p14 = scmp.ge.s32.totalorder %s13, 4
    %s23 = sphi 0, %s25
    %s26 = sphi 0, %s23
    %s27 = sphi 0, %s26
    %s43 = sphi 0, %s27
    %s47 = sphi 0, %s47
    %s49 = sphi 0, %s47
    %s50 = sphi 0, %s49
    %s64 = sphi 0, %s50
    %s70 = sphi 0, %s72
    %s73 = sphi 0, %s70
    %s74 = sphi 0, %s73
    %s90 = sphi 0, %s74
    %s96 = sphi 0, %s98
    %s99 = sphi 0, %s96
    %s100 = sphi 0, %s99
    %s116 = sphi 0, %s100
    %s122 = sphi 0, %s124
    %s125 = sphi 0, %s122
    %s126 = sphi 0, %s125
    %s142 = sphi 0, %s126
    %s148 = sphi 0, %s150
    %s151 = sphi 0, %s148
    %s152 = sphi 0, %s151
    %s168 = sphi 0, %s152
    %s174 = sphi 0, %s176
    %s177 = sphi 0, %s174
    %s178 = sphi 0, %s177
    %s194 = sphi 0, %s178
    %s200 = sphi 0, %s202
    %s203 = sphi 0, %s200
    %s204 = sphi 0, %s203
    %s220 = sphi 0, %s204
  $region4: #{generate_feats_forward.7} parent=0 // loop_header_branch
    %16 = sbr.rel (%p14) target = $region8
  $region5: #{generate_feats_forward.7} parent=0 // loop_body
    %s18 = ssub.s32 %s13, 1
    %s19 = ssub.s32 %s13, 2
    %s20 = sadd.s32 %s13, 1
    %s21 = ssub.s32 %s13, %s20
    %p22 = scmp.eq.s32.totalorder %s21, 0
    %s24 = sadd.s32 %s23, 1
    %s25 = scalar_select %p22, %s23, %s24
    %p28 = pneg %p22
    %p29 = scmp.eq.s32.totalorder %s13, 1
    %p30 = por %p28, %p29
    %p31 = scmp.ne.s32.totalorder %s23, %s26
    %p32 = scmp.eq.s32.totalorder %s13, 0
    %p33 = por %p31, %p32
    %p34 = scmp.ne.s32.totalorder %s23, %s26
    %p35 = scmp.eq.s32.totalorder %s18, 1
    %p36 = por %p34, %p35
    %p37 = scmp.ne.s32.totalorder %s26, %s27
    %p38 = scmp.eq.s32.totalorder %s18, 0
    %p39 = por %p37, %p38
    %p40 = scmp.ne.s32.totalorder %s26, %s27
    %p41 = scmp.eq.s32.totalorder %s19, 1
    %p42 = por %p40, %p41
    %p44 = scmp.ne.s32.totalorder %s27, %s43
    %p45 = scmp.eq.s32.totalorder %s19, 0
    %p46 = por %p44, %p45
    %s48 = sadd.s32 %s47, 1
    %p51 = scmp.eq.s32.totalorder %s13, 1
    %p52 = scmp.ne.s32.totalorder %s47, %s49
    %p53 = scmp.eq.s32.totalorder %s13, 0
    %p54 = por %p52, %p53
    %p55 = scmp.ne.s32.totalorder %s47, %s49
    %p56 = scmp.eq.s32.totalorder %s18, 1
    %p57 = por %p55, %p56
    %p58 = scmp.ne.s32.totalorder %s49, %s50
    %p59 = scmp.eq.s32.totalorder %s18, 0
    %p60 = por %p58, %p59
    %p61 = scmp.ne.s32.totalorder %s49, %s50
    %p62 = scmp.eq.s32.totalorder %s19, 1
    %p63 = por %p61, %p62
    %p65 = scmp.ne.s32.totalorder %s50, %s64
    %p66 = scmp.eq.s32.totalorder %s19, 0
    %p67 = por %p65, %p66
    %s68 = ssub.s32 %s13, %s20
    %p69 = scmp.eq.s32.totalorder %s68, 0
    %s71 = sadd.s32 %s70, 1
    %s72 = scalar_select %p69, %s70, %s71
    %p75 = pneg %p69
    %p76 = scmp.eq.s32.totalorder %s13, 1
    %p77 = por %p75, %p76
    %p78 = scmp.ne.s32.totalorder %s70, %s73
    %p79 = scmp.eq.s32.totalorder %s13, 0
    %p80 = por %p78, %p79
    %p81 = scmp.ne.s32.totalorder %s70, %s73
    %p82 = scmp.eq.s32.totalorder %s18, 1
    %p83 = por %p81, %p82
    %p84 = scmp.ne.s32.totalorder %s73, %s74
    %p85 = scmp.eq.s32.totalorder %s18, 0
    %p86 = por %p84, %p85
    %p87 = scmp.ne.s32.totalorder %s73, %s74
    %p88 = scmp.eq.s32.totalorder %s19, 1
    %p89 = por %p87, %p88
    %p91 = scmp.ne.s32.totalorder %s74, %s90
    %p92 = scmp.eq.s32.totalorder %s19, 0
    %p93 = por %p91, %p92
    %s94 = ssub.s32 %s13, %s20
    %p95 = scmp.eq.s32.totalorder %s94, 0
    %s97 = sadd.s32 %s96, 1
    %s98 = scalar_select %p95, %s96, %s97
    %p101 = pneg %p95
    %p102 = scmp.eq.s32.totalorder %s13, 1
    %p103 = por %p101, %p102
    %p104 = scmp.ne.s32.totalorder %s96, %s99
    %p105 = scmp.eq.s32.totalorder %s13, 0
    %p106 = por %p104, %p105
    %p107 = scmp.ne.s32.totalorder %s96, %s99
    %p108 = scmp.eq.s32.totalorder %s18, 1
    %p109 = por %p107, %p108
    %p110 = scmp.ne.s32.totalorder %s99, %s100
    %p111 = scmp.eq.s32.totalorder %s18, 0
    %p112 = por %p110, %p111
    %p113 = scmp.ne.s32.totalorder %s99, %s100
    %p114 = scmp.eq.s32.totalorder %s19, 1
    %p115 = por %p113, %p114
    %p117 = scmp.ne.s32.totalorder %s100, %s116
    %p118 = scmp.eq.s32.totalorder %s19, 0
    %p119 = por %p117, %p118
    %s120 = ssub.s32 %s13, %s20
    %p121 = scmp.eq.s32.totalorder %s120, 0
    %s123 = sadd.s32 %s122, 1
    %s124 = scalar_select %p121, %s122, %s123
    %p127 = pneg %p121
    %p128 = scmp.eq.s32.totalorder %s13, 1
    %p129 = por %p127, %p128
    %p130 = scmp.ne.s32.totalorder %s122, %s125
    %p131 = scmp.eq.s32.totalorder %s13, 0
    %p132 = por %p130, %p131
    %p133 = scmp.ne.s32.totalorder %s122, %s125
    %p134 = scmp.eq.s32.totalorder %s18, 1
    %p135 = por %p133, %p134
    %p136 = scmp.ne.s32.totalorder %s125, %s126
    %p137 = scmp.eq.s32.totalorder %s18, 0
    %p138 = por %p136, %p137
    %p139 = scmp.ne.s32.totalorder %s125, %s126
    %p140 = scmp.eq.s32.totalorder %s19, 1
    %p141 = por %p139, %p140
    %p143 = scmp.ne.s32.totalorder %s126, %s142
    %p144 = scmp.eq.s32.totalorder %s19, 0
    %p145 = por %p143, %p144
    %s146 = ssub.s32 %s13, %s20
    %p147 = scmp.eq.s32.totalorder %s146, 0
    %s149 = sadd.s32 %s148, 1
    %s150 = scalar_select %p147, %s148, %s149
    %p153 = pneg %p147
    %p154 = scmp.eq.s32.totalorder %s13, 1
    %p155 = por %p153, %p154
    %p156 = scmp.ne.s32.totalorder %s148, %s151
    %p157 = scmp.eq.s32.totalorder %s13, 0
    %p158 = por %p156, %p157
    %p159 = scmp.ne.s32.totalorder %s148, %s151
    %p160 = scmp.eq.s32.totalorder %s18, 1
    %p161 = por %p159, %p160
    %p162 = scmp.ne.s32.totalorder %s151, %s152
    %p163 = scmp.eq.s32.totalorder %s18, 0
    %p164 = por %p162, %p163
    %p165 = scmp.ne.s32.totalorder %s151, %s152
    %p166 = scmp.eq.s32.totalorder %s19, 1
    %p167 = por %p165, %p166
    %p169 = scmp.ne.s32.totalorder %s152, %s168
    %p170 = scmp.eq.s32.totalorder %s19, 0
    %p171 = por %p169, %p170
    %s172 = ssub.s32 %s13, %s20
    %p173 = scmp.eq.s32.totalorder %s172, 0
    %s175 = sadd.s32 %s174, 1
    %s176 = scalar_select %p173, %s174, %s175
    %p179 = pneg %p173
    %p180 = scmp.eq.s32.totalorder %s13, 1
    %p181 = por %p179, %p180
    %p182 = scmp.ne.s32.totalorder %s174, %s177
    %p183 = scmp.eq.s32.totalorder %s13, 0
    %p184 = por %p182, %p183
    %p185 = scmp.ne.s32.totalorder %s174, %s177
    %p186 = scmp.eq.s32.totalorder %s18, 1
    %p187 = por %p185, %p186
    %p188 = scmp.ne.s32.totalorder %s177, %s178
    %p189 = scmp.eq.s32.totalorder %s18, 0
    %p190 = por %p188, %p189
    %p191 = scmp.ne.s32.totalorder %s177, %s178
    %p192 = scmp.eq.s32.totalorder %s19, 1
    %p193 = por %p191, %p192
    %p195 = scmp.ne.s32.totalorder %s178, %s194
    %p196 = scmp.eq.s32.totalorder %s19, 0
    %p197 = por %p195, %p196
    %s198 = ssub.s32 %s13, %s20
    %p199 = scmp.eq.s32.totalorder %s198, 0
    %s201 = sadd.s32 %s200, 1
    %s202 = scalar_select %p199, %s200, %s201
    %p205 = pneg %p199
    %p206 = scmp.eq.s32.totalorder %s13, 1
    %p207 = por %p205, %p206
    %p208 = scmp.ne.s32.totalorder %s200, %s203
    %p209 = scmp.eq.s32.totalorder %s13, 0
    %p210 = por %p208, %p209
    %p211 = scmp.ne.s32.totalorder %s200, %s203
    %p212 = scmp.eq.s32.totalorder %s18, 1
    %p213 = por %p211, %p212
    %p214 = scmp.ne.s32.totalorder %s203, %s204
    %p215 = scmp.eq.s32.totalorder %s18, 0
    %p216 = por %p214, %p215
    %p217 = scmp.ne.s32.totalorder %s203, %s204
    %p218 = scmp.eq.s32.totalorder %s19, 1
    %p219 = por %p217, %p218
    %p221 = scmp.ne.s32.totalorder %s204, %s220
    %p222 = scmp.eq.s32.totalorder %s19, 0
    %p223 = por %p221, %p222
    %p224 = scmp.le.s32.totalorder 1, %s13
    %p225 = scmp.lt.s32.totalorder %s13, 3
    %p226 = pnand %p224, %p225
    %p227 = pneg %p226
    // Predicated region
    $region9: #{generate_feats_forward.7} parent=5 // pred_check
      _
    $region10: #{generate_feats_forward.7} parent=5 // pred_check_branch
      %229 = sbr.rel (%p226) target = $region12
    $region11: #{generate_feats_forward.7} parent=5 // pred_region
      %s230 = ssub.s32 %s13, 1
      // Predicated region
      $region13: #{generate_feats_forward.7} parent=11 // pred_check
        %p231 = pneg %p60
      $region14: #{generate_feats_forward.7} parent=11 // pred_check_branch
        %233 = sbr.rel (%p231) target = $region16
      $region15: #{generate_feats_forward.7} parent=11 // pred_region
        _
      $region16: #{generate_feats_forward.7} parent=11 // pred_fallthru
        _
    $region12: #{generate_feats_forward.7} parent=5 // pred_fallthru
      _
    %p234 = scmp.lt.s32.totalorder %s13, 2
    // Predicated region
    $region17: #{generate_feats_forward.7} parent=5 // pred_check
      %p235 = pneg %p234
    $region18: #{generate_feats_forward.7} parent=5 // pred_check_branch
      %237 = sbr.rel (%p235) target = $region20
    $region19: #{generate_feats_forward.7} parent=5 // pred_region
      // Predicated region
      $region21: #{generate_feats_forward.7} parent=19 // pred_check
        %p238 = pneg %p33
      $region22: #{generate_feats_forward.7} parent=19 // pred_check_branch
        %240 = sbr.rel (%p238) target = $region24
      $region23: #{generate_feats_forward.7} parent=19 // pred_region
        %p241 = scmp.lt.s32.totalorder %s13, 1
        %s242 = scalar_select %p241, %s13, 1
        %s243 = smul.addr %s242, 4
        %s244 = smul.addr %s243, 4
        %s245 = scalar_lea.vmem %s0, %s244
      $region24: #{generate_feats_forward.7} parent=19 // pred_fallthru
        _
      // Predicated region
      $region25: #{generate_feats_forward.7} parent=19 // pred_check
        %p246 = pneg %p80
      $region26: #{generate_feats_forward.7} parent=19 // pred_check_branch
        %248 = sbr.rel (%p246) target = $region28
      $region27: #{generate_feats_forward.7} parent=19 // pred_region
        %p249 = scmp.lt.s32.totalorder %s13, 1
        %s250 = scalar_select %p249, %s13, 1
        %s251 = smul.addr %s250, 18
        %s252 = smul.addr %s251, 4
        %s253 = scalar_lea.vmem %s2, %s252
      $region28: #{generate_feats_forward.7} parent=19 // pred_fallthru
        _
      // Predicated region
      $region29: #{generate_feats_forward.7} parent=19 // pred_check
        %p254 = pneg %p106
      $region30: #{generate_feats_forward.7} parent=19 // pred_check_branch
        %256 = sbr.rel (%p254) target = $region32
      $region31: #{generate_feats_forward.7} parent=19 // pred_region
        %p257 = scmp.lt.s32.totalorder %s13, 1
        %s258 = scalar_select %p257, %s13, 1
        %s259 = smul.addr %s258, 2
        %s260 = smul.addr %s259, 4
        %s261 = scalar_lea.vmem %s3, %s260
      $region32: #{generate_feats_forward.7} parent=19 // pred_fallthru
        _
      // Predicated region
      $region33: #{generate_feats_forward.7} parent=19 // pred_check
        %p262 = pneg %p132
      $region34: #{generate_feats_forward.7} parent=19 // pred_check_branch
        %264 = sbr.rel (%p262) target = $region36
      $region35: #{generate_feats_forward.7} parent=19 // pred_region
        %p265 = scmp.lt.s32.totalorder %s13, 1
        %s266 = scalar_select %p265, %s13, 1
        %s267 = smul.addr %s266, 6
        %s268 = smul.addr %s267, 4
        %s269 = scalar_lea.vmem %s4, %s268
      $region36: #{generate_feats_forward.7} parent=19 // pred_fallthru
        _
      // Predicated region
      $region37: #{generate_feats_forward.7} parent=19 // pred_check
        %p270 = pneg %p158
      $region38: #{generate_feats_forward.7} parent=19 // pred_check_branch
        %272 = sbr.rel (%p270) target = $region40
      $region39: #{generate_feats_forward.7} parent=19 // pred_region
        %p273 = scmp.lt.s32.totalorder %s13, 1
        %s274 = scalar_select %p273, %s13, 1
        %s275 = scalar_lea.vmem %s5, %s274
      $region40: #{generate_feats_forward.7} parent=19 // pred_fallthru
        _
      // Predicated region
      $region41: #{generate_feats_forward.7} parent=19 // pred_check
        %p276 = pneg %p184
      $region42: #{generate_feats_forward.7} parent=19 // pred_check_branch
        %278 = sbr.rel (%p276) target = $region44
      $region43: #{generate_feats_forward.7} parent=19 // pred_region
        %p279 = scmp.lt.s32.totalorder %s13, 1
        %s280 = scalar_select %p279, %s13, 1
        %s281 = smul.addr %s280, 16
        %s282 = smul.addr %s281, 4
        %s283 = scalar_lea.vmem %s6, %s282
      $region44: #{generate_feats_forward.7} parent=19 // pred_fallthru
        _
    $region20: #{generate_feats_forward.7} parent=5 // pred_fallthru
      _
    %p284 = scmp.le.s32.totalorder 1, %s13
    %p285 = scmp.lt.s32.totalorder %s13, 3
    %p286 = pnand %p284, %p285
    %p287 = pneg %p286
    // Predicated region
    $region45: #{generate_feats_forward.7} parent=5 // pred_check
      _
    $region46: #{generate_feats_forward.7} parent=5 // pred_check_branch
      %289 = sbr.rel (%p286) target = $region48
    $region47: #{generate_feats_forward.7} parent=5 // pred_region
      %s290 = ssub.s32 %s13, 1
      %p291 = scmp.lt.s32.totalorder %s18, 1
      %s292 = scalar_select %p291, %s18, 1
      %s293 = smul.addr %s292, 4
      %s294 = smul.addr %s293, 4
      %s295 = scalar_lea.vmem %s0, %s294
      %p296 = pneg %p39
      %p297 = pneg %p36
      %p298 = pneg %p60
      %p299 = pneg %p57
      %p300 = scmp.lt.s32.totalorder %s18, 1
      %s301 = scalar_select %p300, %s18, 1
      %s302 = smul.addr %s301, 18
      %s303 = smul.addr %s302, 4
      %s304 = scalar_lea.vmem %s2, %s303
      %p305 = pneg %p86
      %p306 = pneg %p83
      %p307 = scmp.lt.s32.totalorder %s18, 1
      %s308 = scalar_select %p307, %s18, 1
      %s309 = smul.addr %s308, 2
      %s310 = smul.addr %s309, 4
      %s311 = scalar_lea.vmem %s3, %s310
      %p312 = pneg %p112
      %p313 = pneg %p109
      %p314 = scmp.lt.s32.totalorder %s18, 1
      %s315 = scalar_select %p314, %s18, 1
      %s316 = smul.addr %s315, 6
      %s317 = smul.addr %s316, 4
      %s318 = scalar_lea.vmem %s4, %s317
      %p319 = pneg %p138
      %p320 = pneg %p135
      %p321 = scmp.lt.s32.totalorder %s18, 1
      %s322 = scalar_select %p321, %s18, 1
      %s323 = scalar_lea.vmem %s5, %s322
      %p324 = pneg %p164
      %p325 = pneg %p161
      %p326 = scmp.lt.s32.totalorder %s18, 1
      %s327 = scalar_select %p326, %s18, 1
      %s328 = smul.addr %s327, 16
      %s329 = smul.addr %s328, 4
      %s330 = scalar_lea.vmem %s6, %s329
      %p331 = pneg %p190
      %p332 = pneg %p187
      %p333 = pneg %p216
      %p334 = pneg %p213
      %p335 = scmp.lt.s32.totalorder %s18, 1
      %s336 = scalar_select %p335, %s18, 1
      %s337 = smul.addr %s336, 4
      %s338 = smul.addr %s337, 4
      %s339 = scalar_lea.vmem %s7, %s338
      %p340 = scmp.lt.s32.totalorder %s18, 1
      %s341 = scalar_select %p340, %s18, 1
      %s342 = smul.addr %s341, 4
      %s343 = smul.addr %s342, 4
      %s344 = scalar_lea.vmem %s0, %s343
      %p345 = scmp.lt.s32.totalorder %s18, 1
      %s346 = scalar_select %p345, %s18, 1
      %s347 = smul.addr %s346, 18
      %s348 = smul.addr %s347, 4
      %s349 = scalar_lea.vmem %s2, %s348
      %p350 = scmp.lt.s32.totalorder %s18, 1
      %s351 = scalar_select %p350, %s18, 1
      %s352 = smul.addr %s351, 2
      %s353 = smul.addr %s352, 4
      %s354 = scalar_lea.vmem %s3, %s353
      %p355 = scmp.lt.s32.totalorder %s18, 1
      %s356 = scalar_select %p355, %s18, 1
      %s357 = smul.addr %s356, 6
      %s358 = smul.addr %s357, 4
      %s359 = scalar_lea.vmem %s4, %s358
      %p360 = scmp.lt.s32.totalorder %s18, 1
      %s361 = scalar_select %p360, %s18, 1
      %s362 = scalar_lea.vmem %s5, %s361
      %p363 = scmp.lt.s32.totalorder %s18, 1
      %s364 = scalar_select %p363, %s18, 1
      %s365 = smul.addr %s364, 16
      %s366 = smul.addr %s365, 4
      %s367 = scalar_lea.vmem %s6, %s366
      %p368 = scmp.lt.s32.totalorder %s18, 1
      %s369 = scalar_select %p368, %s18, 1
      %s370 = smul.addr %s369, 4
      %s371 = smul.addr %s370, 4
      %s372 = scalar_lea.vmem %s7, %s371
      %v374 = vld [vmem:[%s344] sm:$0xf]
      %v375 = vld [vmem:[%s344 + $0x4] sm:$0xf]
      %v376 = vld [vmem:[%s344 + $0x8] sm:$0xf]
      %v377 = vld [vmem:[%s344 + $0xc] sm:$0xf]
      %v378 = vunpack.c.l.bf16 %v374
      %v379 = vunpack.c.l.bf16 %v375
      %v380 = vunpack.c.l.bf16 %v376
      %v381 = vunpack.c.l.bf16 %v377
      %v382 = vld [vmem:[%s1] sm:$0xff]
      %v383 = vld [vmem:[%s1 + $0x8] sm:$0xff]
      %v384 = vld [vmem:[%s1 + $0x10] sm:$0xff]
      %v385 = vld [vmem:[%s1 + $0x18] sm:$0xff]
      %v386 = vld [vmem:[%s354] sm:$0xf]
      %v387 = vld [vmem:[%s354 + $0x4] sm:$0xf]
      %v388 = vld [vmem:[%s359] sm:$0xf]
      %v389 = vld [vmem:[%s359 + $0x4] sm:$0xf]
      %v390 = vld [vmem:[%s359 + $0x8] sm:$0xf]
      %v391 = vld [vmem:[%s359 + $0xc] sm:$0xf]
      %v392 = vld [vmem:[%s359 + $0x10] sm:$0xf]
      %v393 = vld [vmem:[%s359 + $0x14] sm:$0xf]
      %v394 = vld [vmem:[%s362] sm:$0x1]
      %v395 = vld [vmem:[%s367] sm:$0xf]
      %v396 = vld [vmem:[%s367 + $0x4] sm:$0xf]
      %v397 = vld [vmem:[%s367 + $0x8] sm:$0xf]
      %v398 = vld [vmem:[%s367 + $0xc] sm:$0xf]
      %v399 = vld [vmem:[%s367 + $0x10] sm:$0xf]
      %v400 = vld [vmem:[%s367 + $0x14] sm:$0xf]
      %v401 = vld [vmem:[%s367 + $0x18] sm:$0xf]
      %v402 = vld [vmem:[%s367 + $0x1c] sm:$0xf]
      %v403 = vld [vmem:[%s367 + $0x20] sm:$0xf]
      %v404 = vld [vmem:[%s367 + $0x24] sm:$0xf]
      %v405 = vld [vmem:[%s367 + $0x28] sm:$0xf]
      %v406 = vld [vmem:[%s367 + $0x2c] sm:$0xf]
      %v407 = vld [vmem:[%s367 + $0x30] sm:$0xf]
      %v408 = vld [vmem:[%s367 + $0x34] sm:$0xf]
      %v409 = vld [vmem:[%s367 + $0x38] sm:$0xf]
      %v410 = vld [vmem:[%s367 + $0x3c] sm:$0xf]
      %v411 = vrot.slane %v378, 3
      %v412 = vrot.slane %v379, 3
      %v413 = vrot.slane %v380, 3
      %v414 = vrot.slane %v381, 3
      %v415 = vlaneseq
      %v416 = vshrl.u32 %v415, 7
      %vm417 = vcmp.lt.s32.totalorder %v416, 5
      %v418 = vsel %vm417, %v413, %v414
      %v419 = vsel %vm417, %v412, %v413
      %v420 = vsel %vm417, %v411, %v412
      %v421 = vsel %vm417, %v414, %v411
      %423 = vset.pattern.permute.xlu0 0
      %424 = vperm.xlu0 %423, %v382
      %v425 = vpop.permute.xlu0 %424
      %428 = vset.pattern.permute.xlu0 0
      %429 = vperm.xlu0 %428, %v383
      %v430 = vpop.permute.xlu0 %429
      %433 = vset.pattern.permute.xlu0 0
      %434 = vperm.xlu0 %433, %v384
      %v435 = vpop.permute.xlu0 %434
      %438 = vset.pattern.permute.xlu0 0
      %439 = vperm.xlu0 %438, %v385
      %v440 = vpop.permute.xlu0 %439
      %v442 = vmul.f32 %v421, %v425
      %v443 = vmul.f32 %v420, %v430
      %v444 = vmul.f32 %v419, %v435
      %v445 = vmul.f32 %v418, %v440
      %v446 = vpack.c.bf16 %v443, %v442
      %v447 = vpack.c.bf16 %v445, %v444
      %v448 = vld [vmem:[%s349] sm:$0xf]
      %v449 = vld [vmem:[%s349 + $0x4] sm:$0xf]
      %v450 = vrot.slane %v378, 4
      %v451 = vrot.slane %v379, 4
      %v452 = vrot.slane %v380, 4
      %v453 = vrot.slane %v381, 4
      %vm454 = vcmp.lt.s32.totalorder %v416, 4
      %v455 = vsel %vm454, %v452, %v453
      %v456 = vsel %vm454, %v451, %v452
      %v457 = vsel %vm454, %v450, %v451
      %v458 = vsel %vm454, %v453, %v450
      %459 = vset.pattern.permute.xlu0 1
      %460 = vperm.xlu0 %459, %v382
      %v461 = vpop.permute.xlu0 %460
      %463 = vset.pattern.permute.xlu0 1
      %464 = vperm.xlu0 %463, %v383
      %v465 = vpop.permute.xlu0 %464
      %467 = vset.pattern.permute.xlu0 1
      %468 = vperm.xlu0 %467, %v384
      %v469 = vpop.permute.xlu0 %468
      %471 = vset.pattern.permute.xlu0 1
      %472 = vperm.xlu0 %471, %v385
      %v473 = vpop.permute.xlu0 %472
      %v475 = vmul.f32 %v458, %v461
      %v476 = vmul.f32 %v457, %v465
      %v477 = vmul.f32 %v456, %v469
      %v478 = vmul.f32 %v455, %v473
      %v479 = vpack.c.bf16 %v476, %v475
      %v480 = vpack.c.bf16 %v478, %v477
      %s481 = scalar_lea.vmem %s349, 8
      %v482 = vld [vmem:[%s481] sm:$0xf]
      %v483 = vld [vmem:[%s481 + $0x4] sm:$0xf]
      %v486 = vunpack.c.l.b16 %v482
      %v487 = vunpack.c.l.b16 %v483
      %v488 = vpack.c.b16 %v487, %v486
      %vm490 = vcmask 130048
      %v492 = vsel %vm490, %v479, 0
      %v495 = vsel %vm490, %v480, 0
      %497 = vmatprep.subr.bf16.mxu0 0
      %498 = vmatpush1.bf16.msra.mxu0 %v488
      %499 = vmatprep.subr.bf16.mxu0 0
      %500 = vmatpush1.bf16.msra.mxu0 0
      %501 = vmatprep.subr.bf16.mxu0 0
      %502 = vmatpush1.bf16.msra.mxu0 0
      %503 = vmatprep.subr.bf16.mxu0 0
      %504 = vmatpush1.bf16.msra.mxu0 0
      %505 = vmatprep.subr.bf16.mxu0 0
      %506 = vmatpush1.bf16.msra.mxu0 0
      %507 = vmatprep.subr.bf16.mxu0 0
      %508 = vmatpush1.bf16.msra.mxu0 0
      %509 = vmatprep.subr.bf16.mxu0 0
      %510 = vmatpush1.bf16.msra.mxu0 0
      %511 = vmatprep.subr.bf16.mxu0 0
      %512 = vmatpush1.bf16.msra.mxu0 0
      %513 = vmatprep.subr.bf16.mxu0 0
      %514 = vmatpush1.bf16.msra.mxu0 0
      %515 = vmatprep.subr.bf16.mxu0 0
      %516 = vmatpush1.bf16.msra.mxu0 0
      %517 = vmatprep.subr.bf16.mxu0 0
      %518 = vmatpush1.bf16.msra.mxu0 0
      %519 = vmatprep.subr.bf16.mxu0 0
      %520 = vmatpush1.bf16.msra.mxu0 0
      %521 = vmatprep.subr.bf16.mxu0 0
      %522 = vmatpush1.bf16.msra.mxu0 0
      %523 = vmatprep.subr.bf16.mxu0 0
      %524 = vmatpush1.bf16.msra.mxu0 0
      %525 = vmatprep.subr.bf16.mxu0 0
      %526 = vmatpush1.bf16.msra.mxu0 0
      %527 = vmatprep.subr.bf16.mxu0 0
      %528 = vmatpush1.bf16.msra.mxu0 0
      %529 = vmatprep.mubr.bf16.mxu0 0
      %530 = vmatmul.mubr.bf16.gmra.mrb[0].mxu0 %v492
      %v531 = vpop.f32.mrb[0].mxu0
      %v532 = vadd.f32 0.0, %v531
      %v533 = vpop.f32.mrb[0].mxu0
      %v534 = vpop.f32.mrb[0].mxu0
      %v535 = vadd.f32 0.0, %v534
      %v536 = vpop.f32.mrb[0].mxu0
      %537 = vmatprep.mubr.bf16.mxu0 0
      %538 = vmatmul.mubr.bf16.gmra.mrb[0].mxu0 %v495
      %v539 = vpop.f32.mrb[0].mxu0
      %v540 = vadd.f32 0.0, %v539
      %v541 = vpop.f32.mrb[0].mxu0
      %v542 = vpop.f32.mrb[0].mxu0
      %v543 = vadd.f32 0.0, %v542
      %v544 = vpop.f32.mrb[0].mxu0
      %545 = vdwg.mxu0
      %v548 = vunpack.c.l.b16 %v448
      %v549 = vunpack.c.l.b16 %v449
      %v550 = vpack.c.b16 %v549, %v548
      %v553 = vsel %vm490, %v446, 0
      %v556 = vsel %vm490, %v447, 0
      %558 = vmatprep.subr.bf16.mxu0 0
      %559 = vmatpush1.bf16.msra.mxu0 %v550
      %560 = vmatprep.subr.bf16.mxu0 0
      %561 = vmatpush1.bf16.msra.mxu0 0
      %562 = vmatprep.subr.bf16.mxu0 0
      %563 = vmatpush1.bf16.msra.mxu0 0
      %564 = vmatprep.subr.bf16.mxu0 0
      %565 = vmatpush1.bf16.msra.mxu0 0
      %566 = vmatprep.subr.bf16.mxu0 0
      %567 = vmatpush1.bf16.msra.mxu0 0
      %568 = vmatprep.subr.bf16.mxu0 0
      %569 = vmatpush1.bf16.msra.mxu0 0
      %570 = vmatprep.subr.bf16.mxu0 0
      %571 = vmatpush1.bf16.msra.mxu0 0
      %572 = vmatprep.subr.bf16.mxu0 0
      %573 = vmatpush1.bf16.msra.mxu0 0
      %574 = vmatprep.subr.bf16.mxu0 0
      %575 = vmatpush1.bf16.msra.mxu0 0
      %576 = vmatprep.subr.bf16.mxu0 0
      %577 = vmatpush1.bf16.msra.mxu0 0
      %578 = vmatprep.subr.bf16.mxu0 0
      %579 = vmatpush1.bf16.msra.mxu0 0
      %580 = vmatprep.subr.bf16.mxu0 0
      %581 = vmatpush1.bf16.msra.mxu0 0
      %582 = vmatprep.subr.bf16.mxu0 0
      %583 = vmatpush1.bf16.msra.mxu0 0
      %584 = vmatprep.subr.bf16.mxu0 0
      %585 = vmatpush1.bf16.msra.mxu0 0
      %586 = vmatprep.subr.bf16.mxu0 0
      %587 = vmatpush1.bf16.msra.mxu0 0
      %588 = vmatprep.subr.bf16.mxu0 0
      %589 = vmatpush1.bf16.msra.mxu0 0
      %590 = vmatprep.mubr.bf16.mxu0 0
      %591 = vmatmul.mubr.bf16.gmra.mrb[0].mxu0 %v553
      %v592 = vpop.f32.mrb[0].mxu0
      %v593 = vadd.f32 %v532, %v592
      %v594 = vpop.f32.mrb[0].mxu0
      %v595 = vpop.f32.mrb[0].mxu0
      %v596 = vadd.f32 %v535, %v595
      %v597 = vpop.f32.mrb[0].mxu0
      %598 = vmatprep.mubr.bf16.mxu0 0
      %599 = vmatmul.mubr.bf16.gmra.mrb[0].mxu0 %v556
      %v600 = vpop.f32.mrb[0].mxu0
      %v601 = vadd.f32 %v540, %v600
      %v602 = vpop.f32.mrb[0].mxu0
      %v603 = vpop.f32.mrb[0].mxu0
      %v604 = vadd.f32 %v543, %v603
      %v605 = vpop.f32.mrb[0].mxu0
      %606 = vdwg.mxu0
      %v607 = vrot.slane %v378, 5
      %v608 = vrot.slane %v379, 5
      %v609 = vrot.slane %v380, 5
      %v610 = vrot.slane %v381, 5
      %vm611 = vcmp.lt.s32.totalorder %v416, 3
      %v612 = vsel %vm611, %v609, %v610
      %v613 = vsel %vm611, %v608, %v609
      %v614 = vsel %vm611, %v607, %v608
      %v615 = vsel %vm611, %v610, %v607
      %616 = vset.pattern.permute.xlu0 2
      %617 = vperm.xlu0 %616, %v382
      %v618 = vpop.permute.xlu0 %617
      %620 = vset.pattern.permute.xlu0 2
      %621 = vperm.xlu0 %620, %v383
      %v622 = vpop.permute.xlu0 %621
      %624 = vset.pattern.permute.xlu0 2
      %625 = vperm.xlu0 %624, %v384
      %v626 = vpop.permute.xlu0 %625
      %628 = vset.pattern.permute.xlu0 2
      %629 = vperm.xlu0 %628, %v385
      %v630 = vpop.permute.xlu0 %629
      %v632 = vmul.f32 %v615, %v618
      %v633 = vmul.f32 %v614, %v622
      %v634 = vmul.f32 %v613, %v626
      %v635 = vmul.f32 %v612, %v630
      %v636 = vpack.c.bf16 %v633, %v632
      %v637 = vpack.c.bf16 %v635, %v634
      %s638 = scalar_lea.vmem %s349, 16
      %v639 = vld [vmem:[%s638] sm:$0xf]
      %v640 = vld [vmem:[%s638 + $0x4] sm:$0xf]
      %v643 = vunpack.c.l.b16 %v639
      %v644 = vunpack.c.l.b16 %v640
      %v645 = vpack.c.b16 %v644, %v643
      %v648 = vsel %vm490, %v636, 0
      %v651 = vsel %vm490, %v637, 0
      %653 = vmatprep.subr.bf16.mxu0 0
      %654 = vmatpush1.bf16.msra.mxu0 %v645
      %655 = vmatprep.subr.bf16.mxu0 0
      %656 = vmatpush1.bf16.msra.mxu0 0
      %657 = vmatprep.subr.bf16.mxu0 0
      %658 = vmatpush1.bf16.msra.mxu0 0
      %659 = vmatprep.subr.bf16.mxu0 0
      %660 = vmatpush1.bf16.msra.mxu0 0
      %661 = vmatprep.subr.bf16.mxu0 0
      %662 = vmatpush1.bf16.msra.mxu0 0
      %663 = vmatprep.subr.bf16.mxu0 0
      %664 = vmatpush1.bf16.msra.mxu0 0
      %665 = vmatprep.subr.bf16.mxu0 0
      %666 = vmatpush1.bf16.msra.mxu0 0
      %667 = vmatprep.subr.bf16.mxu0 0
      %668 = vmatpush1.bf16.msra.mxu0 0
      %669 = vmatprep.subr.bf16.mxu0 0
      %670 = vmatpush1.bf16.msra.mxu0 0
      %671 = vmatprep.subr.bf16.mxu0 0
      %672 = vmatpush1.bf16.msra.mxu0 0
      %673 = vmatprep.subr.bf16.mxu0 0
      %674 = vmatpush1.bf16.msra.mxu0 0
      %675 = vmatprep.subr.bf16.mxu0 0
      %676 = vmatpush1.bf16.msra.mxu0 0
      %677 = vmatprep.subr.bf16.mxu0 0
      %678 = vmatpush1.bf16.msra.mxu0 0
      %679 = vmatprep.subr.bf16.mxu0 0
      %680 = vmatpush1.bf16.msra.mxu0 0
      %681 = vmatprep.subr.bf16.mxu0 0
      %682 = vmatpush1.bf16.msra.mxu0 0
      %683 = vmatprep.subr.bf16.mxu0 0
      %684 = vmatpush1.bf16.msra.mxu0 0
      %685 = vmatprep.mubr.bf16.mxu0 0
      %686 = vmatmul.mubr.bf16.gmra.mrb[0].mxu0 %v648
      %v687 = vpop.f32.mrb[0].mxu0
      %v688 = vadd.f32 0.0, %v687
      %v689 = vpop.f32.mrb[0].mxu0
      %v690 = vpop.f32.mrb[0].mxu0
      %v691 = vadd.f32 0.0, %v690
      %v692 = vpop.f32.mrb[0].mxu0
      %693 = vmatprep.mubr.bf16.mxu0 0
      %694 = vmatmul.mubr.bf16.gmra.mrb[0].mxu0 %v651
      %v695 = vpop.f32.mrb[0].mxu0
      %v696 = vadd.f32 0.0, %v695
      %v697 = vpop.f32.mrb[0].mxu0
      %v698 = vpop.f32.mrb[0].mxu0
      %v699 = vadd.f32 0.0, %v698
      %v700 = vpop.f32.mrb[0].mxu0
      %701 = vdwg.mxu0
      %v702 = vadd.f32 %v593, %v688
      %v703 = vadd.f32 %v596, %v691
      %v704 = vadd.f32 %v601, %v696
      %v705 = vadd.f32 %v604, %v699
      %v706 = vrot.slane %v378, 7
      %v707 = vrot.slane %v379, 7
      %v708 = vrot.slane %v380, 7
      %v709 = vrot.slane %v381, 7
      %vm710 = vcmp.lt.s32.totalorder %v416, 1
      %v711 = vsel %vm710, %v708, %v709
      %v712 = vsel %vm710, %v707, %v708
      %v713 = vsel %vm710, %v706, %v707
      %v714 = vsel %vm710, %v709, %v706
      %715 = vset.pattern.permute.xlu0 3
      %716 = vperm.xlu0 %715, %v382
      %v717 = vpop.permute.xlu0 %716
      %719 = vset.pattern.permute.xlu0 3
      %720 = vperm.xlu0 %719, %v383
      %v721 = vpop.permute.xlu0 %720
      %723 = vset.pattern.permute.xlu0 3
      %724 = vperm.xlu0 %723, %v384
      %v725 = vpop.permute.xlu0 %724
      %727 = vset.pattern.permute.xlu0 3
      %728 = vperm.xlu0 %727, %v385
      %v729 = vpop.permute.xlu0 %728
      %v731 = vmul.f32 %v714, %v717
      %v732 = vmul.f32 %v713, %v721
      %v733 = vmul.f32 %v712, %v725
      %v734 = vmul.f32 %v711, %v729
      %v735 = vpack.c.bf16 %v732, %v731
      %v736 = vpack.c.bf16 %v734, %v733
      %s737 = scalar_lea.vmem %s349, 24
      %v738 = vld [vmem:[%s737] sm:$0xf]
      %v739 = vld [vmem:[%s737 + $0x4] sm:$0xf]
      %v742 = vunpack.c.l.b16 %v738
      %v743 = vunpack.c.l.b16 %v739
      %v744 = vpack.c.b16 %v743, %v742
      %v747 = vsel %vm490, %v735, 0
      %v750 = vsel %vm490, %v736, 0
      %752 = vmatprep.subr.bf16.mxu0 0
      %753 = vmatpush1.bf16.msra.mxu0 %v744
      %754 = vmatprep.subr.bf16.mxu0 0
      %755 = vmatpush1.bf16.msra.mxu0 0
      %756 = vmatprep.subr.bf16.mxu0 0
      %757 = vmatpush1.bf16.msra.mxu0 0
      %758 = vmatprep.subr.bf16.mxu0 0
      %759 = vmatpush1.bf16.msra.mxu0 0
      %760 = vmatprep.subr.bf16.mxu0 0
      %761 = vmatpush1.bf16.msra.mxu0 0
      %762 = vmatprep.subr.bf16.mxu0 0
      %763 = vmatpush1.bf16.msra.mxu0 0
      %764 = vmatprep.subr.bf16.mxu0 0
      %765 = vmatpush1.bf16.msra.mxu0 0
      %766 = vmatprep.subr.bf16.mxu0 0
      %767 = vmatpush1.bf16.msra.mxu0 0
      %768 = vmatprep.subr.bf16.mxu0 0
      %769 = vmatpush1.bf16.msra.mxu0 0
      %770 = vmatprep.subr.bf16.mxu0 0
      %771 = vmatpush1.bf16.msra.mxu0 0
      %772 = vmatprep.subr.bf16.mxu0 0
      %773 = vmatpush1.bf16.msra.mxu0 0
      %774 = vmatprep.subr.bf16.mxu0 0
      %775 = vmatpush1.bf16.msra.mxu0 0
      %776 = vmatprep.subr.bf16.mxu0 0
      %777 = vmatpush1.bf16.msra.mxu0 0
      %778 = vmatprep.subr.bf16.mxu0 0
      %779 = vmatpush1.bf16.msra.mxu0 0
      %780 = vmatprep.subr.bf16.mxu0 0
      %781 = vmatpush1.bf16.msra.mxu0 0
      %782 = vmatprep.subr.bf16.mxu0 0
      %783 = vmatpush1.bf16.msra.mxu0 0
      %784 = vmatprep.mubr.bf16.mxu0 0
      %785 = vmatmul.mubr.bf16.gmra.mrb[0].mxu0 %v747
      %v786 = vpop.f32.mrb[0].mxu0
      %v787 = vadd.f32 0.0, %v786
      %v788 = vpop.f32.mrb[0].mxu0
      %v789 = vpop.f32.mrb[0].mxu0
      %v790 = vadd.f32 0.0, %v789
      %v791 = vpop.f32.mrb[0].mxu0
      %792 = vmatprep.mubr.bf16.mxu0 0
      %793 = vmatmul.mubr.bf16.gmra.mrb[0].mxu0 %v750
      %v794 = vpop.f32.mrb[0].mxu0
      %v795 = vadd.f32 0.0, %v794
      %v796 = vpop.f32.mrb[0].mxu0
      %v797 = vpop.f32.mrb[0].mxu0
      %v798 = vadd.f32 0.0, %v797
      %v799 = vpop.f32.mrb[0].mxu0
      %800 = vdwg.mxu0
      %v801 = vadd.f32 %v702, %v787
      %v802 = vadd.f32 %v703, %v790
      %v803 = vadd.f32 %v704, %v795
      %v804 = vadd.f32 %v705, %v798
      %v805 = vpack.c.bf16 %v379, %v378
      %v806 = vpack.c.bf16 %v381, %v380
      %s807 = scalar_lea.vmem %s349, 32
      %v808 = vld [vmem:[%s807] sm:$0xf]
      %v809 = vld [vmem:[%s807 + $0x4] sm:$0xf]
      %v812 = vunpack.c.l.b16 %v808
      %v813 = vunpack.c.l.b16 %v809
      %v814 = vpack.c.b16 %v813, %v812
      %v817 = vsel %vm490, %v805, 0
      %v820 = vsel %vm490, %v806, 0
      %822 = vmatprep.subr.bf16.mxu0 0
      %823 = vmatpush1.bf16.msra.mxu0 %v814
      %824 = vmatprep.subr.bf16.mxu0 0
      %825 = vmatpush1.bf16.msra.mxu0 0
      %826 = vmatprep.subr.bf16.mxu0 0
      %827 = vmatpush1.bf16.msra.mxu0 0
      %828 = vmatprep.subr.bf16.mxu0 0
      %829 = vmatpush1.bf16.msra.mxu0 0
      %830 = vmatprep.subr.bf16.mxu0 0
      %831 = vmatpush1.bf16.msra.mxu0 0
      %832 = vmatprep.subr.bf16.mxu0 0
      %833 = vmatpush1.bf16.msra.mxu0 0
      %834 = vmatprep.subr.bf16.mxu0 0
      %835 = vmatpush1.bf16.msra.mxu0 0
      %836 = vmatprep.subr.bf16.mxu0 0
      %837 = vmatpush1.bf16.msra.mxu0 0
      %838 = vmatprep.subr.bf16.mxu0 0
      %839 = vmatpush1.bf16.msra.mxu0 0
      %840 = vmatprep.subr.bf16.mxu0 0
      %841 = vmatpush1.bf16.msra.mxu0 0
      %842 = vmatprep.subr.bf16.mxu0 0
      %843 = vmatpush1.bf16.msra.mxu0 0
      %844 = vmatprep.subr.bf16.mxu0 0
      %845 = vmatpush1.bf16.msra.mxu0 0
      %846 = vmatprep.subr.bf16.mxu0 0
      %847 = vmatpush1.bf16.msra.mxu0 0
      %848 = vmatprep.subr.bf16.mxu0 0
      %849 = vmatpush1.bf16.msra.mxu0 0
      %850 = vmatprep.subr.bf16.mxu0 0
      %851 = vmatpush1.bf16.msra.mxu0 0
      %852 = vmatprep.subr.bf16.mxu0 0
      %853 = vmatpush1.bf16.msra.mxu0 0
      %854 = vmatprep.mubr.bf16.mxu0 0
      %855 = vmatmul.mubr.bf16.gmra.mrb[0].mxu0 %v817
      %v856 = vpop.f32.mrb[0].mxu0
      %v857 = vadd.f32 0.0, %v856
      %v858 = vpop.f32.mrb[0].mxu0
      %v859 = vpop.f32.mrb[0].mxu0
      %v860 = vadd.f32 0.0, %v859
      %v861 = vpop.f32.mrb[0].mxu0
      %862 = vmatprep.mubr.bf16.mxu0 0
      %863 = vmatmul.mubr.bf16.gmra.mrb[0].mxu0 %v820
      %v864 = vpop.f32.mrb[0].mxu0
      %v865 = vadd.f32 0.0, %v864
      %v866 = vpop.f32.mrb[0].mxu0
      %v867 = vpop.f32.mrb[0].mxu0
      %v868 = vadd.f32 0.0, %v867
      %v869 = vpop.f32.mrb[0].mxu0
      %870 = vdwg.mxu0
      %v871 = vadd.f32 %v801, %v857
      %v872 = vadd.f32 %v802, %v860
      %v873 = vadd.f32 %v803, %v865
      %v874 = vadd.f32 %v804, %v868
      %v875 = vrot.slane %v378, 1
      %v876 = vrot.slane %v379, 1
      %v877 = vrot.slane %v380, 1
      %v878 = vrot.slane %v381, 1
      %vm879 = vcmp.lt.s32.totalorder %v416, 7
      %v880 = vsel %vm879, %v877, %v878
      %v881 = vsel %vm879, %v876, %v877
      %v882 = vsel %vm879, %v875, %v876
      %v883 = vsel %vm879, %v878, %v875
      %884 = vset.pattern.permute.xlu0 5
      %885 = vperm.xlu0 %884, %v382
      %v886 = vpop.permute.xlu0 %885
      %888 = vset.pattern.permute.xlu0 5
      %889 = vperm.xlu0 %888, %v383
      %v890 = vpop.permute.xlu0 %889
      %892 = vset.pattern.permute.xlu0 5
      %893 = vperm.xlu0 %892, %v384
      %v894 = vpop.permute.xlu0 %893
      %896 = vset.pattern.permute.xlu0 5
      %897 = vperm.xlu0 %896, %v385
      %v898 = vpop.permute.xlu0 %897
      %v900 = vmul.f32 %v882, %v886
      %v901 = vmul.f32 %v881, %v890
      %v902 = vmul.f32 %v880, %v894
      %v903 = vmul.f32 %v883, %v898
      %v904 = vpack.c.bf16 %v901, %v900
      %v905 = vpack.c.bf16 %v903, %v902
      %s906 = scalar_lea.vmem %s349, 40
      %v907 = vld [vmem:[%s906] sm:$0xf]
      %v908 = vld [vmem:[%s906 + $0x4] sm:$0xf]
      %v911 = vunpack.c.l.b16 %v907
      %v912 = vunpack.c.l.b16 %v908
      %v913 = vpack.c.b16 %v912, %v911
      %v916 = vsel %vm490, %v904, 0
      %v919 = vsel %vm490, %v905, 0
      %921 = vmatprep.subr.bf16.mxu0 0
      %922 = vmatpush1.bf16.msra.mxu0 %v913
      %923 = vmatprep.subr.bf16.mxu0 0
      %924 = vmatpush1.bf16.msra.mxu0 0
      %925 = vmatprep.subr.bf16.mxu0 0
      %926 = vmatpush1.bf16.msra.mxu0 0
      %927 = vmatprep.subr.bf16.mxu0 0
      %928 = vmatpush1.bf16.msra.mxu0 0
      %929 = vmatprep.subr.bf16.mxu0 0
      %930 = vmatpush1.bf16.msra.mxu0 0
      %931 = vmatprep.subr.bf16.mxu0 0
      %932 = vmatpush1.bf16.msra.mxu0 0
      %933 = vmatprep.subr.bf16.mxu0 0
      %934 = vmatpush1.bf16.msra.mxu0 0
      %935 = vmatprep.subr.bf16.mxu0 0
      %936 = vmatpush1.bf16.msra.mxu0 0
      %937 = vmatprep.subr.bf16.mxu0 0
      %938 = vmatpush1.bf16.msra.mxu0 0
      %939 = vmatprep.subr.bf16.mxu0 0
      %940 = vmatpush1.bf16.msra.mxu0 0
      %941 = vmatprep.subr.bf16.mxu0 0
      %942 = vmatpush1.bf16.msra.mxu0 0
      %943 = vmatprep.subr.bf16.mxu0 0
      %944 = vmatpush1.bf16.msra.mxu0 0
      %945 = vmatprep.subr.bf16.mxu0 0
      %946 = vmatpush1.bf16.msra.mxu0 0
      %947 = vmatprep.subr.bf16.mxu0 0
      %948 = vmatpush1.bf16.msra.mxu0 0
      %949 = vmatprep.subr.bf16.mxu0 0
      %950 = vmatpush1.bf16.msra.mxu0 0
      %951 = vmatprep.subr.bf16.mxu0 0
      %952 = vmatpush1.bf16.msra.mxu0 0
      %953 = vmatprep.mubr.bf16.mxu0 0
      %954 = vmatmul.mubr.bf16.gmra.mrb[0].mxu0 %v916
      %v955 = vpop.f32.mrb[0].mxu0
      %v956 = vadd.f32 0.0, %v955
      %v957 = vpop.f32.mrb[0].mxu0
      %v958 = vpop.f32.mrb[0].mxu0
      %v959 = vadd.f32 0.0, %v958
      %v960 = vpop.f32.mrb[0].mxu0
      %961 = vmatprep.mubr.bf16.mxu0 0
      %962 = vmatmul.mubr.bf16.gmra.mrb[0].mxu0 %v919
      %v963 = vpop.f32.mrb[0].mxu0
      %v964 = vadd.f32 0.0, %v963
      %v965 = vpop.f32.mrb[0].mxu0
      %v966 = vpop.f32.mrb[0].mxu0
      %v967 = vadd.f32 0.0, %v966
      %v968 = vpop.f32.mrb[0].mxu0
      %969 = vdwg.mxu0
      %v970 = vadd.f32 %v871, %v956
      %v971 = vadd.f32 %v872, %v959
      %v972 = vadd.f32 %v873, %v964
      %v973 = vadd.f32 %v874, %v967
      %974 = vset.pattern.permute.xlu0 6
      %975 = vperm.xlu0 %974, %v382
      %v976 = vpop.permute.xlu0 %975
      %978 = vset.pattern.permute.xlu0 6
      %979 = vperm.xlu0 %978, %v383
      %v980 = vpop.permute.xlu0 %979
      %982 = vset.pattern.permute.xlu0 6
      %983 = vperm.xlu0 %982, %v384
      %v984 = vpop.permute.xlu0 %983
      %986 = vset.pattern.permute.xlu0 6
      %987 = vperm.xlu0 %986, %v385
      %v988 = vpop.permute.xlu0 %987
      %v990 = vmul.f32 %v420, %v976
      %v991 = vmul.f32 %v419, %v980
      %v992 = vmul.f32 %v418, %v984
      %v993 = vmul.f32 %v421, %v988
      %v994 = vpack.c.bf16 %v991, %v990
      %v995 = vpack.c.bf16 %v993, %v992
      %s996 = scalar_lea.vmem %s349, 48
      %v997 = vld [vmem:[%s996] sm:$0xf]
      %v998 = vld [vmem:[%s996 + $0x4] sm:$0xf]
      %v1001 = vunpack.c.l.b16 %v997
      %v1002 = vunpack.c.l.b16 %v998
      %v1003 = vpack.c.b16 %v1002, %v1001
      %v1006 = vsel %vm490, %v994, 0
      %v1009 = vsel %vm490, %v995, 0
      %1011 = vmatprep.subr.bf16.mxu0 0
      %1012 = vmatpush1.bf16.msra.mxu0 %v1003
      %1013 = vmatprep.subr.bf16.mxu0 0
      %1014 = vmatpush1.bf16.msra.mxu0 0
      %1015 = vmatprep.subr.bf16.mxu0 0
      %1016 = vmatpush1.bf16.msra.mxu0 0
      %1017 = vmatprep.subr.bf16.mxu0 0
      %1018 = vmatpush1.bf16.msra.mxu0 0
      %1019 = vmatprep.subr.bf16.mxu0 0
      %1020 = vmatpush1.bf16.msra.mxu0 0
      %1021 = vmatprep.subr.bf16.mxu0 0
      %1022 = vmatpush1.bf16.msra.mxu0 0
      %1023 = vmatprep.subr.bf16.mxu0 0
      %1024 = vmatpush1.bf16.msra.mxu0 0
      %1025 = vmatprep.subr.bf16.mxu0 0
      %1026 = vmatpush1.bf16.msra.mxu0 0
      %1027 = vmatprep.subr.bf16.mxu0 0
      %1028 = vmatpush1.bf16.msra.mxu0 0
      %1029 = vmatprep.subr.bf16.mxu0 0
      %1030 = vmatpush1.bf16.msra.mxu0 0
      %1031 = vmatprep.subr.bf16.mxu0 0
      %1032 = vmatpush1.bf16.msra.mxu0 0
      %1033 = vmatprep.subr.bf16.mxu0 0
      %1034 = vmatpush1.bf16.msra.mxu0 0
      %1035 = vmatprep.subr.bf16.mxu0 0
      %1036 = vmatpush1.bf16.msra.mxu0 0
      %1037 = vmatprep.subr.bf16.mxu0 0
      %1038 = vmatpush1.bf16.msra.mxu0 0
      %1039 = vmatprep.subr.bf16.mxu0 0
      %1040 = vmatpush1.bf16.msra.mxu0 0
      %1041 = vmatprep.subr.bf16.mxu0 0
      %1042 = vmatpush1.bf16.msra.mxu0 0
      %1043 = vmatprep.mubr.bf16.mxu0 0
      %1044 = vmatmul.mubr.bf16.gmra.mrb[0].mxu0 %v1006
      %v1045 = vpop.f32.mrb[0].mxu0
      %v1046 = vadd.f32 0.0, %v1045
      %v1047 = vpop.f32.mrb[0].mxu0
      %v1048 = vpop.f32.mrb[0].mxu0
      %v1049 = vadd.f32 0.0, %v1048
      %v1050 = vpop.f32.mrb[0].mxu0
      %1051 = vmatprep.mubr.bf16.mxu0 0
      %1052 = vmatmul.mubr.bf16.gmra.mrb[0].mxu0 %v1009
      %v1053 = vpop.f32.mrb[0].mxu0
      %v1054 = vadd.f32 0.0, %v1053
      %v1055 = vpop.f32.mrb[0].mxu0
      %v1056 = vpop.f32.mrb[0].mxu0
      %v1057 = vadd.f32 0.0, %v1056
      %v1058 = vpop.f32.mrb[0].mxu0
      %1059 = vdwg.mxu0
      %v1060 = vadd.f32 %v970, %v1046
      %v1061 = vadd.f32 %v971, %v1049
      %v1062 = vadd.f32 %v972, %v1054
      %v1063 = vadd.f32 %v973, %v1057
      %1064 = vset.pattern.permute.xlu0 7
      %1065 = vperm.xlu0 %1064, %v382
      %v1066 = vpop.permute.xlu0 %1065
      %1068 = vset.pattern.permute.xlu0 7
      %1069 = vperm.xlu0 %1068, %v383
      %v1070 = vpop.permute.xlu0 %1069
      %1072 = vset.pattern.permute.xlu0 7
      %1073 = vperm.xlu0 %1072, %v384
      %v1074 = vpop.permute.xlu0 %1073
      %1076 = vset.pattern.permute.xlu0 7
      %1077 = vperm.xlu0 %1076, %v385
      %v1078 = vpop.permute.xlu0 %1077
      %v1080 = vmul.f32 %v457, %v1066
      %v1081 = vmul.f32 %v456, %v1070
      %v1082 = vmul.f32 %v455, %v1074
      %v1083 = vmul.f32 %v458, %v1078
      %v1084 = vpack.c.bf16 %v1081, %v1080
      %v1085 = vpack.c.bf16 %v1083, %v1082
      %s1086 = scalar_lea.vmem %s349, 56
      %v1087 = vld [vmem:[%s1086] sm:$0xf]
      %v1088 = vld [vmem:[%s1086 + $0x4] sm:$0xf]
      %v1091 = vunpack.c.l.b16 %v1087
      %v1092 = vunpack.c.l.b16 %v1088
      %v1093 = vpack.c.b16 %v1092, %v1091
      %v1096 = vsel %vm490, %v1084, 0
      %v1099 = vsel %vm490, %v1085, 0
      %1101 = vmatprep.subr.bf16.mxu0 0
      %1102 = vmatpush1.bf16.msra.mxu0 %v1093
      %1103 = vmatprep.subr.bf16.mxu0 0
      %1104 = vmatpush1.bf16.msra.mxu0 0
      %1105 = vmatprep.subr.bf16.mxu0 0
      %1106 = vmatpush1.bf16.msra.mxu0 0
      %1107 = vmatprep.subr.bf16.mxu0 0
      %1108 = vmatpush1.bf16.msra.mxu0 0
      %1109 = vmatprep.subr.bf16.mxu0 0
      %1110 = vmatpush1.bf16.msra.mxu0 0
      %1111 = vmatprep.subr.bf16.mxu0 0
      %1112 = vmatpush1.bf16.msra.mxu0 0
      %1113 = vmatprep.subr.bf16.mxu0 0
      %1114 = vmatpush1.bf16.msra.mxu0 0
      %1115 = vmatprep.subr.bf16.mxu0 0
      %1116 = vmatpush1.bf16.msra.mxu0 0
      %1117 = vmatprep.subr.bf16.mxu0 0
      %1118 = vmatpush1.bf16.msra.mxu0 0
      %1119 = vmatprep.subr.bf16.mxu0 0
      %1120 = vmatpush1.bf16.msra.mxu0 0
      %1121 = vmatprep.subr.bf16.mxu0 0
      %1122 = vmatpush1.bf16.msra.mxu0 0
      %1123 = vmatprep.subr.bf16.mxu0 0
      %1124 = vmatpush1.bf16.msra.mxu0 0
      %1125 = vmatprep.subr.bf16.mxu0 0
      %1126 = vmatpush1.bf16.msra.mxu0 0
      %1127 = vmatprep.subr.bf16.mxu0 0
      %1128 = vmatpush1.bf16.msra.mxu0 0
      %1129 = vmatprep.subr.bf16.mxu0 0
      %1130 = vmatpush1.bf16.msra.mxu0 0
      %1131 = vmatprep.subr.bf16.mxu0 0
      %1132 = vmatpush1.bf16.msra.mxu0 0
      %1133 = vmatprep.mubr.bf16.mxu0 0
      %1134 = vmatmul.mubr.bf16.gmra.mrb[0].mxu0 %v1096
      %v1135 = vpop.f32.mrb[0].mxu0
      %v1136 = vadd.f32 0.0, %v1135
      %v1137 = vpop.f32.mrb[0].mxu0
      %v1138 = vpop.f32.mrb[0].mxu0
      %v1139 = vadd.f32 0.0, %v1138
      %v1140 = vpop.f32.mrb[0].mxu0
      %1141 = vmatprep.mubr.bf16.mxu0 0
      %1142 = vmatmul.mubr.bf16.gmra.mrb[0].mxu0 %v1099
      %v1143 = vpop.f32.mrb[0].mxu0
      %v1144 = vadd.f32 0.0, %v1143
      %v1145 = vpop.f32.mrb[0].mxu0
      %v1146 = vpop.f32.mrb[0].mxu0
      %v1147 = vadd.f32 0.0, %v1146
      %v1148 = vpop.f32.mrb[0].mxu0
      %1149 = vdwg.mxu0
      %v1150 = vadd.f32 %v1060, %v1136
      %v1151 = vadd.f32 %v1061, %v1139
      %v1152 = vadd.f32 %v1062, %v1144
      %v1153 = vadd.f32 %v1063, %v1147
      %1154 = vset.pattern.permute.xlu0 8
      %1155 = vperm.xlu0 %1154, %v382
      %v1156 = vpop.permute.xlu0 %1155
      %1158 = vset.pattern.permute.xlu0 8
      %1159 = vperm.xlu0 %1158, %v383
      %v1160 = vpop.permute.xlu0 %1159
      %1162 = vset.pattern.permute.xlu0 8
      %1163 = vperm.xlu0 %1162, %v384
      %v1164 = vpop.permute.xlu0 %1163
      %1166 = vset.pattern.permute.xlu0 8
      %1167 = vperm.xlu0 %1166, %v385
      %v1168 = vpop.permute.xlu0 %1167
      %v1170 = vmul.f32 %v614, %v1156
      %v1171 = vmul.f32 %v613, %v1160
      %v1172 = vmul.f32 %v612, %v1164
      %v1173 = vmul.f32 %v615, %v1168
      %v1174 = vpack.c.bf16 %v1171, %v1170
      %v1175 = vpack.c.bf16 %v1173, %v1172
      %s1176 = scalar_lea.vmem %s349, 64
      %v1177 = vld [vmem:[%s1176] sm:$0xf]
      %v1178 = vld [vmem:[%s1176 + $0x4] sm:$0xf]
      %v1181 = vunpack.c.l.b16 %v1177
      %v1182 = vunpack.c.l.b16 %v1178
      %v1183 = vpack.c.b16 %v1182, %v1181
      %v1186 = vsel %vm490, %v1174, 0
      %v1189 = vsel %vm490, %v1175, 0
      %1191 = vmatprep.subr.bf16.mxu0 0
      %1192 = vmatpush1.bf16.msra.mxu0 %v1183
      %1193 = vmatprep.subr.bf16.mxu0 0
      %1194 = vmatpush1.bf16.msra.mxu0 0
      %1195 = vmatprep.subr.bf16.mxu0 0
      %1196 = vmatpush1.bf16.msra.mxu0 0
      %1197 = vmatprep.subr.bf16.mxu0 0
      %1198 = vmatpush1.bf16.msra.mxu0 0
      %1199 = vmatprep.subr.bf16.mxu0 0
      %1200 = vmatpush1.bf16.msra.mxu0 0
      %1201 = vmatprep.subr.bf16.mxu0 0
      %1202 = vmatpush1.bf16.msra.mxu0 0
      %1203 = vmatprep.subr.bf16.mxu0 0
      %1204 = vmatpush1.bf16.msra.mxu0 0
      %1205 = vmatprep.subr.bf16.mxu0 0
      %1206 = vmatpush1.bf16.msra.mxu0 0
      %1207 = vmatprep.subr.bf16.mxu0 0
      %1208 = vmatpush1.bf16.msra.mxu0 0
      %1209 = vmatprep.subr.bf16.mxu0 0
      %1210 = vmatpush1.bf16.msra.mxu0 0
      %1211 = vmatprep.subr.bf16.mxu0 0
      %1212 = vmatpush1.bf16.msra.mxu0 0
      %1213 = vmatprep.subr.bf16.mxu0 0
      %1214 = vmatpush1.bf16.msra.mxu0 0
      %1215 = vmatprep.subr.bf16.mxu0 0
      %1216 = vmatpush1.bf16.msra.mxu0 0
      %1217 = vmatprep.subr.bf16.mxu0 0
      %1218 = vmatpush1.bf16.msra.mxu0 0
      %1219 = vmatprep.subr.bf16.mxu0 0
      %1220 = vmatpush1.bf16.msra.mxu0 0
      %1221 = vmatprep.subr.bf16.mxu0 0
      %1222 = vmatpush1.bf16.msra.mxu0 0
      %1223 = vmatprep.mubr.bf16.mxu0 0
      %1224 = vmatmul.mubr.bf16.gmra.mrb[0].mxu0 %v1186
      %v1225 = vpop.f32.mrb[0].mxu0
      %v1226 = vadd.f32 0.0, %v1225
      %v1227 = vpop.f32.mrb[0].mxu0
      %v1228 = vpop.f32.mrb[0].mxu0
      %v1229 = vadd.f32 0.0, %v1228
      %v1230 = vpop.f32.mrb[0].mxu0
      %1231 = vmatprep.mubr.bf16.mxu0 0
      %1232 = vmatmul.mubr.bf16.gmra.mrb[0].mxu0 %v1189
      %v1233 = vpop.f32.mrb[0].mxu0
      %v1234 = vadd.f32 0.0, %v1233
      %v1235 = vpop.f32.mrb[0].mxu0
      %v1236 = vpop.f32.mrb[0].mxu0
      %v1237 = vadd.f32 0.0, %v1236
      %v1238 = vpop.f32.mrb[0].mxu0
      %1239 = vdwg.mxu0
      %v1240 = vadd.f32 %v1150, %v1226
      %v1241 = vadd.f32 %v1151, %v1229
      %v1242 = vadd.f32 %v1152, %v1234
      %v1243 = vadd.f32 %v1153, %v1237
      %v1244 = vpack.c.bf16 %v1241, %v1240
      %v1245 = vpack.c.bf16 %v1243, %v1242
      %v1250 = vunpack.c.l.b16 %v374
      %v1251 = vunpack.c.l.b16 %v375
      %v1252 = vunpack.c.l.b16 %v376
      %v1253 = vunpack.c.l.b16 %v377
      %v1254 = vpack.c.b16 %v1251, %v1250
      %v1255 = vpack.c.b16 %v1253, %v1252
      %1256 = vrot.lane.b32.xlu0 %v1254, 112
      %v1257 = vpop.permute.xlu0 %1256
      %1258 = vrot.lane.b32.xlu0 %v1255, 112
      %v1259 = vpop.permute.xlu0 %1258
      %v1266 = vunpack.c.l.b16 %v388
      %v1267 = vunpack.c.l.b16 %v389
      %v1268 = vunpack.c.l.b16 %v390
      %v1269 = vunpack.c.l.b16 %v391
      %v1270 = vunpack.c.l.b16 %v392
      %v1271 = vunpack.c.l.b16 %v393
      %v1272 = vpack.c.b16 %v1267, %v1266
      %v1273 = vpack.c.b16 %v1269, %v1268
      %v1274 = vpack.c.b16 %v1271, %v1270
      %vm1278 = vcmask 392192
      %v1280 = vsel %vm1278, %v1257, 0
      %v1283 = vsel %vm1278, %v1259, 0
      %1285 = vmatprep.subr.bf16.mxu0 0
      %1286 = vmatpush1.bf16.msra.mxu0 %v1272
      %1287 = vmatprep.subr.bf16.mxu0 0
      %1288 = vmatpush1.bf16.msra.mxu0 %v1273
      %1289 = vmatprep.subr.bf16.mxu0 0
      %1290 = vmatpush1.bf16.msra.mxu0 %v1274
      %1291 = vmatprep.subr.bf16.mxu0 0
      %1292 = vmatpush1.bf16.msra.mxu0 0
      %1293 = vmatprep.subr.bf16.mxu0 0
      %1294 = vmatpush1.bf16.msra.mxu0 0
      %1295 = vmatprep.subr.bf16.mxu0 0
      %1296 = vmatpush1.bf16.msra.mxu0 0
      %1297 = vmatprep.subr.bf16.mxu0 0
      %1298 = vmatpush1.bf16.msra.mxu0 0
      %1299 = vmatprep.subr.bf16.mxu0 0
      %1300 = vmatpush1.bf16.msra.mxu0 0
      %1301 = vmatprep.subr.bf16.mxu0 0
      %1302 = vmatpush1.bf16.msra.mxu0 0
      %1303 = vmatprep.subr.bf16.mxu0 0
      %1304 = vmatpush1.bf16.msra.mxu0 0
      %1305 = vmatprep.subr.bf16.mxu0 0
      %1306 = vmatpush1.bf16.msra.mxu0 0
      %1307 = vmatprep.subr.bf16.mxu0 0
      %1308 = vmatpush1.bf16.msra.mxu0 0
      %1309 = vmatprep.subr.bf16.mxu0 0
      %1310 = vmatpush1.bf16.msra.mxu0 0
      %1311 = vmatprep.subr.bf16.mxu0 0
      %1312 = vmatpush1.bf16.msra.mxu0 0
      %1313 = vmatprep.subr.bf16.mxu0 0
      %1314 = vmatpush1.bf16.msra.mxu0 0
      %1315 = vmatprep.subr.bf16.mxu0 0
      %1316 = vmatpush1.bf16.msra.mxu0 0
      %1317 = vmatprep.mubr.bf16.mxu0 0
      %1318 = vmatmul.mubr.bf16.gmra.mrb[0].mxu0 %v1280
      %v1319 = vpop.f32.mrb[0].mxu0
      %v1320 = vadd.f32 0.0, %v1319
      %v1321 = vpop.f32.mrb[0].mxu0
      %v1322 = vpop.f32.mrb[0].mxu0
      %v1323 = vadd.f32 0.0, %v1322
      %v1324 = vpop.f32.mrb[0].mxu0
      %1325 = vmatprep.mubr.bf16.mxu0 0
      %1326 = vmatmul.mubr.bf16.gmra.mrb[0].mxu0 %v1283
      %v1327 = vpop.f32.mrb[0].mxu0
      %v1328 = vadd.f32 0.0, %v1327
      %v1329 = vpop.f32.mrb[0].mxu0
      %v1330 = vpop.f32.mrb[0].mxu0
      %v1331 = vadd.f32 0.0, %v1330
      %v1332 = vpop.f32.mrb[0].mxu0
      %1333 = vdwg.mxu0
      %v1336 = vunpack.c.l.b16 %v386
      %v1337 = vunpack.c.l.b16 %v387
      %v1338 = vpack.c.b16 %v1337, %v1336
      %v1341 = vsel %vm490, %v1244, 0
      %v1344 = vsel %vm490, %v1245, 0
      %1346 = vmatprep.subr.bf16.mxu0 0
      %1347 = vmatpush1.bf16.msra.mxu0 %v1338
      %1348 = vmatprep.subr.bf16.mxu0 0
      %1349 = vmatpush1.bf16.msra.mxu0 0
      %1350 = vmatprep.subr.bf16.mxu0 0
      %1351 = vmatpush1.bf16.msra.mxu0 0
      %1352 = vmatprep.subr.bf16.mxu0 0
      %1353 = vmatpush1.bf16.msra.mxu0 0
      %1354 = vmatprep.subr.bf16.mxu0 0
      %1355 = vmatpush1.bf16.msra.mxu0 0
      %1356 = vmatprep.subr.bf16.mxu0 0
      %1357 = vmatpush1.bf16.msra.mxu0 0
      %1358 = vmatprep.subr.bf16.mxu0 0
      %1359 = vmatpush1.bf16.msra.mxu0 0
      %1360 = vmatprep.subr.bf16.mxu0 0
      %1361 = vmatpush1.bf16.msra.mxu0 0
      %1362 = vmatprep.subr.bf16.mxu0 0
      %1363 = vmatpush1.bf16.msra.mxu0 0
      %1364 = vmatprep.subr.bf16.mxu0 0
      %1365 = vmatpush1.bf16.msra.mxu0 0
      %1366 = vmatprep.subr.bf16.mxu0 0
      %1367 = vmatpush1.bf16.msra.mxu0 0
      %1368 = vmatprep.subr.bf16.mxu0 0
      %1369 = vmatpush1.bf16.msra.mxu0 0
      %1370 = vmatprep.subr.bf16.mxu0 0
      %1371 = vmatpush1.bf16.msra.mxu0 0
      %1372 = vmatprep.subr.bf16.mxu0 0
      %1373 = vmatpush1.bf16.msra.mxu0 0
      %1374 = vmatprep.subr.bf16.mxu0 0
      %1375 = vmatpush1.bf16.msra.mxu0 0
      %1376 = vmatprep.subr.bf16.mxu0 0
      %1377 = vmatpush1.bf16.msra.mxu0 0
      %1378 = vmatprep.mubr.bf16.mxu0 0
      %1379 = vmatmul.mubr.bf16.gmra.mrb[0].mxu0 %v1341
      %v1380 = vpop.f32.mrb[0].mxu0
      %v1381 = vadd.f32 %v1320, %v1380
      %v1382 = vpop.f32.mrb[0].mxu0
      %v1383 = vpop.f32.mrb[0].mxu0
      %v1384 = vadd.f32 %v1323, %v1383
      %v1385 = vpop.f32.mrb[0].mxu0
      %1386 = vmatprep.mubr.bf16.mxu0 0
      %1387 = vmatmul.mubr.bf16.gmra.mrb[0].mxu0 %v1344
      %v1388 = vpop.f32.mrb[0].mxu0
      %v1389 = vadd.f32 %v1328, %v1388
      %v1390 = vpop.f32.mrb[0].mxu0
      %v1391 = vpop.f32.mrb[0].mxu0
      %v1392 = vadd.f32 %v1331, %v1391
      %v1393 = vpop.f32.mrb[0].mxu0
      %1394 = vdwg.mxu0
      %v1396 = vlaneseq
      %v1397 = vshrl.u32 %v1396, 7
      %v1398 = vsub.s32 0, %v1397
      %v1399 = vrot.slane %v394, %v1398
      %v1401 = vadd.f32 %v1381, %v1399
      %v1402 = vadd.f32 %v1384, %v1399
      %v1403 = vadd.f32 %v1389, %v1399
      %v1404 = vadd.f32 %v1392, %v1399
      %v1405 = vmax.f32 %v1401, 0.0
      %v1406 = vmax.f32 %v1402, 0.0
      %v1407 = vmax.f32 %v1403, 0.0
      %v1408 = vmax.f32 %v1404, 0.0
      %v1409 = vpack.c.bf16 %v1406, %v1405
      %v1410 = vpack.c.bf16 %v1408, %v1407
      %v1427 = vunpack.c.l.b16 %v395
      %v1428 = vunpack.c.l.b16 %v396
      %v1429 = vunpack.c.l.b16 %v397
      %v1430 = vunpack.c.l.b16 %v398
      %v1431 = vunpack.c.l.b16 %v399
      %v1432 = vunpack.c.l.b16 %v400
      %v1433 = vunpack.c.l.b16 %v401
      %v1434 = vunpack.c.l.b16 %v402
      %v1435 = vunpack.c.l.b16 %v403
      %v1436 = vunpack.c.l.b16 %v404
      %v1437 = vunpack.c.l.b16 %v405
      %v1438 = vunpack.c.l.b16 %v406
      %v1439 = vunpack.c.l.b16 %v407
      %v1440 = vunpack.c.l.b16 %v408
      %v1441 = vunpack.c.l.b16 %v409
      %v1442 = vunpack.c.l.b16 %v410
      %v1443 = vpack.c.b16 %v1428, %v1427
      %v1444 = vpack.c.b16 %v1430, %v1429
      %v1445 = vpack.c.b16 %v1432, %v1431
      %v1446 = vpack.c.b16 %v1434, %v1433
      %v1447 = vpack.c.b16 %v1436, %v1435
      %v1448 = vpack.c.b16 %v1438, %v1437
      %v1449 = vpack.c.b16 %v1440, %v1439
      %v1450 = vpack.c.b16 %v1442, %v1441
      %1459 = vmatprep.subr.bf16.mxu0 0
      %1460 = vmatpush1.bf16.msra.mxu0 %v1443
      %1461 = vmatprep.subr.bf16.mxu0 0
      %1462 = vmatpush1.bf16.msra.mxu0 %v1444
      %1463 = vmatprep.subr.bf16.mxu0 0
      %1464 = vmatpush1.bf16.msra.mxu0 %v1445
      %1465 = vmatprep.subr.bf16.mxu0 0
      %1466 = vmatpush1.bf16.msra.mxu0 %v1446
      %1467 = vmatprep.subr.bf16.mxu0 0
      %1468 = vmatpush1.bf16.msra.mxu0 %v1447
      %1469 = vmatprep.subr.bf16.mxu0 0
      %1470 = vmatpush1.bf16.msra.mxu0 %v1448
      %1471 = vmatprep.subr.bf16.mxu0 0
      %1472 = vmatpush1.bf16.msra.mxu0 %v1449
      %1473 = vmatprep.subr.bf16.mxu0 0
      %1474 = vmatpush1.bf16.msra.mxu0 %v1450
      %1475 = vmatprep.subr.bf16.mxu0 0
      %1476 = vmatpush1.bf16.msra.mxu0 0
      %1477 = vmatprep.subr.bf16.mxu0 0
      %1478 = vmatpush1.bf16.msra.mxu0 0
      %1479 = vmatprep.subr.bf16.mxu0 0
      %1480 = vmatpush1.bf16.msra.mxu0 0
      %1481 = vmatprep.subr.bf16.mxu0 0
      %1482 = vmatpush1.bf16.msra.mxu0 0
      %1483 = vmatprep.subr.bf16.mxu0 0
      %1484 = vmatpush1.bf16.msra.mxu0 0
      %1485 = vmatprep.subr.bf16.mxu0 0
      %1486 = vmatpush1.bf16.msra.mxu0 0
      %1487 = vmatprep.subr.bf16.mxu0 0
      %1488 = vmatpush1.bf16.msra.mxu0 0
      %1489 = vmatprep.subr.bf16.mxu0 0
      %1490 = vmatpush1.bf16.msra.mxu0 0
      %1491 = vmatprep.mubr.bf16.mxu0 0
      %1492 = vmatmul.mubr.bf16.gmra.mrb[0].mxu0 %v1409
      %v1493 = vpop.f32.mrb[0].mxu0
      %v1494 = vadd.f32 0.0, %v1493
      %v1495 = vpop.f32.mrb[0].mxu0
      %v1496 = vpop.f32.mrb[0].mxu0
      %v1497 = vadd.f32 0.0, %v1496
      %v1498 = vpop.f32.mrb[0].mxu0
      %1499 = vmatprep.mubr.bf16.mxu0 0
      %1500 = vmatmul.mubr.bf16.gmra.mrb[0].mxu0 %v1410
      %v1501 = vpop.f32.mrb[0].mxu0
      %v1502 = vadd.f32 0.0, %v1501
      %v1503 = vpop.f32.mrb[0].mxu0
      %v1504 = vpop.f32.mrb[0].mxu0
      %v1505 = vadd.f32 0.0, %v1504
      %v1506 = vpop.f32.mrb[0].mxu0
      %1507 = vdwg.mxu0
      %v1508 = vadd.f32 %v378, %v1494
      %v1509 = vadd.f32 %v379, %v1497
      %v1510 = vadd.f32 %v380, %v1502
      %v1511 = vadd.f32 %v381, %v1505
      %v1512 = vpack.c.bf16 %v1509, %v1508
      %v1513 = vpack.c.bf16 %v1511, %v1510
      %v1516 = vunpack.c.l.b16 %v1512
      %v1517 = vunpack.c.h.b16 %v1512
      %v1518 = vunpack.c.l.b16 %v1513
      %v1519 = vunpack.c.h.b16 %v1513
      %v1520 = vpack.c.b16 %v1516, %v1516
      %v1521 = vpack.c.b16 %v1517, %v1517
      %v1522 = vpack.c.b16 %v1518, %v1518
      %v1523 = vpack.c.b16 %v1519, %v1519
      %vm1528 = vcmask 519168
      %1529 = vst.msk [vmem:[%s372] sm:$0xf] %vm1528, %v1520
      %1530 = vst.msk [vmem:[%s372 + $0x4] sm:$0xf] %vm1528, %v1521
      %1531 = vst.msk [vmem:[%s372 + $0x8] sm:$0xf] %vm1528, %v1522
      %1532 = vst.msk [vmem:[%s372 + $0xc] sm:$0xf] %vm1528, %v1523
      %p1533 = scmp.lt.s32.totalorder %s18, 1
      %s1534 = scalar_select %p1533, %s18, 1
      %s1535 = smul.addr %s1534, 4
      %s1536 = smul.addr %s1535, 4
      %s1537 = scalar_lea.vmem %s7, %s1536
      // Predicated region
      $region49: #{generate_feats_forward.7} parent=47 // pred_check
        %p1538 = pneg %p213
      $region50: #{generate_feats_forward.7} parent=47 // pred_check_branch
        %1540 = sbr.rel (%p1538) target = $region52
      $region51: #{generate_feats_forward.7} parent=47 // pred_region
        _
      $region52: #{generate_feats_forward.7} parent=47 // pred_fallthru
        _
    $region48: #{generate_feats_forward.7} parent=5 // pred_fallthru
      _
    %p1541 = scmp.le.s32.totalorder 2, %s13
    // Predicated region
    $region53: #{generate_feats_forward.7} parent=5 // pred_check
      %p1542 = pneg %p1541
    $region54: #{generate_feats_forward.7} parent=5 // pred_check_branch
      %1544 = sbr.rel (%p1542) target = $region56
    $region55: #{generate_feats_forward.7} parent=5 // pred_region
      %s1545 = ssub.s32 %s13, 2
      // Predicated region
      $region57: #{generate_feats_forward.7} parent=55 // pred_check
        %p1546 = pneg %p219
      $region58: #{generate_feats_forward.7} parent=55 // pred_check_branch
        %1548 = sbr.rel (%p1546) target = $region60
      $region59: #{generate_feats_forward.7} parent=55 // pred_region
        %p1549 = scmp.lt.s32.totalorder %s19, 1
        %s1550 = scalar_select %p1549, %s19, 1
        %s1551 = smul.addr %s1550, 4
        %s1552 = smul.addr %s1551, 4
        %s1553 = scalar_lea.vmem %s7, %s1552
      $region60: #{generate_feats_forward.7} parent=55 // pred_fallthru
        _
    $region56: #{generate_feats_forward.7} parent=5 // pred_fallthru
      _
  $region6: #{generate_feats_forward.7} parent=0 // loop_footer
    %s17 = sadd.s32 1, %s13
  $region7: #{generate_feats_forward.7} parent=0 // loop_footer_branch
    %12 = sbr.rel target = $region3
  $region8: #{generate_feats_forward.7} parent=0 // loop_exit
    _

// kernel: generate_feats_forward.8
$region0: #{generate_feats_forward.8}
  #allocation0 [shape = 'u32[]', space=smem, size = 0x4, offset = 0x4, fixed_abs, tag = 'smem constant byte address 0x4 - core index']
  #allocation1 [shape = 'u32[144,128]{1,0:T(1,128)}', space=vmem, size = 0x12000, scoped, tag = 'internal scratch']
  %s0 = inlined_call_operand.vmem [shape: bf16[2,8,256], index: 0, kind: input, shape index: {}]
  %s1 = inlined_call_operand.vmem [shape: bf16[2,256,128], index: 1, kind: input, shape index: {}]
  %s2 = inlined_call_operand.vmem [shape: f32[2,1,128], index: 2, kind: input, shape index: {}]
  %s3 = inlined_call_operand.vmem [shape: f32[8,9], index: 3, kind: input, shape index: {}]
  %s4 = inlined_call_operand.vmem [shape: bf16[2,9,32,32], index: 4, kind: input, shape index: {}]
  %s5 = inlined_call_operand.vmem [shape: bf16[2,32,256], index: 5, kind: input, shape index: {}]
  %s6 = inlined_call_operand.vmem [shape: bf16[2,96,256], index: 6, kind: input, shape index: {}]
  %s7 = inlined_call_operand.vmem [shape: f32[2,1,256], index: 7, kind: input, shape index: {}]
  %s8 = inlined_call_operand.vmem [shape: bf16[2,256,128], index: 8, kind: input, shape index: {}]
  %s9 = inlined_call_operand.vmem [shape: bf16[2,8,128], index: 9, kind: output, shape index: {}]
  %s10 = sld [smem:[#allocation0]]
  $region69: #{generate_feats_forward.8} parent=0
    _
  %s12 = ssub.s32 1, %s10
  %s13 = scalar_select 0, %s12, %s10
  loop: start=0, step=1, limit=4
  $region2: #{generate_feats_forward.8} parent=0 // loop_pre_header
    _
  $region3: #{generate_feats_forward.8} parent=0 // loop_header
    %s15 = sphi 0, %s19
    %p16 = scmp.ge.s32.totalorder %s15, 4
    %s25 = sphi 0, %s27
    %s28 = sphi 0, %s25
    %s29 = sphi 0, %s28
    %s45 = sphi 0, %s29
    %s51 = sphi 0, %s53
    %s54 = sphi 0, %s51
    %s55 = sphi 0, %s54
    %s71 = sphi 0, %s55
    %s77 = sphi 0, %s79
    %s80 = sphi 0, %s77
    %s81 = sphi 0, %s80
    %s97 = sphi 0, %s81
    %s101 = sphi 0, %s101
    %s103 = sphi 0, %s101
    %s104 = sphi 0, %s103
    %s118 = sphi 0, %s104
    %s124 = sphi 0, %s126
    %s127 = sphi 0, %s124
    %s128 = sphi 0, %s127
    %s144 = sphi 0, %s128
    %s150 = sphi 0, %s152
    %s153 = sphi 0, %s150
    %s154 = sphi 0, %s153
    %s170 = sphi 0, %s154
    %s176 = sphi 0, %s178
    %s179 = sphi 0, %s176
    %s180 = sphi 0, %s179
    %s196 = sphi 0, %s180
    %s202 = sphi 0, %s204
    %s205 = sphi 0, %s202
    %s206 = sphi 0, %s205
    %s222 = sphi 0, %s206
    %s228 = sphi 0, %s230
    %s231 = sphi 0, %s228
    %s232 = sphi 0, %s231
    %s248 = sphi 0, %s232
    %s254 = sphi 0, %s256
    %s257 = sphi 0, %s254
    %s258 = sphi 0, %s257
    %s274 = sphi 0, %s258
  $region4: #{generate_feats_forward.8} parent=0 // loop_header_branch
    %18 = sbr.rel (%p16) target = $region8
  $region5: #{generate_feats_forward.8} parent=0 // loop_body
    %s20 = ssub.s32 %s15, 1
    %s21 = ssub.s32 %s15, 2
    %s22 = sadd.s32 %s15, 1
    %s23 = ssub.s32 %s15, %s22
    %p24 = scmp.eq.s32.totalorder %s23, 0
    %s26 = sadd.s32 %s25, 1
    %s27 = scalar_select %p24, %s25, %s26
    %p30 = pneg %p24
    %p31 = scmp.eq.s32.totalorder %s15, 1
    %p32 = por %p30, %p31
    %p33 = scmp.ne.s32.totalorder %s25, %s28
    %p34 = scmp.eq.s32.totalorder %s15, 0
    %p35 = por %p33, %p34
    %p36 = scmp.ne.s32.totalorder %s25, %s28
    %p37 = scmp.eq.s32.totalorder %s20, 1
    %p38 = por %p36, %p37
    %p39 = scmp.ne.s32.totalorder %s28, %s29
    %p40 = scmp.eq.s32.totalorder %s20, 0
    %p41 = por %p39, %p40
    %p42 = scmp.ne.s32.totalorder %s28, %s29
    %p43 = scmp.eq.s32.totalorder %s21, 1
    %p44 = por %p42, %p43
    %p46 = scmp.ne.s32.totalorder %s29, %s45
    %p47 = scmp.eq.s32.totalorder %s21, 0
    %p48 = por %p46, %p47
    %s49 = ssub.s32 %s15, %s22
    %p50 = scmp.eq.s32.totalorder %s49, 0
    %s52 = sadd.s32 %s51, 1
    %s53 = scalar_select %p50, %s51, %s52
    %p56 = pneg %p50
    %p57 = scmp.eq.s32.totalorder %s15, 1
    %p58 = por %p56, %p57
    %p59 = scmp.ne.s32.totalorder %s51, %s54
    %p60 = scmp.eq.s32.totalorder %s15, 0
    %p61 = por %p59, %p60
    %p62 = scmp.ne.s32.totalorder %s51, %s54
    %p63 = scmp.eq.s32.totalorder %s20, 1
    %p64 = por %p62, %p63
    %p65 = scmp.ne.s32.totalorder %s54, %s55
    %p66 = scmp.eq.s32.totalorder %s20, 0
    %p67 = por %p65, %p66
    %p68 = scmp.ne.s32.totalorder %s54, %s55
    %p69 = scmp.eq.s32.totalorder %s21, 1
    %p70 = por %p68, %p69
    %p72 = scmp.ne.s32.totalorder %s55, %s71
    %p73 = scmp.eq.s32.totalorder %s21, 0
    %p74 = por %p72, %p73
    %s75 = ssub.s32 %s15, %s22
    %p76 = scmp.eq.s32.totalorder %s75, 0
    %s78 = sadd.s32 %s77, 1
    %s79 = scalar_select %p76, %s77, %s78
    %p82 = pneg %p76
    %p83 = scmp.eq.s32.totalorder %s15, 1
    %p84 = por %p82, %p83
    %p85 = scmp.ne.s32.totalorder %s77, %s80
    %p86 = scmp.eq.s32.totalorder %s15, 0
    %p87 = por %p85, %p86
    %p88 = scmp.ne.s32.totalorder %s77, %s80
    %p89 = scmp.eq.s32.totalorder %s20, 1
    %p90 = por %p88, %p89
    %p91 = scmp.ne.s32.totalorder %s80, %s81
    %p92 = scmp.eq.s32.totalorder %s20, 0
    %p93 = por %p91, %p92
    %p94 = scmp.ne.s32.totalorder %s80, %s81
    %p95 = scmp.eq.s32.totalorder %s21, 1
    %p96 = por %p94, %p95
    %p98 = scmp.ne.s32.totalorder %s81, %s97
    %p99 = scmp.eq.s32.totalorder %s21, 0
    %p100 = por %p98, %p99
    %s102 = sadd.s32 %s101, 1
    %p105 = scmp.eq.s32.totalorder %s15, 1
    %p106 = scmp.ne.s32.totalorder %s101, %s103
    %p107 = scmp.eq.s32.totalorder %s15, 0
    %p108 = por %p106, %p107
    %p109 = scmp.ne.s32.totalorder %s101, %s103
    %p110 = scmp.eq.s32.totalorder %s20, 1
    %p111 = por %p109, %p110
    %p112 = scmp.ne.s32.totalorder %s103, %s104
    %p113 = scmp.eq.s32.totalorder %s20, 0
    %p114 = por %p112, %p113
    %p115 = scmp.ne.s32.totalorder %s103, %s104
    %p116 = scmp.eq.s32.totalorder %s21, 1
    %p117 = por %p115, %p116
    %p119 = scmp.ne.s32.totalorder %s104, %s118
    %p120 = scmp.eq.s32.totalorder %s21, 0
    %p121 = por %p119, %p120
    %s122 = ssub.s32 %s15, %s22
    %p123 = scmp.eq.s32.totalorder %s122, 0
    %s125 = sadd.s32 %s124, 1
    %s126 = scalar_select %p123, %s124, %s125
    %p129 = pneg %p123
    %p130 = scmp.eq.s32.totalorder %s15, 1
    %p131 = por %p129, %p130
    %p132 = scmp.ne.s32.totalorder %s124, %s127
    %p133 = scmp.eq.s32.totalorder %s15, 0
    %p134 = por %p132, %p133
    %p135 = scmp.ne.s32.totalorder %s124, %s127
    %p136 = scmp.eq.s32.totalorder %s20, 1
    %p137 = por %p135, %p136
    %p138 = scmp.ne.s32.totalorder %s127, %s128
    %p139 = scmp.eq.s32.totalorder %s20, 0
    %p140 = por %p138, %p139
    %p141 = scmp.ne.s32.totalorder %s127, %s128
    %p142 = scmp.eq.s32.totalorder %s21, 1
    %p143 = por %p141, %p142
    %p145 = scmp.ne.s32.totalorder %s128, %s144
    %p146 = scmp.eq.s32.totalorder %s21, 0
    %p147 = por %p145, %p146
    %s148 = ssub.s32 %s15, %s22
    %p149 = scmp.eq.s32.totalorder %s148, 0
    %s151 = sadd.s32 %s150, 1
    %s152 = scalar_select %p149, %s150, %s151
    %p155 = pneg %p149
    %p156 = scmp.eq.s32.totalorder %s15, 1
    %p157 = por %p155, %p156
    %p158 = scmp.ne.s32.totalorder %s150, %s153
    %p159 = scmp.eq.s32.totalorder %s15, 0
    %p160 = por %p158, %p159
    %p161 = scmp.ne.s32.totalorder %s150, %s153
    %p162 = scmp.eq.s32.totalorder %s20, 1
    %p163 = por %p161, %p162
    %p164 = scmp.ne.s32.totalorder %s153, %s154
    %p165 = scmp.eq.s32.totalorder %s20, 0
    %p166 = por %p164, %p165
    %p167 = scmp.ne.s32.totalorder %s153, %s154
    %p168 = scmp.eq.s32.totalorder %s21, 1
    %p169 = por %p167, %p168
    %p171 = scmp.ne.s32.totalorder %s154, %s170
    %p172 = scmp.eq.s32.totalorder %s21, 0
    %p173 = por %p171, %p172
    %s174 = ssub.s32 %s15, %s22
    %p175 = scmp.eq.s32.totalorder %s174, 0
    %s177 = sadd.s32 %s176, 1
    %s178 = scalar_select %p175, %s176, %s177
    %p181 = pneg %p175
    %p182 = scmp.eq.s32.totalorder %s15, 1
    %p183 = por %p181, %p182
    %p184 = scmp.ne.s32.totalorder %s176, %s179
    %p185 = scmp.eq.s32.totalorder %s15, 0
    %p186 = por %p184, %p185
    %p187 = scmp.ne.s32.totalorder %s176, %s179
    %p188 = scmp.eq.s32.totalorder %s20, 1
    %p189 = por %p187, %p188
    %p190 = scmp.ne.s32.totalorder %s179, %s180
    %p191 = scmp.eq.s32.totalorder %s20, 0
    %p192 = por %p190, %p191
    %p193 = scmp.ne.s32.totalorder %s179, %s180
    %p194 = scmp.eq.s32.totalorder %s21, 1
    %p195 = por %p193, %p194
    %p197 = scmp.ne.s32.totalorder %s180, %s196
    %p198 = scmp.eq.s32.totalorder %s21, 0
    %p199 = por %p197, %p198
    %s200 = ssub.s32 %s15, %s22
    %p201 = scmp.eq.s32.totalorder %s200, 0
    %s203 = sadd.s32 %s202, 1
    %s204 = scalar_select %p201, %s202, %s203
    %p207 = pneg %p201
    %p208 = scmp.eq.s32.totalorder %s15, 1
    %p209 = por %p207, %p208
    %p210 = scmp.ne.s32.totalorder %s202, %s205
    %p211 = scmp.eq.s32.totalorder %s15, 0
    %p212 = por %p210, %p211
    %p213 = scmp.ne.s32.totalorder %s202, %s205
    %p214 = scmp.eq.s32.totalorder %s20, 1
    %p215 = por %p213, %p214
    %p216 = scmp.ne.s32.totalorder %s205, %s206
    %p217 = scmp.eq.s32.totalorder %s20, 0
    %p218 = por %p216, %p217
    %p219 = scmp.ne.s32.totalorder %s205, %s206
    %p220 = scmp.eq.s32.totalorder %s21, 1
    %p221 = por %p219, %p220
    %p223 = scmp.ne.s32.totalorder %s206, %s222
    %p224 = scmp.eq.s32.totalorder %s21, 0
    %p225 = por %p223, %p224
    %s226 = ssub.s32 %s15, %s22
    %p227 = scmp.eq.s32.totalorder %s226, 0
    %s229 = sadd.s32 %s228, 1
    %s230 = scalar_select %p227, %s228, %s229
    %p233 = pneg %p227
    %p234 = scmp.eq.s32.totalorder %s15, 1
    %p235 = por %p233, %p234
    %p236 = scmp.ne.s32.totalorder %s228, %s231
    %p237 = scmp.eq.s32.totalorder %s15, 0
    %p238 = por %p236, %p237
    %p239 = scmp.ne.s32.totalorder %s228, %s231
    %p240 = scmp.eq.s32.totalorder %s20, 1
    %p241 = por %p239, %p240
    %p242 = scmp.ne.s32.totalorder %s231, %s232
    %p243 = scmp.eq.s32.totalorder %s20, 0
    %p244 = por %p242, %p243
    %p245 = scmp.ne.s32.totalorder %s231, %s232
    %p246 = scmp.eq.s32.totalorder %s21, 1
    %p247 = por %p245, %p246
    %p249 = scmp.ne.s32.totalorder %s232, %s248
    %p250 = scmp.eq.s32.totalorder %s21, 0
    %p251 = por %p249, %p250
    %s252 = ssub.s32 %s15, %s22
    %p253 = scmp.eq.s32.totalorder %s252, 0
    %s255 = sadd.s32 %s254, 1
    %s256 = scalar_select %p253, %s254, %s255
    %p259 = pneg %p253
    %p260 = scmp.eq.s32.totalorder %s15, 1
    %p261 = por %p259, %p260
    %p262 = scmp.ne.s32.totalorder %s254, %s257
    %p263 = scmp.eq.s32.totalorder %s15, 0
    %p264 = por %p262, %p263
    %p265 = scmp.ne.s32.totalorder %s254, %s257
    %p266 = scmp.eq.s32.totalorder %s20, 1
    %p267 = por %p265, %p266
    %p268 = scmp.ne.s32.totalorder %s257, %s258
    %p269 = scmp.eq.s32.totalorder %s20, 0
    %p270 = por %p268, %p269
    %p271 = scmp.ne.s32.totalorder %s257, %s258
    %p272 = scmp.eq.s32.totalorder %s21, 1
    %p273 = por %p271, %p272
    %p275 = scmp.ne.s32.totalorder %s258, %s274
    %p276 = scmp.eq.s32.totalorder %s21, 0
    %p277 = por %p275, %p276
    %p278 = scmp.le.s32.totalorder 1, %s15
    %p279 = scmp.lt.s32.totalorder %s15, 3
    %p280 = pnand %p278, %p279
    %p281 = pneg %p280
    // Predicated region
    $region9: #{generate_feats_forward.8} parent=5 // pred_check
      _
    $region10: #{generate_feats_forward.8} parent=5 // pred_check_branch
      %283 = sbr.rel (%p280) target = $region12
    $region11: #{generate_feats_forward.8} parent=5 // pred_region
      %s284 = ssub.s32 %s15, 1
      // Predicated region
      $region13: #{generate_feats_forward.8} parent=11 // pred_check
        %p285 = pneg %p114
      $region14: #{generate_feats_forward.8} parent=11 // pred_check_branch
        %287 = sbr.rel (%p285) target = $region16
      $region15: #{generate_feats_forward.8} parent=11 // pred_region
        _
      $region16: #{generate_feats_forward.8} parent=11 // pred_fallthru
        _
    $region12: #{generate_feats_forward.8} parent=5 // pred_fallthru
      _
    %p288 = scmp.lt.s32.totalorder %s15, 2
    // Predicated region
    $region17: #{generate_feats_forward.8} parent=5 // pred_check
      %p289 = pneg %p288
    $region18: #{generate_feats_forward.8} parent=5 // pred_check_branch
      %291 = sbr.rel (%p289) target = $region20
    $region19: #{generate_feats_forward.8} parent=5 // pred_region
      // Predicated region
      $region21: #{generate_feats_forward.8} parent=19 // pred_check
        %p292 = pneg %p35
      $region22: #{generate_feats_forward.8} parent=19 // pred_check_branch
        %294 = sbr.rel (%p292) target = $region24
      $region23: #{generate_feats_forward.8} parent=19 // pred_region
        %p295 = scmp.lt.s32.totalorder %s15, 1
        %s296 = scalar_select %p295, %s15, 1
        %s297 = smul.addr %s296, 2
        %s298 = smul.addr %s297, 4
        %s299 = scalar_lea.vmem %s0, %s298
      $region24: #{generate_feats_forward.8} parent=19 // pred_fallthru
        _
      // Predicated region
      $region25: #{generate_feats_forward.8} parent=19 // pred_check
        %p300 = pneg %p61
      $region26: #{generate_feats_forward.8} parent=19 // pred_check_branch
        %302 = sbr.rel (%p300) target = $region28
      $region27: #{generate_feats_forward.8} parent=19 // pred_region
        %p303 = scmp.lt.s32.totalorder %s15, 1
        %s304 = scalar_select %p303, %s15, 1
        %s305 = smul.addr %s304, 32
        %s306 = smul.addr %s305, 4
        %s307 = scalar_lea.vmem %s1, %s306
      $region28: #{generate_feats_forward.8} parent=19 // pred_fallthru
        _
      // Predicated region
      $region29: #{generate_feats_forward.8} parent=19 // pred_check
        %p308 = pneg %p87
      $region30: #{generate_feats_forward.8} parent=19 // pred_check_branch
        %310 = sbr.rel (%p308) target = $region32
      $region31: #{generate_feats_forward.8} parent=19 // pred_region
        %p311 = scmp.lt.s32.totalorder %s15, 1
        %s312 = scalar_select %p311, %s15, 1
        %s313 = scalar_lea.vmem %s2, %s312
      $region32: #{generate_feats_forward.8} parent=19 // pred_fallthru
        _
      // Predicated region
      $region33: #{generate_feats_forward.8} parent=19 // pred_check
        %p314 = pneg %p134
      $region34: #{generate_feats_forward.8} parent=19 // pred_check_branch
        %316 = sbr.rel (%p314) target = $region36
      $region35: #{generate_feats_forward.8} parent=19 // pred_region
        %p317 = scmp.lt.s32.totalorder %s15, 1
        %s318 = scalar_select %p317, %s15, 1
        %s319 = smul.addr %s318, 36
        %s320 = smul.addr %s319, 4
        %s321 = scalar_lea.vmem %s4, %s320
      $region36: #{generate_feats_forward.8} parent=19 // pred_fallthru
        _
      // Predicated region
      $region37: #{generate_feats_forward.8} parent=19 // pred_check
        %p322 = pneg %p160
      $region38: #{generate_feats_forward.8} parent=19 // pred_check_branch
        %324 = sbr.rel (%p322) target = $region40
      $region39: #{generate_feats_forward.8} parent=19 // pred_region
        %p325 = scmp.lt.s32.totalorder %s15, 1
        %s326 = scalar_select %p325, %s15, 1
        %s327 = smul.addr %s326, 8
        %s328 = smul.addr %s327, 4
        %s329 = scalar_lea.vmem %s5, %s328
      $region40: #{generate_feats_forward.8} parent=19 // pred_fallthru
        _
      // Predicated region
      $region41: #{generate_feats_forward.8} parent=19 // pred_check
        %p330 = pneg %p186
      $region42: #{generate_feats_forward.8} parent=19 // pred_check_branch
        %332 = sbr.rel (%p330) target = $region44
      $region43: #{generate_feats_forward.8} parent=19 // pred_region
        %p333 = scmp.lt.s32.totalorder %s15, 1
        %s334 = scalar_select %p333, %s15, 1
        %s335 = smul.addr %s334, 24
        %s336 = smul.addr %s335, 4
        %s337 = scalar_lea.vmem %s6, %s336
      $region44: #{generate_feats_forward.8} parent=19 // pred_fallthru
        _
      // Predicated region
      $region45: #{generate_feats_forward.8} parent=19 // pred_check
        %p338 = pneg %p212
      $region46: #{generate_feats_forward.8} parent=19 // pred_check_branch
        %340 = sbr.rel (%p338) target = $region48
      $region47: #{generate_feats_forward.8} parent=19 // pred_region
        %p341 = scmp.lt.s32.totalorder %s15, 1
        %s342 = scalar_select %p341, %s15, 1
        %s343 = smul.addr %s342, 2
        %s344 = scalar_lea.vmem %s7, %s343
      $region48: #{generate_feats_forward.8} parent=19 // pred_fallthru
        _
      // Predicated region
      $region49: #{generate_feats_forward.8} parent=19 // pred_check
        %p345 = pneg %p238
      $region50: #{generate_feats_forward.8} parent=19 // pred_check_branch
        %347 = sbr.rel (%p345) target = $region52
      $region51: #{generate_feats_forward.8} parent=19 // pred_region
        %p348 = scmp.lt.s32.totalorder %s15, 1
        %s349 = scalar_select %p348, %s15, 1
        %s350 = smul.addr %s349, 32
        %s351 = smul.addr %s350, 4
        %s352 = scalar_lea.vmem %s8, %s351
      $region52: #{generate_feats_forward.8} parent=19 // pred_fallthru
        _
    $region20: #{generate_feats_forward.8} parent=5 // pred_fallthru
      _
    %p353 = scmp.le.s32.totalorder 1, %s15
    %p354 = scmp.lt.s32.totalorder %s15, 3
    %p355 = pnand %p353, %p354
    %p356 = pneg %p355
    // Predicated region
    $region53: #{generate_feats_forward.8} parent=5 // pred_check
      _
    $region54: #{generate_feats_forward.8} parent=5 // pred_check_branch
      %358 = sbr.rel (%p355) target = $region56
    $region55: #{generate_feats_forward.8} parent=5 // pred_region
      %s359 = ssub.s32 %s15, 1
      %p360 = scmp.lt.s32.totalorder %s20, 1
      %s361 = scalar_select %p360, %s20, 1
      %s362 = smul.addr %s361, 2
      %s363 = smul.addr %s362, 4
      %s364 = scalar_lea.vmem %s0, %s363
      %p365 = pneg %p41
      %p366 = pneg %p38
      %p367 = scmp.lt.s32.totalorder %s20, 1
      %s368 = scalar_select %p367, %s20, 1
      %s369 = smul.addr %s368, 32
      %s370 = smul.addr %s369, 4
      %s371 = scalar_lea.vmem %s1, %s370
      %p372 = pneg %p67
      %p373 = pneg %p64
      %p374 = scmp.lt.s32.totalorder %s20, 1
      %s375 = scalar_select %p374, %s20, 1
      %s376 = scalar_lea.vmem %s2, %s375
      %p377 = pneg %p93
      %p378 = pneg %p90
      %p379 = pneg %p114
      %p380 = pneg %p111
      %p381 = scmp.lt.s32.totalorder %s20, 1
      %s382 = scalar_select %p381, %s20, 1
      %s383 = smul.addr %s382, 36
      %s384 = smul.addr %s383, 4
      %s385 = scalar_lea.vmem %s4, %s384
      %p386 = pneg %p140
      %p387 = pneg %p137
      %p388 = scmp.lt.s32.totalorder %s20, 1
      %s389 = scalar_select %p388, %s20, 1
      %s390 = smul.addr %s389, 8
      %s391 = smul.addr %s390, 4
      %s392 = scalar_lea.vmem %s5, %s391
      %p393 = pneg %p166
      %p394 = pneg %p163
      %p395 = scmp.lt.s32.totalorder %s20, 1
      %s396 = scalar_select %p395, %s20, 1
      %s397 = smul.addr %s396, 24
      %s398 = smul.addr %s397, 4
      %s399 = scalar_lea.vmem %s6, %s398
      %p400 = pneg %p192
      %p401 = pneg %p189
      %p402 = scmp.lt.s32.totalorder %s20, 1
      %s403 = scalar_select %p402, %s20, 1
      %s404 = smul.addr %s403, 2
      %s405 = scalar_lea.vmem %s7, %s404
      %p406 = pneg %p218
      %p407 = pneg %p215
      %p408 = scmp.lt.s32.totalorder %s20, 1
      %s409 = scalar_select %p408, %s20, 1
      %s410 = smul.addr %s409, 32
      %s411 = smul.addr %s410, 4
      %s412 = scalar_lea.vmem %s8, %s411
      %p413 = pneg %p244
      %p414 = pneg %p241
      %p415 = pneg %p270
      %p416 = pneg %p267
      %p417 = scmp.lt.s32.totalorder %s20, 1
      %s418 = scalar_select %p417, %s20, 1
      %s419 = smul.addr %s418, 4
      %s420 = scalar_lea.vmem %s9, %s419
      %p421 = scmp.lt.s32.totalorder %s20, 1
      %s422 = scalar_select %p421, %s20, 1
      %s423 = smul.addr %s422, 2
      %s424 = smul.addr %s423, 4
      %s425 = scalar_lea.vmem %s0, %s424
      %p426 = scmp.lt.s32.totalorder %s20, 1
      %s427 = scalar_select %p426, %s20, 1
      %s428 = smul.addr %s427, 32
      %s429 = smul.addr %s428, 4
      %s430 = scalar_lea.vmem %s1, %s429
      %p431 = scmp.lt.s32.totalorder %s20, 1
      %s432 = scalar_select %p431, %s20, 1
      %s433 = scalar_lea.vmem %s2, %s432
      %p434 = scmp.lt.s32.totalorder %s20, 1
      %s435 = scalar_select %p434, %s20, 1
      %s436 = smul.addr %s435, 36
      %s437 = smul.addr %s436, 4
      %s438 = scalar_lea.vmem %s4, %s437
      %p439 = scmp.lt.s32.totalorder %s20, 1
      %s440 = scalar_select %p439, %s20, 1
      %s441 = smul.addr %s440, 8
      %s442 = smul.addr %s441, 4
      %s443 = scalar_lea.vmem %s5, %s442
      %p444 = scmp.lt.s32.totalorder %s20, 1
      %s445 = scalar_select %p444, %s20, 1
      %s446 = smul.addr %s445, 24
      %s447 = smul.addr %s446, 4
      %s448 = scalar_lea.vmem %s6, %s447
      %p449 = scmp.lt.s32.totalorder %s20, 1
      %s450 = scalar_select %p449, %s20, 1
      %s451 = smul.addr %s450, 2
      %s452 = scalar_lea.vmem %s7, %s451
      %p453 = scmp.lt.s32.totalorder %s20, 1
      %s454 = scalar_select %p453, %s20, 1
      %s455 = smul.addr %s454, 32
      %s456 = smul.addr %s455, 4
      %s457 = scalar_lea.vmem %s8, %s456
      %p458 = scmp.lt.s32.totalorder %s20, 1
      %s459 = scalar_select %p458, %s20, 1
      %s460 = smul.addr %s459, 4
      %s461 = scalar_lea.vmem %s9, %s460
      %v463 = vld [vmem:[%s425] sm:$0xff]
      %v464 = vld [vmem:[%s430] sm:$0xf]
      %v465 = vld [vmem:[%s430 + $0x4] sm:$0xf]
      %v466 = vld [vmem:[%s430 + $0x8] sm:$0xf]
      %v467 = vld [vmem:[%s430 + $0xc] sm:$0xf]
      %v468 = vld [vmem:[%s430 + $0x10] sm:$0xf]
      %v469 = vld [vmem:[%s430 + $0x14] sm:$0xf]
      %v470 = vld [vmem:[%s430 + $0x18] sm:$0xf]
      %v471 = vld [vmem:[%s430 + $0x1c] sm:$0xf]
      %v472 = vld [vmem:[%s430 + $0x20] sm:$0xf]
      %v473 = vld [vmem:[%s430 + $0x24] sm:$0xf]
      %v474 = vld [vmem:[%s430 + $0x28] sm:$0xf]
      %v475 = vld [vmem:[%s430 + $0x2c] sm:$0xf]
      %v476 = vld [vmem:[%s430 + $0x30] sm:$0xf]
      %v477 = vld [vmem:[%s430 + $0x34] sm:$0xf]
      %v478 = vld [vmem:[%s430 + $0x38] sm:$0xf]
      %v479 = vld [vmem:[%s430 + $0x3c] sm:$0xf]
      %v480 = vld [vmem:[%s430 + $0x40] sm:$0xf]
      %v481 = vld [vmem:[%s430 + $0x44] sm:$0xf]
      %v482 = vld [vmem:[%s430 + $0x48] sm:$0xf]
      %v483 = vld [vmem:[%s430 + $0x4c] sm:$0xf]
      %v484 = vld [vmem:[%s430 + $0x50] sm:$0xf]
      %v485 = vld [vmem:[%s430 + $0x54] sm:$0xf]
      %v486 = vld [vmem:[%s430 + $0x58] sm:$0xf]
      %v487 = vld [vmem:[%s430 + $0x5c] sm:$0xf]
      %v488 = vld [vmem:[%s430 + $0x60] sm:$0xf]
      %v489 = vld [vmem:[%s430 + $0x64] sm:$0xf]
      %v490 = vld [vmem:[%s430 + $0x68] sm:$0xf]
      %v491 = vld [vmem:[%s430 + $0x6c] sm:$0xf]
      %v492 = vld [vmem:[%s430 + $0x70] sm:$0xf]
      %v493 = vld [vmem:[%s430 + $0x74] sm:$0xf]
      %v494 = vld [vmem:[%s430 + $0x78] sm:$0xf]
      %v495 = vld [vmem:[%s430 + $0x7c] sm:$0xf]
      %v496 = vld [vmem:[%s433] sm:$0x1]
      %v498 = vlaneseq
      %v499 = vshrl.u32 %v498, 7
      %v500 = vsub.s32 0, %v499
      %v501 = vrot.slane %v496, %v500
      %v504 = vunpack.c.l.b16 %v463
      %v505 = vunpack.c.h.b16 %v463
      %v506 = vpack.c.b16 %v504, %v504
      %v507 = vpack.c.b16 %v505, %v505
      %v542 = vunpack.c.l.b16 %v464
      %v543 = vunpack.c.l.b16 %v465
      %v544 = vunpack.c.l.b16 %v466
      %v545 = vunpack.c.l.b16 %v467
      %v546 = vunpack.c.l.b16 %v468
      %v547 = vunpack.c.l.b16 %v469
      %v548 = vunpack.c.l.b16 %v470
      %v549 = vunpack.c.l.b16 %v471
      %v550 = vunpack.c.l.b16 %v472
      %v551 = vunpack.c.l.b16 %v473
      %v552 = vunpack.c.l.b16 %v474
      %v553 = vunpack.c.l.b16 %v475
      %v554 = vunpack.c.l.b16 %v476
      %v555 = vunpack.c.l.b16 %v477
      %v556 = vunpack.c.l.b16 %v478
      %v557 = vunpack.c.l.b16 %v479
      %v558 = vunpack.c.l.b16 %v480
      %v559 = vunpack.c.l.b16 %v481
      %v560 = vunpack.c.l.b16 %v482
      %v561 = vunpack.c.l.b16 %v483
      %v562 = vunpack.c.l.b16 %v484
      %v563 = vunpack.c.l.b16 %v485
      %v564 = vunpack.c.l.b16 %v486
      %v565 = vunpack.c.l.b16 %v487
      %v566 = vunpack.c.l.b16 %v488
      %v567 = vunpack.c.l.b16 %v489
      %v568 = vunpack.c.l.b16 %v490
      %v569 = vunpack.c.l.b16 %v491
      %v570 = vunpack.c.l.b16 %v492
      %v571 = vunpack.c.l.b16 %v493
      %v572 = vunpack.c.l.b16 %v494
      %v573 = vunpack.c.l.b16 %v495
      %v574 = vpack.c.b16 %v543, %v542
      %v575 = vpack.c.b16 %v545, %v544
      %v576 = vpack.c.b16 %v547, %v546
      %v577 = vpack.c.b16 %v549, %v548
      %v578 = vpack.c.b16 %v551, %v550
      %v579 = vpack.c.b16 %v553, %v552
      %v580 = vpack.c.b16 %v555, %v554
      %v581 = vpack.c.b16 %v557, %v556
      %v582 = vpack.c.b16 %v559, %v558
      %v583 = vpack.c.b16 %v561, %v560
      %v584 = vpack.c.b16 %v563, %v562
      %v585 = vpack.c.b16 %v565, %v564
      %v586 = vpack.c.b16 %v567, %v566
      %v587 = vpack.c.b16 %v569, %v568
      %v588 = vpack.c.b16 %v571, %v570
      %v589 = vpack.c.b16 %v573, %v572
      %606 = vmatprep.subr.bf16.mxu0 0
      %607 = vmatpush1.bf16.msra.mxu0 %v574
      %608 = vmatprep.subr.bf16.mxu0 0
      %609 = vmatpush1.bf16.msra.mxu0 %v575
      %610 = vmatprep.subr.bf16.mxu0 0
      %611 = vmatpush1.bf16.msra.mxu0 %v576
      %612 = vmatprep.subr.bf16.mxu0 0
      %613 = vmatpush1.bf16.msra.mxu0 %v577
      %614 = vmatprep.subr.bf16.mxu0 0
      %615 = vmatpush1.bf16.msra.mxu0 %v578
      %616 = vmatprep.subr.bf16.mxu0 0
      %617 = vmatpush1.bf16.msra.mxu0 %v579
      %618 = vmatprep.subr.bf16.mxu0 0
      %619 = vmatpush1.bf16.msra.mxu0 %v580
      %620 = vmatprep.subr.bf16.mxu0 0
      %621 = vmatpush1.bf16.msra.mxu0 %v581
      %622 = vmatprep.subr.bf16.mxu0 0
      %623 = vmatpush1.bf16.msra.mxu0 %v582
      %624 = vmatprep.subr.bf16.mxu0 0
      %625 = vmatpush1.bf16.msra.mxu0 %v583
      %626 = vmatprep.subr.bf16.mxu0 0
      %627 = vmatpush1.bf16.msra.mxu0 %v584
      %628 = vmatprep.subr.bf16.mxu0 0
      %629 = vmatpush1.bf16.msra.mxu0 %v585
      %630 = vmatprep.subr.bf16.mxu0 0
      %631 = vmatpush1.bf16.msra.mxu0 %v586
      %632 = vmatprep.subr.bf16.mxu0 0
      %633 = vmatpush1.bf16.msra.mxu0 %v587
      %634 = vmatprep.subr.bf16.mxu0 0
      %635 = vmatpush1.bf16.msra.mxu0 %v588
      %636 = vmatprep.subr.bf16.mxu0 0
      %637 = vmatpush1.bf16.msra.mxu0 %v589
      %638 = vmatprep.mubr.bf16.mxu0 %v507
      %639 = vmatmul.mubr.bf16.gmra.mrb[0].mxu0 %v506
      %v640 = vpop.f32.mrb[0].mxu0
      %v641 = vadd.f32 %v501, %v640
      %v642 = vpop.f32.mrb[0].mxu0
      %v643 = vpop.f32.mrb[0].mxu0
      %v644 = vpop.f32.mrb[0].mxu0
      %645 = vdwg.mxu0
      %v646 = vpack.c.bf16 %v641, %v641
      %v647 = vld [vmem:[%s3] sm:$0xff]
      %v648 = vld [vmem:[%s443] sm:$0xff]
      %v649 = vld [vmem:[%s443 + $0x8] sm:$0xff]
      %v650 = vld [vmem:[%s443 + $0x10] sm:$0xff]
      %v651 = vld [vmem:[%s443 + $0x18] sm:$0xff]
      %v652 = vld [vmem:[%s448] sm:$0xff]
      %v653 = vld [vmem:[%s448 + $0x8] sm:$0xff]
      %v654 = vld [vmem:[%s448 + $0x10] sm:$0xff]
      %v655 = vld [vmem:[%s448 + $0x18] sm:$0xff]
      %v656 = vld [vmem:[%s448 + $0x20] sm:$0xff]
      %v657 = vld [vmem:[%s448 + $0x28] sm:$0xff]
      %v658 = vld [vmem:[%s448 + $0x30] sm:$0xff]
      %v659 = vld [vmem:[%s448 + $0x38] sm:$0xff]
      %v660 = vld [vmem:[%s448 + $0x40] sm:$0xff]
      %v661 = vld [vmem:[%s448 + $0x48] sm:$0xff]
      %v662 = vld [vmem:[%s448 + $0x50] sm:$0xff]
      %v663 = vld [vmem:[%s448 + $0x58] sm:$0xff]
      %v664 = vld [vmem:[%s452] sm:$0x3]
      %v665 = vld [vmem:[%s457] sm:$0xf]
      %v666 = vld [vmem:[%s457 + $0x4] sm:$0xf]
      %v667 = vld [vmem:[%s457 + $0x8] sm:$0xf]
      %v668 = vld [vmem:[%s457 + $0xc] sm:$0xf]
      %v669 = vld [vmem:[%s457 + $0x10] sm:$0xf]
      %v670 = vld [vmem:[%s457 + $0x14] sm:$0xf]
      %v671 = vld [vmem:[%s457 + $0x18] sm:$0xf]
      %v672 = vld [vmem:[%s457 + $0x1c] sm:$0xf]
      %v673 = vld [vmem:[%s457 + $0x20] sm:$0xf]
      %v674 = vld [vmem:[%s457 + $0x24] sm:$0xf]
      %v675 = vld [vmem:[%s457 + $0x28] sm:$0xf]
      %v676 = vld [vmem:[%s457 + $0x2c] sm:$0xf]
      %v677 = vld [vmem:[%s457 + $0x30] sm:$0xf]
      %v678 = vld [vmem:[%s457 + $0x34] sm:$0xf]
      %v679 = vld [vmem:[%s457 + $0x38] sm:$0xf]
      %v680 = vld [vmem:[%s457 + $0x3c] sm:$0xf]
      %v681 = vld [vmem:[%s457 + $0x40] sm:$0xf]
      %v682 = vld [vmem:[%s457 + $0x44] sm:$0xf]
      %v683 = vld [vmem:[%s457 + $0x48] sm:$0xf]
      %v684 = vld [vmem:[%s457 + $0x4c] sm:$0xf]
      %v685 = vld [vmem:[%s457 + $0x50] sm:$0xf]
      %v686 = vld [vmem:[%s457 + $0x54] sm:$0xf]
      %v687 = vld [vmem:[%s457 + $0x58] sm:$0xf]
      %v688 = vld [vmem:[%s457 + $0x5c] sm:$0xf]
      %v689 = vld [vmem:[%s457 + $0x60] sm:$0xf]
      %v690 = vld [vmem:[%s457 + $0x64] sm:$0xf]
      %v691 = vld [vmem:[%s457 + $0x68] sm:$0xf]
      %v692 = vld [vmem:[%s457 + $0x6c] sm:$0xf]
      %v693 = vld [vmem:[%s457 + $0x70] sm:$0xf]
      %v694 = vld [vmem:[%s457 + $0x74] sm:$0xf]
      %v695 = vld [vmem:[%s457 + $0x78] sm:$0xf]
      %v696 = vld [vmem:[%s457 + $0x7c] sm:$0xf]
      %v697 = vrot.slane %v641, 5
      %699 = vset.pattern.permute.xlu0 0
      %700 = vperm.xlu0 %699, %v647
      %v701 = vpop.permute.xlu0 %700
      %v703 = vmul.f32 %v697, %v701
      %v704 = vpack.c.bf16 %v703, %v703
      %v705 = vld [vmem:[%s438] sm:$0xf]
      %v706 = vld [vmem:[%s438 + $0x4] sm:$0xf]
      %v707 = vld [vmem:[%s438 + $0x8] sm:$0xf]
      %v708 = vld [vmem:[%s438 + $0xc] sm:$0xf]
      %v709 = vrot.slane %v641, 6
      %710 = vset.pattern.permute.xlu0 1
      %711 = vperm.xlu0 %710, %v647
      %v712 = vpop.permute.xlu0 %711
      %v714 = vmul.f32 %v709, %v712
      %v715 = vpack.c.bf16 %v714, %v714
      %s716 = scalar_lea.vmem %s438, 16
      %v717 = vld [vmem:[%s716] sm:$0xf]
      %v718 = vld [vmem:[%s716 + $0x4] sm:$0xf]
      %v719 = vld [vmem:[%s716 + $0x8] sm:$0xf]
      %v720 = vld [vmem:[%s716 + $0xc] sm:$0xf]
      %v725 = vunpack.c.l.b16 %v717
      %v726 = vunpack.c.l.b16 %v718
      %v727 = vunpack.c.l.b16 %v719
      %v728 = vunpack.c.l.b16 %v720
      %v729 = vpack.c.b16 %v726, %v725
      %v730 = vpack.c.b16 %v728, %v727
      %vm733 = vcmask 261120
      %v735 = vsel %vm733, %v715, 0
      %737 = vmatprep.subr.bf16.mxu0 0
      %738 = vmatpush1.bf16.msra.mxu0 %v729
      %739 = vmatprep.subr.bf16.mxu0 0
      %740 = vmatpush1.bf16.msra.mxu0 %v730
      %741 = vmatprep.subr.bf16.mxu0 0
      %742 = vmatpush1.bf16.msra.mxu0 0
      %743 = vmatprep.subr.bf16.mxu0 0
      %744 = vmatpush1.bf16.msra.mxu0 0
      %745 = vmatprep.subr.bf16.mxu0 0
      %746 = vmatpush1.bf16.msra.mxu0 0
      %747 = vmatprep.subr.bf16.mxu0 0
      %748 = vmatpush1.bf16.msra.mxu0 0
      %749 = vmatprep.subr.bf16.mxu0 0
      %750 = vmatpush1.bf16.msra.mxu0 0
      %751 = vmatprep.subr.bf16.mxu0 0
      %752 = vmatpush1.bf16.msra.mxu0 0
      %753 = vmatprep.subr.bf16.mxu0 0
      %754 = vmatpush1.bf16.msra.mxu0 0
      %755 = vmatprep.subr.bf16.mxu0 0
      %756 = vmatpush1.bf16.msra.mxu0 0
      %757 = vmatprep.subr.bf16.mxu0 0
      %758 = vmatpush1.bf16.msra.mxu0 0
      %759 = vmatprep.subr.bf16.mxu0 0
      %760 = vmatpush1.bf16.msra.mxu0 0
      %761 = vmatprep.subr.bf16.mxu0 0
      %762 = vmatpush1.bf16.msra.mxu0 0
      %763 = vmatprep.subr.bf16.mxu0 0
      %764 = vmatpush1.bf16.msra.mxu0 0
      %765 = vmatprep.subr.bf16.mxu0 0
      %766 = vmatpush1.bf16.msra.mxu0 0
      %767 = vmatprep.subr.bf16.mxu0 0
      %768 = vmatpush1.bf16.msra.mxu0 0
      %769 = vmatprep.mubr.bf16.mxu0 0
      %770 = vmatmul.mubr.bf16.gmra.mrb[0].mxu0 %v735
      %v771 = vpop.f32.mrb[0].mxu0
      %v772 = vadd.f32 0.0, %v771
      %v773 = vpop.f32.mrb[0].mxu0
      %v774 = vpop.f32.mrb[0].mxu0
      %v775 = vpop.f32.mrb[0].mxu0
      %776 = vdwg.mxu0
      %v781 = vunpack.c.l.b16 %v705
      %v782 = vunpack.c.l.b16 %v706
      %v783 = vunpack.c.l.b16 %v707
      %v784 = vunpack.c.l.b16 %v708
      %v785 = vpack.c.b16 %v782, %v781
      %v786 = vpack.c.b16 %v784, %v783
      %v790 = vsel %vm733, %v704, 0
      %792 = vmatprep.subr.bf16.mxu0 0
      %793 = vmatpush1.bf16.msra.mxu0 %v785
      %794 = vmatprep.subr.bf16.mxu0 0
      %795 = vmatpush1.bf16.msra.mxu0 %v786
      %796 = vmatprep.subr.bf16.mxu0 0
      %797 = vmatpush1.bf16.msra.mxu0 0
      %798 = vmatprep.subr.bf16.mxu0 0
      %799 = vmatpush1.bf16.msra.mxu0 0
      %800 = vmatprep.subr.bf16.mxu0 0
      %801 = vmatpush1.bf16.msra.mxu0 0
      %802 = vmatprep.subr.bf16.mxu0 0
      %803 = vmatpush1.bf16.msra.mxu0 0
      %804 = vmatprep.subr.bf16.mxu0 0
      %805 = vmatpush1.bf16.msra.mxu0 0
      %806 = vmatprep.subr.bf16.mxu0 0
      %807 = vmatpush1.bf16.msra.mxu0 0
      %808 = vmatprep.subr.bf16.mxu0 0
      %809 = vmatpush1.bf16.msra.mxu0 0
      %810 = vmatprep.subr.bf16.mxu0 0
      %811 = vmatpush1.bf16.msra.mxu0 0
      %812 = vmatprep.subr.bf16.mxu0 0
      %813 = vmatpush1.bf16.msra.mxu0 0
      %814 = vmatprep.subr.bf16.mxu0 0
      %815 = vmatpush1.bf16.msra.mxu0 0
      %816 = vmatprep.subr.bf16.mxu0 0
      %817 = vmatpush1.bf16.msra.mxu0 0
      %818 = vmatprep.subr.bf16.mxu0 0
      %819 = vmatpush1.bf16.msra.mxu0 0
      %820 = vmatprep.subr.bf16.mxu0 0
      %821 = vmatpush1.bf16.msra.mxu0 0
      %822 = vmatprep.subr.bf16.mxu0 0
      %823 = vmatpush1.bf16.msra.mxu0 0
      %824 = vmatprep.mubr.bf16.mxu0 0
      %825 = vmatmul.mubr.bf16.gmra.mrb[0].mxu0 %v790
      %v826 = vpop.f32.mrb[0].mxu0
      %v827 = vadd.f32 %v772, %v826
      %v828 = vpop.f32.mrb[0].mxu0
      %v829 = vpop.f32.mrb[0].mxu0
      %v830 = vpop.f32.mrb[0].mxu0
      %831 = vdwg.mxu0
      %v832 = vrot.slane %v641, 7
      %833 = vset.pattern.permute.xlu0 2
      %834 = vperm.xlu0 %833, %v647
      %v835 = vpop.permute.xlu0 %834
      %v837 = vmul.f32 %v832, %v835
      %v838 = vpack.c.bf16 %v837, %v837
      %s839 = scalar_lea.vmem %s438, 32
      %v840 = vld [vmem:[%s839] sm:$0xf]
      %v841 = vld [vmem:[%s839 + $0x4] sm:$0xf]
      %v842 = vld [vmem:[%s839 + $0x8] sm:$0xf]
      %v843 = vld [vmem:[%s839 + $0xc] sm:$0xf]
      %v848 = vunpack.c.l.b16 %v840
      %v849 = vunpack.c.l.b16 %v841
      %v850 = vunpack.c.l.b16 %v842
      %v851 = vunpack.c.l.b16 %v843
      %v852 = vpack.c.b16 %v849, %v848
      %v853 = vpack.c.b16 %v851, %v850
      %v857 = vsel %vm733, %v838, 0
      %859 = vmatprep.subr.bf16.mxu0 0
      %860 = vmatpush1.bf16.msra.mxu0 %v852
      %861 = vmatprep.subr.bf16.mxu0 0
      %862 = vmatpush1.bf16.msra.mxu0 %v853
      %863 = vmatprep.subr.bf16.mxu0 0
      %864 = vmatpush1.bf16.msra.mxu0 0
      %865 = vmatprep.subr.bf16.mxu0 0
      %866 = vmatpush1.bf16.msra.mxu0 0
      %867 = vmatprep.subr.bf16.mxu0 0
      %868 = vmatpush1.bf16.msra.mxu0 0
      %869 = vmatprep.subr.bf16.mxu0 0
      %870 = vmatpush1.bf16.msra.mxu0 0
      %871 = vmatprep.subr.bf16.mxu0 0
      %872 = vmatpush1.bf16.msra.mxu0 0
      %873 = vmatprep.subr.bf16.mxu0 0
      %874 = vmatpush1.bf16.msra.mxu0 0
      %875 = vmatprep.subr.bf16.mxu0 0
      %876 = vmatpush1.bf16.msra.mxu0 0
      %877 = vmatprep.subr.bf16.mxu0 0
      %878 = vmatpush1.bf16.msra.mxu0 0
      %879 = vmatprep.subr.bf16.mxu0 0
      %880 = vmatpush1.bf16.msra.mxu0 0
      %881 = vmatprep.subr.bf16.mxu0 0
      %882 = vmatpush1.bf16.msra.mxu0 0
      %883 = vmatprep.subr.bf16.mxu0 0
      %884 = vmatpush1.bf16.msra.mxu0 0
      %885 = vmatprep.subr.bf16.mxu0 0
      %886 = vmatpush1.bf16.msra.mxu0 0
      %887 = vmatprep.subr.bf16.mxu0 0
      %888 = vmatpush1.bf16.msra.mxu0 0
      %889 = vmatprep.subr.bf16.mxu0 0
      %890 = vmatpush1.bf16.msra.mxu0 0
      %891 = vmatprep.mubr.bf16.mxu0 0
      %892 = vmatmul.mubr.bf16.gmra.mrb[0].mxu0 %v857
      %v893 = vpop.f32.mrb[0].mxu0
      %v894 = vadd.f32 0.0, %v893
      %v895 = vpop.f32.mrb[0].mxu0
      %v896 = vpop.f32.mrb[0].mxu0
      %v897 = vpop.f32.mrb[0].mxu0
      %898 = vdwg.mxu0
      %v899 = vadd.f32 %v827, %v894
      %900 = vset.pattern.permute.xlu0 3
      %901 = vperm.xlu0 %900, %v647
      %v902 = vpop.permute.xlu0 %901
      %v904 = vmul.f32 %v832, %v902
      %v905 = vpack.c.bf16 %v904, %v904
      %s906 = scalar_lea.vmem %s438, 48
      %v907 = vld [vmem:[%s906] sm:$0xf]
      %v908 = vld [vmem:[%s906 + $0x4] sm:$0xf]
      %v909 = vld [vmem:[%s906 + $0x8] sm:$0xf]
      %v910 = vld [vmem:[%s906 + $0xc] sm:$0xf]
      %v915 = vunpack.c.l.b16 %v907
      %v916 = vunpack.c.l.b16 %v908
      %v917 = vunpack.c.l.b16 %v909
      %v918 = vunpack.c.l.b16 %v910
      %v919 = vpack.c.b16 %v916, %v915
      %v920 = vpack.c.b16 %v918, %v917
      %v924 = vsel %vm733, %v905, 0
      %926 = vmatprep.subr.bf16.mxu0 0
      %927 = vmatpush1.bf16.msra.mxu0 %v919
      %928 = vmatprep.subr.bf16.mxu0 0
      %929 = vmatpush1.bf16.msra.mxu0 %v920
      %930 = vmatprep.subr.bf16.mxu0 0
      %931 = vmatpush1.bf16.msra.mxu0 0
      %932 = vmatprep.subr.bf16.mxu0 0
      %933 = vmatpush1.bf16.msra.mxu0 0
      %934 = vmatprep.subr.bf16.mxu0 0
      %935 = vmatpush1.bf16.msra.mxu0 0
      %936 = vmatprep.subr.bf16.mxu0 0
      %937 = vmatpush1.bf16.msra.mxu0 0
      %938 = vmatprep.subr.bf16.mxu0 0
      %939 = vmatpush1.bf16.msra.mxu0 0
      %940 = vmatprep.subr.bf16.mxu0 0
      %941 = vmatpush1.bf16.msra.mxu0 0
      %942 = vmatprep.subr.bf16.mxu0 0
      %943 = vmatpush1.bf16.msra.mxu0 0
      %944 = vmatprep.subr.bf16.mxu0 0
      %945 = vmatpush1.bf16.msra.mxu0 0
      %946 = vmatprep.subr.bf16.mxu0 0
      %947 = vmatpush1.bf16.msra.mxu0 0
      %948 = vmatprep.subr.bf16.mxu0 0
      %949 = vmatpush1.bf16.msra.mxu0 0
      %950 = vmatprep.subr.bf16.mxu0 0
      %951 = vmatpush1.bf16.msra.mxu0 0
      %952 = vmatprep.subr.bf16.mxu0 0
      %953 = vmatpush1.bf16.msra.mxu0 0
      %954 = vmatprep.subr.bf16.mxu0 0
      %955 = vmatpush1.bf16.msra.mxu0 0
      %956 = vmatprep.subr.bf16.mxu0 0
      %957 = vmatpush1.bf16.msra.mxu0 0
      %958 = vmatprep.mubr.bf16.mxu0 0
      %959 = vmatmul.mubr.bf16.gmra.mrb[0].mxu0 %v924
      %v960 = vpop.f32.mrb[0].mxu0
      %v961 = vadd.f32 0.0, %v960
      %v962 = vpop.f32.mrb[0].mxu0
      %v963 = vpop.f32.mrb[0].mxu0
      %v964 = vpop.f32.mrb[0].mxu0
      %965 = vdwg.mxu0
      %v966 = vadd.f32 %v899, %v961
      %s967 = scalar_lea.vmem %s438, 64
      %v968 = vld [vmem:[%s967] sm:$0xf]
      %v969 = vld [vmem:[%s967 + $0x4] sm:$0xf]
      %v970 = vld [vmem:[%s967 + $0x8] sm:$0xf]
      %v971 = vld [vmem:[%s967 + $0xc] sm:$0xf]
      %v976 = vunpack.c.l.b16 %v968
      %v977 = vunpack.c.l.b16 %v969
      %v978 = vunpack.c.l.b16 %v970
      %v979 = vunpack.c.l.b16 %v971
      %v980 = vpack.c.b16 %v977, %v976
      %v981 = vpack.c.b16 %v979, %v978
      %v985 = vsel %vm733, %v646, 0
      %987 = vmatprep.subr.bf16.mxu0 0
      %988 = vmatpush1.bf16.msra.mxu0 %v980
      %989 = vmatprep.subr.bf16.mxu0 0
      %990 = vmatpush1.bf16.msra.mxu0 %v981
      %991 = vmatprep.subr.bf16.mxu0 0
      %992 = vmatpush1.bf16.msra.mxu0 0
      %993 = vmatprep.subr.bf16.mxu0 0
      %994 = vmatpush1.bf16.msra.mxu0 0
      %995 = vmatprep.subr.bf16.mxu0 0
      %996 = vmatpush1.bf16.msra.mxu0 0
      %997 = vmatprep.subr.bf16.mxu0 0
      %998 = vmatpush1.bf16.msra.mxu0 0
      %999 = vmatprep.subr.bf16.mxu0 0
      %1000 = vmatpush1.bf16.msra.mxu0 0
      %1001 = vmatprep.subr.bf16.mxu0 0
      %1002 = vmatpush1.bf16.msra.mxu0 0
      %1003 = vmatprep.subr.bf16.mxu0 0
      %1004 = vmatpush1.bf16.msra.mxu0 0
      %1005 = vmatprep.subr.bf16.mxu0 0
      %1006 = vmatpush1.bf16.msra.mxu0 0
      %1007 = vmatprep.subr.bf16.mxu0 0
      %1008 = vmatpush1.bf16.msra.mxu0 0
      %1009 = vmatprep.subr.bf16.mxu0 0
      %1010 = vmatpush1.bf16.msra.mxu0 0
      %1011 = vmatprep.subr.bf16.mxu0 0
      %1012 = vmatpush1.bf16.msra.mxu0 0
      %1013 = vmatprep.subr.bf16.mxu0 0
      %1014 = vmatpush1.bf16.msra.mxu0 0
      %1015 = vmatprep.subr.bf16.mxu0 0
      %1016 = vmatpush1.bf16.msra.mxu0 0
      %1017 = vmatprep.subr.bf16.mxu0 0
      %1018 = vmatpush1.bf16.msra.mxu0 0
      %1019 = vmatprep.mubr.bf16.mxu0 0
      %1020 = vmatmul.mubr.bf16.gmra.mrb[0].mxu0 %v985
      %v1021 = vpop.f32.mrb[0].mxu0
      %v1022 = vadd.f32 0.0, %v1021
      %v1023 = vpop.f32.mrb[0].mxu0
      %v1024 = vpop.f32.mrb[0].mxu0
      %v1025 = vpop.f32.mrb[0].mxu0
      %1026 = vdwg.mxu0
      %v1027 = vadd.f32 %v966, %v1022
      %v1028 = vrot.slane %v641, 1
      %1029 = vset.pattern.permute.xlu0 5
      %1030 = vperm.xlu0 %1029, %v647
      %v1031 = vpop.permute.xlu0 %1030
      %v1033 = vmul.f32 %v1028, %v1031
      %v1034 = vpack.c.bf16 %v1033, %v1033
      %s1035 = scalar_lea.vmem %s438, 80
      %v1036 = vld [vmem:[%s1035] sm:$0xf]
      %v1037 = vld [vmem:[%s1035 + $0x4] sm:$0xf]
      %v1038 = vld [vmem:[%s1035 + $0x8] sm:$0xf]
      %v1039 = vld [vmem:[%s1035 + $0xc] sm:$0xf]
      %v1044 = vunpack.c.l.b16 %v1036
      %v1045 = vunpack.c.l.b16 %v1037
      %v1046 = vunpack.c.l.b16 %v1038
      %v1047 = vunpack.c.l.b16 %v1039
      %v1048 = vpack.c.b16 %v1045, %v1044
      %v1049 = vpack.c.b16 %v1047, %v1046
      %v1053 = vsel %vm733, %v1034, 0
      %1055 = vmatprep.subr.bf16.mxu0 0
      %1056 = vmatpush1.bf16.msra.mxu0 %v1048
      %1057 = vmatprep.subr.bf16.mxu0 0
      %1058 = vmatpush1.bf16.msra.mxu0 %v1049
      %1059 = vmatprep.subr.bf16.mxu0 0
      %1060 = vmatpush1.bf16.msra.mxu0 0
      %1061 = vmatprep.subr.bf16.mxu0 0
      %1062 = vmatpush1.bf16.msra.mxu0 0
      %1063 = vmatprep.subr.bf16.mxu0 0
      %1064 = vmatpush1.bf16.msra.mxu0 0
      %1065 = vmatprep.subr.bf16.mxu0 0
      %1066 = vmatpush1.bf16.msra.mxu0 0
      %1067 = vmatprep.subr.bf16.mxu0 0
      %1068 = vmatpush1.bf16.msra.mxu0 0
      %1069 = vmatprep.subr.bf16.mxu0 0
      %1070 = vmatpush1.bf16.msra.mxu0 0
      %1071 = vmatprep.subr.bf16.mxu0 0
      %1072 = vmatpush1.bf16.msra.mxu0 0
      %1073 = vmatprep.subr.bf16.mxu0 0
      %1074 = vmatpush1.bf16.msra.mxu0 0
      %1075 = vmatprep.subr.bf16.mxu0 0
      %1076 = vmatpush1.bf16.msra.mxu0 0
      %1077 = vmatprep.subr.bf16.mxu0 0
      %1078 = vmatpush1.bf16.msra.mxu0 0
      %1079 = vmatprep.subr.bf16.mxu0 0
      %1080 = vmatpush1.bf16.msra.mxu0 0
      %1081 = vmatprep.subr.bf16.mxu0 0
      %1082 = vmatpush1.bf16.msra.mxu0 0
      %1083 = vmatprep.subr.bf16.mxu0 0
      %1084 = vmatpush1.bf16.msra.mxu0 0
      %1085 = vmatprep.subr.bf16.mxu0 0
      %1086 = vmatpush1.bf16.msra.mxu0 0
      %1087 = vmatprep.mubr.bf16.mxu0 0
      %1088 = vmatmul.mubr.bf16.gmra.mrb[0].mxu0 %v1053
      %v1089 = vpop.f32.mrb[0].mxu0
      %v1090 = vadd.f32 0.0, %v1089
      %v1091 = vpop.f32.mrb[0].mxu0
      %v1092 = vpop.f32.mrb[0].mxu0
      %v1093 = vpop.f32.mrb[0].mxu0
      %1094 = vdwg.mxu0
      %v1095 = vadd.f32 %v1027, %v1090
      %1096 = vset.pattern.permute.xlu0 6
      %1097 = vperm.xlu0 %1096, %v647
      %v1098 = vpop.permute.xlu0 %1097
      %v1100 = vmul.f32 %v1028, %v1098
      %v1101 = vpack.c.bf16 %v1100, %v1100
      %s1102 = scalar_lea.vmem %s438, 96
      %v1103 = vld [vmem:[%s1102] sm:$0xf]
      %v1104 = vld [vmem:[%s1102 + $0x4] sm:$0xf]
      %v1105 = vld [vmem:[%s1102 + $0x8] sm:$0xf]
      %v1106 = vld [vmem:[%s1102 + $0xc] sm:$0xf]
      %v1111 = vunpack.c.l.b16 %v1103
      %v1112 = vunpack.c.l.b16 %v1104
      %v1113 = vunpack.c.l.b16 %v1105
      %v1114 = vunpack.c.l.b16 %v1106
      %v1115 = vpack.c.b16 %v1112, %v1111
      %v1116 = vpack.c.b16 %v1114, %v1113
      %v1120 = vsel %vm733, %v1101, 0
      %1122 = vmatprep.subr.bf16.mxu0 0
      %1123 = vmatpush1.bf16.msra.mxu0 %v1115
      %1124 = vmatprep.subr.bf16.mxu0 0
      %1125 = vmatpush1.bf16.msra.mxu0 %v1116
      %1126 = vmatprep.subr.bf16.mxu0 0
      %1127 = vmatpush1.bf16.msra.mxu0 0
      %1128 = vmatprep.subr.bf16.mxu0 0
      %1129 = vmatpush1.bf16.msra.mxu0 0
      %1130 = vmatprep.subr.bf16.mxu0 0
      %1131 = vmatpush1.bf16.msra.mxu0 0
      %1132 = vmatprep.subr.bf16.mxu0 0
      %1133 = vmatpush1.bf16.msra.mxu0 0
      %1134 = vmatprep.subr.bf16.mxu0 0
      %1135 = vmatpush1.bf16.msra.mxu0 0
      %1136 = vmatprep.subr.bf16.mxu0 0
      %1137 = vmatpush1.bf16.msra.mxu0 0
      %1138 = vmatprep.subr.bf16.mxu0 0
      %1139 = vmatpush1.bf16.msra.mxu0 0
      %1140 = vmatprep.subr.bf16.mxu0 0
      %1141 = vmatpush1.bf16.msra.mxu0 0
      %1142 = vmatprep.subr.bf16.mxu0 0
      %1143 = vmatpush1.bf16.msra.mxu0 0
      %1144 = vmatprep.subr.bf16.mxu0 0
      %1145 = vmatpush1.bf16.msra.mxu0 0
      %1146 = vmatprep.subr.bf16.mxu0 0
      %1147 = vmatpush1.bf16.msra.mxu0 0
      %1148 = vmatprep.subr.bf16.mxu0 0
      %1149 = vmatpush1.bf16.msra.mxu0 0
      %1150 = vmatprep.subr.bf16.mxu0 0
      %1151 = vmatpush1.bf16.msra.mxu0 0
      %1152 = vmatprep.subr.bf16.mxu0 0
      %1153 = vmatpush1.bf16.msra.mxu0 0
      %1154 = vmatprep.mubr.bf16.mxu0 0
      %1155 = vmatmul.mubr.bf16.gmra.mrb[0].mxu0 %v1120
      %v1156 = vpop.f32.mrb[0].mxu0
      %v1157 = vadd.f32 0.0, %v1156
      %v1158 = vpop.f32.mrb[0].mxu0
      %v1159 = vpop.f32.mrb[0].mxu0
      %v1160 = vpop.f32.mrb[0].mxu0
      %1161 = vdwg.mxu0
      %v1162 = vadd.f32 %v1095, %v1157
      %v1163 = vrot.slane %v641, 2
      %1164 = vset.pattern.permute.xlu0 7
      %1165 = vperm.xlu0 %1164, %v647
      %v1166 = vpop.permute.xlu0 %1165
      %v1168 = vmul.f32 %v1163, %v1166
      %v1169 = vpack.c.bf16 %v1168, %v1168
      %s1170 = scalar_lea.vmem %s438, 112
      %v1171 = vld [vmem:[%s1170] sm:$0xf]
      %v1172 = vld [vmem:[%s1170 + $0x4] sm:$0xf]
      %v1173 = vld [vmem:[%s1170 + $0x8] sm:$0xf]
      %v1174 = vld [vmem:[%s1170 + $0xc] sm:$0xf]
      %v1179 = vunpack.c.l.b16 %v1171
      %v1180 = vunpack.c.l.b16 %v1172
      %v1181 = vunpack.c.l.b16 %v1173
      %v1182 = vunpack.c.l.b16 %v1174
      %v1183 = vpack.c.b16 %v1180, %v1179
      %v1184 = vpack.c.b16 %v1182, %v1181
      %v1188 = vsel %vm733, %v1169, 0
      %1190 = vmatprep.subr.bf16.mxu0 0
      %1191 = vmatpush1.bf16.msra.mxu0 %v1183
      %1192 = vmatprep.subr.bf16.mxu0 0
      %1193 = vmatpush1.bf16.msra.mxu0 %v1184
      %1194 = vmatprep.subr.bf16.mxu0 0
      %1195 = vmatpush1.bf16.msra.mxu0 0
      %1196 = vmatprep.subr.bf16.mxu0 0
      %1197 = vmatpush1.bf16.msra.mxu0 0
      %1198 = vmatprep.subr.bf16.mxu0 0
      %1199 = vmatpush1.bf16.msra.mxu0 0
      %1200 = vmatprep.subr.bf16.mxu0 0
      %1201 = vmatpush1.bf16.msra.mxu0 0
      %1202 = vmatprep.subr.bf16.mxu0 0
      %1203 = vmatpush1.bf16.msra.mxu0 0
      %1204 = vmatprep.subr.bf16.mxu0 0
      %1205 = vmatpush1.bf16.msra.mxu0 0
      %1206 = vmatprep.subr.bf16.mxu0 0
      %1207 = vmatpush1.bf16.msra.mxu0 0
      %1208 = vmatprep.subr.bf16.mxu0 0
      %1209 = vmatpush1.bf16.msra.mxu0 0
      %1210 = vmatprep.subr.bf16.mxu0 0
      %1211 = vmatpush1.bf16.msra.mxu0 0
      %1212 = vmatprep.subr.bf16.mxu0 0
      %1213 = vmatpush1.bf16.msra.mxu0 0
      %1214 = vmatprep.subr.bf16.mxu0 0
      %1215 = vmatpush1.bf16.msra.mxu0 0
      %1216 = vmatprep.subr.bf16.mxu0 0
      %1217 = vmatpush1.bf16.msra.mxu0 0
      %1218 = vmatprep.subr.bf16.mxu0 0
      %1219 = vmatpush1.bf16.msra.mxu0 0
      %1220 = vmatprep.subr.bf16.mxu0 0
      %1221 = vmatpush1.bf16.msra.mxu0 0
      %1222 = vmatprep.mubr.bf16.mxu0 0
      %1223 = vmatmul.mubr.bf16.gmra.mrb[0].mxu0 %v1188
      %v1224 = vpop.f32.mrb[0].mxu0
      %v1225 = vadd.f32 0.0, %v1224
      %v1226 = vpop.f32.mrb[0].mxu0
      %v1227 = vpop.f32.mrb[0].mxu0
      %v1228 = vpop.f32.mrb[0].mxu0
      %1229 = vdwg.mxu0
      %v1230 = vadd.f32 %v1162, %v1225
      %v1231 = vrot.slane %v641, 3
      %1232 = vset.pattern.permute.xlu0 8
      %1233 = vperm.xlu0 %1232, %v647
      %v1234 = vpop.permute.xlu0 %1233
      %v1236 = vmul.f32 %v1231, %v1234
      %v1237 = vpack.c.bf16 %v1236, %v1236
      %s1238 = scalar_lea.vmem %s438, 128
      %v1239 = vld [vmem:[%s1238] sm:$0xf]
      %v1240 = vld [vmem:[%s1238 + $0x4] sm:$0xf]
      %v1241 = vld [vmem:[%s1238 + $0x8] sm:$0xf]
      %v1242 = vld [vmem:[%s1238 + $0xc] sm:$0xf]
      %v1247 = vunpack.c.l.b16 %v1239
      %v1248 = vunpack.c.l.b16 %v1240
      %v1249 = vunpack.c.l.b16 %v1241
      %v1250 = vunpack.c.l.b16 %v1242
      %v1251 = vpack.c.b16 %v1248, %v1247
      %v1252 = vpack.c.b16 %v1250, %v1249
      %v1256 = vsel %vm733, %v1237, 0
      %1258 = vmatprep.subr.bf16.mxu0 0
      %1259 = vmatpush1.bf16.msra.mxu0 %v1251
      %1260 = vmatprep.subr.bf16.mxu0 0
      %1261 = vmatpush1.bf16.msra.mxu0 %v1252
      %1262 = vmatprep.subr.bf16.mxu0 0
      %1263 = vmatpush1.bf16.msra.mxu0 0
      %1264 = vmatprep.subr.bf16.mxu0 0
      %1265 = vmatpush1.bf16.msra.mxu0 0
      %1266 = vmatprep.subr.bf16.mxu0 0
      %1267 = vmatpush1.bf16.msra.mxu0 0
      %1268 = vmatprep.subr.bf16.mxu0 0
      %1269 = vmatpush1.bf16.msra.mxu0 0
      %1270 = vmatprep.subr.bf16.mxu0 0
      %1271 = vmatpush1.bf16.msra.mxu0 0
      %1272 = vmatprep.subr.bf16.mxu0 0
      %1273 = vmatpush1.bf16.msra.mxu0 0
      %1274 = vmatprep.subr.bf16.mxu0 0
      %1275 = vmatpush1.bf16.msra.mxu0 0
      %1276 = vmatprep.subr.bf16.mxu0 0
      %1277 = vmatpush1.bf16.msra.mxu0 0
      %1278 = vmatprep.subr.bf16.mxu0 0
      %1279 = vmatpush1.bf16.msra.mxu0 0
      %1280 = vmatprep.subr.bf16.mxu0 0
      %1281 = vmatpush1.bf16.msra.mxu0 0
      %1282 = vmatprep.subr.bf16.mxu0 0
      %1283 = vmatpush1.bf16.msra.mxu0 0
      %1284 = vmatprep.subr.bf16.mxu0 0
      %1285 = vmatpush1.bf16.msra.mxu0 0
      %1286 = vmatprep.subr.bf16.mxu0 0
      %1287 = vmatpush1.bf16.msra.mxu0 0
      %1288 = vmatprep.subr.bf16.mxu0 0
      %1289 = vmatpush1.bf16.msra.mxu0 0
      %1290 = vmatprep.mubr.bf16.mxu0 0
      %1291 = vmatmul.mubr.bf16.gmra.mrb[0].mxu0 %v1256
      %v1292 = vpop.f32.mrb[0].mxu0
      %v1293 = vadd.f32 0.0, %v1292
      %v1294 = vpop.f32.mrb[0].mxu0
      %v1295 = vpop.f32.mrb[0].mxu0
      %v1296 = vpop.f32.mrb[0].mxu0
      %1297 = vdwg.mxu0
      %v1298 = vadd.f32 %v1230, %v1293
      %v1299 = vpack.c.bf16 %v1298, %v1298
      %1301 = vrot.lane.b32.xlu0 %v646, 96
      %v1302 = vpop.permute.xlu0 %1301
      %v1315 = vunpack.c.l.b16 %v652
      %v1316 = vunpack.c.h.b16 %v652
      %v1317 = vunpack.c.l.b16 %v653
      %v1318 = vunpack.c.h.b16 %v653
      %v1319 = vunpack.c.l.b16 %v654
      %v1320 = vunpack.c.h.b16 %v654
      %v1321 = vunpack.c.l.b16 %v655
      %v1322 = vunpack.c.h.b16 %v655
      %v1323 = vunpack.c.l.b16 %v656
      %v1324 = vunpack.c.h.b16 %v656
      %v1325 = vunpack.c.l.b16 %v657
      %v1326 = vunpack.c.h.b16 %v657
      %v1327 = vunpack.c.l.b16 %v658
      %v1328 = vunpack.c.h.b16 %v658
      %v1329 = vunpack.c.l.b16 %v659
      %v1330 = vunpack.c.h.b16 %v659
      %v1331 = vunpack.c.l.b16 %v660
      %v1332 = vunpack.c.h.b16 %v660
      %v1333 = vunpack.c.l.b16 %v661
      %v1334 = vunpack.c.h.b16 %v661
      %v1335 = vunpack.c.l.b16 %v662
      %v1336 = vunpack.c.h.b16 %v662
      %v1337 = vunpack.c.l.b16 %v663
      %v1338 = vunpack.c.h.b16 %v663
      %v1339 = vpack.c.b16 %v1317, %v1315
      %v1340 = vpack.c.b16 %v1318, %v1316
      %v1341 = vpack.c.b16 %v1321, %v1319
      %v1342 = vpack.c.b16 %v1322, %v1320
      %v1343 = vpack.c.b16 %v1325, %v1323
      %v1344 = vpack.c.b16 %v1326, %v1324
      %v1345 = vpack.c.b16 %v1329, %v1327
      %v1346 = vpack.c.b16 %v1330, %v1328
      %v1347 = vpack.c.b16 %v1333, %v1331
      %v1348 = vpack.c.b16 %v1334, %v1332
      %v1349 = vpack.c.b16 %v1337, %v1335
      %v1350 = vpack.c.b16 %v1338, %v1336
      %vm1363 = vcmask 785408
      %v1365 = vsel %vm1363, %v1302, 0
      %1367 = vmatprep.subr.bf16.mxu0 %v1340
      %1368 = vmatpush1.bf16.msra.mxu0 %v1339
      %1369 = vmatprep.subr.bf16.mxu0 %v1342
      %1370 = vmatpush1.bf16.msra.mxu0 %v1341
      %1371 = vmatprep.subr.bf16.mxu0 %v1344
      %1372 = vmatpush1.bf16.msra.mxu0 %v1343
      %1373 = vmatprep.subr.bf16.mxu0 %v1346
      %1374 = vmatpush1.bf16.msra.mxu0 %v1345
      %1375 = vmatprep.subr.bf16.mxu0 %v1348
      %1376 = vmatpush1.bf16.msra.mxu0 %v1347
      %1377 = vmatprep.subr.bf16.mxu0 %v1350
      %1378 = vmatpush1.bf16.msra.mxu0 %v1349
      %1379 = vmatprep.subr.bf16.mxu0 0
      %1380 = vmatpush1.bf16.msra.mxu0 0
      %1381 = vmatprep.subr.bf16.mxu0 0
      %1382 = vmatpush1.bf16.msra.mxu0 0
      %1383 = vmatprep.subr.bf16.mxu0 0
      %1384 = vmatpush1.bf16.msra.mxu0 0
      %1385 = vmatprep.subr.bf16.mxu0 0
      %1386 = vmatpush1.bf16.msra.mxu0 0
      %1387 = vmatprep.subr.bf16.mxu0 0
      %1388 = vmatpush1.bf16.msra.mxu0 0
      %1389 = vmatprep.subr.bf16.mxu0 0
      %1390 = vmatpush1.bf16.msra.mxu0 0
      %1391 = vmatprep.subr.bf16.mxu0 0
      %1392 = vmatpush1.bf16.msra.mxu0 0
      %1393 = vmatprep.subr.bf16.mxu0 0
      %1394 = vmatpush1.bf16.msra.mxu0 0
      %1395 = vmatprep.subr.bf16.mxu0 0
      %1396 = vmatpush1.bf16.msra.mxu0 0
      %1397 = vmatprep.subr.bf16.mxu0 0
      %1398 = vmatpush1.bf16.msra.mxu0 0
      %1399 = vmatprep.mubr.bf16.mxu0 0
      %1400 = vmatmul.mubr.bf16.gmra.mrb[0].mxu0 %v1365
      %v1401 = vpop.f32.mrb[0].mxu0
      %v1402 = vadd.f32 0.0, %v1401
      %v1403 = vpop.f32.mrb[0].mxu0
      %v1404 = vadd.f32 0.0, %v1403
      %v1405 = vpop.f32.mrb[0].mxu0
      %v1406 = vpop.f32.mrb[0].mxu0
      %1407 = vdwg.mxu0
      %v1412 = vunpack.c.l.b16 %v648
      %v1413 = vunpack.c.h.b16 %v648
      %v1414 = vunpack.c.l.b16 %v649
      %v1415 = vunpack.c.h.b16 %v649
      %v1416 = vunpack.c.l.b16 %v650
      %v1417 = vunpack.c.h.b16 %v650
      %v1418 = vunpack.c.l.b16 %v651
      %v1419 = vunpack.c.h.b16 %v651
      %v1420 = vpack.c.b16 %v1414, %v1412
      %v1421 = vpack.c.b16 %v1415, %v1413
      %v1422 = vpack.c.b16 %v1418, %v1416
      %v1423 = vpack.c.b16 %v1419, %v1417
      %v1429 = vsel %vm733, %v1299, 0
      %1431 = vmatprep.subr.bf16.mxu0 %v1421
      %1432 = vmatpush1.bf16.msra.mxu0 %v1420
      %1433 = vmatprep.subr.bf16.mxu0 %v1423
      %1434 = vmatpush1.bf16.msra.mxu0 %v1422
      %1435 = vmatprep.subr.bf16.mxu0 0
      %1436 = vmatpush1.bf16.msra.mxu0 0
      %1437 = vmatprep.subr.bf16.mxu0 0
      %1438 = vmatpush1.bf16.msra.mxu0 0
      %1439 = vmatprep.subr.bf16.mxu0 0
      %1440 = vmatpush1.bf16.msra.mxu0 0
      %1441 = vmatprep.subr.bf16.mxu0 0
      %1442 = vmatpush1.bf16.msra.mxu0 0
      %1443 = vmatprep.subr.bf16.mxu0 0
      %1444 = vmatpush1.bf16.msra.mxu0 0
      %1445 = vmatprep.subr.bf16.mxu0 0
      %1446 = vmatpush1.bf16.msra.mxu0 0
      %1447 = vmatprep.subr.bf16.mxu0 0
      %1448 = vmatpush1.bf16.msra.mxu0 0
      %1449 = vmatprep.subr.bf16.mxu0 0
      %1450 = vmatpush1.bf16.msra.mxu0 0
      %1451 = vmatprep.subr.bf16.mxu0 0
      %1452 = vmatpush1.bf16.msra.mxu0 0
      %1453 = vmatprep.subr.bf16.mxu0 0
      %1454 = vmatpush1.bf16.msra.mxu0 0
      %1455 = vmatprep.subr.bf16.mxu0 0
      %1456 = vmatpush1.bf16.msra.mxu0 0
      %1457 = vmatprep.subr.bf16.mxu0 0
      %1458 = vmatpush1.bf16.msra.mxu0 0
      %1459 = vmatprep.subr.bf16.mxu0 0
      %1460 = vmatpush1.bf16.msra.mxu0 0
      %1461 = vmatprep.subr.bf16.mxu0 0
      %1462 = vmatpush1.bf16.msra.mxu0 0
      %1463 = vmatprep.mubr.bf16.mxu0 0
      %1464 = vmatmul.mubr.bf16.gmra.mrb[0].mxu0 %v1429
      %v1465 = vpop.f32.mrb[0].mxu0
      %v1466 = vadd.f32 %v1402, %v1465
      %v1467 = vpop.f32.mrb[0].mxu0
      %v1468 = vadd.f32 %v1404, %v1467
      %v1469 = vpop.f32.mrb[0].mxu0
      %v1470 = vpop.f32.mrb[0].mxu0
      %1471 = vdwg.mxu0
      %v1473 = vlaneseq
      %v1474 = vshrl.u32 %v1473, 7
      %v1475 = vsub.s32 0, %v1474
      %v1476 = vrot.slane %v664, %v1475
      %v1477 = vlaneseq
      %v1478 = vshrl.u32 %v1477, 7
      %v1479 = vsub.s32 1, %v1478
      %v1480 = vrot.slane %v664, %v1479
      %v1483 = vadd.f32 %v1466, %v1476
      %v1484 = vadd.f32 %v1468, %v1480
      %v1485 = vmax.f32 %v1483, 0.0
      %v1486 = vmax.f32 %v1484, 0.0
      %v1487 = vpack.c.bf16 %v1485, %v1485
      %v1488 = vpack.c.bf16 %v1486, %v1486
      %v1521 = vunpack.c.l.b16 %v665
      %v1522 = vunpack.c.l.b16 %v666
      %v1523 = vunpack.c.l.b16 %v667
      %v1524 = vunpack.c.l.b16 %v668
      %v1525 = vunpack.c.l.b16 %v669
      %v1526 = vunpack.c.l.b16 %v670
      %v1527 = vunpack.c.l.b16 %v671
      %v1528 = vunpack.c.l.b16 %v672
      %v1529 = vunpack.c.l.b16 %v673
      %v1530 = vunpack.c.l.b16 %v674
      %v1531 = vunpack.c.l.b16 %v675
      %v1532 = vunpack.c.l.b16 %v676
      %v1533 = vunpack.c.l.b16 %v677
      %v1534 = vunpack.c.l.b16 %v678
      %v1535 = vunpack.c.l.b16 %v679
      %v1536 = vunpack.c.l.b16 %v680
      %v1537 = vunpack.c.l.b16 %v681
      %v1538 = vunpack.c.l.b16 %v682
      %v1539 = vunpack.c.l.b16 %v683
      %v1540 = vunpack.c.l.b16 %v684
      %v1541 = vunpack.c.l.b16 %v685
      %v1542 = vunpack.c.l.b16 %v686
      %v1543 = vunpack.c.l.b16 %v687
      %v1544 = vunpack.c.l.b16 %v688
      %v1545 = vunpack.c.l.b16 %v689
      %v1546 = vunpack.c.l.b16 %v690
      %v1547 = vunpack.c.l.b16 %v691
      %v1548 = vunpack.c.l.b16 %v692
      %v1549 = vunpack.c.l.b16 %v693
      %v1550 = vunpack.c.l.b16 %v694
      %v1551 = vunpack.c.l.b16 %v695
      %v1552 = vunpack.c.l.b16 %v696
      %v1553 = vpack.c.b16 %v1522, %v1521
      %v1554 = vpack.c.b16 %v1524, %v1523
      %v1555 = vpack.c.b16 %v1526, %v1525
      %v1556 = vpack.c.b16 %v1528, %v1527
      %v1557 = vpack.c.b16 %v1530, %v1529
      %v1558 = vpack.c.b16 %v1532, %v1531
      %v1559 = vpack.c.b16 %v1534, %v1533
      %v1560 = vpack.c.b16 %v1536, %v1535
      %v1561 = vpack.c.b16 %v1538, %v1537
      %v1562 = vpack.c.b16 %v1540, %v1539
      %v1563 = vpack.c.b16 %v1542, %v1541
      %v1564 = vpack.c.b16 %v1544, %v1543
      %v1565 = vpack.c.b16 %v1546, %v1545
      %v1566 = vpack.c.b16 %v1548, %v1547
      %v1567 = vpack.c.b16 %v1550, %v1549
      %v1568 = vpack.c.b16 %v1552, %v1551
      %1585 = vmatprep.subr.bf16.mxu0 0
      %1586 = vmatpush1.bf16.msra.mxu0 %v1553
      %1587 = vmatprep.subr.bf16.mxu0 0
      %1588 = vmatpush1.bf16.msra.mxu0 %v1554
      %1589 = vmatprep.subr.bf16.mxu0 0
      %1590 = vmatpush1.bf16.msra.mxu0 %v1555
      %1591 = vmatprep.subr.bf16.mxu0 0
      %1592 = vmatpush1.bf16.msra.mxu0 %v1556
      %1593 = vmatprep.subr.bf16.mxu0 0
      %1594 = vmatpush1.bf16.msra.mxu0 %v1557
      %1595 = vmatprep.subr.bf16.mxu0 0
      %1596 = vmatpush1.bf16.msra.mxu0 %v1558
      %1597 = vmatprep.subr.bf16.mxu0 0
      %1598 = vmatpush1.bf16.msra.mxu0 %v1559
      %1599 = vmatprep.subr.bf16.mxu0 0
      %1600 = vmatpush1.bf16.msra.mxu0 %v1560
      %1601 = vmatprep.subr.bf16.mxu0 0
      %1602 = vmatpush1.bf16.msra.mxu0 %v1561
      %1603 = vmatprep.subr.bf16.mxu0 0
      %1604 = vmatpush1.bf16.msra.mxu0 %v1562
      %1605 = vmatprep.subr.bf16.mxu0 0
      %1606 = vmatpush1.bf16.msra.mxu0 %v1563
      %1607 = vmatprep.subr.bf16.mxu0 0
      %1608 = vmatpush1.bf16.msra.mxu0 %v1564
      %1609 = vmatprep.subr.bf16.mxu0 0
      %1610 = vmatpush1.bf16.msra.mxu0 %v1565
      %1611 = vmatprep.subr.bf16.mxu0 0
      %1612 = vmatpush1.bf16.msra.mxu0 %v1566
      %1613 = vmatprep.subr.bf16.mxu0 0
      %1614 = vmatpush1.bf16.msra.mxu0 %v1567
      %1615 = vmatprep.subr.bf16.mxu0 0
      %1616 = vmatpush1.bf16.msra.mxu0 %v1568
      %1617 = vmatprep.mubr.bf16.mxu0 %v1488
      %1618 = vmatmul.mubr.bf16.gmra.mrb[0].mxu0 %v1487
      %v1619 = vpop.f32.mrb[0].mxu0
      %v1620 = vadd.f32 0.0, %v1619
      %v1621 = vpop.f32.mrb[0].mxu0
      %v1622 = vpop.f32.mrb[0].mxu0
      %v1623 = vpop.f32.mrb[0].mxu0
      %1624 = vdwg.mxu0
      %v1625 = vadd.f32 %v641, %v1620
      %v1626 = vpack.c.bf16 %v1625, %v1625
      %1627 = vst [vmem:[%s461] sm:$0xf] %v1626
      %p1628 = scmp.lt.s32.totalorder %s20, 1
      %s1629 = scalar_select %p1628, %s20, 1
      %s1630 = smul.addr %s1629, 4
      %s1631 = scalar_lea.vmem %s9, %s1630
      // Predicated region
      $region57: #{generate_feats_forward.8} parent=55 // pred_check
        %p1632 = pneg %p267
      $region58: #{generate_feats_forward.8} parent=55 // pred_check_branch
        %1634 = sbr.rel (%p1632) target = $region60
      $region59: #{generate_feats_forward.8} parent=55 // pred_region
        _
      $region60: #{generate_feats_forward.8} parent=55 // pred_fallthru
        _
    $region56: #{generate_feats_forward.8} parent=5 // pred_fallthru
      _
    %p1635 = scmp.le.s32.totalorder 2, %s15
    // Predicated region
    $region61: #{generate_feats_forward.8} parent=5 // pred_check
      %p1636 = pneg %p1635
    $region62: #{generate_feats_forward.8} parent=5 // pred_check_branch
      %1638 = sbr.rel (%p1636) target = $region64
    $region63: #{generate_feats_forward.8} parent=5 // pred_region
      %s1639 = ssub.s32 %s15, 2
      // Predicated region
      $region65: #{generate_feats_forward.8} parent=63 // pred_check
        %p1640 = pneg %p273
      $region66: #{generate_feats_forward.8} parent=63 // pred_check_branch
        %1642 = sbr.rel (%p1640) target = $region68
      $region67: #{generate_feats_forward.8} parent=63 // pred_region
        %p1643 = scmp.lt.s32.totalorder %s21, 1
        %s1644 = scalar_select %p1643, %s21, 1
        %s1645 = smul.addr %s1644, 4
        %s1646 = scalar_lea.vmem %s9, %s1645
      $region68: #{generate_feats_forward.8} parent=63 // pred_fallthru
        _
    $region64: #{generate_feats_forward.8} parent=5 // pred_fallthru
      _
  $region6: #{generate_feats_forward.8} parent=0 // loop_footer
    %s19 = sadd.s32 1, %s15
  $region7: #{generate_feats_forward.8} parent=0 // loop_footer_branch
    %14 = sbr.rel target = $region3
  $region8: #{generate_feats_forward.8} parent=0 // loop_exit
    _

// kernel: generate_feats_forward.9
$region0: #{generate_feats_forward.9}
  #allocation0 [shape = 'u32[]', space=smem, size = 0x4, offset = 0x4, fixed_abs, tag = 'smem constant byte address 0x4 - core index']
  #allocation1 [shape = 'u32[144,128]{1,0:T(1,128)}', space=vmem, size = 0x12000, scoped, tag = 'internal scratch']
  %s0 = inlined_call_operand.vmem [shape: bf16[2,2,512], index: 0, kind: input, shape index: {}]
  %s1 = inlined_call_operand.vmem [shape: bf16[2,512,256], index: 1, kind: input, shape index: {}]
  %s2 = inlined_call_operand.vmem [shape: f32[2,1,256], index: 2, kind: input, shape index: {}]
  %s3 = inlined_call_operand.vmem [shape: f32[2,9], index: 3, kind: input, shape index: {}]
  %s4 = inlined_call_operand.vmem [shape: bf16[2,9,64,64], index: 4, kind: input, shape index: {}]
  %s5 = inlined_call_operand.vmem [shape: bf16[2,64,512], index: 5, kind: input, shape index: {}]
  %s6 = inlined_call_operand.vmem [shape: bf16[2,192,512], index: 6, kind: input, shape index: {}]
  %s7 = inlined_call_operand.vmem [shape: f32[2,1,512], index: 7, kind: input, shape index: {}]
  %s8 = inlined_call_operand.vmem [shape: bf16[2,512,256], index: 8, kind: input, shape index: {}]
  %s9 = inlined_call_operand.vmem [shape: bf16[2,2,256], index: 9, kind: output, shape index: {}]
  %s10 = sld [smem:[#allocation0]]
  $region69: #{generate_feats_forward.9} parent=0
    _
  %s12 = ssub.s32 1, %s10
  %s13 = scalar_select 0, %s12, %s10
  loop: start=0, step=1, limit=4
  $region2: #{generate_feats_forward.9} parent=0 // loop_pre_header
    _
  $region3: #{generate_feats_forward.9} parent=0 // loop_header
    %s15 = sphi 0, %s19
    %p16 = scmp.ge.s32.totalorder %s15, 4
    %s25 = sphi 0, %s27
    %s28 = sphi 0, %s25
    %s29 = sphi 0, %s28
    %s45 = sphi 0, %s29
    %s51 = sphi 0, %s53
    %s54 = sphi 0, %s51
    %s55 = sphi 0, %s54
    %s71 = sphi 0, %s55
    %s77 = sphi 0, %s79
    %s80 = sphi 0, %s77
    %s81 = sphi 0, %s80
    %s97 = sphi 0, %s81
    %s101 = sphi 0, %s101
    %s103 = sphi 0, %s101
    %s104 = sphi 0, %s103
    %s118 = sphi 0, %s104
    %s124 = sphi 0, %s126
    %s127 = sphi 0, %s124
    %s128 = sphi 0, %s127
    %s144 = sphi 0, %s128
    %s150 = sphi 0, %s152
    %s153 = sphi 0, %s150
    %s154 = sphi 0, %s153
    %s170 = sphi 0, %s154
    %s176 = sphi 0, %s178
    %s179 = sphi 0, %s176
    %s180 = sphi 0, %s179
    %s196 = sphi 0, %s180
    %s202 = sphi 0, %s204
    %s205 = sphi 0, %s202
    %s206 = sphi 0, %s205
    %s222 = sphi 0, %s206
    %s228 = sphi 0, %s230
    %s231 = sphi 0, %s228
    %s232 = sphi 0, %s231
    %s248 = sphi 0, %s232
    %s254 = sphi 0, %s256
    %s257 = sphi 0, %s254
    %s258 = sphi 0, %s257
    %s274 = sphi 0, %s258
  $region4: #{generate_feats_forward.9} parent=0 // loop_header_branch
    %18 = sbr.rel (%p16) target = $region8
  $region5: #{generate_feats_forward.9} parent=0 // loop_body
    %s20 = ssub.s32 %s15, 1
    %s21 = ssub.s32 %s15, 2
    %s22 = sadd.s32 %s15, 1
    %s23 = ssub.s32 %s15, %s22
    %p24 = scmp.eq.s32.totalorder %s23, 0
    %s26 = sadd.s32 %s25, 1
    %s27 = scalar_select %p24, %s25, %s26
    %p30 = pneg %p24
    %p31 = scmp.eq.s32.totalorder %s15, 1
    %p32 = por %p30, %p31
    %p33 = scmp.ne.s32.totalorder %s25, %s28
    %p34 = scmp.eq.s32.totalorder %s15, 0
    %p35 = por %p33, %p34
    %p36 = scmp.ne.s32.totalorder %s25, %s28
    %p37 = scmp.eq.s32.totalorder %s20, 1
    %p38 = por %p36, %p37
    %p39 = scmp.ne.s32.totalorder %s28, %s29
    %p40 = scmp.eq.s32.totalorder %s20, 0
    %p41 = por %p39, %p40
    %p42 = scmp.ne.s32.totalorder %s28, %s29
    %p43 = scmp.eq.s32.totalorder %s21, 1
    %p44 = por %p42, %p43
    %p46 = scmp.ne.s32.totalorder %s29, %s45
    %p47 = scmp.eq.s32.totalorder %s21, 0
    %p48 = por %p46, %p47
    %s49 = ssub.s32 %s15, %s22
    %p50 = scmp.eq.s32.totalorder %s49, 0
    %s52 = sadd.s32 %s51, 1
    %s53 = scalar_select %p50, %s51, %s52
    %p56 = pneg %p50
    %p57 = scmp.eq.s32.totalorder %s15, 1
    %p58 = por %p56, %p57
    %p59 = scmp.ne.s32.totalorder %s51, %s54
    %p60 = scmp.eq.s32.totalorder %s15, 0
    %p61 = por %p59, %p60
    %p62 = scmp.ne.s32.totalorder %s51, %s54
    %p63 = scmp.eq.s32.totalorder %s20, 1
    %p64 = por %p62, %p63
    %p65 = scmp.ne.s32.totalorder %s54, %s55
    %p66 = scmp.eq.s32.totalorder %s20, 0
    %p67 = por %p65, %p66
    %p68 = scmp.ne.s32.totalorder %s54, %s55
    %p69 = scmp.eq.s32.totalorder %s21, 1
    %p70 = por %p68, %p69
    %p72 = scmp.ne.s32.totalorder %s55, %s71
    %p73 = scmp.eq.s32.totalorder %s21, 0
    %p74 = por %p72, %p73
    %s75 = ssub.s32 %s15, %s22
    %p76 = scmp.eq.s32.totalorder %s75, 0
    %s78 = sadd.s32 %s77, 1
    %s79 = scalar_select %p76, %s77, %s78
    %p82 = pneg %p76
    %p83 = scmp.eq.s32.totalorder %s15, 1
    %p84 = por %p82, %p83
    %p85 = scmp.ne.s32.totalorder %s77, %s80
    %p86 = scmp.eq.s32.totalorder %s15, 0
    %p87 = por %p85, %p86
    %p88 = scmp.ne.s32.totalorder %s77, %s80
    %p89 = scmp.eq.s32.totalorder %s20, 1
    %p90 = por %p88, %p89
    %p91 = scmp.ne.s32.totalorder %s80, %s81
    %p92 = scmp.eq.s32.totalorder %s20, 0
    %p93 = por %p91, %p92
    %p94 = scmp.ne.s32.totalorder %s80, %s81
    %p95 = scmp.eq.s32.totalorder %s21, 1
    %p96 = por %p94, %p95
    %p98 = scmp.ne.s32.totalorder %s81, %s97
    %p99 = scmp.eq.s32.totalorder %s21, 0
    %p100 = por %p98, %p99
    %s102 = sadd.s32 %s101, 1
    %p105 = scmp.eq.s32.totalorder %s15, 1
    %p106 = scmp.ne.s32.totalorder %s101, %s103
    %p107 = scmp.eq.s32.totalorder %s15, 0
    %p108 = por %p106, %p107
    %p109 = scmp.ne.s32.totalorder %s101, %s103
    %p110 = scmp.eq.s32.totalorder %s20, 1
    %p111 = por %p109, %p110
    %p112 = scmp.ne.s32.totalorder %s103, %s104
    %p113 = scmp.eq.s32.totalorder %s20, 0
    %p114 = por %p112, %p113
    %p115 = scmp.ne.s32.totalorder %s103, %s104
    %p116 = scmp.eq.s32.totalorder %s21, 1
    %p117 = por %p115, %p116
    %p119 = scmp.ne.s32.totalorder %s104, %s118
    %p120 = scmp.eq.s32.totalorder %s21, 0
    %p121 = por %p119, %p120
    %s122 = ssub.s32 %s15, %s22
    %p123 = scmp.eq.s32.totalorder %s122, 0
    %s125 = sadd.s32 %s124, 1
    %s126 = scalar_select %p123, %s124, %s125
    %p129 = pneg %p123
    %p130 = scmp.eq.s32.totalorder %s15, 1
    %p131 = por %p129, %p130
    %p132 = scmp.ne.s32.totalorder %s124, %s127
    %p133 = scmp.eq.s32.totalorder %s15, 0
    %p134 = por %p132, %p133
    %p135 = scmp.ne.s32.totalorder %s124, %s127
    %p136 = scmp.eq.s32.totalorder %s20, 1
    %p137 = por %p135, %p136
    %p138 = scmp.ne.s32.totalorder %s127, %s128
    %p139 = scmp.eq.s32.totalorder %s20, 0
    %p140 = por %p138, %p139
    %p141 = scmp.ne.s32.totalorder %s127, %s128
    %p142 = scmp.eq.s32.totalorder %s21, 1
    %p143 = por %p141, %p142
    %p145 = scmp.ne.s32.totalorder %s128, %s144
    %p146 = scmp.eq.s32.totalorder %s21, 0
    %p147 = por %p145, %p146
    %s148 = ssub.s32 %s15, %s22
    %p149 = scmp.eq.s32.totalorder %s148, 0
    %s151 = sadd.s32 %s150, 1
    %s152 = scalar_select %p149, %s150, %s151
    %p155 = pneg %p149
    %p156 = scmp.eq.s32.totalorder %s15, 1
    %p157 = por %p155, %p156
    %p158 = scmp.ne.s32.totalorder %s150, %s153
    %p159 = scmp.eq.s32.totalorder %s15, 0
    %p160 = por %p158, %p159
    %p161 = scmp.ne.s32.totalorder %s150, %s153
    %p162 = scmp.eq.s32.totalorder %s20, 1
    %p163 = por %p161, %p162
    %p164 = scmp.ne.s32.totalorder %s153, %s154
    %p165 = scmp.eq.s32.totalorder %s20, 0
    %p166 = por %p164, %p165
    %p167 = scmp.ne.s32.totalorder %s153, %s154
    %p168 = scmp.eq.s32.totalorder %s21, 1
    %p169 = por %p167, %p168
    %p171 = scmp.ne.s32.totalorder %s154, %s170
    %p172 = scmp.eq.s32.totalorder %s21, 0
    %p173 = por %p171, %p172
    %s174 = ssub.s32 %s15, %s22
    %p175 = scmp.eq.s32.totalorder %s174, 0
    %s177 = sadd.s32 %s176, 1
    %s178 = scalar_select %p175, %s176, %s177
    %p181 = pneg %p175
    %p182 = scmp.eq.s32.totalorder %s15, 1
    %p183 = por %p181, %p182
    %p184 = scmp.ne.s32.totalorder %s176, %s179
    %p185 = scmp.eq.s32.totalorder %s15, 0
    %p186 = por %p184, %p185
    %p187 = scmp.ne.s32.totalorder %s176, %s179
    %p188 = scmp.eq.s32.totalorder %s20, 1
    %p189 = por %p187, %p188
    %p190 = scmp.ne.s32.totalorder %s179, %s180
    %p191 = scmp.eq.s32.totalorder %s20, 0
    %p192 = por %p190, %p191
    %p193 = scmp.ne.s32.totalorder %s179, %s180
    %p194 = scmp.eq.s32.totalorder %s21, 1
    %p195 = por %p193, %p194
    %p197 = scmp.ne.s32.totalorder %s180, %s196
    %p198 = scmp.eq.s32.totalorder %s21, 0
    %p199 = por %p197, %p198
    %s200 = ssub.s32 %s15, %s22
    %p201 = scmp.eq.s32.totalorder %s200, 0
    %s203 = sadd.s32 %s202, 1
    %s204 = scalar_select %p201, %s202, %s203
    %p207 = pneg %p201
    %p208 = scmp.eq.s32.totalorder %s15, 1
    %p209 = por %p207, %p208
    %p210 = scmp.ne.s32.totalorder %s202, %s205
    %p211 = scmp.eq.s32.totalorder %s15, 0
    %p212 = por %p210, %p211
    %p213 = scmp.ne.s32.totalorder %s202, %s205
    %p214 = scmp.eq.s32.totalorder %s20, 1
    %p215 = por %p213, %p214
    %p216 = scmp.ne.s32.totalorder %s205, %s206
    %p217 = scmp.eq.s32.totalorder %s20, 0
    %p218 = por %p216, %p217
    %p219 = scmp.ne.s32.totalorder %s205, %s206
    %p220 = scmp.eq.s32.totalorder %s21, 1
    %p221 = por %p219, %p220
    %p223 = scmp.ne.s32.totalorder %s206, %s222
    %p224 = scmp.eq.s32.totalorder %s21, 0
    %p225 = por %p223, %p224
    %s226 = ssub.s32 %s15, %s22
    %p227 = scmp.eq.s32.totalorder %s226, 0
    %s229 = sadd.s32 %s228, 1
    %s230 = scalar_select %p227, %s228, %s229
    %p233 = pneg %p227
    %p234 = scmp.eq.s32.totalorder %s15, 1
    %p235 = por %p233, %p234
    %p236 = scmp.ne.s32.totalorder %s228, %s231
    %p237 = scmp.eq.s32.totalorder %s15, 0
    %p238 = por %p236, %p237
    %p239 = scmp.ne.s32.totalorder %s228, %s231
    %p240 = scmp.eq.s32.totalorder %s20, 1
    %p241 = por %p239, %p240
    %p242 = scmp.ne.s32.totalorder %s231, %s232
    %p243 = scmp.eq.s32.totalorder %s20, 0
    %p244 = por %p242, %p243
    %p245 = scmp.ne.s32.totalorder %s231, %s232
    %p246 = scmp.eq.s32.totalorder %s21, 1
    %p247 = por %p245, %p246
    %p249 = scmp.ne.s32.totalorder %s232, %s248
    %p250 = scmp.eq.s32.totalorder %s21, 0
    %p251 = por %p249, %p250
    %s252 = ssub.s32 %s15, %s22
    %p253 = scmp.eq.s32.totalorder %s252, 0
    %s255 = sadd.s32 %s254, 1
    %s256 = scalar_select %p253, %s254, %s255
    %p259 = pneg %p253
    %p260 = scmp.eq.s32.totalorder %s15, 1
    %p261 = por %p259, %p260
    %p262 = scmp.ne.s32.totalorder %s254, %s257
    %p263 = scmp.eq.s32.totalorder %s15, 0
    %p264 = por %p262, %p263
    %p265 = scmp.ne.s32.totalorder %s254, %s257
    %p266 = scmp.eq.s32.totalorder %s20, 1
    %p267 = por %p265, %p266
    %p268 = scmp.ne.s32.totalorder %s257, %s258
    %p269 = scmp.eq.s32.totalorder %s20, 0
    %p270 = por %p268, %p269
    %p271 = scmp.ne.s32.totalorder %s257, %s258
    %p272 = scmp.eq.s32.totalorder %s21, 1
    %p273 = por %p271, %p272
    %p275 = scmp.ne.s32.totalorder %s258, %s274
    %p276 = scmp.eq.s32.totalorder %s21, 0
    %p277 = por %p275, %p276
    %p278 = scmp.le.s32.totalorder 1, %s15
    %p279 = scmp.lt.s32.totalorder %s15, 3
    %p280 = pnand %p278, %p279
    %p281 = pneg %p280
    // Predicated region
    $region9: #{generate_feats_forward.9} parent=5 // pred_check
      _
    $region10: #{generate_feats_forward.9} parent=5 // pred_check_branch
      %283 = sbr.rel (%p280) target = $region12
    $region11: #{generate_feats_forward.9} parent=5 // pred_region
      %s284 = ssub.s32 %s15, 1
      // Predicated region
      $region13: #{generate_feats_forward.9} parent=11 // pred_check
        %p285 = pneg %p114
      $region14: #{generate_feats_forward.9} parent=11 // pred_check_branch
        %287 = sbr.rel (%p285) target = $region16
      $region15: #{generate_feats_forward.9} parent=11 // pred_region
        _
      $region16: #{generate_feats_forward.9} parent=11 // pred_fallthru
        _
    $region12: #{generate_feats_forward.9} parent=5 // pred_fallthru
      _
    %p288 = scmp.lt.s32.totalorder %s15, 2
    // Predicated region
    $region17: #{generate_feats_forward.9} parent=5 // pred_check
      %p289 = pneg %p288
    $region18: #{generate_feats_forward.9} parent=5 // pred_check_branch
      %291 = sbr.rel (%p289) target = $region20
    $region19: #{generate_feats_forward.9} parent=5 // pred_region
      // Predicated region
      $region21: #{generate_feats_forward.9} parent=19 // pred_check
        %p292 = pneg %p35
      $region22: #{generate_feats_forward.9} parent=19 // pred_check_branch
        %294 = sbr.rel (%p292) target = $region24
      $region23: #{generate_feats_forward.9} parent=19 // pred_region
        %p295 = scmp.lt.s32.totalorder %s15, 1
        %s296 = scalar_select %p295, %s15, 1
        %s297 = smul.addr %s296, 4
        %s298 = scalar_lea.vmem %s0, %s297
      $region24: #{generate_feats_forward.9} parent=19 // pred_fallthru
        _
      // Predicated region
      $region25: #{generate_feats_forward.9} parent=19 // pred_check
        %p299 = pneg %p61
      $region26: #{generate_feats_forward.9} parent=19 // pred_check_branch
        %301 = sbr.rel (%p299) target = $region28
      $region27: #{generate_feats_forward.9} parent=19 // pred_region
        %p302 = scmp.lt.s32.totalorder %s15, 1
        %s303 = scalar_select %p302, %s15, 1
        %s304 = smul.addr %s303, 128
        %s305 = smul.addr %s304, 4
        %s306 = scalar_lea.vmem %s1, %s305
      $region28: #{generate_feats_forward.9} parent=19 // pred_fallthru
        _
      // Predicated region
      $region29: #{generate_feats_forward.9} parent=19 // pred_check
        %p307 = pneg %p87
      $region30: #{generate_feats_forward.9} parent=19 // pred_check_branch
        %309 = sbr.rel (%p307) target = $region32
      $region31: #{generate_feats_forward.9} parent=19 // pred_region
        %p310 = scmp.lt.s32.totalorder %s15, 1
        %s311 = scalar_select %p310, %s15, 1
        %s312 = smul.addr %s311, 2
        %s313 = scalar_lea.vmem %s2, %s312
      $region32: #{generate_feats_forward.9} parent=19 // pred_fallthru
        _
      // Predicated region
      $region33: #{generate_feats_forward.9} parent=19 // pred_check
        %p314 = pneg %p134
      $region34: #{generate_feats_forward.9} parent=19 // pred_check_branch
        %316 = sbr.rel (%p314) target = $region36
      $region35: #{generate_feats_forward.9} parent=19 // pred_region
        %p317 = scmp.lt.s32.totalorder %s15, 1
        %s318 = scalar_select %p317, %s15, 1
        %s319 = smul.addr %s318, 72
        %s320 = smul.addr %s319, 4
        %s321 = scalar_lea.vmem %s4, %s320
      $region36: #{generate_feats_forward.9} parent=19 // pred_fallthru
        _
      // Predicated region
      $region37: #{generate_feats_forward.9} parent=19 // pred_check
        %p322 = pneg %p160
      $region38: #{generate_feats_forward.9} parent=19 // pred_check_branch
        %324 = sbr.rel (%p322) target = $region40
      $region39: #{generate_feats_forward.9} parent=19 // pred_region
        %p325 = scmp.lt.s32.totalorder %s15, 1
        %s326 = scalar_select %p325, %s15, 1
        %s327 = smul.addr %s326, 32
        %s328 = smul.addr %s327, 4
        %s329 = scalar_lea.vmem %s5, %s328
      $region40: #{generate_feats_forward.9} parent=19 // pred_fallthru
        _
      // Predicated region
      $region41: #{generate_feats_forward.9} parent=19 // pred_check
        %p330 = pneg %p186
      $region42: #{generate_feats_forward.9} parent=19 // pred_check_branch
        %332 = sbr.rel (%p330) target = $region44
      $region43: #{generate_feats_forward.9} parent=19 // pred_region
        %p333 = scmp.lt.s32.totalorder %s15, 1
        %s334 = scalar_select %p333, %s15, 1
        %s335 = smul.addr %s334, 96
        %s336 = smul.addr %s335, 4
        %s337 = scalar_lea.vmem %s6, %s336
      $region44: #{generate_feats_forward.9} parent=19 // pred_fallthru
        _
      // Predicated region
      $region45: #{generate_feats_forward.9} parent=19 // pred_check
        %p338 = pneg %p212
      $region46: #{generate_feats_forward.9} parent=19 // pred_check_branch
        %340 = sbr.rel (%p338) target = $region48
      $region47: #{generate_feats_forward.9} parent=19 // pred_region
        %p341 = scmp.lt.s32.totalorder %s15, 1
        %s342 = scalar_select %p341, %s15, 1
        %s343 = smul.addr %s342, 4
        %s344 = scalar_lea.vmem %s7, %s343
      $region48: #{generate_feats_forward.9} parent=19 // pred_fallthru
        _
      // Predicated region
      $region49: #{generate_feats_forward.9} parent=19 // pred_check
        %p345 = pneg %p238
      $region50: #{generate_feats_forward.9} parent=19 // pred_check_branch
        %347 = sbr.rel (%p345) target = $region52
      $region51: #{generate_feats_forward.9} parent=19 // pred_region
        %p348 = scmp.lt.s32.totalorder %s15, 1
        %s349 = scalar_select %p348, %s15, 1
        %s350 = smul.addr %s349, 128
        %s351 = smul.addr %s350, 4
        %s352 = scalar_lea.vmem %s8, %s351
      $region52: #{generate_feats_forward.9} parent=19 // pred_fallthru
        _
    $region20: #{generate_feats_forward.9} parent=5 // pred_fallthru
      _
    %p353 = scmp.le.s32.totalorder 1, %s15
    %p354 = scmp.lt.s32.totalorder %s15, 3
    %p355 = pnand %p353, %p354
    %p356 = pneg %p355
    // Predicated region
    $region53: #{generate_feats_forward.9} parent=5 // pred_check
      _
    $region54: #{generate_feats_forward.9} parent=5 // pred_check_branch
      %358 = sbr.rel (%p355) target = $region56
    $region55: #{generate_feats_forward.9} parent=5 // pred_region
      %s359 = ssub.s32 %s15, 1
      %p360 = scmp.lt.s32.totalorder %s20, 1
      %s361 = scalar_select %p360, %s20, 1
      %s362 = smul.addr %s361, 4
      %s363 = scalar_lea.vmem %s0, %s362
      %p364 = pneg %p41
      %p365 = pneg %p38
      %p366 = scmp.lt.s32.totalorder %s20, 1
      %s367 = scalar_select %p366, %s20, 1
      %s368 = smul.addr %s367, 128
      %s369 = smul.addr %s368, 4
      %s370 = scalar_lea.vmem %s1, %s369
      %p371 = pneg %p67
      %p372 = pneg %p64
      %p373 = scmp.lt.s32.totalorder %s20, 1
      %s374 = scalar_select %p373, %s20, 1
      %s375 = smul.addr %s374, 2
      %s376 = scalar_lea.vmem %s2, %s375
      %p377 = pneg %p93
      %p378 = pneg %p90
      %p379 = pneg %p114
      %p380 = pneg %p111
      %p381 = scmp.lt.s32.totalorder %s20, 1
      %s382 = scalar_select %p381, %s20, 1
      %s383 = smul.addr %s382, 72
      %s384 = smul.addr %s383, 4
      %s385 = scalar_lea.vmem %s4, %s384
      %p386 = pneg %p140
      %p387 = pneg %p137
      %p388 = scmp.lt.s32.totalorder %s20, 1
      %s389 = scalar_select %p388, %s20, 1
      %s390 = smul.addr %s389, 32
      %s391 = smul.addr %s390, 4
      %s392 = scalar_lea.vmem %s5, %s391
      %p393 = pneg %p166
      %p394 = pneg %p163
      %p395 = scmp.lt.s32.totalorder %s20, 1
      %s396 = scalar_select %p395, %s20, 1
      %s397 = smul.addr %s396, 96
      %s398 = smul.addr %s397, 4
      %s399 = scalar_lea.vmem %s6, %s398
      %p400 = pneg %p192
      %p401 = pneg %p189
      %p402 = scmp.lt.s32.totalorder %s20, 1
      %s403 = scalar_select %p402, %s20, 1
      %s404 = smul.addr %s403, 4
      %s405 = scalar_lea.vmem %s7, %s404
      %p406 = pneg %p218
      %p407 = pneg %p215
      %p408 = scmp.lt.s32.totalorder %s20, 1
      %s409 = scalar_select %p408, %s20, 1
      %s410 = smul.addr %s409, 128
      %s411 = smul.addr %s410, 4
      %s412 = scalar_lea.vmem %s8, %s411
      %p413 = pneg %p244
      %p414 = pneg %p241
      %p415 = pneg %p270
      %p416 = pneg %p267
      %p417 = scmp.lt.s32.totalorder %s20, 1
      %s418 = scalar_select %p417, %s20, 1
      %s419 = smul.addr %s418, 2
      %s420 = scalar_lea.vmem %s9, %s419
      %p421 = scmp.lt.s32.totalorder %s20, 1
      %s422 = scalar_select %p421, %s20, 1
      %s423 = smul.addr %s422, 4
      %s424 = scalar_lea.vmem %s0, %s423
      %p425 = scmp.lt.s32.totalorder %s20, 1
      %s426 = scalar_select %p425, %s20, 1
      %s427 = smul.addr %s426, 128
      %s428 = smul.addr %s427, 4
      %s429 = scalar_lea.vmem %s1, %s428
      %p430 = scmp.lt.s32.totalorder %s20, 1
      %s431 = scalar_select %p430, %s20, 1
      %s432 = smul.addr %s431, 2
      %s433 = scalar_lea.vmem %s2, %s432
      %p434 = scmp.lt.s32.totalorder %s20, 1
      %s435 = scalar_select %p434, %s20, 1
      %s436 = smul.addr %s435, 72
      %s437 = smul.addr %s436, 4
      %s438 = scalar_lea.vmem %s4, %s437
      %p439 = scmp.lt.s32.totalorder %s20, 1
      %s440 = scalar_select %p439, %s20, 1
      %s441 = smul.addr %s440, 32
      %s442 = smul.addr %s441, 4
      %s443 = scalar_lea.vmem %s5, %s442
      %p444 = scmp.lt.s32.totalorder %s20, 1
      %s445 = scalar_select %p444, %s20, 1
      %s446 = smul.addr %s445, 96
      %s447 = smul.addr %s446, 4
      %s448 = scalar_lea.vmem %s6, %s447
      %p449 = scmp.lt.s32.totalorder %s20, 1
      %s450 = scalar_select %p449, %s20, 1
      %s451 = smul.addr %s450, 4
      %s452 = scalar_lea.vmem %s7, %s451
      %p453 = scmp.lt.s32.totalorder %s20, 1
      %s454 = scalar_select %p453, %s20, 1
      %s455 = smul.addr %s454, 128
      %s456 = smul.addr %s455, 4
      %s457 = scalar_lea.vmem %s8, %s456
      %p458 = scmp.lt.s32.totalorder %s20, 1
      %s459 = scalar_select %p458, %s20, 1
      %s460 = smul.addr %s459, 2
      %s461 = scalar_lea.vmem %s9, %s460
      %v463 = vld [vmem:[%s424] sm:$0xf]
      %v464 = vld [vmem:[%s429] sm:$0xff]
      %v465 = vld [vmem:[%s429 + $0x8] sm:$0xff]
      %v466 = vld [vmem:[%s429 + $0x10] sm:$0xff]
      %v467 = vld [vmem:[%s429 + $0x18] sm:$0xff]
      %v468 = vld [vmem:[%s429 + $0x20] sm:$0xff]
      %v469 = vld [vmem:[%s429 + $0x28] sm:$0xff]
      %v470 = vld [vmem:[%s429 + $0x30] sm:$0xff]
      %v471 = vld [vmem:[%s429 + $0x38] sm:$0xff]
      %v472 = vld [vmem:[%s429 + $0x40] sm:$0xff]
      %v473 = vld [vmem:[%s429 + $0x48] sm:$0xff]
      %v474 = vld [vmem:[%s429 + $0x50] sm:$0xff]
      %v475 = vld [vmem:[%s429 + $0x58] sm:$0xff]
      %v476 = vld [vmem:[%s429 + $0x60] sm:$0xff]
      %v477 = vld [vmem:[%s429 + $0x68] sm:$0xff]
      %v478 = vld [vmem:[%s429 + $0x70] sm:$0xff]
      %v479 = vld [vmem:[%s429 + $0x78] sm:$0xff]
      %v480 = vld [vmem:[%s429 + $0x80] sm:$0xff]
      %v481 = vld [vmem:[%s429 + $0x88] sm:$0xff]
      %v482 = vld [vmem:[%s429 + $0x90] sm:$0xff]
      %v483 = vld [vmem:[%s429 + $0x98] sm:$0xff]
      %v484 = vld [vmem:[%s429 + $0xa0] sm:$0xff]
      %v485 = vld [vmem:[%s429 + $0xa8] sm:$0xff]
      %v486 = vld [vmem:[%s429 + $0xb0] sm:$0xff]
      %v487 = vld [vmem:[%s429 + $0xb8] sm:$0xff]
      %v488 = vld [vmem:[%s429 + $0xc0] sm:$0xff]
      %v489 = vld [vmem:[%s429 + $0xc8] sm:$0xff]
      %v490 = vld [vmem:[%s429 + $0xd0] sm:$0xff]
      %v491 = vld [vmem:[%s429 + $0xd8] sm:$0xff]
      %v492 = vld [vmem:[%s429 + $0xe0] sm:$0xff]
      %v493 = vld [vmem:[%s429 + $0xe8] sm:$0xff]
      %v494 = vld [vmem:[%s429 + $0xf0] sm:$0xff]
      %v495 = vld [vmem:[%s429 + $0xf8] sm:$0xff]
      %v496 = vld [vmem:[%s429 + $0x100] sm:$0xff]
      %v497 = vld [vmem:[%s429 + $0x108] sm:$0xff]
      %v498 = vld [vmem:[%s429 + $0x110] sm:$0xff]
      %v499 = vld [vmem:[%s429 + $0x118] sm:$0xff]
      %v500 = vld [vmem:[%s429 + $0x120] sm:$0xff]
      %v501 = vld [vmem:[%s429 + $0x128] sm:$0xff]
      %v502 = vld [vmem:[%s429 + $0x130] sm:$0xff]
      %v503 = vld [vmem:[%s429 + $0x138] sm:$0xff]
      %v504 = vld [vmem:[%s429 + $0x140] sm:$0xff]
      %v505 = vld [vmem:[%s429 + $0x148] sm:$0xff]
      %v506 = vld [vmem:[%s429 + $0x150] sm:$0xff]
      %v507 = vld [vmem:[%s429 + $0x158] sm:$0xff]
      %v508 = vld [vmem:[%s429 + $0x160] sm:$0xff]
      %v509 = vld [vmem:[%s429 + $0x168] sm:$0xff]
      %v510 = vld [vmem:[%s429 + $0x170] sm:$0xff]
      %v511 = vld [vmem:[%s429 + $0x178] sm:$0xff]
      %v512 = vld [vmem:[%s429 + $0x180] sm:$0xff]
      %v513 = vld [vmem:[%s429 + $0x188] sm:$0xff]
      %v514 = vld [vmem:[%s429 + $0x190] sm:$0xff]
      %v515 = vld [vmem:[%s429 + $0x198] sm:$0xff]
      %v516 = vld [vmem:[%s429 + $0x1a0] sm:$0xff]
      %v517 = vld [vmem:[%s429 + $0x1a8] sm:$0xff]
      %v518 = vld [vmem:[%s429 + $0x1b0] sm:$0xff]
      %v519 = vld [vmem:[%s429 + $0x1b8] sm:$0xff]
      %v520 = vld [vmem:[%s429 + $0x1c0] sm:$0xff]
      %v521 = vld [vmem:[%s429 + $0x1c8] sm:$0xff]
      %v522 = vld [vmem:[%s429 + $0x1d0] sm:$0xff]
      %v523 = vld [vmem:[%s429 + $0x1d8] sm:$0xff]
      %v524 = vld [vmem:[%s429 + $0x1e0] sm:$0xff]
      %v525 = vld [vmem:[%s429 + $0x1e8] sm:$0xff]
      %v526 = vld [vmem:[%s429 + $0x1f0] sm:$0xff]
      %v527 = vld [vmem:[%s429 + $0x1f8] sm:$0xff]
      %v528 = vld [vmem:[%s433] sm:$0x3]
      %v530 = vlaneseq
      %v531 = vshrl.u32 %v530, 7
      %v532 = vsub.s32 0, %v531
      %v533 = vrot.slane %v528, %v532
      %v534 = vlaneseq
      %v535 = vshrl.u32 %v534, 7
      %v536 = vsub.s32 1, %v535
      %v537 = vrot.slane %v528, %v536
      %v542 = vunpack.c.l.s4 1966171168
      %v543 = vunpack.c.0.s8 %v542
      %v544 = vlaneseq
      %v545 = vshrl.u32 %v544, 7
      %v546 = vsub.s32 %v543, %v545
      %v547 = vrot.slane %v463, %v546
      %v548 = vcombine.high %v547, %v547
      %v550 = vunpack.c.l.s4 1966171168
      %v551 = vunpack.c.0.s8 %v550
      %v552 = vlaneseq
      %v553 = vshrl.u32 %v552, 7
      %v554 = vsub.s32 %v551, %v553
      %v555 = vrot.slane %v547, %v554
      %v557 = vunpack.c.l.s4 1966171168
      %v558 = vunpack.c.0.s8 %v557
      %v559 = vlaneseq
      %v560 = vshrl.u32 %v559, 7
      %v561 = vsub.s32 %v558, %v560
      %v562 = vrot.slane %v548, %v561
      %v563 = vcombine.high %v555, %v555
      %v564 = vcombine.high %v562, %v562
      %v633 = vunpack.c.l.b16 %v464
      %v634 = vunpack.c.h.b16 %v464
      %v635 = vunpack.c.l.b16 %v465
      %v636 = vunpack.c.h.b16 %v465
      %v637 = vunpack.c.l.b16 %v466
      %v638 = vunpack.c.h.b16 %v466
      %v639 = vunpack.c.l.b16 %v467
      %v640 = vunpack.c.h.b16 %v467
      %v641 = vunpack.c.l.b16 %v468
      %v642 = vunpack.c.h.b16 %v468
      %v643 = vunpack.c.l.b16 %v469
      %v644 = vunpack.c.h.b16 %v469
      %v645 = vunpack.c.l.b16 %v470
      %v646 = vunpack.c.h.b16 %v470
      %v647 = vunpack.c.l.b16 %v471
      %v648 = vunpack.c.h.b16 %v471
      %v649 = vunpack.c.l.b16 %v472
      %v650 = vunpack.c.h.b16 %v472
      %v651 = vunpack.c.l.b16 %v473
      %v652 = vunpack.c.h.b16 %v473
      %v653 = vunpack.c.l.b16 %v474
      %v654 = vunpack.c.h.b16 %v474
      %v655 = vunpack.c.l.b16 %v475
      %v656 = vunpack.c.h.b16 %v475
      %v657 = vunpack.c.l.b16 %v476
      %v658 = vunpack.c.h.b16 %v476
      %v659 = vunpack.c.l.b16 %v477
      %v660 = vunpack.c.h.b16 %v477
      %v661 = vunpack.c.l.b16 %v478
      %v662 = vunpack.c.h.b16 %v478
      %v663 = vunpack.c.l.b16 %v479
      %v664 = vunpack.c.h.b16 %v479
      %v665 = vunpack.c.l.b16 %v480
      %v666 = vunpack.c.h.b16 %v480
      %v667 = vunpack.c.l.b16 %v481
      %v668 = vunpack.c.h.b16 %v481
      %v669 = vunpack.c.l.b16 %v482
      %v670 = vunpack.c.h.b16 %v482
      %v671 = vunpack.c.l.b16 %v483
      %v672 = vunpack.c.h.b16 %v483
      %v673 = vunpack.c.l.b16 %v484
      %v674 = vunpack.c.h.b16 %v484
      %v675 = vunpack.c.l.b16 %v485
      %v676 = vunpack.c.h.b16 %v485
      %v677 = vunpack.c.l.b16 %v486
      %v678 = vunpack.c.h.b16 %v486
      %v679 = vunpack.c.l.b16 %v487
      %v680 = vunpack.c.h.b16 %v487
      %v681 = vunpack.c.l.b16 %v488
      %v682 = vunpack.c.h.b16 %v488
      %v683 = vunpack.c.l.b16 %v489
      %v684 = vunpack.c.h.b16 %v489
      %v685 = vunpack.c.l.b16 %v490
      %v686 = vunpack.c.h.b16 %v490
      %v687 = vunpack.c.l.b16 %v491
      %v688 = vunpack.c.h.b16 %v491
      %v689 = vunpack.c.l.b16 %v492
      %v690 = vunpack.c.h.b16 %v492
      %v691 = vunpack.c.l.b16 %v493
      %v692 = vunpack.c.h.b16 %v493
      %v693 = vunpack.c.l.b16 %v494
      %v694 = vunpack.c.h.b16 %v494
      %v695 = vunpack.c.l.b16 %v495
      %v696 = vunpack.c.h.b16 %v495
      %v697 = vunpack.c.l.b16 %v496
      %v698 = vunpack.c.h.b16 %v496
      %v699 = vunpack.c.l.b16 %v497
      %v700 = vunpack.c.h.b16 %v497
      %v701 = vunpack.c.l.b16 %v498
      %v702 = vunpack.c.h.b16 %v498
      %v703 = vunpack.c.l.b16 %v499
      %v704 = vunpack.c.h.b16 %v499
      %v705 = vunpack.c.l.b16 %v500
      %v706 = vunpack.c.h.b16 %v500
      %v707 = vunpack.c.l.b16 %v501
      %v708 = vunpack.c.h.b16 %v501
      %v709 = vunpack.c.l.b16 %v502
      %v710 = vunpack.c.h.b16 %v502
      %v711 = vunpack.c.l.b16 %v503
      %v712 = vunpack.c.h.b16 %v503
      %v713 = vunpack.c.l.b16 %v504
      %v714 = vunpack.c.h.b16 %v504
      %v715 = vunpack.c.l.b16 %v505
      %v716 = vunpack.c.h.b16 %v505
      %v717 = vunpack.c.l.b16 %v506
      %v718 = vunpack.c.h.b16 %v506
      %v719 = vunpack.c.l.b16 %v507
      %v720 = vunpack.c.h.b16 %v507
      %v721 = vunpack.c.l.b16 %v508
      %v722 = vunpack.c.h.b16 %v508
      %v723 = vunpack.c.l.b16 %v509
      %v724 = vunpack.c.h.b16 %v509
      %v725 = vunpack.c.l.b16 %v510
      %v726 = vunpack.c.h.b16 %v510
      %v727 = vunpack.c.l.b16 %v511
      %v728 = vunpack.c.h.b16 %v511
      %v729 = vunpack.c.l.b16 %v512
      %v730 = vunpack.c.h.b16 %v512
      %v731 = vunpack.c.l.b16 %v513
      %v732 = vunpack.c.h.b16 %v513
      %v733 = vunpack.c.l.b16 %v514
      %v734 = vunpack.c.h.b16 %v514
      %v735 = vunpack.c.l.b16 %v515
      %v736 = vunpack.c.h.b16 %v515
      %v737 = vunpack.c.l.b16 %v516
      %v738 = vunpack.c.h.b16 %v516
      %v739 = vunpack.c.l.b16 %v517
      %v740 = vunpack.c.h.b16 %v517
      %v741 = vunpack.c.l.b16 %v518
      %v742 = vunpack.c.h.b16 %v518
      %v743 = vunpack.c.l.b16 %v519
      %v744 = vunpack.c.h.b16 %v519
      %v745 = vunpack.c.l.b16 %v520
      %v746 = vunpack.c.h.b16 %v520
      %v747 = vunpack.c.l.b16 %v521
      %v748 = vunpack.c.h.b16 %v521
      %v749 = vunpack.c.l.b16 %v522
      %v750 = vunpack.c.h.b16 %v522
      %v751 = vunpack.c.l.b16 %v523
      %v752 = vunpack.c.h.b16 %v523
      %v753 = vunpack.c.l.b16 %v524
      %v754 = vunpack.c.h.b16 %v524
      %v755 = vunpack.c.l.b16 %v525
      %v756 = vunpack.c.h.b16 %v525
      %v757 = vunpack.c.l.b16 %v526
      %v758 = vunpack.c.h.b16 %v526
      %v759 = vunpack.c.l.b16 %v527
      %v760 = vunpack.c.h.b16 %v527
      %v761 = vpack.c.b16 %v635, %v633
      %v762 = vpack.c.b16 %v636, %v634
      %v763 = vpack.c.b16 %v639, %v637
      %v764 = vpack.c.b16 %v640, %v638
      %v765 = vpack.c.b16 %v643, %v641
      %v766 = vpack.c.b16 %v644, %v642
      %v767 = vpack.c.b16 %v647, %v645
      %v768 = vpack.c.b16 %v648, %v646
      %v769 = vpack.c.b16 %v651, %v649
      %v770 = vpack.c.b16 %v652, %v650
      %v771 = vpack.c.b16 %v655, %v653
      %v772 = vpack.c.b16 %v656, %v654
      %v773 = vpack.c.b16 %v659, %v657
      %v774 = vpack.c.b16 %v660, %v658
      %v775 = vpack.c.b16 %v663, %v661
      %v776 = vpack.c.b16 %v664, %v662
      %v777 = vpack.c.b16 %v667, %v665
      %v778 = vpack.c.b16 %v668, %v666
      %v779 = vpack.c.b16 %v671, %v669
      %v780 = vpack.c.b16 %v672, %v670
      %v781 = vpack.c.b16 %v675, %v673
      %v782 = vpack.c.b16 %v676, %v674
      %v783 = vpack.c.b16 %v679, %v677
      %v784 = vpack.c.b16 %v680, %v678
      %v785 = vpack.c.b16 %v683, %v681
      %v786 = vpack.c.b16 %v684, %v682
      %v787 = vpack.c.b16 %v687, %v685
      %v788 = vpack.c.b16 %v688, %v686
      %v789 = vpack.c.b16 %v691, %v689
      %v790 = vpack.c.b16 %v692, %v690
      %v791 = vpack.c.b16 %v695, %v693
      %v792 = vpack.c.b16 %v696, %v694
      %v793 = vpack.c.b16 %v699, %v697
      %v794 = vpack.c.b16 %v700, %v698
      %v795 = vpack.c.b16 %v703, %v701
      %v796 = vpack.c.b16 %v704, %v702
      %v797 = vpack.c.b16 %v707, %v705
      %v798 = vpack.c.b16 %v708, %v706
      %v799 = vpack.c.b16 %v711, %v709
      %v800 = vpack.c.b16 %v712, %v710
      %v801 = vpack.c.b16 %v715, %v713
      %v802 = vpack.c.b16 %v716, %v714
      %v803 = vpack.c.b16 %v719, %v717
      %v804 = vpack.c.b16 %v720, %v718
      %v805 = vpack.c.b16 %v723, %v721
      %v806 = vpack.c.b16 %v724, %v722
      %v807 = vpack.c.b16 %v727, %v725
      %v808 = vpack.c.b16 %v728, %v726
      %v809 = vpack.c.b16 %v731, %v729
      %v810 = vpack.c.b16 %v732, %v730
      %v811 = vpack.c.b16 %v735, %v733
      %v812 = vpack.c.b16 %v736, %v734
      %v813 = vpack.c.b16 %v739, %v737
      %v814 = vpack.c.b16 %v740, %v738
      %v815 = vpack.c.b16 %v743, %v741
      %v816 = vpack.c.b16 %v744, %v742
      %v817 = vpack.c.b16 %v747, %v745
      %v818 = vpack.c.b16 %v748, %v746
      %v819 = vpack.c.b16 %v751, %v749
      %v820 = vpack.c.b16 %v752, %v750
      %v821 = vpack.c.b16 %v755, %v753
      %v822 = vpack.c.b16 %v756, %v754
      %v823 = vpack.c.b16 %v759, %v757
      %v824 = vpack.c.b16 %v760, %v758
      %889 = vmatprep.subr.bf16.mxu0 %v762
      %890 = vmatpush1.bf16.msra.mxu0 %v761
      %891 = vmatprep.subr.bf16.mxu0 %v764
      %892 = vmatpush1.bf16.msra.mxu0 %v763
      %893 = vmatprep.subr.bf16.mxu0 %v766
      %894 = vmatpush1.bf16.msra.mxu0 %v765
      %895 = vmatprep.subr.bf16.mxu0 %v768
      %896 = vmatpush1.bf16.msra.mxu0 %v767
      %897 = vmatprep.subr.bf16.mxu0 %v770
      %898 = vmatpush1.bf16.msra.mxu0 %v769
      %899 = vmatprep.subr.bf16.mxu0 %v772
      %900 = vmatpush1.bf16.msra.mxu0 %v771
      %901 = vmatprep.subr.bf16.mxu0 %v774
      %902 = vmatpush1.bf16.msra.mxu0 %v773
      %903 = vmatprep.subr.bf16.mxu0 %v776
      %904 = vmatpush1.bf16.msra.mxu0 %v775
      %905 = vmatprep.subr.bf16.mxu0 %v778
      %906 = vmatpush1.bf16.msra.mxu0 %v777
      %907 = vmatprep.subr.bf16.mxu0 %v780
      %908 = vmatpush1.bf16.msra.mxu0 %v779
      %909 = vmatprep.subr.bf16.mxu0 %v782
      %910 = vmatpush1.bf16.msra.mxu0 %v781
      %911 = vmatprep.subr.bf16.mxu0 %v784
      %912 = vmatpush1.bf16.msra.mxu0 %v783
      %913 = vmatprep.subr.bf16.mxu0 %v786
      %914 = vmatpush1.bf16.msra.mxu0 %v785
      %915 = vmatprep.subr.bf16.mxu0 %v788
      %916 = vmatpush1.bf16.msra.mxu0 %v787
      %917 = vmatprep.subr.bf16.mxu0 %v790
      %918 = vmatpush1.bf16.msra.mxu0 %v789
      %919 = vmatprep.subr.bf16.mxu0 %v792
      %920 = vmatpush1.bf16.msra.mxu0 %v791
      %921 = vmatprep.mubr.bf16.mxu0 %v562
      %922 = vmatmul.mubr.bf16.gmra.mrb[0].mxu0 %v555
      %v923 = vpop.f32.mrb[0].mxu0
      %v924 = vadd.f32 %v533, %v923
      %v925 = vpop.f32.mrb[0].mxu0
      %v926 = vadd.f32 %v537, %v925
      %v927 = vpop.f32.mrb[0].mxu0
      %v928 = vpop.f32.mrb[0].mxu0
      %929 = vdwg.mxu0
      %930 = vmatprep.subr.bf16.mxu0 %v794
      %931 = vmatpush1.bf16.msra.mxu0 %v793
      %932 = vmatprep.subr.bf16.mxu0 %v796
      %933 = vmatpush1.bf16.msra.mxu0 %v795
      %934 = vmatprep.subr.bf16.mxu0 %v798
      %935 = vmatpush1.bf16.msra.mxu0 %v797
      %936 = vmatprep.subr.bf16.mxu0 %v800
      %937 = vmatpush1.bf16.msra.mxu0 %v799
      %938 = vmatprep.subr.bf16.mxu0 %v802
      %939 = vmatpush1.bf16.msra.mxu0 %v801
      %940 = vmatprep.subr.bf16.mxu0 %v804
      %941 = vmatpush1.bf16.msra.mxu0 %v803
      %942 = vmatprep.subr.bf16.mxu0 %v806
      %943 = vmatpush1.bf16.msra.mxu0 %v805
      %944 = vmatprep.subr.bf16.mxu0 %v808
      %945 = vmatpush1.bf16.msra.mxu0 %v807
      %946 = vmatprep.subr.bf16.mxu0 %v810
      %947 = vmatpush1.bf16.msra.mxu0 %v809
      %948 = vmatprep.subr.bf16.mxu0 %v812
      %949 = vmatpush1.bf16.msra.mxu0 %v811
      %950 = vmatprep.subr.bf16.mxu0 %v814
      %951 = vmatpush1.bf16.msra.mxu0 %v813
      %952 = vmatprep.subr.bf16.mxu0 %v816
      %953 = vmatpush1.bf16.msra.mxu0 %v815
      %954 = vmatprep.subr.bf16.mxu0 %v818
      %955 = vmatpush1.bf16.msra.mxu0 %v817
      %956 = vmatprep.subr.bf16.mxu0 %v820
      %957 = vmatpush1.bf16.msra.mxu0 %v819
      %958 = vmatprep.subr.bf16.mxu0 %v822
      %959 = vmatpush1.bf16.msra.mxu0 %v821
      %960 = vmatprep.subr.bf16.mxu0 %v824
      %961 = vmatpush1.bf16.msra.mxu0 %v823
      %962 = vmatprep.mubr.bf16.mxu0 %v564
      %963 = vmatmul.mubr.bf16.gmra.mrb[0].mxu0 %v563
      %v964 = vpop.f32.mrb[0].mxu0
      %v965 = vadd.f32 %v924, %v964
      %v966 = vpop.f32.mrb[0].mxu0
      %v967 = vadd.f32 %v926, %v966
      %v968 = vpop.f32.mrb[0].mxu0
      %v969 = vpop.f32.mrb[0].mxu0
      %970 = vdwg.mxu0
      %v971 = vpack.c.bf16 %v965, %v965
      %v972 = vpack.c.bf16 %v967, %v967
      %v973 = vld [vmem:[%s443] sm:$0xff]
      %v974 = vld [vmem:[%s443 + $0x8] sm:$0xff]
      %v975 = vld [vmem:[%s443 + $0x10] sm:$0xff]
      %v976 = vld [vmem:[%s443 + $0x18] sm:$0xff]
      %v977 = vld [vmem:[%s443 + $0x20] sm:$0xff]
      %v978 = vld [vmem:[%s443 + $0x28] sm:$0xff]
      %v979 = vld [vmem:[%s443 + $0x30] sm:$0xff]
      %v980 = vld [vmem:[%s443 + $0x38] sm:$0xff]
      %v981 = vld [vmem:[%s443 + $0x40] sm:$0xff]
      %v982 = vld [vmem:[%s443 + $0x48] sm:$0xff]
      %v983 = vld [vmem:[%s443 + $0x50] sm:$0xff]
      %v984 = vld [vmem:[%s443 + $0x58] sm:$0xff]
      %v985 = vld [vmem:[%s443 + $0x60] sm:$0xff]
      %v986 = vld [vmem:[%s443 + $0x68] sm:$0xff]
      %v987 = vld [vmem:[%s443 + $0x70] sm:$0xff]
      %v988 = vld [vmem:[%s443 + $0x78] sm:$0xff]
      %v989 = vld [vmem:[%s448] sm:$0xff]
      %v990 = vld [vmem:[%s448 + $0x8] sm:$0xff]
      %v991 = vld [vmem:[%s448 + $0x10] sm:$0xff]
      %v992 = vld [vmem:[%s448 + $0x18] sm:$0xff]
      %v993 = vld [vmem:[%s448 + $0x20] sm:$0xff]
      %v994 = vld [vmem:[%s448 + $0x28] sm:$0xff]
      %v995 = vld [vmem:[%s448 + $0x30] sm:$0xff]
      %v996 = vld [vmem:[%s448 + $0x38] sm:$0xff]
      %v997 = vld [vmem:[%s448 + $0x40] sm:$0xff]
      %v998 = vld [vmem:[%s448 + $0x48] sm:$0xff]
      %v999 = vld [vmem:[%s448 + $0x50] sm:$0xff]
      %v1000 = vld [vmem:[%s448 + $0x58] sm:$0xff]
      %v1001 = vld [vmem:[%s448 + $0x60] sm:$0xff]
      %v1002 = vld [vmem:[%s448 + $0x68] sm:$0xff]
      %v1003 = vld [vmem:[%s448 + $0x70] sm:$0xff]
      %v1004 = vld [vmem:[%s448 + $0x78] sm:$0xff]
      %v1005 = vld [vmem:[%s448 + $0x80] sm:$0xff]
      %v1006 = vld [vmem:[%s448 + $0x88] sm:$0xff]
      %v1007 = vld [vmem:[%s448 + $0x90] sm:$0xff]
      %v1008 = vld [vmem:[%s448 + $0x98] sm:$0xff]
      %v1009 = vld [vmem:[%s448 + $0xa0] sm:$0xff]
      %v1010 = vld [vmem:[%s448 + $0xa8] sm:$0xff]
      %v1011 = vld [vmem:[%s448 + $0xb0] sm:$0xff]
      %v1012 = vld [vmem:[%s448 + $0xb8] sm:$0xff]
      %v1013 = vld [vmem:[%s448 + $0xc0] sm:$0xff]
      %v1014 = vld [vmem:[%s448 + $0xc8] sm:$0xff]
      %v1015 = vld [vmem:[%s448 + $0xd0] sm:$0xff]
      %v1016 = vld [vmem:[%s448 + $0xd8] sm:$0xff]
      %v1017 = vld [vmem:[%s448 + $0xe0] sm:$0xff]
      %v1018 = vld [vmem:[%s448 + $0xe8] sm:$0xff]
      %v1019 = vld [vmem:[%s448 + $0xf0] sm:$0xff]
      %v1020 = vld [vmem:[%s448 + $0xf8] sm:$0xff]
      %v1021 = vld [vmem:[%s448 + $0x100] sm:$0xff]
      %v1022 = vld [vmem:[%s448 + $0x108] sm:$0xff]
      %v1023 = vld [vmem:[%s448 + $0x110] sm:$0xff]
      %v1024 = vld [vmem:[%s448 + $0x118] sm:$0xff]
      %v1025 = vld [vmem:[%s448 + $0x120] sm:$0xff]
      %v1026 = vld [vmem:[%s448 + $0x128] sm:$0xff]
      %v1027 = vld [vmem:[%s448 + $0x130] sm:$0xff]
      %v1028 = vld [vmem:[%s448 + $0x138] sm:$0xff]
      %v1029 = vld [vmem:[%s448 + $0x140] sm:$0xff]
      %v1030 = vld [vmem:[%s448 + $0x148] sm:$0xff]
      %v1031 = vld [vmem:[%s448 + $0x150] sm:$0xff]
      %v1032 = vld [vmem:[%s448 + $0x158] sm:$0xff]
      %v1033 = vld [vmem:[%s448 + $0x160] sm:$0xff]
      %v1034 = vld [vmem:[%s448 + $0x168] sm:$0xff]
      %v1035 = vld [vmem:[%s448 + $0x170] sm:$0xff]
      %v1036 = vld [vmem:[%s448 + $0x178] sm:$0xff]
      %v1037 = vld [vmem:[%s452] sm:$0xf]
      %v1038 = vld [vmem:[%s457] sm:$0xff]
      %v1039 = vld [vmem:[%s457 + $0x8] sm:$0xff]
      %v1040 = vld [vmem:[%s457 + $0x10] sm:$0xff]
      %v1041 = vld [vmem:[%s457 + $0x18] sm:$0xff]
      %v1042 = vld [vmem:[%s457 + $0x20] sm:$0xff]
      %v1043 = vld [vmem:[%s457 + $0x28] sm:$0xff]
      %v1044 = vld [vmem:[%s457 + $0x30] sm:$0xff]
      %v1045 = vld [vmem:[%s457 + $0x38] sm:$0xff]
      %v1046 = vld [vmem:[%s457 + $0x40] sm:$0xff]
      %v1047 = vld [vmem:[%s457 + $0x48] sm:$0xff]
      %v1048 = vld [vmem:[%s457 + $0x50] sm:$0xff]
      %v1049 = vld [vmem:[%s457 + $0x58] sm:$0xff]
      %v1050 = vld [vmem:[%s457 + $0x60] sm:$0xff]
      %v1051 = vld [vmem:[%s457 + $0x68] sm:$0xff]
      %v1052 = vld [vmem:[%s457 + $0x70] sm:$0xff]
      %v1053 = vld [vmem:[%s457 + $0x78] sm:$0xff]
      %v1054 = vld [vmem:[%s457 + $0x80] sm:$0xff]
      %v1055 = vld [vmem:[%s457 + $0x88] sm:$0xff]
      %v1056 = vld [vmem:[%s457 + $0x90] sm:$0xff]
      %v1057 = vld [vmem:[%s457 + $0x98] sm:$0xff]
      %v1058 = vld [vmem:[%s457 + $0xa0] sm:$0xff]
      %v1059 = vld [vmem:[%s457 + $0xa8] sm:$0xff]
      %v1060 = vld [vmem:[%s457 + $0xb0] sm:$0xff]
      %v1061 = vld [vmem:[%s457 + $0xb8] sm:$0xff]
      %v1062 = vld [vmem:[%s457 + $0xc0] sm:$0xff]
      %v1063 = vld [vmem:[%s457 + $0xc8] sm:$0xff]
      %v1064 = vld [vmem:[%s457 + $0xd0] sm:$0xff]
      %v1065 = vld [vmem:[%s457 + $0xd8] sm:$0xff]
      %v1066 = vld [vmem:[%s457 + $0xe0] sm:$0xff]
      %v1067 = vld [vmem:[%s457 + $0xe8] sm:$0xff]
      %v1068 = vld [vmem:[%s457 + $0xf0] sm:$0xff]
      %v1069 = vld [vmem:[%s457 + $0xf8] sm:$0xff]
      %v1070 = vld [vmem:[%s457 + $0x100] sm:$0xff]
      %v1071 = vld [vmem:[%s457 + $0x108] sm:$0xff]
      %v1072 = vld [vmem:[%s457 + $0x110] sm:$0xff]
      %v1073 = vld [vmem:[%s457 + $0x118] sm:$0xff]
      %v1074 = vld [vmem:[%s457 + $0x120] sm:$0xff]
      %v1075 = vld [vmem:[%s457 + $0x128] sm:$0xff]
      %v1076 = vld [vmem:[%s457 + $0x130] sm:$0xff]
      %v1077 = vld [vmem:[%s457 + $0x138] sm:$0xff]
      %v1078 = vld [vmem:[%s457 + $0x140] sm:$0xff]
      %v1079 = vld [vmem:[%s457 + $0x148] sm:$0xff]
      %v1080 = vld [vmem:[%s457 + $0x150] sm:$0xff]
      %v1081 = vld [vmem:[%s457 + $0x158] sm:$0xff]
      %v1082 = vld [vmem:[%s457 + $0x160] sm:$0xff]
      %v1083 = vld [vmem:[%s457 + $0x168] sm:$0xff]
      %v1084 = vld [vmem:[%s457 + $0x170] sm:$0xff]
      %v1085 = vld [vmem:[%s457 + $0x178] sm:$0xff]
      %v1086 = vld [vmem:[%s457 + $0x180] sm:$0xff]
      %v1087 = vld [vmem:[%s457 + $0x188] sm:$0xff]
      %v1088 = vld [vmem:[%s457 + $0x190] sm:$0xff]
      %v1089 = vld [vmem:[%s457 + $0x198] sm:$0xff]
      %v1090 = vld [vmem:[%s457 + $0x1a0] sm:$0xff]
      %v1091 = vld [vmem:[%s457 + $0x1a8] sm:$0xff]
      %v1092 = vld [vmem:[%s457 + $0x1b0] sm:$0xff]
      %v1093 = vld [vmem:[%s457 + $0x1b8] sm:$0xff]
      %v1094 = vld [vmem:[%s457 + $0x1c0] sm:$0xff]
      %v1095 = vld [vmem:[%s457 + $0x1c8] sm:$0xff]
      %v1096 = vld [vmem:[%s457 + $0x1d0] sm:$0xff]
      %v1097 = vld [vmem:[%s457 + $0x1d8] sm:$0xff]
      %v1098 = vld [vmem:[%s457 + $0x1e0] sm:$0xff]
      %v1099 = vld [vmem:[%s457 + $0x1e8] sm:$0xff]
      %v1100 = vld [vmem:[%s457 + $0x1f0] sm:$0xff]
      %v1101 = vld [vmem:[%s457 + $0x1f8] sm:$0xff]
      %s1102 = scalar_lea.vmem %s438, 128
      %v1103 = vld [vmem:[%s1102] sm:$0xf]
      %v1104 = vld [vmem:[%s1102 + $0x4] sm:$0xf]
      %v1105 = vld [vmem:[%s1102 + $0x8] sm:$0xf]
      %v1106 = vld [vmem:[%s1102 + $0xc] sm:$0xf]
      %v1107 = vld [vmem:[%s1102 + $0x10] sm:$0xf]
      %v1108 = vld [vmem:[%s1102 + $0x14] sm:$0xf]
      %v1109 = vld [vmem:[%s1102 + $0x18] sm:$0xf]
      %v1110 = vld [vmem:[%s1102 + $0x1c] sm:$0xf]
      %v1119 = vunpack.c.l.b16 %v1103
      %v1120 = vunpack.c.l.b16 %v1104
      %v1121 = vunpack.c.l.b16 %v1105
      %v1122 = vunpack.c.l.b16 %v1106
      %v1123 = vunpack.c.l.b16 %v1107
      %v1124 = vunpack.c.l.b16 %v1108
      %v1125 = vunpack.c.l.b16 %v1109
      %v1126 = vunpack.c.l.b16 %v1110
      %v1127 = vpack.c.b16 %v1120, %v1119
      %v1128 = vpack.c.b16 %v1122, %v1121
      %v1129 = vpack.c.b16 %v1124, %v1123
      %v1130 = vpack.c.b16 %v1126, %v1125
      %vm1135 = vcmask 523264
      %v1137 = vsel %vm1135, %v971, 0
      %1139 = vmatprep.subr.bf16.mxu0 0
      %1140 = vmatpush1.bf16.msra.mxu0 %v1127
      %1141 = vmatprep.subr.bf16.mxu0 0
      %1142 = vmatpush1.bf16.msra.mxu0 %v1128
      %1143 = vmatprep.subr.bf16.mxu0 0
      %1144 = vmatpush1.bf16.msra.mxu0 %v1129
      %1145 = vmatprep.subr.bf16.mxu0 0
      %1146 = vmatpush1.bf16.msra.mxu0 %v1130
      %1147 = vmatprep.subr.bf16.mxu0 0
      %1148 = vmatpush1.bf16.msra.mxu0 0
      %1149 = vmatprep.subr.bf16.mxu0 0
      %1150 = vmatpush1.bf16.msra.mxu0 0
      %1151 = vmatprep.subr.bf16.mxu0 0
      %1152 = vmatpush1.bf16.msra.mxu0 0
      %1153 = vmatprep.subr.bf16.mxu0 0
      %1154 = vmatpush1.bf16.msra.mxu0 0
      %1155 = vmatprep.subr.bf16.mxu0 0
      %1156 = vmatpush1.bf16.msra.mxu0 0
      %1157 = vmatprep.subr.bf16.mxu0 0
      %1158 = vmatpush1.bf16.msra.mxu0 0
      %1159 = vmatprep.subr.bf16.mxu0 0
      %1160 = vmatpush1.bf16.msra.mxu0 0
      %1161 = vmatprep.subr.bf16.mxu0 0
      %1162 = vmatpush1.bf16.msra.mxu0 0
      %1163 = vmatprep.subr.bf16.mxu0 0
      %1164 = vmatpush1.bf16.msra.mxu0 0
      %1165 = vmatprep.subr.bf16.mxu0 0
      %1166 = vmatpush1.bf16.msra.mxu0 0
      %1167 = vmatprep.subr.bf16.mxu0 0
      %1168 = vmatpush1.bf16.msra.mxu0 0
      %1169 = vmatprep.subr.bf16.mxu0 0
      %1170 = vmatpush1.bf16.msra.mxu0 0
      %1171 = vmatprep.mubr.bf16.mxu0 0
      %1172 = vmatmul.mubr.bf16.gmra.mrb[0].mxu0 %v1137
      %v1173 = vpop.f32.mrb[0].mxu0
      %v1174 = vadd.f32 0.0, %v1173
      %v1175 = vpop.f32.mrb[0].mxu0
      %v1176 = vpop.f32.mrb[0].mxu0
      %v1177 = vpop.f32.mrb[0].mxu0
      %1178 = vdwg.mxu0
      %v1179 = vpack.c.bf16 %v1174, %v1174
      %1182 = vrot.lane.b32.xlu0 %v971, 64
      %v1183 = vpop.permute.xlu0 %1182
      %1184 = vrot.lane.b32.xlu0 %v972, 64
      %v1185 = vpop.permute.xlu0 %1184
      %vm1186 = vcmask 523264
      %v1187 = vsel %vm1186, %v1183, %v1185
      %v1237 = vunpack.c.l.b16 %v989
      %v1238 = vunpack.c.h.b16 %v989
      %v1239 = vunpack.c.l.b16 %v990
      %v1240 = vunpack.c.h.b16 %v990
      %v1241 = vunpack.c.l.b16 %v991
      %v1242 = vunpack.c.h.b16 %v991
      %v1243 = vunpack.c.l.b16 %v992
      %v1244 = vunpack.c.h.b16 %v992
      %v1245 = vunpack.c.l.b16 %v993
      %v1246 = vunpack.c.h.b16 %v993
      %v1247 = vunpack.c.l.b16 %v994
      %v1248 = vunpack.c.h.b16 %v994
      %v1249 = vunpack.c.l.b16 %v995
      %v1250 = vunpack.c.h.b16 %v995
      %v1251 = vunpack.c.l.b16 %v996
      %v1252 = vunpack.c.h.b16 %v996
      %v1253 = vunpack.c.l.b16 %v997
      %v1254 = vunpack.c.h.b16 %v997
      %v1255 = vunpack.c.l.b16 %v998
      %v1256 = vunpack.c.h.b16 %v998
      %v1257 = vunpack.c.l.b16 %v999
      %v1258 = vunpack.c.h.b16 %v999
      %v1259 = vunpack.c.l.b16 %v1000
      %v1260 = vunpack.c.h.b16 %v1000
      %v1261 = vunpack.c.l.b16 %v1001
      %v1262 = vunpack.c.h.b16 %v1001
      %v1263 = vunpack.c.l.b16 %v1002
      %v1264 = vunpack.c.h.b16 %v1002
      %v1265 = vunpack.c.l.b16 %v1003
      %v1266 = vunpack.c.h.b16 %v1003
      %v1267 = vunpack.c.l.b16 %v1004
      %v1268 = vunpack.c.h.b16 %v1004
      %v1269 = vunpack.c.l.b16 %v1005
      %v1270 = vunpack.c.h.b16 %v1005
      %v1271 = vunpack.c.l.b16 %v1006
      %v1272 = vunpack.c.h.b16 %v1006
      %v1273 = vunpack.c.l.b16 %v1007
      %v1274 = vunpack.c.h.b16 %v1007
      %v1275 = vunpack.c.l.b16 %v1008
      %v1276 = vunpack.c.h.b16 %v1008
      %v1277 = vunpack.c.l.b16 %v1009
      %v1278 = vunpack.c.h.b16 %v1009
      %v1279 = vunpack.c.l.b16 %v1010
      %v1280 = vunpack.c.h.b16 %v1010
      %v1281 = vunpack.c.l.b16 %v1011
      %v1282 = vunpack.c.h.b16 %v1011
      %v1283 = vunpack.c.l.b16 %v1012
      %v1284 = vunpack.c.h.b16 %v1012
      %v1285 = vunpack.c.l.b16 %v1013
      %v1286 = vunpack.c.h.b16 %v1013
      %v1287 = vunpack.c.l.b16 %v1014
      %v1288 = vunpack.c.h.b16 %v1014
      %v1289 = vunpack.c.l.b16 %v1015
      %v1290 = vunpack.c.h.b16 %v1015
      %v1291 = vunpack.c.l.b16 %v1016
      %v1292 = vunpack.c.h.b16 %v1016
      %v1293 = vunpack.c.l.b16 %v1017
      %v1294 = vunpack.c.h.b16 %v1017
      %v1295 = vunpack.c.l.b16 %v1018
      %v1296 = vunpack.c.h.b16 %v1018
      %v1297 = vunpack.c.l.b16 %v1019
      %v1298 = vunpack.c.h.b16 %v1019
      %v1299 = vunpack.c.l.b16 %v1020
      %v1300 = vunpack.c.h.b16 %v1020
      %v1301 = vunpack.c.l.b16 %v1021
      %v1302 = vunpack.c.h.b16 %v1021
      %v1303 = vunpack.c.l.b16 %v1022
      %v1304 = vunpack.c.h.b16 %v1022
      %v1305 = vunpack.c.l.b16 %v1023
      %v1306 = vunpack.c.h.b16 %v1023
      %v1307 = vunpack.c.l.b16 %v1024
      %v1308 = vunpack.c.h.b16 %v1024
      %v1309 = vunpack.c.l.b16 %v1025
      %v1310 = vunpack.c.h.b16 %v1025
      %v1311 = vunpack.c.l.b16 %v1026
      %v1312 = vunpack.c.h.b16 %v1026
      %v1313 = vunpack.c.l.b16 %v1027
      %v1314 = vunpack.c.h.b16 %v1027
      %v1315 = vunpack.c.l.b16 %v1028
      %v1316 = vunpack.c.h.b16 %v1028
      %v1317 = vunpack.c.l.b16 %v1029
      %v1318 = vunpack.c.h.b16 %v1029
      %v1319 = vunpack.c.l.b16 %v1030
      %v1320 = vunpack.c.h.b16 %v1030
      %v1321 = vunpack.c.l.b16 %v1031
      %v1322 = vunpack.c.h.b16 %v1031
      %v1323 = vunpack.c.l.b16 %v1032
      %v1324 = vunpack.c.h.b16 %v1032
      %v1325 = vunpack.c.l.b16 %v1033
      %v1326 = vunpack.c.h.b16 %v1033
      %v1327 = vunpack.c.l.b16 %v1034
      %v1328 = vunpack.c.h.b16 %v1034
      %v1329 = vunpack.c.l.b16 %v1035
      %v1330 = vunpack.c.h.b16 %v1035
      %v1331 = vunpack.c.l.b16 %v1036
      %v1332 = vunpack.c.h.b16 %v1036
      %v1333 = vpack.c.b16 %v1241, %v1237
      %v1334 = vpack.c.b16 %v1242, %v1238
      %v1335 = vpack.c.b16 %v1243, %v1239
      %v1336 = vpack.c.b16 %v1244, %v1240
      %v1337 = vpack.c.b16 %v1249, %v1245
      %v1338 = vpack.c.b16 %v1250, %v1246
      %v1339 = vpack.c.b16 %v1251, %v1247
      %v1340 = vpack.c.b16 %v1252, %v1248
      %v1341 = vpack.c.b16 %v1257, %v1253
      %v1342 = vpack.c.b16 %v1258, %v1254
      %v1343 = vpack.c.b16 %v1259, %v1255
      %v1344 = vpack.c.b16 %v1260, %v1256
      %v1345 = vpack.c.b16 %v1265, %v1261
      %v1346 = vpack.c.b16 %v1266, %v1262
      %v1347 = vpack.c.b16 %v1267, %v1263
      %v1348 = vpack.c.b16 %v1268, %v1264
      %v1349 = vpack.c.b16 %v1273, %v1269
      %v1350 = vpack.c.b16 %v1274, %v1270
      %v1351 = vpack.c.b16 %v1275, %v1271
      %v1352 = vpack.c.b16 %v1276, %v1272
      %v1353 = vpack.c.b16 %v1281, %v1277
      %v1354 = vpack.c.b16 %v1282, %v1278
      %v1355 = vpack.c.b16 %v1283, %v1279
      %v1356 = vpack.c.b16 %v1284, %v1280
      %v1357 = vpack.c.b16 %v1289, %v1285
      %v1358 = vpack.c.b16 %v1290, %v1286
      %v1359 = vpack.c.b16 %v1291, %v1287
      %v1360 = vpack.c.b16 %v1292, %v1288
      %v1361 = vpack.c.b16 %v1297, %v1293
      %v1362 = vpack.c.b16 %v1298, %v1294
      %v1363 = vpack.c.b16 %v1299, %v1295
      %v1364 = vpack.c.b16 %v1300, %v1296
      %v1365 = vpack.c.b16 %v1305, %v1301
      %v1366 = vpack.c.b16 %v1306, %v1302
      %v1367 = vpack.c.b16 %v1307, %v1303
      %v1368 = vpack.c.b16 %v1308, %v1304
      %v1369 = vpack.c.b16 %v1313, %v1309
      %v1370 = vpack.c.b16 %v1314, %v1310
      %v1371 = vpack.c.b16 %v1315, %v1311
      %v1372 = vpack.c.b16 %v1316, %v1312
      %v1373 = vpack.c.b16 %v1321, %v1317
      %v1374 = vpack.c.b16 %v1322, %v1318
      %v1375 = vpack.c.b16 %v1323, %v1319
      %v1376 = vpack.c.b16 %v1324, %v1320
      %v1377 = vpack.c.b16 %v1329, %v1325
      %v1378 = vpack.c.b16 %v1330, %v1326
      %v1379 = vpack.c.b16 %v1331, %v1327
      %v1380 = vpack.c.b16 %v1332, %v1328
      %v1430 = vsel %vm1135, %v1185, 0
      %1432 = vmatprep.subr.bf16.mxu0 %v1334
      %1433 = vmatpush1.bf16.msra.mxu0 %v1333
      %1434 = vmatprep.subr.bf16.mxu0 %v1338
      %1435 = vmatpush1.bf16.msra.mxu0 %v1337
      %1436 = vmatprep.subr.bf16.mxu0 %v1342
      %1437 = vmatpush1.bf16.msra.mxu0 %v1341
      %1438 = vmatprep.subr.bf16.mxu0 %v1346
      %1439 = vmatpush1.bf16.msra.mxu0 %v1345
      %1440 = vmatprep.subr.bf16.mxu0 %v1350
      %1441 = vmatpush1.bf16.msra.mxu0 %v1349
      %1442 = vmatprep.subr.bf16.mxu0 %v1354
      %1443 = vmatpush1.bf16.msra.mxu0 %v1353
      %1444 = vmatprep.subr.bf16.mxu0 %v1358
      %1445 = vmatpush1.bf16.msra.mxu0 %v1357
      %1446 = vmatprep.subr.bf16.mxu0 %v1362
      %1447 = vmatpush1.bf16.msra.mxu0 %v1361
      %1448 = vmatprep.subr.bf16.mxu0 %v1366
      %1449 = vmatpush1.bf16.msra.mxu0 %v1365
      %1450 = vmatprep.subr.bf16.mxu0 %v1370
      %1451 = vmatpush1.bf16.msra.mxu0 %v1369
      %1452 = vmatprep.subr.bf16.mxu0 %v1374
      %1453 = vmatpush1.bf16.msra.mxu0 %v1373
      %1454 = vmatprep.subr.bf16.mxu0 %v1378
      %1455 = vmatpush1.bf16.msra.mxu0 %v1377
      %1456 = vmatprep.subr.bf16.mxu0 0
      %1457 = vmatpush1.bf16.msra.mxu0 0
      %1458 = vmatprep.subr.bf16.mxu0 0
      %1459 = vmatpush1.bf16.msra.mxu0 0
      %1460 = vmatprep.subr.bf16.mxu0 0
      %1461 = vmatpush1.bf16.msra.mxu0 0
      %1462 = vmatprep.subr.bf16.mxu0 0
      %1463 = vmatpush1.bf16.msra.mxu0 0
      %1464 = vmatprep.mubr.bf16.mxu0 %v1430
      %1465 = vmatmul.mubr.bf16.gmra.mrb[0].mxu0 %v1187
      %v1466 = vpop.f32.mrb[0].mxu0
      %v1467 = vadd.f32 0.0, %v1466
      %v1468 = vpop.f32.mrb[0].mxu0
      %v1469 = vadd.f32 0.0, %v1468
      %v1470 = vpop.f32.mrb[0].mxu0
      %v1471 = vpop.f32.mrb[0].mxu0
      %1472 = vdwg.mxu0
      %1473 = vmatprep.subr.bf16.mxu0 %v1336
      %1474 = vmatpush1.bf16.msra.mxu0 %v1335
      %1475 = vmatprep.subr.bf16.mxu0 %v1340
      %1476 = vmatpush1.bf16.msra.mxu0 %v1339
      %1477 = vmatprep.subr.bf16.mxu0 %v1344
      %1478 = vmatpush1.bf16.msra.mxu0 %v1343
      %1479 = vmatprep.subr.bf16.mxu0 %v1348
      %1480 = vmatpush1.bf16.msra.mxu0 %v1347
      %1481 = vmatprep.subr.bf16.mxu0 %v1352
      %1482 = vmatpush1.bf16.msra.mxu0 %v1351
      %1483 = vmatprep.subr.bf16.mxu0 %v1356
      %1484 = vmatpush1.bf16.msra.mxu0 %v1355
      %1485 = vmatprep.subr.bf16.mxu0 %v1360
      %1486 = vmatpush1.bf16.msra.mxu0 %v1359
      %1487 = vmatprep.subr.bf16.mxu0 %v1364
      %1488 = vmatpush1.bf16.msra.mxu0 %v1363
      %1489 = vmatprep.subr.bf16.mxu0 %v1368
      %1490 = vmatpush1.bf16.msra.mxu0 %v1367
      %1491 = vmatprep.subr.bf16.mxu0 %v1372
      %1492 = vmatpush1.bf16.msra.mxu0 %v1371
      %1493 = vmatprep.subr.bf16.mxu0 %v1376
      %1494 = vmatpush1.bf16.msra.mxu0 %v1375
      %1495 = vmatprep.subr.bf16.mxu0 %v1380
      %1496 = vmatpush1.bf16.msra.mxu0 %v1379
      %1497 = vmatprep.subr.bf16.mxu0 0
      %1498 = vmatpush1.bf16.msra.mxu0 0
      %1499 = vmatprep.subr.bf16.mxu0 0
      %1500 = vmatpush1.bf16.msra.mxu0 0
      %1501 = vmatprep.subr.bf16.mxu0 0
      %1502 = vmatpush1.bf16.msra.mxu0 0
      %1503 = vmatprep.subr.bf16.mxu0 0
      %1504 = vmatpush1.bf16.msra.mxu0 0
      %1505 = vmatprep.mubr.bf16.mxu0 %v1430
      %1506 = vmatmul.mubr.bf16.gmra.mrb[0].mxu0 %v1187
      %v1507 = vpop.f32.mrb[0].mxu0
      %v1508 = vadd.f32 0.0, %v1507
      %v1509 = vpop.f32.mrb[0].mxu0
      %v1510 = vadd.f32 0.0, %v1509
      %v1511 = vpop.f32.mrb[0].mxu0
      %v1512 = vpop.f32.mrb[0].mxu0
      %1513 = vdwg.mxu0
      %v1530 = vunpack.c.l.b16 %v973
      %v1531 = vunpack.c.h.b16 %v973
      %v1532 = vunpack.c.l.b16 %v974
      %v1533 = vunpack.c.h.b16 %v974
      %v1534 = vunpack.c.l.b16 %v975
      %v1535 = vunpack.c.h.b16 %v975
      %v1536 = vunpack.c.l.b16 %v976
      %v1537 = vunpack.c.h.b16 %v976
      %v1538 = vunpack.c.l.b16 %v977
      %v1539 = vunpack.c.h.b16 %v977
      %v1540 = vunpack.c.l.b16 %v978
      %v1541 = vunpack.c.h.b16 %v978
      %v1542 = vunpack.c.l.b16 %v979
      %v1543 = vunpack.c.h.b16 %v979
      %v1544 = vunpack.c.l.b16 %v980
      %v1545 = vunpack.c.h.b16 %v980
      %v1546 = vunpack.c.l.b16 %v981
      %v1547 = vunpack.c.h.b16 %v981
      %v1548 = vunpack.c.l.b16 %v982
      %v1549 = vunpack.c.h.b16 %v982
      %v1550 = vunpack.c.l.b16 %v983
      %v1551 = vunpack.c.h.b16 %v983
      %v1552 = vunpack.c.l.b16 %v984
      %v1553 = vunpack.c.h.b16 %v984
      %v1554 = vunpack.c.l.b16 %v985
      %v1555 = vunpack.c.h.b16 %v985
      %v1556 = vunpack.c.l.b16 %v986
      %v1557 = vunpack.c.h.b16 %v986
      %v1558 = vunpack.c.l.b16 %v987
      %v1559 = vunpack.c.h.b16 %v987
      %v1560 = vunpack.c.l.b16 %v988
      %v1561 = vunpack.c.h.b16 %v988
      %v1562 = vpack.c.b16 %v1534, %v1530
      %v1563 = vpack.c.b16 %v1535, %v1531
      %v1564 = vpack.c.b16 %v1536, %v1532
      %v1565 = vpack.c.b16 %v1537, %v1533
      %v1566 = vpack.c.b16 %v1542, %v1538
      %v1567 = vpack.c.b16 %v1543, %v1539
      %v1568 = vpack.c.b16 %v1544, %v1540
      %v1569 = vpack.c.b16 %v1545, %v1541
      %v1570 = vpack.c.b16 %v1550, %v1546
      %v1571 = vpack.c.b16 %v1551, %v1547
      %v1572 = vpack.c.b16 %v1552, %v1548
      %v1573 = vpack.c.b16 %v1553, %v1549
      %v1574 = vpack.c.b16 %v1558, %v1554
      %v1575 = vpack.c.b16 %v1559, %v1555
      %v1576 = vpack.c.b16 %v1560, %v1556
      %v1577 = vpack.c.b16 %v1561, %v1557
      %v1595 = vsel %vm1135, %v1179, 0
      %1597 = vmatprep.subr.bf16.mxu0 %v1563
      %1598 = vmatpush1.bf16.msra.mxu0 %v1562
      %1599 = vmatprep.subr.bf16.mxu0 %v1567
      %1600 = vmatpush1.bf16.msra.mxu0 %v1566
      %1601 = vmatprep.subr.bf16.mxu0 %v1571
      %1602 = vmatpush1.bf16.msra.mxu0 %v1570
      %1603 = vmatprep.subr.bf16.mxu0 %v1575
      %1604 = vmatpush1.bf16.msra.mxu0 %v1574
      %1605 = vmatprep.subr.bf16.mxu0 0
      %1606 = vmatpush1.bf16.msra.mxu0 0
      %1607 = vmatprep.subr.bf16.mxu0 0
      %1608 = vmatpush1.bf16.msra.mxu0 0
      %1609 = vmatprep.subr.bf16.mxu0 0
      %1610 = vmatpush1.bf16.msra.mxu0 0
      %1611 = vmatprep.subr.bf16.mxu0 0
      %1612 = vmatpush1.bf16.msra.mxu0 0
      %1613 = vmatprep.subr.bf16.mxu0 0
      %1614 = vmatpush1.bf16.msra.mxu0 0
      %1615 = vmatprep.subr.bf16.mxu0 0
      %1616 = vmatpush1.bf16.msra.mxu0 0
      %1617 = vmatprep.subr.bf16.mxu0 0
      %1618 = vmatpush1.bf16.msra.mxu0 0
      %1619 = vmatprep.subr.bf16.mxu0 0
      %1620 = vmatpush1.bf16.msra.mxu0 0
      %1621 = vmatprep.subr.bf16.mxu0 0
      %1622 = vmatpush1.bf16.msra.mxu0 0
      %1623 = vmatprep.subr.bf16.mxu0 0
      %1624 = vmatpush1.bf16.msra.mxu0 0
      %1625 = vmatprep.subr.bf16.mxu0 0
      %1626 = vmatpush1.bf16.msra.mxu0 0
      %1627 = vmatprep.subr.bf16.mxu0 0
      %1628 = vmatpush1.bf16.msra.mxu0 0
      %1629 = vmatprep.mubr.bf16.mxu0 0
      %1630 = vmatmul.mubr.bf16.gmra.mrb[0].mxu0 %v1595
      %v1631 = vpop.f32.mrb[0].mxu0
      %v1632 = vadd.f32 %v1467, %v1631
      %v1633 = vpop.f32.mrb[0].mxu0
      %v1634 = vadd.f32 %v1469, %v1633
      %v1635 = vpop.f32.mrb[0].mxu0
      %v1636 = vpop.f32.mrb[0].mxu0
      %1637 = vdwg.mxu0
      %1638 = vmatprep.subr.bf16.mxu0 %v1565
      %1639 = vmatpush1.bf16.msra.mxu0 %v1564
      %1640 = vmatprep.subr.bf16.mxu0 %v1569
      %1641 = vmatpush1.bf16.msra.mxu0 %v1568
      %1642 = vmatprep.subr.bf16.mxu0 %v1573
      %1643 = vmatpush1.bf16.msra.mxu0 %v1572
      %1644 = vmatprep.subr.bf16.mxu0 %v1577
      %1645 = vmatpush1.bf16.msra.mxu0 %v1576
      %1646 = vmatprep.subr.bf16.mxu0 0
      %1647 = vmatpush1.bf16.msra.mxu0 0
      %1648 = vmatprep.subr.bf16.mxu0 0
      %1649 = vmatpush1.bf16.msra.mxu0 0
      %1650 = vmatprep.subr.bf16.mxu0 0
      %1651 = vmatpush1.bf16.msra.mxu0 0
      %1652 = vmatprep.subr.bf16.mxu0 0
      %1653 = vmatpush1.bf16.msra.mxu0 0
      %1654 = vmatprep.subr.bf16.mxu0 0
      %1655 = vmatpush1.bf16.msra.mxu0 0
      %1656 = vmatprep.subr.bf16.mxu0 0
      %1657 = vmatpush1.bf16.msra.mxu0 0
      %1658 = vmatprep.subr.bf16.mxu0 0
      %1659 = vmatpush1.bf16.msra.mxu0 0
      %1660 = vmatprep.subr.bf16.mxu0 0
      %1661 = vmatpush1.bf16.msra.mxu0 0
      %1662 = vmatprep.subr.bf16.mxu0 0
      %1663 = vmatpush1.bf16.msra.mxu0 0
      %1664 = vmatprep.subr.bf16.mxu0 0
      %1665 = vmatpush1.bf16.msra.mxu0 0
      %1666 = vmatprep.subr.bf16.mxu0 0
      %1667 = vmatpush1.bf16.msra.mxu0 0
      %1668 = vmatprep.subr.bf16.mxu0 0
      %1669 = vmatpush1.bf16.msra.mxu0 0
      %1670 = vmatprep.mubr.bf16.mxu0 0
      %1671 = vmatmul.mubr.bf16.gmra.mrb[0].mxu0 %v1595
      %v1672 = vpop.f32.mrb[0].mxu0
      %v1673 = vadd.f32 %v1508, %v1672
      %v1674 = vpop.f32.mrb[0].mxu0
      %v1675 = vadd.f32 %v1510, %v1674
      %v1676 = vpop.f32.mrb[0].mxu0
      %v1677 = vpop.f32.mrb[0].mxu0
      %1678 = vdwg.mxu0
      %v1680 = vlaneseq
      %v1681 = vshrl.u32 %v1680, 7
      %v1682 = vsub.s32 0, %v1681
      %v1683 = vrot.slane %v1037, %v1682
      %v1684 = vlaneseq
      %v1685 = vshrl.u32 %v1684, 7
      %v1686 = vsub.s32 1, %v1685
      %v1687 = vrot.slane %v1037, %v1686
      %v1688 = vlaneseq
      %v1689 = vshrl.u32 %v1688, 7
      %v1690 = vsub.s32 2, %v1689
      %v1691 = vrot.slane %v1037, %v1690
      %v1692 = vlaneseq
      %v1693 = vshrl.u32 %v1692, 7
      %v1694 = vsub.s32 3, %v1693
      %v1695 = vrot.slane %v1037, %v1694
      %v1700 = vadd.f32 %v1632, %v1683
      %v1701 = vadd.f32 %v1634, %v1687
      %v1702 = vadd.f32 %v1673, %v1691
      %v1703 = vadd.f32 %v1675, %v1695
      %v1704 = vmax.f32 %v1700, 0.0
      %v1705 = vmax.f32 %v1701, 0.0
      %v1706 = vmax.f32 %v1702, 0.0
      %v1707 = vmax.f32 %v1703, 0.0
      %v1708 = vpack.c.bf16 %v1704, %v1704
      %v1709 = vpack.c.bf16 %v1705, %v1705
      %v1710 = vpack.c.bf16 %v1706, %v1706
      %v1711 = vpack.c.bf16 %v1707, %v1707
      %v1776 = vunpack.c.l.b16 %v1038
      %v1777 = vunpack.c.h.b16 %v1038
      %v1778 = vunpack.c.l.b16 %v1039
      %v1779 = vunpack.c.h.b16 %v1039
      %v1780 = vunpack.c.l.b16 %v1040
      %v1781 = vunpack.c.h.b16 %v1040
      %v1782 = vunpack.c.l.b16 %v1041
      %v1783 = vunpack.c.h.b16 %v1041
      %v1784 = vunpack.c.l.b16 %v1042
      %v1785 = vunpack.c.h.b16 %v1042
      %v1786 = vunpack.c.l.b16 %v1043
      %v1787 = vunpack.c.h.b16 %v1043
      %v1788 = vunpack.c.l.b16 %v1044
      %v1789 = vunpack.c.h.b16 %v1044
      %v1790 = vunpack.c.l.b16 %v1045
      %v1791 = vunpack.c.h.b16 %v1045
      %v1792 = vunpack.c.l.b16 %v1046
      %v1793 = vunpack.c.h.b16 %v1046
      %v1794 = vunpack.c.l.b16 %v1047
      %v1795 = vunpack.c.h.b16 %v1047
      %v1796 = vunpack.c.l.b16 %v1048
      %v1797 = vunpack.c.h.b16 %v1048
      %v1798 = vunpack.c.l.b16 %v1049
      %v1799 = vunpack.c.h.b16 %v1049
      %v1800 = vunpack.c.l.b16 %v1050
      %v1801 = vunpack.c.h.b16 %v1050
      %v1802 = vunpack.c.l.b16 %v1051
      %v1803 = vunpack.c.h.b16 %v1051
      %v1804 = vunpack.c.l.b16 %v1052
      %v1805 = vunpack.c.h.b16 %v1052
      %v1806 = vunpack.c.l.b16 %v1053
      %v1807 = vunpack.c.h.b16 %v1053
      %v1808 = vunpack.c.l.b16 %v1054
      %v1809 = vunpack.c.h.b16 %v1054
      %v1810 = vunpack.c.l.b16 %v1055
      %v1811 = vunpack.c.h.b16 %v1055
      %v1812 = vunpack.c.l.b16 %v1056
      %v1813 = vunpack.c.h.b16 %v1056
      %v1814 = vunpack.c.l.b16 %v1057
      %v1815 = vunpack.c.h.b16 %v1057
      %v1816 = vunpack.c.l.b16 %v1058
      %v1817 = vunpack.c.h.b16 %v1058
      %v1818 = vunpack.c.l.b16 %v1059
      %v1819 = vunpack.c.h.b16 %v1059
      %v1820 = vunpack.c.l.b16 %v1060
      %v1821 = vunpack.c.h.b16 %v1060
      %v1822 = vunpack.c.l.b16 %v1061
      %v1823 = vunpack.c.h.b16 %v1061
      %v1824 = vunpack.c.l.b16 %v1062
      %v1825 = vunpack.c.h.b16 %v1062
      %v1826 = vunpack.c.l.b16 %v1063
      %v1827 = vunpack.c.h.b16 %v1063
      %v1828 = vunpack.c.l.b16 %v1064
      %v1829 = vunpack.c.h.b16 %v1064
      %v1830 = vunpack.c.l.b16 %v1065
      %v1831 = vunpack.c.h.b16 %v1065
      %v1832 = vunpack.c.l.b16 %v1066
      %v1833 = vunpack.c.h.b16 %v1066
      %v1834 = vunpack.c.l.b16 %v1067
      %v1835 = vunpack.c.h.b16 %v1067
      %v1836 = vunpack.c.l.b16 %v1068
      %v1837 = vunpack.c.h.b16 %v1068
      %v1838 = vunpack.c.l.b16 %v1069
      %v1839 = vunpack.c.h.b16 %v1069
      %v1840 = vunpack.c.l.b16 %v1070
      %v1841 = vunpack.c.h.b16 %v1070
      %v1842 = vunpack.c.l.b16 %v1071
      %v1843 = vunpack.c.h.b16 %v1071
      %v1844 = vunpack.c.l.b16 %v1072
      %v1845 = vunpack.c.h.b16 %v1072
      %v1846 = vunpack.c.l.b16 %v1073
      %v1847 = vunpack.c.h.b16 %v1073
      %v1848 = vunpack.c.l.b16 %v1074
      %v1849 = vunpack.c.h.b16 %v1074
      %v1850 = vunpack.c.l.b16 %v1075
      %v1851 = vunpack.c.h.b16 %v1075
      %v1852 = vunpack.c.l.b16 %v1076
      %v1853 = vunpack.c.h.b16 %v1076
      %v1854 = vunpack.c.l.b16 %v1077
      %v1855 = vunpack.c.h.b16 %v1077
      %v1856 = vunpack.c.l.b16 %v1078
      %v1857 = vunpack.c.h.b16 %v1078
      %v1858 = vunpack.c.l.b16 %v1079
      %v1859 = vunpack.c.h.b16 %v1079
      %v1860 = vunpack.c.l.b16 %v1080
      %v1861 = vunpack.c.h.b16 %v1080
      %v1862 = vunpack.c.l.b16 %v1081
      %v1863 = vunpack.c.h.b16 %v1081
      %v1864 = vunpack.c.l.b16 %v1082
      %v1865 = vunpack.c.h.b16 %v1082
      %v1866 = vunpack.c.l.b16 %v1083
      %v1867 = vunpack.c.h.b16 %v1083
      %v1868 = vunpack.c.l.b16 %v1084
      %v1869 = vunpack.c.h.b16 %v1084
      %v1870 = vunpack.c.l.b16 %v1085
      %v1871 = vunpack.c.h.b16 %v1085
      %v1872 = vunpack.c.l.b16 %v1086
      %v1873 = vunpack.c.h.b16 %v1086
      %v1874 = vunpack.c.l.b16 %v1087
      %v1875 = vunpack.c.h.b16 %v1087
      %v1876 = vunpack.c.l.b16 %v1088
      %v1877 = vunpack.c.h.b16 %v1088
      %v1878 = vunpack.c.l.b16 %v1089
      %v1879 = vunpack.c.h.b16 %v1089
      %v1880 = vunpack.c.l.b16 %v1090
      %v1881 = vunpack.c.h.b16 %v1090
      %v1882 = vunpack.c.l.b16 %v1091
      %v1883 = vunpack.c.h.b16 %v1091
      %v1884 = vunpack.c.l.b16 %v1092
      %v1885 = vunpack.c.h.b16 %v1092
      %v1886 = vunpack.c.l.b16 %v1093
      %v1887 = vunpack.c.h.b16 %v1093
      %v1888 = vunpack.c.l.b16 %v1094
      %v1889 = vunpack.c.h.b16 %v1094
      %v1890 = vunpack.c.l.b16 %v1095
      %v1891 = vunpack.c.h.b16 %v1095
      %v1892 = vunpack.c.l.b16 %v1096
      %v1893 = vunpack.c.h.b16 %v1096
      %v1894 = vunpack.c.l.b16 %v1097
      %v1895 = vunpack.c.h.b16 %v1097
      %v1896 = vunpack.c.l.b16 %v1098
      %v1897 = vunpack.c.h.b16 %v1098
      %v1898 = vunpack.c.l.b16 %v1099
      %v1899 = vunpack.c.h.b16 %v1099
      %v1900 = vunpack.c.l.b16 %v1100
      %v1901 = vunpack.c.h.b16 %v1100
      %v1902 = vunpack.c.l.b16 %v1101
      %v1903 = vunpack.c.h.b16 %v1101
      %v1904 = vpack.c.b16 %v1778, %v1776
      %v1905 = vpack.c.b16 %v1779, %v1777
      %v1906 = vpack.c.b16 %v1782, %v1780
      %v1907 = vpack.c.b16 %v1783, %v1781
      %v1908 = vpack.c.b16 %v1786, %v1784
      %v1909 = vpack.c.b16 %v1787, %v1785
      %v1910 = vpack.c.b16 %v1790, %v1788
      %v1911 = vpack.c.b16 %v1791, %v1789
      %v1912 = vpack.c.b16 %v1794, %v1792
      %v1913 = vpack.c.b16 %v1795, %v1793
      %v1914 = vpack.c.b16 %v1798, %v1796
      %v1915 = vpack.c.b16 %v1799, %v1797
      %v1916 = vpack.c.b16 %v1802, %v1800
      %v1917 = vpack.c.b16 %v1803, %v1801
      %v1918 = vpack.c.b16 %v1806, %v1804
      %v1919 = vpack.c.b16 %v1807, %v1805
      %v1920 = vpack.c.b16 %v1810, %v1808
      %v1921 = vpack.c.b16 %v1811, %v1809
      %v1922 = vpack.c.b16 %v1814, %v1812
      %v1923 = vpack.c.b16 %v1815, %v1813
      %v1924 = vpack.c.b16 %v1818, %v1816
      %v1925 = vpack.c.b16 %v1819, %v1817
      %v1926 = vpack.c.b16 %v1822, %v1820
      %v1927 = vpack.c.b16 %v1823, %v1821
      %v1928 = vpack.c.b16 %v1826, %v1824
      %v1929 = vpack.c.b16 %v1827, %v1825
      %v1930 = vpack.c.b16 %v1830, %v1828
      %v1931 = vpack.c.b16 %v1831, %v1829
      %v1932 = vpack.c.b16 %v1834, %v1832
      %v1933 = vpack.c.b16 %v1835, %v1833
      %v1934 = vpack.c.b16 %v1838, %v1836
      %v1935 = vpack.c.b16 %v1839, %v1837
      %v1936 = vpack.c.b16 %v1842, %v1840
      %v1937 = vpack.c.b16 %v1843, %v1841
      %v1938 = vpack.c.b16 %v1846, %v1844
      %v1939 = vpack.c.b16 %v1847, %v1845
      %v1940 = vpack.c.b16 %v1850, %v1848
      %v1941 = vpack.c.b16 %v1851, %v1849
      %v1942 = vpack.c.b16 %v1854, %v1852
      %v1943 = vpack.c.b16 %v1855, %v1853
      %v1944 = vpack.c.b16 %v1858, %v1856
      %v1945 = vpack.c.b16 %v1859, %v1857
      %v1946 = vpack.c.b16 %v1862, %v1860
      %v1947 = vpack.c.b16 %v1863, %v1861
      %v1948 = vpack.c.b16 %v1866, %v1864
      %v1949 = vpack.c.b16 %v1867, %v1865
      %v1950 = vpack.c.b16 %v1870, %v1868
      %v1951 = vpack.c.b16 %v1871, %v1869
      %v1952 = vpack.c.b16 %v1874, %v1872
      %v1953 = vpack.c.b16 %v1875, %v1873
      %v1954 = vpack.c.b16 %v1878, %v1876
      %v1955 = vpack.c.b16 %v1879, %v1877
      %v1956 = vpack.c.b16 %v1882, %v1880
      %v1957 = vpack.c.b16 %v1883, %v1881
      %v1958 = vpack.c.b16 %v1886, %v1884
      %v1959 = vpack.c.b16 %v1887, %v1885
      %v1960 = vpack.c.b16 %v1890, %v1888
      %v1961 = vpack.c.b16 %v1891, %v1889
      %v1962 = vpack.c.b16 %v1894, %v1892
      %v1963 = vpack.c.b16 %v1895, %v1893
      %v1964 = vpack.c.b16 %v1898, %v1896
      %v1965 = vpack.c.b16 %v1899, %v1897
      %v1966 = vpack.c.b16 %v1902, %v1900
      %v1967 = vpack.c.b16 %v1903, %v1901
      %2032 = vmatprep.subr.bf16.mxu0 %v1905
      %2033 = vmatpush1.bf16.msra.mxu0 %v1904
      %2034 = vmatprep.subr.bf16.mxu0 %v1907
      %2035 = vmatpush1.bf16.msra.mxu0 %v1906
      %2036 = vmatprep.subr.bf16.mxu0 %v1909
      %2037 = vmatpush1.bf16.msra.mxu0 %v1908
      %2038 = vmatprep.subr.bf16.mxu0 %v1911
      %2039 = vmatpush1.bf16.msra.mxu0 %v1910
      %2040 = vmatprep.subr.bf16.mxu0 %v1913
      %2041 = vmatpush1.bf16.msra.mxu0 %v1912
      %2042 = vmatprep.subr.bf16.mxu0 %v1915
      %2043 = vmatpush1.bf16.msra.mxu0 %v1914
      %2044 = vmatprep.subr.bf16.mxu0 %v1917
      %2045 = vmatpush1.bf16.msra.mxu0 %v1916
      %2046 = vmatprep.subr.bf16.mxu0 %v1919
      %2047 = vmatpush1.bf16.msra.mxu0 %v1918
      %2048 = vmatprep.subr.bf16.mxu0 %v1921
      %2049 = vmatpush1.bf16.msra.mxu0 %v1920
      %2050 = vmatprep.subr.bf16.mxu0 %v1923
      %2051 = vmatpush1.bf16.msra.mxu0 %v1922
      %2052 = vmatprep.subr.bf16.mxu0 %v1925
      %2053 = vmatpush1.bf16.msra.mxu0 %v1924
      %2054 = vmatprep.subr.bf16.mxu0 %v1927
      %2055 = vmatpush1.bf16.msra.mxu0 %v1926
      %2056 = vmatprep.subr.bf16.mxu0 %v1929
      %2057 = vmatpush1.bf16.msra.mxu0 %v1928
      %2058 = vmatprep.subr.bf16.mxu0 %v1931
      %2059 = vmatpush1.bf16.msra.mxu0 %v1930
      %2060 = vmatprep.subr.bf16.mxu0 %v1933
      %2061 = vmatpush1.bf16.msra.mxu0 %v1932
      %2062 = vmatprep.subr.bf16.mxu0 %v1935
      %2063 = vmatpush1.bf16.msra.mxu0 %v1934
      %2064 = vmatprep.mubr.bf16.mxu0 %v1709
      %2065 = vmatmul.mubr.bf16.gmra.mrb[0].mxu0 %v1708
      %v2066 = vpop.f32.mrb[0].mxu0
      %v2067 = vadd.f32 0.0, %v2066
      %v2068 = vpop.f32.mrb[0].mxu0
      %v2069 = vadd.f32 0.0, %v2068
      %v2070 = vpop.f32.mrb[0].mxu0
      %v2071 = vpop.f32.mrb[0].mxu0
      %2072 = vdwg.mxu0
      %2073 = vmatprep.subr.bf16.mxu0 %v1937
      %2074 = vmatpush1.bf16.msra.mxu0 %v1936
      %2075 = vmatprep.subr.bf16.mxu0 %v1939
      %2076 = vmatpush1.bf16.msra.mxu0 %v1938
      %2077 = vmatprep.subr.bf16.mxu0 %v1941
      %2078 = vmatpush1.bf16.msra.mxu0 %v1940
      %2079 = vmatprep.subr.bf16.mxu0 %v1943
      %2080 = vmatpush1.bf16.msra.mxu0 %v1942
      %2081 = vmatprep.subr.bf16.mxu0 %v1945
      %2082 = vmatpush1.bf16.msra.mxu0 %v1944
      %2083 = vmatprep.subr.bf16.mxu0 %v1947
      %2084 = vmatpush1.bf16.msra.mxu0 %v1946
      %2085 = vmatprep.subr.bf16.mxu0 %v1949
      %2086 = vmatpush1.bf16.msra.mxu0 %v1948
      %2087 = vmatprep.subr.bf16.mxu0 %v1951
      %2088 = vmatpush1.bf16.msra.mxu0 %v1950
      %2089 = vmatprep.subr.bf16.mxu0 %v1953
      %2090 = vmatpush1.bf16.msra.mxu0 %v1952
      %2091 = vmatprep.subr.bf16.mxu0 %v1955
      %2092 = vmatpush1.bf16.msra.mxu0 %v1954
      %2093 = vmatprep.subr.bf16.mxu0 %v1957
      %2094 = vmatpush1.bf16.msra.mxu0 %v1956
      %2095 = vmatprep.subr.bf16.mxu0 %v1959
      %2096 = vmatpush1.bf16.msra.mxu0 %v1958
      %2097 = vmatprep.subr.bf16.mxu0 %v1961
      %2098 = vmatpush1.bf16.msra.mxu0 %v1960
      %2099 = vmatprep.subr.bf16.mxu0 %v1963
      %2100 = vmatpush1.bf16.msra.mxu0 %v1962
      %2101 = vmatprep.subr.bf16.mxu0 %v1965
      %2102 = vmatpush1.bf16.msra.mxu0 %v1964
      %2103 = vmatprep.subr.bf16.mxu0 %v1967
      %2104 = vmatpush1.bf16.msra.mxu0 %v1966
      %2105 = vmatprep.mubr.bf16.mxu0 %v1711
      %2106 = vmatmul.mubr.bf16.gmra.mrb[0].mxu0 %v1710
      %v2107 = vpop.f32.mrb[0].mxu0
      %v2108 = vadd.f32 %v2067, %v2107
      %v2109 = vpop.f32.mrb[0].mxu0
      %v2110 = vadd.f32 %v2069, %v2109
      %v2111 = vpop.f32.mrb[0].mxu0
      %v2112 = vpop.f32.mrb[0].mxu0
      %2113 = vdwg.mxu0
      %v2114 = vadd.f32 %v965, %v2108
      %v2115 = vadd.f32 %v967, %v2110
      %v2116 = vpack.c.bf16 %v2114, %v2114
      %v2117 = vpack.c.bf16 %v2115, %v2115
      %v2120 = vcombine.low %v2116, %v2117
      %v2122 = vunpack.c.l.s4 1966171168
      %v2123 = vunpack.c.0.s8 %v2122
      %v2124 = vlaneseq
      %v2125 = vshrl.u32 %v2124, 7
      %v2126 = vsub.s32 %v2123, %v2125
      %v2127 = vrot.slane %v2120, %v2126
      %v2129 = vunpack.c.l.s4 1966171168
      %v2130 = vunpack.c.0.s8 %v2129
      %v2131 = vlaneseq
      %v2132 = vshrl.u32 %v2131, 7
      %v2133 = vsub.s32 %v2130, %v2132
      %v2134 = vrot.slane %v2127, %v2133
      %2136 = vst [vmem:[%s461] sm:$0x3] %v2134
      %p2137 = scmp.lt.s32.totalorder %s20, 1
      %s2138 = scalar_select %p2137, %s20, 1
      %s2139 = smul.addr %s2138, 2
      %s2140 = scalar_lea.vmem %s9, %s2139
      // Predicated region
      $region57: #{generate_feats_forward.9} parent=55 // pred_check
        %p2141 = pneg %p267
      $region58: #{generate_feats_forward.9} parent=55 // pred_check_branch
        %2143 = sbr.rel (%p2141) target = $region60
      $region59: #{generate_feats_forward.9} parent=55 // pred_region
        _
      $region60: #{generate_feats_forward.9} parent=55 // pred_fallthru
        _
    $region56: #{generate_feats_forward.9} parent=5 // pred_fallthru
      _
    %p2144 = scmp.le.s32.totalorder 2, %s15
    // Predicated region
    $region61: #{generate_feats_forward.9} parent=5 // pred_check
      %p2145 = pneg %p2144
    $region62: #{generate_feats_forward.9} parent=5 // pred_check_branch
      %2147 = sbr.rel (%p2145) target = $region64
    $region63: #{generate_feats_forward.9} parent=5 // pred_region
      %s2148 = ssub.s32 %s15, 2
      // Predicated region
      $region65: #{generate_feats_forward.9} parent=63 // pred_check
        %p2149 = pneg %p273
      $region66: #{generate_feats_forward.9} parent=63 // pred_check_branch
        %2151 = sbr.rel (%p2149) target = $region68
      $region67: #{generate_feats_forward.9} parent=63 // pred_region
        %p2152 = scmp.lt.s32.totalorder %s21, 1
        %s2153 = scalar_select %p2152, %s21, 1
        %s2154 = smul.addr %s2153, 2
        %s2155 = scalar_lea.vmem %s9, %s2154
      $region68: #{generate_feats_forward.9} parent=63 // pred_fallthru
        _
    $region64: #{generate_feats_forward.9} parent=5 // pred_fallthru
      _
  $region6: #{generate_feats_forward.9} parent=0 // loop_footer
    %s19 = sadd.s32 1, %s15
  $region7: #{generate_feats_forward.9} parent=0 // loop_footer_branch
    %14 = sbr.rel target = $region3
  $region8: #{generate_feats_forward.9} parent=0 // loop_exit
    _

</llo_original>
